<compile_context>
chip_gen: v5e
topology: v5e:2x2
jax: 0.10.0
libtpu: 0.0.40
codegen_flags: <defaults>
</compile_context>

<pallas_src>
import functools
import numpy as np
import jax
import jax.numpy as jnp
from jax import lax
from jax.experimental import pallas as pl
from jax.experimental.pallas import tpu as pltpu

# ----------------------------- config (small) -------------------------------
IMG_SIZE = 16
PATCH_SIZE = 4
IN_CHANS = 3
NUM_CLASSES = 10
EMBED_DIM_ARG = 8
NUM_HEADS = 4
EMBED_DIM = EMBED_DIM_ARG * NUM_HEADS          # ConViT does embed_dim *= num_heads
DEPTH = 4
LOCAL_UP_TO_LAYER = 2
MLP_RATIO = 4.0
LOCALITY_STRENGTH = 1.0
NUM_PATCHES = (IMG_SIZE // PATCH_SIZE) ** 2
N_GPSA = LOCAL_UP_TO_LAYER
N_MHSA = DEPTH - LOCAL_UP_TO_LAYER
HIDDEN = int(EMBED_DIM * MLP_RATIO)
PATCH_DIM = IN_CHANS * PATCH_SIZE * PATCH_SIZE
HEAD_DIM = EMBED_DIM // NUM_HEADS
SCALE = HEAD_DIM ** (-0.5)
BATCH = 2
LN_EPS = 1e-5
NT_PAD = 24            # tokens per image padded to a multiple of 8 (>= 17)
OUT_PAD = 128          # lane-padded logits / bias width
NEG_INF = -1e30


# --------------------------- in-kernel math helpers --------------------------
def _ln(x, g, b):
    mu = jnp.mean(x, axis=-1, keepdims=True)
    xc = x - mu
    var = jnp.mean(xc * xc, axis=-1, keepdims=True)
    return xc * lax.rsqrt(var + LN_EPS) * g + b


def _erf(x):
    # Abramowitz & Stegun 7.1.26 (|err| < 1.5e-7): exp + polynomials only.
    a1, a2, a3, a4, a5 = (0.254829592, -0.284496736, 1.421413741,
                          -1.453152027, 1.061405429)
    p = 0.3275911
    sgn = jnp.where(x >= 0.0, 1.0, -1.0)
    ax = jnp.abs(x)
    t = 1.0 / (1.0 + p * ax)
    poly = ((((a5 * t + a4) * t + a3) * t + a2) * t + a1) * t
    return sgn * (1.0 - poly * jnp.exp(-ax * ax))


def _gelu(x):
    # nn.GELU default is the exact erf form.
    return 0.5 * x * (1.0 + _erf(x * 0.7071067811865476))


def _bf(x):
    return x.astype(jnp.bfloat16)


# ------------------------------ the fused kernel -----------------------------
def _convit_kernel(patches_ref, const_ref, pembw_ref, blkw_ref, vec_ref,
                   gpos_ref, headw_ref, o_ref, *, b_step):
    E, H, Dh, Np, Nt = EMBED_DIM, NUM_HEADS, HEAD_DIM, NUM_PATCHES, NT_PAD
    R = b_step * Nt

    # ---- patch embed + pos embed (conv bias folded into posb); 8 pad rows ----
    posb = const_ref[0:Np, 0:E]                                   # (16, E) f32
    pw = pembw_ref[...]                                           # (48, E) bf16
    rows = []
    for b in range(b_step):
        pe = jnp.dot(patches_ref[b], pw,
                     preferred_element_type=jnp.float32) + posb   # (16, E)
        rows.append(pe)
        rows.append(jnp.zeros((Nt - Np, E), jnp.float32))
    x = jnp.concatenate(rows, axis=0)                             # (R, E) f32

    # Key masks: GPSA sees 16 patch keys, MHSA sees 17 (patches + cls).
    col = lax.broadcasted_iota(jnp.int32, (1, Nt), 1)
    mask_gpsa = jnp.where(col < Np, 0.0, NEG_INF)
    mask_mhsa = jnp.where(col < Np + 1, 0.0, NEG_INF)

    for l in range(DEPTH):
        gated = l < N_GPSA
        if l == N_GPSA:
            # cls token joins the sequence right before the first MHSA block
            cls_row = const_ref[Np:Np + 1, 0:E]                   # (1, E)
            ridx = lax.broadcasted_iota(jnp.int32, (R, 1), 0)
            x = jnp.where(ridx % Nt == Np, cls_row, x)
        key_mask = mask_gpsa if gated else mask_mhsa

        # small-vector slab rows: n1_g, n1_b, proj_b, n2_g, n2_b, fc1_b, fc2_b
        n1g = vec_ref[l, 0:1, 0:E]
        n1b = vec_ref[l, 1:2, 0:E]
        projb = vec_ref[l, 2:3, 0:E]
        n2g = vec_ref[l, 3:4, 0:E]
        n2b = vec_ref[l, 4:5, 0:E]
        fc1b = vec_ref[l, 5:6, 0:HIDDEN]
        fc2b = vec_ref[l, 6:7, 0:E]

        # matmul-weight slab columns: qkv | proj | fc1 | fc2
        qkv_w = blkw_ref[l, 0:E, 0:3 * E]                         # (E, 3E)
        proj_w = blkw_ref[l, 0:E, 3 * E:4 * E]                    # (E, E)
        fc1_w = blkw_ref[l, 0:E, 4 * E:4 * E + HIDDEN]            # (E, HID)
        fc2_w = blkw_ref[l, 0:HIDDEN, 4 * E + HIDDEN:4 * E + HIDDEN + E]

        xn = _ln(x, n1g, n1b)
        qkv = jnp.dot(_bf(xn), qkv_w,
                      preferred_element_type=jnp.float32)         # (R, 3E)

        attn_out = []
        for b in range(b_step):                                   # images
            qkv_b = qkv[b * Nt:(b + 1) * Nt, :]                   # (Nt, 3E)
            houts = []
            for h in range(H):                                    # heads
                q = _bf(qkv_b[:, h * Dh:(h + 1) * Dh])
                k = _bf(qkv_b[:, E + h * Dh:E + (h + 1) * Dh])
                v = _bf(qkv_b[:, 2 * E + h * Dh:2 * E + (h + 1) * Dh])
                # q @ k^T without an explicit transpose
                s = lax.dot_general(q, k, (((1,), (1,)), ((), ())),
                                    preferred_element_type=jnp.float32)
                s = s * SCALE + key_mask                          # (Nt, Nt)
                mx = jnp.max(s, axis=-1, keepdims=True)
                e = jnp.exp(s - mx)
                attn = e * pl.reciprocal(
                    jnp.sum(e, axis=-1, keepdims=True), approx=True)
                if gated:
                    # (1-sig(g))*patch_softmax + sig(g)*pos_softmax, exact renorm
                    one_minus_sig = vec_ref[l, 7:8, h:h + 1]      # (1, 1)
                    attn = one_minus_sig * attn + gpos_ref[l, h]
                    attn = attn / jnp.sum(attn, axis=-1, keepdims=True)
                houts.append(jnp.dot(_bf(attn), v,
                                     preferred_element_type=jnp.float32))
            attn_out.append(jnp.concatenate(houts, axis=-1))      # (Nt, E)
        attn_out = jnp.concatenate(attn_out, axis=0)              # (R, E)

        # proj + residual, LN2, MLP(fc1 -> GELU -> fc2) + residual
        y = x + jnp.dot(_bf(attn_out), proj_w,
                        preferred_element_type=jnp.float32) + projb
        yn = _ln(y, n2g, n2b)
        hid = _gelu(jnp.dot(_bf(yn), fc1_w,
                            preferred_element_type=jnp.float32) + fc1b)
        x = y + jnp.dot(_bf(hid), fc2_w,
                        preferred_element_type=jnp.float32) + fc2b

    # ---- final LayerNorm + classifier head on the cls rows only ----
    cls_rows = [x[b * Nt + Np:b * Nt + Np + 1, :] for b in range(b_step)]
    if 8 - b_step > 0:
        cls_rows.append(jnp.zeros((8 - b_step, E), jnp.float32))
    cls_mat = jnp.concatenate(cls_rows, axis=0)                   # (8, E)
    norm_g = const_ref[Np + 1:Np + 2, 0:E]
    norm_b = const_ref[Np + 2:Np + 3, 0:E]
    head_b = const_ref[Np + 3:Np + 4, 0:OUT_PAD]
    cls_n = _ln(cls_mat, norm_g, norm_b)
    logits = jnp.dot(_bf(cls_n), headw_ref[...],
                     preferred_element_type=jnp.float32) + head_b # (8, 128)
    o_ref[0] = logits


# ------------------------------- module glue --------------------------------
def _rep_spec(shape):
    """Full-array block, same block for every grid step (stays VMEM-resident)."""
    nd = len(shape)
    return pl.BlockSpec(shape, lambda s, _nd=nd: (0,) * _nd)


def _images_per_step(batch):
    try:
        kind = jax.devices()[0].device_kind.lower()
    except Exception:
        kind = ""
    # v7x has 2 TensorCores/chip: keep one image per (parallel) grid step so
    # the cores split the batch.  Single-TC chips fuse the whole batch into
    # one grid step (no serial-loop overhead, one wide matmul chain).
    return 1 if "v7" in kind else batch


def get_rel_indices(num_patches):
    img = int(num_patches ** 0.5)
    ind = np.arange(img)[None, :] - np.arange(img)[:, None]
    indx = np.tile(ind, (img, img))
    indy = np.repeat(np.repeat(ind, img, axis=0), img, axis=1)
    indd = indx ** 2 + indy ** 2
    # last-dim ordering matches torch: [indx, indy, indd]
    return jnp.asarray(np.stack([indx, indy, indd], axis=-1), dtype=jnp.float32)


@functools.partial(jax.jit, static_argnames=("b_step",))
def _convit_forward_impl(x, params, *, b_step):
    B = x.shape[0]
    E, H, Np, p = EMBED_DIM, NUM_HEADS, NUM_PATCHES, PATCH_SIZE
    Hp = IMG_SIZE // p
    n_steps = B // b_step

    # --- patch extraction (conv-as-matmul layout), bf16 matmul operand ---
    patches = x.reshape(B, IN_CHANS, Hp, p, Hp, p).transpose(0, 2, 4, 1, 3, 5)
    patches = patches.reshape(B, Np, PATCH_DIM).astype(jnp.bfloat16)

    # --- const slab (f32): pos+patch bias rows, cls, final LN, head bias ---
    const = jnp.zeros((NT_PAD, OUT_PAD), jnp.float32)
    posb = params["pos_embed"].reshape(Np, E) + params["patch_b"].reshape(1, E)
    const = const.at[0:Np, 0:E].set(posb)
    const = const.at[Np, 0:E].set(params["cls_token"].reshape(E))
    const = const.at[Np + 1, 0:E].set(params["norm_g"])
    const = const.at[Np + 2, 0:E].set(params["norm_b"])
    const = const.at[Np + 3, 0:NUM_CLASSES].set(params["head_b"])

    # --- per-block matmul-weight slab (bf16) + bias/LN/gate slab (f32) ---
    blocks = list(params["gpsa"]) + list(params["mhsa"])
    blk_w = jnp.zeros((DEPTH, HIDDEN, 4 * E + HIDDEN + E), jnp.float32)
    vec = jnp.zeros((DEPTH, 8, OUT_PAD), jnp.float32)
    for l, blk in enumerate(blocks):
        if l < N_GPSA:
            qkv_w = jnp.concatenate([blk["qk_w"], blk["v_w"]], axis=1)
        else:
            qkv_w = blk["qkv_w"]
        blk_w = blk_w.at[l, 0:E, 0:3 * E].set(qkv_w)
        blk_w = blk_w.at[l, 0:E, 3 * E:4 * E].set(blk["proj_w"])
        blk_w = blk_w.at[l, 0:E, 4 * E:4 * E + HIDDEN].set(blk["fc1_w"])
        blk_w = blk_w.at[l, 0:HIDDEN,
                         4 * E + HIDDEN:4 * E + HIDDEN + E].set(blk["fc2_w"])
        vec = vec.at[l, 0, 0:E].set(blk["n1_g"])
        vec = vec.at[l, 1, 0:E].set(blk["n1_b"])
        vec = vec.at[l, 2, 0:E].set(blk["proj_b"])
        vec = vec.at[l, 3, 0:E].set(blk["n2_g"])
        vec = vec.at[l, 4, 0:E].set(blk["n2_b"])
        vec = vec.at[l, 5, 0:HIDDEN].set(blk["fc1_b"])
        vec = vec.at[l, 6, 0:E].set(blk["fc2_b"])
        if l < N_GPSA:
            vec = vec.at[l, 7, 0:H].set(1.0 - jax.nn.sigmoid(blk["gating"]))
    blk_w = blk_w.astype(jnp.bfloat16)

    # --- input-independent GPSA precompute: sigmoid-gated pos-softmax, padded
    rel = get_rel_indices(Np)                                      # (Np, Np, 3)
    gpos = jnp.zeros((max(N_GPSA, 1), H, NT_PAD, NT_PAD), jnp.float32)
    for l in range(N_GPSA):
        blk = params["gpsa"][l]
        logits = (jnp.einsum("nmt,ht->hnm", rel, blk["pos_w"])
                  + blk["pos_b"][:, None, None])                   # (H, Np, Np)
        sig = jax.nn.sigmoid(blk["gating"])
        gp = sig[:, None, None] * jax.nn.softmax(logits, axis=-1)
        gpos = gpos.at[l, :, 0:Np, 0:Np].set(gp)

    pemb_w = params["patch_w"].astype(jnp.bfloat16)
    head_w = (jnp.zeros((E, OUT_PAD), jnp.float32)
              .at[:, 0:NUM_CLASSES].set(params["head_w"])
              .astype(jnp.bfloat16))

    weight_args = (const, pemb_w, blk_w, vec, gpos, head_w)
    in_specs = [pl.BlockSpec((b_step, Np, PATCH_DIM), lambda s: (s, 0, 0))]
    in_specs += [_rep_spec(a.shape) for a in weight_args]

    out = pl.pallas_call(
        functools.partial(_convit_kernel, b_step=b_step),
        out_shape=jax.ShapeDtypeStruct((n_steps, 8, OUT_PAD), jnp.float32),
        grid=(n_steps,),
        in_specs=in_specs,
        out_specs=pl.BlockSpec((1, 8, OUT_PAD), lambda s: (s, 0, 0)),
        compiler_params=pltpu.CompilerParams(
            dimension_semantics=("parallel",)),
    )(patches, *weight_args)

    rows = np.arange(B)
    rows = (rows // b_step) * 8 + (rows % b_step)
    return out.reshape(n_steps * 8, OUT_PAD)[rows, :NUM_CLASSES]


def convit_forward(x, params):
    b_step = _images_per_step(x.shape[0])
    if x.shape[0] % b_step != 0:
        b_step = 1
    return _convit_forward_impl(x, params, b_step=b_step)


# ------------------------------ parameter init ------------------------------
def init_params(key):
    E, H = EMBED_DIM, NUM_HEADS
    keys = iter(jax.random.split(key, 256))

    def tn(shape):  # trunc_normal(std=0.02) stand-in (synthetic)
        return 0.02 * jax.random.normal(next(keys), shape, jnp.float32)

    def zeros(n):
        return jnp.zeros((n,), jnp.float32)

    def ones(n):
        return jnp.ones((n,), jnp.float32)

    params = {
        "patch_w": tn((PATCH_DIM, E)),     # conv weight flattened (Cin*p*p, E)
        "patch_b": zeros(E),
        "cls_token": tn((1, 1, E)),
        "pos_embed": tn((1, NUM_PATCHES, E)),
        "norm_g": ones(E), "norm_b": zeros(E),
        "head_w": tn((E, NUM_CLASSES)),
        "head_b": zeros(NUM_CLASSES),
    }

    # GPSA local_init pos_proj weights (deterministic, as in the module)
    ks = int(H ** 0.5)
    center = (ks - 1) / 2 if ks % 2 == 0 else ks // 2
    pos_w = np.zeros((H, 3), np.float32)
    for h1 in range(ks):
        for h2 in range(ks):
            position = h1 + ks * h2
            pos_w[position, 2] = -1.0
            pos_w[position, 1] = 2.0 * (h1 - center)
            pos_w[position, 0] = 2.0 * (h2 - center)
    pos_w *= LOCALITY_STRENGTH

    gpsa = []
    for _ in range(N_GPSA):
        gpsa.append({
            "n1_g": ones(E), "n1_b": zeros(E),
            "qk_w": tn((E, 2 * E)),                    # qkv_bias=False
            "v_w": jnp.eye(E, dtype=jnp.float32),      # local_init: v = I
            "pos_w": jnp.asarray(pos_w), "pos_b": zeros(H),
            "gating": jnp.ones((H,), jnp.float32),
            "proj_w": tn((E, E)), "proj_b": zeros(E),
            "n2_g": ones(E), "n2_b": zeros(E),
            "fc1_w": tn((E, HIDDEN)), "fc1_b": zeros(HIDDEN),
            "fc2_w": tn((HIDDEN, E)), "fc2_b": zeros(E),
        })

    mhsa = []
    for _ in range(N_MHSA):
        mhsa.append({
            "n1_g": ones(E), "n1_b": zeros(E),
            "qkv_w": tn((E, 3 * E)),                   # qkv_bias=False
            "proj_w": tn((E, E)), "proj_b": zeros(E),
            "n2_g": ones(E), "n2_b": zeros(E),
            "fc1_w": tn((E, HIDDEN)), "fc1_b": zeros(HIDDEN),
            "fc2_w": tn((HIDDEN, E)), "fc2_b": zeros(E),
        })

    params["gpsa"] = gpsa
    params["mhsa"] = mhsa
    return params


# ----------------------------------- main ------------------------------------
if __name__ == "__main__":
    key = jax.random.PRNGKey(0)
    kx, kp = jax.random.split(key)
    x = jax.random.normal(kx, (BATCH, IN_CHANS, IMG_SIZE, IMG_SIZE), jnp.float32)
    params = init_params(kp)
    logits = convit_forward(x, params)
    jax.block_until_ready(logits)
    assert logits.shape == (BATCH, NUM_CLASSES)
    assert bool(jnp.all(jnp.isfinite(logits)))
    # TODO(synk): training-mode spectral-norm penalty (init_uv / calculate power
    # iteration) is a training-only side computation, not part of eval forward.
    print("KERNEL_OK")
</pallas_src>

<mosaic_0001>
module attributes {stable_mosaic.version = 11 : i64} {
  func.func @_convit_kernel(%arg0: i32, %arg1: memref<2x16x48xbf16, #tpu.memory_space<vmem>>, %arg2: memref<24x128xf32, #tpu.memory_space<vmem>>, %arg3: memref<48x32xbf16, #tpu.memory_space<vmem>>, %arg4: memref<4x128x288xbf16, #tpu.memory_space<vmem>>, %arg5: memref<4x8x128xf32, #tpu.memory_space<vmem>>, %arg6: memref<2x4x24x24xf32, #tpu.memory_space<vmem>>, %arg7: memref<32x128xbf16, #tpu.memory_space<vmem>>, %arg8: memref<1x8x128xf32, #tpu.memory_space<vmem>>) attributes {dimension_semantics = [#tpu.dimension_semantics<parallel>], iteration_bounds = array<i64: 1>, scalar_prefetch = 0 : i64, scratch_operands = 0 : i64, tpu.core_type = #tpu.core_type<tc>, window_params = [{transform_indices = @transform_0, window_bounds = array<i64: 2, 16, 48>}, {pipeline_mode = #tpu.pipeline_mode<synchronous>, transform_indices = @transform_1, window_bounds = array<i64: 24, 128>}, {pipeline_mode = #tpu.pipeline_mode<synchronous>, transform_indices = @transform_2, window_bounds = array<i64: 48, 32>}, {pipeline_mode = #tpu.pipeline_mode<synchronous>, transform_indices = @transform_3, window_bounds = array<i64: 4, 128, 288>}, {pipeline_mode = #tpu.pipeline_mode<synchronous>, transform_indices = @transform_4, window_bounds = array<i64: 4, 8, 128>}, {pipeline_mode = #tpu.pipeline_mode<synchronous>, transform_indices = @transform_5, window_bounds = array<i64: 2, 4, 24, 24>}, {pipeline_mode = #tpu.pipeline_mode<synchronous>, transform_indices = @transform_6, window_bounds = array<i64: 32, 128>}, {transform_indices = @transform_7, window_bounds = array<i64: 1, 8, 128>}]} {
    %c0 = arith.constant 0 : index
    %c0_0 = arith.constant 0 : index
    %0 = vector.load %arg2[%c0, %c0_0] : memref<24x128xf32, #tpu.memory_space<vmem>>, vector<16x32xf32>
    %c0_1 = arith.constant 0 : index
    %c0_2 = arith.constant 0 : index
    %1 = vector.load %arg3[%c0_1, %c0_2] : memref<48x32xbf16, #tpu.memory_space<vmem>>, vector<48x32xbf16>
    %c0_3 = arith.constant 0 : index
    %c0_4 = arith.constant 0 : index
    %c0_5 = arith.constant 0 : index
    %2 = vector.load %arg1[%c0_3, %c0_4, %c0_5] : memref<2x16x48xbf16, #tpu.memory_space<vmem>>, vector<1x16x48xbf16>
    %3 = vector.shape_cast %2 : vector<1x16x48xbf16> to vector<16x48xbf16>
    %cst = arith.constant dense<0.000000e+00> : vector<16x32xf32>
    %4 = tpu.matmul %3, %1, %cst {dimension_numbers = #tpu.dot_dimension_numbers<[1], [0], [0], [1], [0, 0, 1, 1], [], []>} : vector<16x48xbf16>, vector<48x32xbf16>, vector<16x32xf32> -> vector<16x32xf32>
    %5 = arith.addf %4, %0 : vector<16x32xf32>
    %cst_6 = arith.constant 0.000000e+00 : f32
    %6 = vector.broadcast %cst_6 : f32 to vector<8x32xf32>
    %c1 = arith.constant 1 : index
    %c0_7 = arith.constant 0 : index
    %c0_8 = arith.constant 0 : index
    %7 = vector.load %arg1[%c1, %c0_7, %c0_8] : memref<2x16x48xbf16, #tpu.memory_space<vmem>>, vector<1x16x48xbf16>
    %8 = vector.shape_cast %7 : vector<1x16x48xbf16> to vector<16x48xbf16>
    %cst_9 = arith.constant dense<0.000000e+00> : vector<16x32xf32>
    %9 = tpu.matmul %8, %1, %cst_9 {dimension_numbers = #tpu.dot_dimension_numbers<[1], [0], [0], [1], [0, 0, 1, 1], [], []>} : vector<16x48xbf16>, vector<48x32xbf16>, vector<16x32xf32> -> vector<16x32xf32>
    %10 = arith.addf %9, %0 : vector<16x32xf32>
    %cst_10 = arith.constant 0.000000e+00 : f32
    %11 = vector.broadcast %cst_10 : f32 to vector<8x32xf32>
    %12 = tpu.concatenate %5, %6, %10, %11 in 0 : vector<16x32xf32>, vector<8x32xf32>, vector<16x32xf32>, vector<8x32xf32> -> vector<48x32xf32>
    %13 = tpu.iota {dimensions = array<i32: 1>} : vector<1x24xi32>
    %c16_i32 = arith.constant 16 : i32
    %14 = vector.broadcast %c16_i32 : i32 to vector<1x24xi32>
    %15 = arith.cmpi slt, %13, %14 : vector<1x24xi32>
    %cst_11 = arith.constant 0.000000e+00 : f32
    %cst_12 = arith.constant -1.000000e+30 : f32
    %16 = vector.broadcast %cst_11 : f32 to vector<1x24xf32>
    %17 = vector.broadcast %cst_12 : f32 to vector<1x24xf32>
    %18 = arith.select %15, %16, %17 : vector<1x24xi1>, vector<1x24xf32>
    %c17_i32 = arith.constant 17 : i32
    %19 = vector.broadcast %c17_i32 : i32 to vector<1x24xi32>
    %20 = arith.cmpi slt, %13, %19 : vector<1x24xi32>
    %cst_13 = arith.constant 0.000000e+00 : f32
    %cst_14 = arith.constant -1.000000e+30 : f32
    %21 = vector.broadcast %cst_13 : f32 to vector<1x24xf32>
    %22 = vector.broadcast %cst_14 : f32 to vector<1x24xf32>
    %23 = arith.select %20, %21, %22 : vector<1x24xi1>, vector<1x24xf32>
    %c0_15 = arith.constant 0 : index
    %c0_16 = arith.constant 0 : index
    %c0_17 = arith.constant 0 : index
    %24 = vector.load %arg5[%c0_15, %c0_16, %c0_17] : memref<4x8x128xf32, #tpu.memory_space<vmem>>, vector<1x1x32xf32>
    %25 = vector.shape_cast %24 : vector<1x1x32xf32> to vector<1x32xf32>
    %c0_18 = arith.constant 0 : index
    %c1_19 = arith.constant 1 : index
    %c0_20 = arith.constant 0 : index
    %26 = vector.load %arg5[%c0_18, %c1_19, %c0_20] : memref<4x8x128xf32, #tpu.memory_space<vmem>>, vector<1x1x32xf32>
    %27 = vector.shape_cast %26 : vector<1x1x32xf32> to vector<1x32xf32>
    %c0_21 = arith.constant 0 : index
    %c2 = arith.constant 2 : index
    %c0_22 = arith.constant 0 : index
    %28 = vector.load %arg5[%c0_21, %c2, %c0_22] : memref<4x8x128xf32, #tpu.memory_space<vmem>>, vector<1x1x32xf32>
    %29 = vector.shape_cast %28 : vector<1x1x32xf32> to vector<1x32xf32>
    %c0_23 = arith.constant 0 : index
    %c3 = arith.constant 3 : index
    %c0_24 = arith.constant 0 : index
    %30 = vector.load %arg5[%c0_23, %c3, %c0_24] : memref<4x8x128xf32, #tpu.memory_space<vmem>>, vector<1x1x32xf32>
    %31 = vector.shape_cast %30 : vector<1x1x32xf32> to vector<1x32xf32>
    %c0_25 = arith.constant 0 : index
    %c4 = arith.constant 4 : index
    %c0_26 = arith.constant 0 : index
    %32 = vector.load %arg5[%c0_25, %c4, %c0_26] : memref<4x8x128xf32, #tpu.memory_space<vmem>>, vector<1x1x32xf32>
    %33 = vector.shape_cast %32 : vector<1x1x32xf32> to vector<1x32xf32>
    %c0_27 = arith.constant 0 : index
    %c5 = arith.constant 5 : index
    %c0_28 = arith.constant 0 : index
    %34 = vector.load %arg5[%c0_27, %c5, %c0_28] : memref<4x8x128xf32, #tpu.memory_space<vmem>>, vector<1x1x128xf32>
    %35 = vector.shape_cast %34 : vector<1x1x128xf32> to vector<1x128xf32>
    %c0_29 = arith.constant 0 : index
    %c6 = arith.constant 6 : index
    %c0_30 = arith.constant 0 : index
    %36 = vector.load %arg5[%c0_29, %c6, %c0_30] : memref<4x8x128xf32, #tpu.memory_space<vmem>>, vector<1x1x32xf32>
    %37 = vector.shape_cast %36 : vector<1x1x32xf32> to vector<1x32xf32>
    %c0_31 = arith.constant 0 : index
    %c0_32 = arith.constant 0 : index
    %c0_33 = arith.constant 0 : index
    %38 = vector.load %arg4[%c0_31, %c0_32, %c0_33] : memref<4x128x288xbf16, #tpu.memory_space<vmem>>, vector<1x32x96xbf16>
    %39 = vector.shape_cast %38 : vector<1x32x96xbf16> to vector<32x96xbf16>
    %c0_34 = arith.constant 0 : index
    %c0_35 = arith.constant 0 : index
    %c96 = arith.constant 96 : index
    %40 = vector.load %arg4[%c0_34, %c0_35, %c96] : memref<4x128x288xbf16, #tpu.memory_space<vmem>>, vector<1x32x32xbf16>
    %41 = vector.shape_cast %40 : vector<1x32x32xbf16> to vector<32x32xbf16>
    %c0_36 = arith.constant 0 : index
    %c0_37 = arith.constant 0 : index
    %c128 = arith.constant 128 : index
    %42 = vector.load %arg4[%c0_36, %c0_37, %c128] : memref<4x128x288xbf16, #tpu.memory_space<vmem>>, vector<1x32x128xbf16>
    %43 = vector.shape_cast %42 : vector<1x32x128xbf16> to vector<32x128xbf16>
    %c0_38 = arith.constant 0 : index
    %c0_39 = arith.constant 0 : index
    %c256 = arith.constant 256 : index
    %44 = vector.load %arg4[%c0_38, %c0_39, %c256] : memref<4x128x288xbf16, #tpu.memory_space<vmem>>, vector<1x128x32xbf16>
    %45 = vector.shape_cast %44 : vector<1x128x32xbf16> to vector<128x32xbf16>
    %cst_40 = arith.constant dense<0.000000e+00> : vector<48xf32>
    %46 = vector.multi_reduction <add>, %12, %cst_40 [1] : vector<48x32xf32> to vector<48xf32>
    %47 = vector.shape_cast %46 : vector<48xf32> to vector<48x1xf32>
    %cst_41 = arith.constant 3.200000e+01 : f32
    %48 = vector.broadcast %cst_41 : f32 to vector<48x1xf32>
    %49 = arith.divf %47, %48 : vector<48x1xf32>
    %50 = vector.broadcast %49 : vector<48x1xf32> to vector<48x32xf32>
    %51 = arith.subf %12, %50 : vector<48x32xf32>
    %52 = arith.mulf %51, %51 : vector<48x32xf32>
    %cst_42 = arith.constant dense<0.000000e+00> : vector<48xf32>
    %53 = vector.multi_reduction <add>, %52, %cst_42 [1] : vector<48x32xf32> to vector<48xf32>
    %54 = vector.shape_cast %53 : vector<48xf32> to vector<48x1xf32>
    %cst_43 = arith.constant 3.200000e+01 : f32
    %55 = vector.broadcast %cst_43 : f32 to vector<48x1xf32>
    %56 = arith.divf %54, %55 : vector<48x1xf32>
    %cst_44 = arith.constant 9.99999974E-6 : f32
    %57 = vector.broadcast %cst_44 : f32 to vector<48x1xf32>
    %58 = arith.addf %56, %57 : vector<48x1xf32>
    %59 = math.rsqrt %58 : vector<48x1xf32>
    %60 = vector.broadcast %59 : vector<48x1xf32> to vector<48x32xf32>
    %61 = arith.mulf %51, %60 : vector<48x32xf32>
    %62 = vector.broadcast %25 : vector<1x32xf32> to vector<48x32xf32>
    %63 = arith.mulf %61, %62 : vector<48x32xf32>
    %64 = vector.broadcast %27 : vector<1x32xf32> to vector<48x32xf32>
    %65 = arith.addf %63, %64 : vector<48x32xf32>
    %66 = arith.truncf %65 : vector<48x32xf32> to vector<48x32xbf16>
    %cst_45 = arith.constant dense<0.000000e+00> : vector<48x96xf32>
    %67 = tpu.matmul %66, %39, %cst_45 {dimension_numbers = #tpu.dot_dimension_numbers<[1], [0], [0], [1], [0, 0, 1, 1], [], []>} : vector<48x32xbf16>, vector<32x96xbf16>, vector<48x96xf32> -> vector<48x96xf32>
    %68 = vector.extract_strided_slice %67 {offsets = [0, 0], sizes = [24, 96], strides = [1, 1]} : vector<48x96xf32> to vector<24x96xf32>
    %69 = vector.extract_strided_slice %68 {offsets = [0, 0], sizes = [24, 8], strides = [1, 1]} : vector<24x96xf32> to vector<24x8xf32>
    %70 = arith.truncf %69 : vector<24x8xf32> to vector<24x8xbf16>
    %71 = vector.extract_strided_slice %68 {offsets = [0, 32], sizes = [24, 8], strides = [1, 1]} : vector<24x96xf32> to vector<24x8xf32>
    %72 = arith.truncf %71 : vector<24x8xf32> to vector<24x8xbf16>
    %73 = vector.extract_strided_slice %68 {offsets = [0, 64], sizes = [24, 8], strides = [1, 1]} : vector<24x96xf32> to vector<24x8xf32>
    %74 = arith.truncf %73 : vector<24x8xf32> to vector<24x8xbf16>
    %cst_46 = arith.constant dense<0.000000e+00> : vector<24x24xf32>
    %75 = tpu.matmul %70, %72, %cst_46 {dimension_numbers = #tpu.dot_dimension_numbers<[1], [1], [0], [0], [0, 0, 1, 0], [], []>} : vector<24x8xbf16>, vector<24x8xbf16>, vector<24x24xf32> -> vector<24x24xf32>
    %cst_47 = arith.constant 0.353553385 : f32
    %76 = vector.broadcast %cst_47 : f32 to vector<24x24xf32>
    %77 = arith.mulf %75, %76 : vector<24x24xf32>
    %78 = vector.broadcast %18 : vector<1x24xf32> to vector<24x24xf32>
    %79 = arith.addf %77, %78 : vector<24x24xf32>
    %cst_48 = arith.constant dense<0xFF800000> : vector<24xf32>
    %80 = vector.multi_reduction <maximumf>, %79, %cst_48 [1] : vector<24x24xf32> to vector<24xf32>
    %81 = vector.shape_cast %80 : vector<24xf32> to vector<24x1xf32>
    %82 = vector.broadcast %81 : vector<24x1xf32> to vector<24x24xf32>
    %83 = arith.subf %79, %82 : vector<24x24xf32>
    %84 = math.exp %83 : vector<24x24xf32>
    %cst_49 = arith.constant dense<0.000000e+00> : vector<24xf32>
    %85 = vector.multi_reduction <add>, %84, %cst_49 [1] : vector<24x24xf32> to vector<24xf32>
    %86 = vector.shape_cast %85 : vector<24xf32> to vector<24x1xf32>
    %87 = tpu.reciprocal %86 {approx = true} : vector<24x1xf32> -> vector<24x1xf32>
    %88 = vector.broadcast %87 : vector<24x1xf32> to vector<24x24xf32>
    %89 = arith.mulf %84, %88 : vector<24x24xf32>
    %c0_50 = arith.constant 0 : index
    %c7 = arith.constant 7 : index
    %c0_51 = arith.constant 0 : index
    %90 = vector.load %arg5[%c0_50, %c7, %c0_51] : memref<4x8x128xf32, #tpu.memory_space<vmem>>, vector<1x1x1xf32>
    %91 = vector.shape_cast %90 : vector<1x1x1xf32> to vector<1x1xf32>
    %92 = vector.broadcast %91 : vector<1x1xf32> to vector<24x24xf32>
    %93 = arith.mulf %92, %89 : vector<24x24xf32>
    %c0_52 = arith.constant 0 : index
    %c0_53 = arith.constant 0 : index
    %c0_54 = arith.constant 0 : index
    %c0_55 = arith.constant 0 : index
    %94 = vector.load %arg6[%c0_52, %c0_53, %c0_54, %c0_55] : memref<2x4x24x24xf32, #tpu.memory_space<vmem>>, vector<1x1x24x24xf32>
    %95 = vector.shape_cast %94 : vector<1x1x24x24xf32> to vector<24x24xf32>
    %96 = arith.addf %93, %95 : vector<24x24xf32>
    %cst_56 = arith.constant dense<0.000000e+00> : vector<24xf32>
    %97 = vector.multi_reduction <add>, %96, %cst_56 [1] : vector<24x24xf32> to vector<24xf32>
    %98 = vector.shape_cast %97 : vector<24xf32> to vector<24x1xf32>
    %99 = vector.broadcast %98 : vector<24x1xf32> to vector<24x24xf32>
    %100 = arith.divf %96, %99 : vector<24x24xf32>
    %101 = arith.truncf %100 : vector<24x24xf32> to vector<24x24xbf16>
    %cst_57 = arith.constant dense<0.000000e+00> : vector<24x8xf32>
    %102 = tpu.matmul %101, %74, %cst_57 {dimension_numbers = #tpu.dot_dimension_numbers<[1], [0], [0], [1], [0, 0, 1, 1], [], []>} : vector<24x24xbf16>, vector<24x8xbf16>, vector<24x8xf32> -> vector<24x8xf32>
    %103 = vector.extract_strided_slice %68 {offsets = [0, 8], sizes = [24, 8], strides = [1, 1]} : vector<24x96xf32> to vector<24x8xf32>
    %104 = arith.truncf %103 : vector<24x8xf32> to vector<24x8xbf16>
    %105 = vector.extract_strided_slice %68 {offsets = [0, 40], sizes = [24, 8], strides = [1, 1]} : vector<24x96xf32> to vector<24x8xf32>
    %106 = arith.truncf %105 : vector<24x8xf32> to vector<24x8xbf16>
    %107 = vector.extract_strided_slice %68 {offsets = [0, 72], sizes = [24, 8], strides = [1, 1]} : vector<24x96xf32> to vector<24x8xf32>
    %108 = arith.truncf %107 : vector<24x8xf32> to vector<24x8xbf16>
    %cst_58 = arith.constant dense<0.000000e+00> : vector<24x24xf32>
    %109 = tpu.matmul %104, %106, %cst_58 {dimension_numbers = #tpu.dot_dimension_numbers<[1], [1], [0], [0], [0, 0, 1, 0], [], []>} : vector<24x8xbf16>, vector<24x8xbf16>, vector<24x24xf32> -> vector<24x24xf32>
    %cst_59 = arith.constant 0.353553385 : f32
    %110 = vector.broadcast %cst_59 : f32 to vector<24x24xf32>
    %111 = arith.mulf %109, %110 : vector<24x24xf32>
    %112 = vector.broadcast %18 : vector<1x24xf32> to vector<24x24xf32>
    %113 = arith.addf %111, %112 : vector<24x24xf32>
    %cst_60 = arith.constant dense<0xFF800000> : vector<24xf32>
    %114 = vector.multi_reduction <maximumf>, %113, %cst_60 [1] : vector<24x24xf32> to vector<24xf32>
    %115 = vector.shape_cast %114 : vector<24xf32> to vector<24x1xf32>
    %116 = vector.broadcast %115 : vector<24x1xf32> to vector<24x24xf32>
    %117 = arith.subf %113, %116 : vector<24x24xf32>
    %118 = math.exp %117 : vector<24x24xf32>
    %cst_61 = arith.constant dense<0.000000e+00> : vector<24xf32>
    %119 = vector.multi_reduction <add>, %118, %cst_61 [1] : vector<24x24xf32> to vector<24xf32>
    %120 = vector.shape_cast %119 : vector<24xf32> to vector<24x1xf32>
    %121 = tpu.reciprocal %120 {approx = true} : vector<24x1xf32> -> vector<24x1xf32>
    %122 = vector.broadcast %121 : vector<24x1xf32> to vector<24x24xf32>
    %123 = arith.mulf %118, %122 : vector<24x24xf32>
    %c0_62 = arith.constant 0 : index
    %c7_63 = arith.constant 7 : index
    %c1_64 = arith.constant 1 : index
    %124 = vector.load %arg5[%c0_62, %c7_63, %c1_64] : memref<4x8x128xf32, #tpu.memory_space<vmem>>, vector<1x1x1xf32>
    %125 = vector.shape_cast %124 : vector<1x1x1xf32> to vector<1x1xf32>
    %126 = vector.broadcast %125 : vector<1x1xf32> to vector<24x24xf32>
    %127 = arith.mulf %126, %123 : vector<24x24xf32>
    %c0_65 = arith.constant 0 : index
    %c1_66 = arith.constant 1 : index
    %c0_67 = arith.constant 0 : index
    %c0_68 = arith.constant 0 : index
    %128 = vector.load %arg6[%c0_65, %c1_66, %c0_67, %c0_68] : memref<2x4x24x24xf32, #tpu.memory_space<vmem>>, vector<1x1x24x24xf32>
    %129 = vector.shape_cast %128 : vector<1x1x24x24xf32> to vector<24x24xf32>
    %130 = arith.addf %127, %129 : vector<24x24xf32>
    %cst_69 = arith.constant dense<0.000000e+00> : vector<24xf32>
    %131 = vector.multi_reduction <add>, %130, %cst_69 [1] : vector<24x24xf32> to vector<24xf32>
    %132 = vector.shape_cast %131 : vector<24xf32> to vector<24x1xf32>
    %133 = vector.broadcast %132 : vector<24x1xf32> to vector<24x24xf32>
    %134 = arith.divf %130, %133 : vector<24x24xf32>
    %135 = arith.truncf %134 : vector<24x24xf32> to vector<24x24xbf16>
    %cst_70 = arith.constant dense<0.000000e+00> : vector<24x8xf32>
    %136 = tpu.matmul %135, %108, %cst_70 {dimension_numbers = #tpu.dot_dimension_numbers<[1], [0], [0], [1], [0, 0, 1, 1], [], []>} : vector<24x24xbf16>, vector<24x8xbf16>, vector<24x8xf32> -> vector<24x8xf32>
    %137 = vector.extract_strided_slice %68 {offsets = [0, 16], sizes = [24, 8], strides = [1, 1]} : vector<24x96xf32> to vector<24x8xf32>
    %138 = arith.truncf %137 : vector<24x8xf32> to vector<24x8xbf16>
    %139 = vector.extract_strided_slice %68 {offsets = [0, 48], sizes = [24, 8], strides = [1, 1]} : vector<24x96xf32> to vector<24x8xf32>
    %140 = arith.truncf %139 : vector<24x8xf32> to vector<24x8xbf16>
    %141 = vector.extract_strided_slice %68 {offsets = [0, 80], sizes = [24, 8], strides = [1, 1]} : vector<24x96xf32> to vector<24x8xf32>
    %142 = arith.truncf %141 : vector<24x8xf32> to vector<24x8xbf16>
    %cst_71 = arith.constant dense<0.000000e+00> : vector<24x24xf32>
    %143 = tpu.matmul %138, %140, %cst_71 {dimension_numbers = #tpu.dot_dimension_numbers<[1], [1], [0], [0], [0, 0, 1, 0], [], []>} : vector<24x8xbf16>, vector<24x8xbf16>, vector<24x24xf32> -> vector<24x24xf32>
    %cst_72 = arith.constant 0.353553385 : f32
    %144 = vector.broadcast %cst_72 : f32 to vector<24x24xf32>
    %145 = arith.mulf %143, %144 : vector<24x24xf32>
    %146 = vector.broadcast %18 : vector<1x24xf32> to vector<24x24xf32>
    %147 = arith.addf %145, %146 : vector<24x24xf32>
    %cst_73 = arith.constant dense<0xFF800000> : vector<24xf32>
    %148 = vector.multi_reduction <maximumf>, %147, %cst_73 [1] : vector<24x24xf32> to vector<24xf32>
    %149 = vector.shape_cast %148 : vector<24xf32> to vector<24x1xf32>
    %150 = vector.broadcast %149 : vector<24x1xf32> to vector<24x24xf32>
    %151 = arith.subf %147, %150 : vector<24x24xf32>
    %152 = math.exp %151 : vector<24x24xf32>
    %cst_74 = arith.constant dense<0.000000e+00> : vector<24xf32>
    %153 = vector.multi_reduction <add>, %152, %cst_74 [1] : vector<24x24xf32> to vector<24xf32>
    %154 = vector.shape_cast %153 : vector<24xf32> to vector<24x1xf32>
    %155 = tpu.reciprocal %154 {approx = true} : vector<24x1xf32> -> vector<24x1xf32>
    %156 = vector.broadcast %155 : vector<24x1xf32> to vector<24x24xf32>
    %157 = arith.mulf %152, %156 : vector<24x24xf32>
    %c0_75 = arith.constant 0 : index
    %c7_76 = arith.constant 7 : index
    %c2_77 = arith.constant 2 : index
    %158 = vector.load %arg5[%c0_75, %c7_76, %c2_77] : memref<4x8x128xf32, #tpu.memory_space<vmem>>, vector<1x1x1xf32>
    %159 = vector.shape_cast %158 : vector<1x1x1xf32> to vector<1x1xf32>
    %160 = vector.broadcast %159 : vector<1x1xf32> to vector<24x24xf32>
    %161 = arith.mulf %160, %157 : vector<24x24xf32>
    %c0_78 = arith.constant 0 : index
    %c2_79 = arith.constant 2 : index
    %c0_80 = arith.constant 0 : index
    %c0_81 = arith.constant 0 : index
    %162 = vector.load %arg6[%c0_78, %c2_79, %c0_80, %c0_81] : memref<2x4x24x24xf32, #tpu.memory_space<vmem>>, vector<1x1x24x24xf32>
    %163 = vector.shape_cast %162 : vector<1x1x24x24xf32> to vector<24x24xf32>
    %164 = arith.addf %161, %163 : vector<24x24xf32>
    %cst_82 = arith.constant dense<0.000000e+00> : vector<24xf32>
    %165 = vector.multi_reduction <add>, %164, %cst_82 [1] : vector<24x24xf32> to vector<24xf32>
    %166 = vector.shape_cast %165 : vector<24xf32> to vector<24x1xf32>
    %167 = vector.broadcast %166 : vector<24x1xf32> to vector<24x24xf32>
    %168 = arith.divf %164, %167 : vector<24x24xf32>
    %169 = arith.truncf %168 : vector<24x24xf32> to vector<24x24xbf16>
    %cst_83 = arith.constant dense<0.000000e+00> : vector<24x8xf32>
    %170 = tpu.matmul %169, %142, %cst_83 {dimension_numbers = #tpu.dot_dimension_numbers<[1], [0], [0], [1], [0, 0, 1, 1], [], []>} : vector<24x24xbf16>, vector<24x8xbf16>, vector<24x8xf32> -> vector<24x8xf32>
    %171 = vector.extract_strided_slice %68 {offsets = [0, 24], sizes = [24, 8], strides = [1, 1]} : vector<24x96xf32> to vector<24x8xf32>
    %172 = arith.truncf %171 : vector<24x8xf32> to vector<24x8xbf16>
    %173 = vector.extract_strided_slice %68 {offsets = [0, 56], sizes = [24, 8], strides = [1, 1]} : vector<24x96xf32> to vector<24x8xf32>
    %174 = arith.truncf %173 : vector<24x8xf32> to vector<24x8xbf16>
    %175 = vector.extract_strided_slice %68 {offsets = [0, 88], sizes = [24, 8], strides = [1, 1]} : vector<24x96xf32> to vector<24x8xf32>
    %176 = arith.truncf %175 : vector<24x8xf32> to vector<24x8xbf16>
    %cst_84 = arith.constant dense<0.000000e+00> : vector<24x24xf32>
    %177 = tpu.matmul %172, %174, %cst_84 {dimension_numbers = #tpu.dot_dimension_numbers<[1], [1], [0], [0], [0, 0, 1, 0], [], []>} : vector<24x8xbf16>, vector<24x8xbf16>, vector<24x24xf32> -> vector<24x24xf32>
    %cst_85 = arith.constant 0.353553385 : f32
    %178 = vector.broadcast %cst_85 : f32 to vector<24x24xf32>
    %179 = arith.mulf %177, %178 : vector<24x24xf32>
    %180 = vector.broadcast %18 : vector<1x24xf32> to vector<24x24xf32>
    %181 = arith.addf %179, %180 : vector<24x24xf32>
    %cst_86 = arith.constant dense<0xFF800000> : vector<24xf32>
    %182 = vector.multi_reduction <maximumf>, %181, %cst_86 [1] : vector<24x24xf32> to vector<24xf32>
    %183 = vector.shape_cast %182 : vector<24xf32> to vector<24x1xf32>
    %184 = vector.broadcast %183 : vector<24x1xf32> to vector<24x24xf32>
    %185 = arith.subf %181, %184 : vector<24x24xf32>
    %186 = math.exp %185 : vector<24x24xf32>
    %cst_87 = arith.constant dense<0.000000e+00> : vector<24xf32>
    %187 = vector.multi_reduction <add>, %186, %cst_87 [1] : vector<24x24xf32> to vector<24xf32>
    %188 = vector.shape_cast %187 : vector<24xf32> to vector<24x1xf32>
    %189 = tpu.reciprocal %188 {approx = true} : vector<24x1xf32> -> vector<24x1xf32>
    %190 = vector.broadcast %189 : vector<24x1xf32> to vector<24x24xf32>
    %191 = arith.mulf %186, %190 : vector<24x24xf32>
    %c0_88 = arith.constant 0 : index
    %c7_89 = arith.constant 7 : index
    %c3_90 = arith.constant 3 : index
    %192 = vector.load %arg5[%c0_88, %c7_89, %c3_90] : memref<4x8x128xf32, #tpu.memory_space<vmem>>, vector<1x1x1xf32>
    %193 = vector.shape_cast %192 : vector<1x1x1xf32> to vector<1x1xf32>
    %194 = vector.broadcast %193 : vector<1x1xf32> to vector<24x24xf32>
    %195 = arith.mulf %194, %191 : vector<24x24xf32>
    %c0_91 = arith.constant 0 : index
    %c3_92 = arith.constant 3 : index
    %c0_93 = arith.constant 0 : index
    %c0_94 = arith.constant 0 : index
    %196 = vector.load %arg6[%c0_91, %c3_92, %c0_93, %c0_94] : memref<2x4x24x24xf32, #tpu.memory_space<vmem>>, vector<1x1x24x24xf32>
    %197 = vector.shape_cast %196 : vector<1x1x24x24xf32> to vector<24x24xf32>
    %198 = arith.addf %195, %197 : vector<24x24xf32>
    %cst_95 = arith.constant dense<0.000000e+00> : vector<24xf32>
    %199 = vector.multi_reduction <add>, %198, %cst_95 [1] : vector<24x24xf32> to vector<24xf32>
    %200 = vector.shape_cast %199 : vector<24xf32> to vector<24x1xf32>
    %201 = vector.broadcast %200 : vector<24x1xf32> to vector<24x24xf32>
    %202 = arith.divf %198, %201 : vector<24x24xf32>
    %203 = arith.truncf %202 : vector<24x24xf32> to vector<24x24xbf16>
    %cst_96 = arith.constant dense<0.000000e+00> : vector<24x8xf32>
    %204 = tpu.matmul %203, %176, %cst_96 {dimension_numbers = #tpu.dot_dimension_numbers<[1], [0], [0], [1], [0, 0, 1, 1], [], []>} : vector<24x24xbf16>, vector<24x8xbf16>, vector<24x8xf32> -> vector<24x8xf32>
    %205 = tpu.concatenate %102, %136, %170, %204 in 1 : vector<24x8xf32>, vector<24x8xf32>, vector<24x8xf32>, vector<24x8xf32> -> vector<24x32xf32>
    %206 = vector.extract_strided_slice %67 {offsets = [24, 0], sizes = [24, 96], strides = [1, 1]} : vector<48x96xf32> to vector<24x96xf32>
    %207 = vector.extract_strided_slice %206 {offsets = [0, 0], sizes = [24, 8], strides = [1, 1]} : vector<24x96xf32> to vector<24x8xf32>
    %208 = arith.truncf %207 : vector<24x8xf32> to vector<24x8xbf16>
    %209 = vector.extract_strided_slice %206 {offsets = [0, 32], sizes = [24, 8], strides = [1, 1]} : vector<24x96xf32> to vector<24x8xf32>
    %210 = arith.truncf %209 : vector<24x8xf32> to vector<24x8xbf16>
    %211 = vector.extract_strided_slice %206 {offsets = [0, 64], sizes = [24, 8], strides = [1, 1]} : vector<24x96xf32> to vector<24x8xf32>
    %212 = arith.truncf %211 : vector<24x8xf32> to vector<24x8xbf16>
    %cst_97 = arith.constant dense<0.000000e+00> : vector<24x24xf32>
    %213 = tpu.matmul %208, %210, %cst_97 {dimension_numbers = #tpu.dot_dimension_numbers<[1], [1], [0], [0], [0, 0, 1, 0], [], []>} : vector<24x8xbf16>, vector<24x8xbf16>, vector<24x24xf32> -> vector<24x24xf32>
    %cst_98 = arith.constant 0.353553385 : f32
    %214 = vector.broadcast %cst_98 : f32 to vector<24x24xf32>
    %215 = arith.mulf %213, %214 : vector<24x24xf32>
    %216 = vector.broadcast %18 : vector<1x24xf32> to vector<24x24xf32>
    %217 = arith.addf %215, %216 : vector<24x24xf32>
    %cst_99 = arith.constant dense<0xFF800000> : vector<24xf32>
    %218 = vector.multi_reduction <maximumf>, %217, %cst_99 [1] : vector<24x24xf32> to vector<24xf32>
    %219 = vector.shape_cast %218 : vector<24xf32> to vector<24x1xf32>
    %220 = vector.broadcast %219 : vector<24x1xf32> to vector<24x24xf32>
    %221 = arith.subf %217, %220 : vector<24x24xf32>
    %222 = math.exp %221 : vector<24x24xf32>
    %cst_100 = arith.constant dense<0.000000e+00> : vector<24xf32>
    %223 = vector.multi_reduction <add>, %222, %cst_100 [1] : vector<24x24xf32> to vector<24xf32>
    %224 = vector.shape_cast %223 : vector<24xf32> to vector<24x1xf32>
    %225 = tpu.reciprocal %224 {approx = true} : vector<24x1xf32> -> vector<24x1xf32>
    %226 = vector.broadcast %225 : vector<24x1xf32> to vector<24x24xf32>
    %227 = arith.mulf %222, %226 : vector<24x24xf32>
    %c0_101 = arith.constant 0 : index
    %c7_102 = arith.constant 7 : index
    %c0_103 = arith.constant 0 : index
    %228 = vector.load %arg5[%c0_101, %c7_102, %c0_103] : memref<4x8x128xf32, #tpu.memory_space<vmem>>, vector<1x1x1xf32>
    %229 = vector.shape_cast %228 : vector<1x1x1xf32> to vector<1x1xf32>
    %230 = vector.broadcast %229 : vector<1x1xf32> to vector<24x24xf32>
    %231 = arith.mulf %230, %227 : vector<24x24xf32>
    %c0_104 = arith.constant 0 : index
    %c0_105 = arith.constant 0 : index
    %c0_106 = arith.constant 0 : index
    %c0_107 = arith.constant 0 : index
    %232 = vector.load %arg6[%c0_104, %c0_105, %c0_106, %c0_107] : memref<2x4x24x24xf32, #tpu.memory_space<vmem>>, vector<1x1x24x24xf32>
    %233 = vector.shape_cast %232 : vector<1x1x24x24xf32> to vector<24x24xf32>
    %234 = arith.addf %231, %233 : vector<24x24xf32>
    %cst_108 = arith.constant dense<0.000000e+00> : vector<24xf32>
    %235 = vector.multi_reduction <add>, %234, %cst_108 [1] : vector<24x24xf32> to vector<24xf32>
    %236 = vector.shape_cast %235 : vector<24xf32> to vector<24x1xf32>
    %237 = vector.broadcast %236 : vector<24x1xf32> to vector<24x24xf32>
    %238 = arith.divf %234, %237 : vector<24x24xf32>
    %239 = arith.truncf %238 : vector<24x24xf32> to vector<24x24xbf16>
    %cst_109 = arith.constant dense<0.000000e+00> : vector<24x8xf32>
    %240 = tpu.matmul %239, %212, %cst_109 {dimension_numbers = #tpu.dot_dimension_numbers<[1], [0], [0], [1], [0, 0, 1, 1], [], []>} : vector<24x24xbf16>, vector<24x8xbf16>, vector<24x8xf32> -> vector<24x8xf32>
    %241 = vector.extract_strided_slice %206 {offsets = [0, 8], sizes = [24, 8], strides = [1, 1]} : vector<24x96xf32> to vector<24x8xf32>
    %242 = arith.truncf %241 : vector<24x8xf32> to vector<24x8xbf16>
    %243 = vector.extract_strided_slice %206 {offsets = [0, 40], sizes = [24, 8], strides = [1, 1]} : vector<24x96xf32> to vector<24x8xf32>
    %244 = arith.truncf %243 : vector<24x8xf32> to vector<24x8xbf16>
    %245 = vector.extract_strided_slice %206 {offsets = [0, 72], sizes = [24, 8], strides = [1, 1]} : vector<24x96xf32> to vector<24x8xf32>
    %246 = arith.truncf %245 : vector<24x8xf32> to vector<24x8xbf16>
    %cst_110 = arith.constant dense<0.000000e+00> : vector<24x24xf32>
    %247 = tpu.matmul %242, %244, %cst_110 {dimension_numbers = #tpu.dot_dimension_numbers<[1], [1], [0], [0], [0, 0, 1, 0], [], []>} : vector<24x8xbf16>, vector<24x8xbf16>, vector<24x24xf32> -> vector<24x24xf32>
    %cst_111 = arith.constant 0.353553385 : f32
    %248 = vector.broadcast %cst_111 : f32 to vector<24x24xf32>
    %249 = arith.mulf %247, %248 : vector<24x24xf32>
    %250 = vector.broadcast %18 : vector<1x24xf32> to vector<24x24xf32>
    %251 = arith.addf %249, %250 : vector<24x24xf32>
    %cst_112 = arith.constant dense<0xFF800000> : vector<24xf32>
    %252 = vector.multi_reduction <maximumf>, %251, %cst_112 [1] : vector<24x24xf32> to vector<24xf32>
    %253 = vector.shape_cast %252 : vector<24xf32> to vector<24x1xf32>
    %254 = vector.broadcast %253 : vector<24x1xf32> to vector<24x24xf32>
    %255 = arith.subf %251, %254 : vector<24x24xf32>
    %256 = math.exp %255 : vector<24x24xf32>
    %cst_113 = arith.constant dense<0.000000e+00> : vector<24xf32>
    %257 = vector.multi_reduction <add>, %256, %cst_113 [1] : vector<24x24xf32> to vector<24xf32>
    %258 = vector.shape_cast %257 : vector<24xf32> to vector<24x1xf32>
    %259 = tpu.reciprocal %258 {approx = true} : vector<24x1xf32> -> vector<24x1xf32>
    %260 = vector.broadcast %259 : vector<24x1xf32> to vector<24x24xf32>
    %261 = arith.mulf %256, %260 : vector<24x24xf32>
    %c0_114 = arith.constant 0 : index
    %c7_115 = arith.constant 7 : index
    %c1_116 = arith.constant 1 : index
    %262 = vector.load %arg5[%c0_114, %c7_115, %c1_116] : memref<4x8x128xf32, #tpu.memory_space<vmem>>, vector<1x1x1xf32>
    %263 = vector.shape_cast %262 : vector<1x1x1xf32> to vector<1x1xf32>
    %264 = vector.broadcast %263 : vector<1x1xf32> to vector<24x24xf32>
    %265 = arith.mulf %264, %261 : vector<24x24xf32>
    %c0_117 = arith.constant 0 : index
    %c1_118 = arith.constant 1 : index
    %c0_119 = arith.constant 0 : index
    %c0_120 = arith.constant 0 : index
    %266 = vector.load %arg6[%c0_117, %c1_118, %c0_119, %c0_120] : memref<2x4x24x24xf32, #tpu.memory_space<vmem>>, vector<1x1x24x24xf32>
    %267 = vector.shape_cast %266 : vector<1x1x24x24xf32> to vector<24x24xf32>
    %268 = arith.addf %265, %267 : vector<24x24xf32>
    %cst_121 = arith.constant dense<0.000000e+00> : vector<24xf32>
    %269 = vector.multi_reduction <add>, %268, %cst_121 [1] : vector<24x24xf32> to vector<24xf32>
    %270 = vector.shape_cast %269 : vector<24xf32> to vector<24x1xf32>
    %271 = vector.broadcast %270 : vector<24x1xf32> to vector<24x24xf32>
    %272 = arith.divf %268, %271 : vector<24x24xf32>
    %273 = arith.truncf %272 : vector<24x24xf32> to vector<24x24xbf16>
    %cst_122 = arith.constant dense<0.000000e+00> : vector<24x8xf32>
    %274 = tpu.matmul %273, %246, %cst_122 {dimension_numbers = #tpu.dot_dimension_numbers<[1], [0], [0], [1], [0, 0, 1, 1], [], []>} : vector<24x24xbf16>, vector<24x8xbf16>, vector<24x8xf32> -> vector<24x8xf32>
    %275 = vector.extract_strided_slice %206 {offsets = [0, 16], sizes = [24, 8], strides = [1, 1]} : vector<24x96xf32> to vector<24x8xf32>
    %276 = arith.truncf %275 : vector<24x8xf32> to vector<24x8xbf16>
    %277 = vector.extract_strided_slice %206 {offsets = [0, 48], sizes = [24, 8], strides = [1, 1]} : vector<24x96xf32> to vector<24x8xf32>
    %278 = arith.truncf %277 : vector<24x8xf32> to vector<24x8xbf16>
    %279 = vector.extract_strided_slice %206 {offsets = [0, 80], sizes = [24, 8], strides = [1, 1]} : vector<24x96xf32> to vector<24x8xf32>
    %280 = arith.truncf %279 : vector<24x8xf32> to vector<24x8xbf16>
    %cst_123 = arith.constant dense<0.000000e+00> : vector<24x24xf32>
    %281 = tpu.matmul %276, %278, %cst_123 {dimension_numbers = #tpu.dot_dimension_numbers<[1], [1], [0], [0], [0, 0, 1, 0], [], []>} : vector<24x8xbf16>, vector<24x8xbf16>, vector<24x24xf32> -> vector<24x24xf32>
    %cst_124 = arith.constant 0.353553385 : f32
    %282 = vector.broadcast %cst_124 : f32 to vector<24x24xf32>
    %283 = arith.mulf %281, %282 : vector<24x24xf32>
    %284 = vector.broadcast %18 : vector<1x24xf32> to vector<24x24xf32>
    %285 = arith.addf %283, %284 : vector<24x24xf32>
    %cst_125 = arith.constant dense<0xFF800000> : vector<24xf32>
    %286 = vector.multi_reduction <maximumf>, %285, %cst_125 [1] : vector<24x24xf32> to vector<24xf32>
    %287 = vector.shape_cast %286 : vector<24xf32> to vector<24x1xf32>
    %288 = vector.broadcast %287 : vector<24x1xf32> to vector<24x24xf32>
    %289 = arith.subf %285, %288 : vector<24x24xf32>
    %290 = math.exp %289 : vector<24x24xf32>
    %cst_126 = arith.constant dense<0.000000e+00> : vector<24xf32>
    %291 = vector.multi_reduction <add>, %290, %cst_126 [1] : vector<24x24xf32> to vector<24xf32>
    %292 = vector.shape_cast %291 : vector<24xf32> to vector<24x1xf32>
    %293 = tpu.reciprocal %292 {approx = true} : vector<24x1xf32> -> vector<24x1xf32>
    %294 = vector.broadcast %293 : vector<24x1xf32> to vector<24x24xf32>
    %295 = arith.mulf %290, %294 : vector<24x24xf32>
    %c0_127 = arith.constant 0 : index
    %c7_128 = arith.constant 7 : index
    %c2_129 = arith.constant 2 : index
    %296 = vector.load %arg5[%c0_127, %c7_128, %c2_129] : memref<4x8x128xf32, #tpu.memory_space<vmem>>, vector<1x1x1xf32>
    %297 = vector.shape_cast %296 : vector<1x1x1xf32> to vector<1x1xf32>
    %298 = vector.broadcast %297 : vector<1x1xf32> to vector<24x24xf32>
    %299 = arith.mulf %298, %295 : vector<24x24xf32>
    %c0_130 = arith.constant 0 : index
    %c2_131 = arith.constant 2 : index
    %c0_132 = arith.constant 0 : index
    %c0_133 = arith.constant 0 : index
    %300 = vector.load %arg6[%c0_130, %c2_131, %c0_132, %c0_133] : memref<2x4x24x24xf32, #tpu.memory_space<vmem>>, vector<1x1x24x24xf32>
    %301 = vector.shape_cast %300 : vector<1x1x24x24xf32> to vector<24x24xf32>
    %302 = arith.addf %299, %301 : vector<24x24xf32>
    %cst_134 = arith.constant dense<0.000000e+00> : vector<24xf32>
    %303 = vector.multi_reduction <add>, %302, %cst_134 [1] : vector<24x24xf32> to vector<24xf32>
    %304 = vector.shape_cast %303 : vector<24xf32> to vector<24x1xf32>
    %305 = vector.broadcast %304 : vector<24x1xf32> to vector<24x24xf32>
    %306 = arith.divf %302, %305 : vector<24x24xf32>
    %307 = arith.truncf %306 : vector<24x24xf32> to vector<24x24xbf16>
    %cst_135 = arith.constant dense<0.000000e+00> : vector<24x8xf32>
    %308 = tpu.matmul %307, %280, %cst_135 {dimension_numbers = #tpu.dot_dimension_numbers<[1], [0], [0], [1], [0, 0, 1, 1], [], []>} : vector<24x24xbf16>, vector<24x8xbf16>, vector<24x8xf32> -> vector<24x8xf32>
    %309 = vector.extract_strided_slice %206 {offsets = [0, 24], sizes = [24, 8], strides = [1, 1]} : vector<24x96xf32> to vector<24x8xf32>
    %310 = arith.truncf %309 : vector<24x8xf32> to vector<24x8xbf16>
    %311 = vector.extract_strided_slice %206 {offsets = [0, 56], sizes = [24, 8], strides = [1, 1]} : vector<24x96xf32> to vector<24x8xf32>
    %312 = arith.truncf %311 : vector<24x8xf32> to vector<24x8xbf16>
    %313 = vector.extract_strided_slice %206 {offsets = [0, 88], sizes = [24, 8], strides = [1, 1]} : vector<24x96xf32> to vector<24x8xf32>
    %314 = arith.truncf %313 : vector<24x8xf32> to vector<24x8xbf16>
    %cst_136 = arith.constant dense<0.000000e+00> : vector<24x24xf32>
    %315 = tpu.matmul %310, %312, %cst_136 {dimension_numbers = #tpu.dot_dimension_numbers<[1], [1], [0], [0], [0, 0, 1, 0], [], []>} : vector<24x8xbf16>, vector<24x8xbf16>, vector<24x24xf32> -> vector<24x24xf32>
    %cst_137 = arith.constant 0.353553385 : f32
    %316 = vector.broadcast %cst_137 : f32 to vector<24x24xf32>
    %317 = arith.mulf %315, %316 : vector<24x24xf32>
    %318 = vector.broadcast %18 : vector<1x24xf32> to vector<24x24xf32>
    %319 = arith.addf %317, %318 : vector<24x24xf32>
    %cst_138 = arith.constant dense<0xFF800000> : vector<24xf32>
    %320 = vector.multi_reduction <maximumf>, %319, %cst_138 [1] : vector<24x24xf32> to vector<24xf32>
    %321 = vector.shape_cast %320 : vector<24xf32> to vector<24x1xf32>
    %322 = vector.broadcast %321 : vector<24x1xf32> to vector<24x24xf32>
    %323 = arith.subf %319, %322 : vector<24x24xf32>
    %324 = math.exp %323 : vector<24x24xf32>
    %cst_139 = arith.constant dense<0.000000e+00> : vector<24xf32>
    %325 = vector.multi_reduction <add>, %324, %cst_139 [1] : vector<24x24xf32> to vector<24xf32>
    %326 = vector.shape_cast %325 : vector<24xf32> to vector<24x1xf32>
    %327 = tpu.reciprocal %326 {approx = true} : vector<24x1xf32> -> vector<24x1xf32>
    %328 = vector.broadcast %327 : vector<24x1xf32> to vector<24x24xf32>
    %329 = arith.mulf %324, %328 : vector<24x24xf32>
    %c0_140 = arith.constant 0 : index
    %c7_141 = arith.constant 7 : index
    %c3_142 = arith.constant 3 : index
    %330 = vector.load %arg5[%c0_140, %c7_141, %c3_142] : memref<4x8x128xf32, #tpu.memory_space<vmem>>, vector<1x1x1xf32>
    %331 = vector.shape_cast %330 : vector<1x1x1xf32> to vector<1x1xf32>
    %332 = vector.broadcast %331 : vector<1x1xf32> to vector<24x24xf32>
    %333 = arith.mulf %332, %329 : vector<24x24xf32>
    %c0_143 = arith.constant 0 : index
    %c3_144 = arith.constant 3 : index
    %c0_145 = arith.constant 0 : index
    %c0_146 = arith.constant 0 : index
    %334 = vector.load %arg6[%c0_143, %c3_144, %c0_145, %c0_146] : memref<2x4x24x24xf32, #tpu.memory_space<vmem>>, vector<1x1x24x24xf32>
    %335 = vector.shape_cast %334 : vector<1x1x24x24xf32> to vector<24x24xf32>
    %336 = arith.addf %333, %335 : vector<24x24xf32>
    %cst_147 = arith.constant dense<0.000000e+00> : vector<24xf32>
    %337 = vector.multi_reduction <add>, %336, %cst_147 [1] : vector<24x24xf32> to vector<24xf32>
    %338 = vector.shape_cast %337 : vector<24xf32> to vector<24x1xf32>
    %339 = vector.broadcast %338 : vector<24x1xf32> to vector<24x24xf32>
    %340 = arith.divf %336, %339 : vector<24x24xf32>
    %341 = arith.truncf %340 : vector<24x24xf32> to vector<24x24xbf16>
    %cst_148 = arith.constant dense<0.000000e+00> : vector<24x8xf32>
    %342 = tpu.matmul %341, %314, %cst_148 {dimension_numbers = #tpu.dot_dimension_numbers<[1], [0], [0], [1], [0, 0, 1, 1], [], []>} : vector<24x24xbf16>, vector<24x8xbf16>, vector<24x8xf32> -> vector<24x8xf32>
    %343 = tpu.concatenate %240, %274, %308, %342 in 1 : vector<24x8xf32>, vector<24x8xf32>, vector<24x8xf32>, vector<24x8xf32> -> vector<24x32xf32>
    %344 = tpu.concatenate %205, %343 in 0 : vector<24x32xf32>, vector<24x32xf32> -> vector<48x32xf32>
    %345 = arith.truncf %344 : vector<48x32xf32> to vector<48x32xbf16>
    %cst_149 = arith.constant dense<0.000000e+00> : vector<48x32xf32>
    %346 = tpu.matmul %345, %41, %cst_149 {dimension_numbers = #tpu.dot_dimension_numbers<[1], [0], [0], [1], [0, 0, 1, 1], [], []>} : vector<48x32xbf16>, vector<32x32xbf16>, vector<48x32xf32> -> vector<48x32xf32>
    %347 = arith.addf %12, %346 : vector<48x32xf32>
    %348 = vector.broadcast %29 : vector<1x32xf32> to vector<48x32xf32>
    %349 = arith.addf %347, %348 : vector<48x32xf32>
    %cst_150 = arith.constant dense<0.000000e+00> : vector<48xf32>
    %350 = vector.multi_reduction <add>, %349, %cst_150 [1] : vector<48x32xf32> to vector<48xf32>
    %351 = vector.shape_cast %350 : vector<48xf32> to vector<48x1xf32>
    %cst_151 = arith.constant 3.200000e+01 : f32
    %352 = vector.broadcast %cst_151 : f32 to vector<48x1xf32>
    %353 = arith.divf %351, %352 : vector<48x1xf32>
    %354 = vector.broadcast %353 : vector<48x1xf32> to vector<48x32xf32>
    %355 = arith.subf %349, %354 : vector<48x32xf32>
    %356 = arith.mulf %355, %355 : vector<48x32xf32>
    %cst_152 = arith.constant dense<0.000000e+00> : vector<48xf32>
    %357 = vector.multi_reduction <add>, %356, %cst_152 [1] : vector<48x32xf32> to vector<48xf32>
    %358 = vector.shape_cast %357 : vector<48xf32> to vector<48x1xf32>
    %cst_153 = arith.constant 3.200000e+01 : f32
    %359 = vector.broadcast %cst_153 : f32 to vector<48x1xf32>
    %360 = arith.divf %358, %359 : vector<48x1xf32>
    %cst_154 = arith.constant 9.99999974E-6 : f32
    %361 = vector.broadcast %cst_154 : f32 to vector<48x1xf32>
    %362 = arith.addf %360, %361 : vector<48x1xf32>
    %363 = math.rsqrt %362 : vector<48x1xf32>
    %364 = vector.broadcast %363 : vector<48x1xf32> to vector<48x32xf32>
    %365 = arith.mulf %355, %364 : vector<48x32xf32>
    %366 = vector.broadcast %31 : vector<1x32xf32> to vector<48x32xf32>
    %367 = arith.mulf %365, %366 : vector<48x32xf32>
    %368 = vector.broadcast %33 : vector<1x32xf32> to vector<48x32xf32>
    %369 = arith.addf %367, %368 : vector<48x32xf32>
    %370 = arith.truncf %369 : vector<48x32xf32> to vector<48x32xbf16>
    %cst_155 = arith.constant dense<0.000000e+00> : vector<48x128xf32>
    %371 = tpu.matmul %370, %43, %cst_155 {dimension_numbers = #tpu.dot_dimension_numbers<[1], [0], [0], [1], [0, 0, 1, 1], [], []>} : vector<48x32xbf16>, vector<32x128xbf16>, vector<48x128xf32> -> vector<48x128xf32>
    %372 = vector.broadcast %35 : vector<1x128xf32> to vector<48x128xf32>
    %373 = arith.addf %371, %372 : vector<48x128xf32>
    %cst_156 = arith.constant 5.000000e-01 : f32
    %374 = vector.broadcast %cst_156 : f32 to vector<48x128xf32>
    %375 = arith.mulf %374, %373 : vector<48x128xf32>
    %cst_157 = arith.constant 0.707106769 : f32
    %376 = vector.broadcast %cst_157 : f32 to vector<48x128xf32>
    %377 = arith.mulf %373, %376 : vector<48x128xf32>
    %cst_158 = arith.constant 0.000000e+00 : f32
    %378 = vector.broadcast %cst_158 : f32 to vector<48x128xf32>
    %379 = arith.cmpf oge, %377, %378 : vector<48x128xf32>
    %cst_159 = arith.constant 1.000000e+00 : f32
    %cst_160 = arith.constant -1.000000e+00 : f32
    %380 = vector.broadcast %cst_159 : f32 to vector<48x128xf32>
    %381 = vector.broadcast %cst_160 : f32 to vector<48x128xf32>
    %382 = arith.select %379, %380, %381 : vector<48x128xi1>, vector<48x128xf32>
    %383 = math.absf %377 : vector<48x128xf32>
    %cst_161 = arith.constant 0.327591091 : f32
    %384 = vector.broadcast %cst_161 : f32 to vector<48x128xf32>
    %385 = arith.mulf %384, %383 : vector<48x128xf32>
    %cst_162 = arith.constant 1.000000e+00 : f32
    %386 = vector.broadcast %cst_162 : f32 to vector<48x128xf32>
    %387 = arith.addf %386, %385 : vector<48x128xf32>
    %cst_163 = arith.constant 1.000000e+00 : f32
    %388 = vector.broadcast %cst_163 : f32 to vector<48x128xf32>
    %389 = arith.divf %388, %387 : vector<48x128xf32>
    %cst_164 = arith.constant 1.06140542 : f32
    %390 = vector.broadcast %cst_164 : f32 to vector<48x128xf32>
    %391 = arith.mulf %390, %389 : vector<48x128xf32>
    %cst_165 = arith.constant -1.45315206 : f32
    %392 = vector.broadcast %cst_165 : f32 to vector<48x128xf32>
    %393 = arith.addf %391, %392 : vector<48x128xf32>
    %394 = arith.mulf %393, %389 : vector<48x128xf32>
    %cst_166 = arith.constant 1.42141378 : f32
    %395 = vector.broadcast %cst_166 : f32 to vector<48x128xf32>
    %396 = arith.addf %394, %395 : vector<48x128xf32>
    %397 = arith.mulf %396, %389 : vector<48x128xf32>
    %cst_167 = arith.constant -0.284496725 : f32
    %398 = vector.broadcast %cst_167 : f32 to vector<48x128xf32>
    %399 = arith.addf %397, %398 : vector<48x128xf32>
    %400 = arith.mulf %399, %389 : vector<48x128xf32>
    %cst_168 = arith.constant 0.254829586 : f32
    %401 = vector.broadcast %cst_168 : f32 to vector<48x128xf32>
    %402 = arith.addf %400, %401 : vector<48x128xf32>
    %403 = arith.mulf %402, %389 : vector<48x128xf32>
    %cst_169 = arith.constant 0.000000e+00 : f32
    %404 = vector.broadcast %cst_169 : f32 to vector<48x128xf32>
    %405 = arith.subf %404, %383 : vector<48x128xf32>
    %406 = arith.mulf %405, %383 : vector<48x128xf32>
    %407 = math.exp %406 : vector<48x128xf32>
    %408 = arith.mulf %403, %407 : vector<48x128xf32>
    %cst_170 = arith.constant 1.000000e+00 : f32
    %409 = vector.broadcast %cst_170 : f32 to vector<48x128xf32>
    %410 = arith.subf %409, %408 : vector<48x128xf32>
    %411 = arith.mulf %382, %410 : vector<48x128xf32>
    %cst_171 = arith.constant 1.000000e+00 : f32
    %412 = vector.broadcast %cst_171 : f32 to vector<48x128xf32>
    %413 = arith.addf %412, %411 : vector<48x128xf32>
    %414 = arith.mulf %375, %413 : vector<48x128xf32>
    %415 = arith.truncf %414 : vector<48x128xf32> to vector<48x128xbf16>
    %cst_172 = arith.constant dense<0.000000e+00> : vector<48x32xf32>
    %416 = tpu.matmul %415, %45, %cst_172 {dimension_numbers = #tpu.dot_dimension_numbers<[1], [0], [0], [1], [0, 0, 1, 1], [], []>} : vector<48x128xbf16>, vector<128x32xbf16>, vector<48x32xf32> -> vector<48x32xf32>
    %417 = arith.addf %349, %416 : vector<48x32xf32>
    %418 = vector.broadcast %37 : vector<1x32xf32> to vector<48x32xf32>
    %419 = arith.addf %417, %418 : vector<48x32xf32>
    %c1_173 = arith.constant 1 : index
    %c0_174 = arith.constant 0 : index
    %c0_175 = arith.constant 0 : index
    %420 = vector.load %arg5[%c1_173, %c0_174, %c0_175] : memref<4x8x128xf32, #tpu.memory_space<vmem>>, vector<1x1x32xf32>
    %421 = vector.shape_cast %420 : vector<1x1x32xf32> to vector<1x32xf32>
    %c1_176 = arith.constant 1 : index
    %c1_177 = arith.constant 1 : index
    %c0_178 = arith.constant 0 : index
    %422 = vector.load %arg5[%c1_176, %c1_177, %c0_178] : memref<4x8x128xf32, #tpu.memory_space<vmem>>, vector<1x1x32xf32>
    %423 = vector.shape_cast %422 : vector<1x1x32xf32> to vector<1x32xf32>
    %c1_179 = arith.constant 1 : index
    %c2_180 = arith.constant 2 : index
    %c0_181 = arith.constant 0 : index
    %424 = vector.load %arg5[%c1_179, %c2_180, %c0_181] : memref<4x8x128xf32, #tpu.memory_space<vmem>>, vector<1x1x32xf32>
    %425 = vector.shape_cast %424 : vector<1x1x32xf32> to vector<1x32xf32>
    %c1_182 = arith.constant 1 : index
    %c3_183 = arith.constant 3 : index
    %c0_184 = arith.constant 0 : index
    %426 = vector.load %arg5[%c1_182, %c3_183, %c0_184] : memref<4x8x128xf32, #tpu.memory_space<vmem>>, vector<1x1x32xf32>
    %427 = vector.shape_cast %426 : vector<1x1x32xf32> to vector<1x32xf32>
    %c1_185 = arith.constant 1 : index
    %c4_186 = arith.constant 4 : index
    %c0_187 = arith.constant 0 : index
    %428 = vector.load %arg5[%c1_185, %c4_186, %c0_187] : memref<4x8x128xf32, #tpu.memory_space<vmem>>, vector<1x1x32xf32>
    %429 = vector.shape_cast %428 : vector<1x1x32xf32> to vector<1x32xf32>
    %c1_188 = arith.constant 1 : index
    %c5_189 = arith.constant 5 : index
    %c0_190 = arith.constant 0 : index
    %430 = vector.load %arg5[%c1_188, %c5_189, %c0_190] : memref<4x8x128xf32, #tpu.memory_space<vmem>>, vector<1x1x128xf32>
    %431 = vector.shape_cast %430 : vector<1x1x128xf32> to vector<1x128xf32>
    %c1_191 = arith.constant 1 : index
    %c6_192 = arith.constant 6 : index
    %c0_193 = arith.constant 0 : index
    %432 = vector.load %arg5[%c1_191, %c6_192, %c0_193] : memref<4x8x128xf32, #tpu.memory_space<vmem>>, vector<1x1x32xf32>
    %433 = vector.shape_cast %432 : vector<1x1x32xf32> to vector<1x32xf32>
    %c1_194 = arith.constant 1 : index
    %c0_195 = arith.constant 0 : index
    %c0_196 = arith.constant 0 : index
    %434 = vector.load %arg4[%c1_194, %c0_195, %c0_196] : memref<4x128x288xbf16, #tpu.memory_space<vmem>>, vector<1x32x96xbf16>
    %435 = vector.shape_cast %434 : vector<1x32x96xbf16> to vector<32x96xbf16>
    %c1_197 = arith.constant 1 : index
    %c0_198 = arith.constant 0 : index
    %c96_199 = arith.constant 96 : index
    %436 = vector.load %arg4[%c1_197, %c0_198, %c96_199] : memref<4x128x288xbf16, #tpu.memory_space<vmem>>, vector<1x32x32xbf16>
    %437 = vector.shape_cast %436 : vector<1x32x32xbf16> to vector<32x32xbf16>
    %c1_200 = arith.constant 1 : index
    %c0_201 = arith.constant 0 : index
    %c128_202 = arith.constant 128 : index
    %438 = vector.load %arg4[%c1_200, %c0_201, %c128_202] : memref<4x128x288xbf16, #tpu.memory_space<vmem>>, vector<1x32x128xbf16>
    %439 = vector.shape_cast %438 : vector<1x32x128xbf16> to vector<32x128xbf16>
    %c1_203 = arith.constant 1 : index
    %c0_204 = arith.constant 0 : index
    %c256_205 = arith.constant 256 : index
    %440 = vector.load %arg4[%c1_203, %c0_204, %c256_205] : memref<4x128x288xbf16, #tpu.memory_space<vmem>>, vector<1x128x32xbf16>
    %441 = vector.shape_cast %440 : vector<1x128x32xbf16> to vector<128x32xbf16>
    %cst_206 = arith.constant dense<0.000000e+00> : vector<48xf32>
    %442 = vector.multi_reduction <add>, %419, %cst_206 [1] : vector<48x32xf32> to vector<48xf32>
    %443 = vector.shape_cast %442 : vector<48xf32> to vector<48x1xf32>
    %cst_207 = arith.constant 3.200000e+01 : f32
    %444 = vector.broadcast %cst_207 : f32 to vector<48x1xf32>
    %445 = arith.divf %443, %444 : vector<48x1xf32>
    %446 = vector.broadcast %445 : vector<48x1xf32> to vector<48x32xf32>
    %447 = arith.subf %419, %446 : vector<48x32xf32>
    %448 = arith.mulf %447, %447 : vector<48x32xf32>
    %cst_208 = arith.constant dense<0.000000e+00> : vector<48xf32>
    %449 = vector.multi_reduction <add>, %448, %cst_208 [1] : vector<48x32xf32> to vector<48xf32>
    %450 = vector.shape_cast %449 : vector<48xf32> to vector<48x1xf32>
    %cst_209 = arith.constant 3.200000e+01 : f32
    %451 = vector.broadcast %cst_209 : f32 to vector<48x1xf32>
    %452 = arith.divf %450, %451 : vector<48x1xf32>
    %cst_210 = arith.constant 9.99999974E-6 : f32
    %453 = vector.broadcast %cst_210 : f32 to vector<48x1xf32>
    %454 = arith.addf %452, %453 : vector<48x1xf32>
    %455 = math.rsqrt %454 : vector<48x1xf32>
    %456 = vector.broadcast %455 : vector<48x1xf32> to vector<48x32xf32>
    %457 = arith.mulf %447, %456 : vector<48x32xf32>
    %458 = vector.broadcast %421 : vector<1x32xf32> to vector<48x32xf32>
    %459 = arith.mulf %457, %458 : vector<48x32xf32>
    %460 = vector.broadcast %423 : vector<1x32xf32> to vector<48x32xf32>
    %461 = arith.addf %459, %460 : vector<48x32xf32>
    %462 = arith.truncf %461 : vector<48x32xf32> to vector<48x32xbf16>
    %cst_211 = arith.constant dense<0.000000e+00> : vector<48x96xf32>
    %463 = tpu.matmul %462, %435, %cst_211 {dimension_numbers = #tpu.dot_dimension_numbers<[1], [0], [0], [1], [0, 0, 1, 1], [], []>} : vector<48x32xbf16>, vector<32x96xbf16>, vector<48x96xf32> -> vector<48x96xf32>
    %464 = vector.extract_strided_slice %463 {offsets = [0, 0], sizes = [24, 96], strides = [1, 1]} : vector<48x96xf32> to vector<24x96xf32>
    %465 = vector.extract_strided_slice %464 {offsets = [0, 0], sizes = [24, 8], strides = [1, 1]} : vector<24x96xf32> to vector<24x8xf32>
    %466 = arith.truncf %465 : vector<24x8xf32> to vector<24x8xbf16>
    %467 = vector.extract_strided_slice %464 {offsets = [0, 32], sizes = [24, 8], strides = [1, 1]} : vector<24x96xf32> to vector<24x8xf32>
    %468 = arith.truncf %467 : vector<24x8xf32> to vector<24x8xbf16>
    %469 = vector.extract_strided_slice %464 {offsets = [0, 64], sizes = [24, 8], strides = [1, 1]} : vector<24x96xf32> to vector<24x8xf32>
    %470 = arith.truncf %469 : vector<24x8xf32> to vector<24x8xbf16>
    %cst_212 = arith.constant dense<0.000000e+00> : vector<24x24xf32>
    %471 = tpu.matmul %466, %468, %cst_212 {dimension_numbers = #tpu.dot_dimension_numbers<[1], [1], [0], [0], [0, 0, 1, 0], [], []>} : vector<24x8xbf16>, vector<24x8xbf16>, vector<24x24xf32> -> vector<24x24xf32>
    %cst_213 = arith.constant 0.353553385 : f32
    %472 = vector.broadcast %cst_213 : f32 to vector<24x24xf32>
    %473 = arith.mulf %471, %472 : vector<24x24xf32>
    %474 = vector.broadcast %18 : vector<1x24xf32> to vector<24x24xf32>
    %475 = arith.addf %473, %474 : vector<24x24xf32>
    %cst_214 = arith.constant dense<0xFF800000> : vector<24xf32>
    %476 = vector.multi_reduction <maximumf>, %475, %cst_214 [1] : vector<24x24xf32> to vector<24xf32>
    %477 = vector.shape_cast %476 : vector<24xf32> to vector<24x1xf32>
    %478 = vector.broadcast %477 : vector<24x1xf32> to vector<24x24xf32>
    %479 = arith.subf %475, %478 : vector<24x24xf32>
    %480 = math.exp %479 : vector<24x24xf32>
    %cst_215 = arith.constant dense<0.000000e+00> : vector<24xf32>
    %481 = vector.multi_reduction <add>, %480, %cst_215 [1] : vector<24x24xf32> to vector<24xf32>
    %482 = vector.shape_cast %481 : vector<24xf32> to vector<24x1xf32>
    %483 = tpu.reciprocal %482 {approx = true} : vector<24x1xf32> -> vector<24x1xf32>
    %484 = vector.broadcast %483 : vector<24x1xf32> to vector<24x24xf32>
    %485 = arith.mulf %480, %484 : vector<24x24xf32>
    %c1_216 = arith.constant 1 : index
    %c7_217 = arith.constant 7 : index
    %c0_218 = arith.constant 0 : index
    %486 = vector.load %arg5[%c1_216, %c7_217, %c0_218] : memref<4x8x128xf32, #tpu.memory_space<vmem>>, vector<1x1x1xf32>
    %487 = vector.shape_cast %486 : vector<1x1x1xf32> to vector<1x1xf32>
    %488 = vector.broadcast %487 : vector<1x1xf32> to vector<24x24xf32>
    %489 = arith.mulf %488, %485 : vector<24x24xf32>
    %c1_219 = arith.constant 1 : index
    %c0_220 = arith.constant 0 : index
    %c0_221 = arith.constant 0 : index
    %c0_222 = arith.constant 0 : index
    %490 = vector.load %arg6[%c1_219, %c0_220, %c0_221, %c0_222] : memref<2x4x24x24xf32, #tpu.memory_space<vmem>>, vector<1x1x24x24xf32>
    %491 = vector.shape_cast %490 : vector<1x1x24x24xf32> to vector<24x24xf32>
    %492 = arith.addf %489, %491 : vector<24x24xf32>
    %cst_223 = arith.constant dense<0.000000e+00> : vector<24xf32>
    %493 = vector.multi_reduction <add>, %492, %cst_223 [1] : vector<24x24xf32> to vector<24xf32>
    %494 = vector.shape_cast %493 : vector<24xf32> to vector<24x1xf32>
    %495 = vector.broadcast %494 : vector<24x1xf32> to vector<24x24xf32>
    %496 = arith.divf %492, %495 : vector<24x24xf32>
    %497 = arith.truncf %496 : vector<24x24xf32> to vector<24x24xbf16>
    %cst_224 = arith.constant dense<0.000000e+00> : vector<24x8xf32>
    %498 = tpu.matmul %497, %470, %cst_224 {dimension_numbers = #tpu.dot_dimension_numbers<[1], [0], [0], [1], [0, 0, 1, 1], [], []>} : vector<24x24xbf16>, vector<24x8xbf16>, vector<24x8xf32> -> vector<24x8xf32>
    %499 = vector.extract_strided_slice %464 {offsets = [0, 8], sizes = [24, 8], strides = [1, 1]} : vector<24x96xf32> to vector<24x8xf32>
    %500 = arith.truncf %499 : vector<24x8xf32> to vector<24x8xbf16>
    %501 = vector.extract_strided_slice %464 {offsets = [0, 40], sizes = [24, 8], strides = [1, 1]} : vector<24x96xf32> to vector<24x8xf32>
    %502 = arith.truncf %501 : vector<24x8xf32> to vector<24x8xbf16>
    %503 = vector.extract_strided_slice %464 {offsets = [0, 72], sizes = [24, 8], strides = [1, 1]} : vector<24x96xf32> to vector<24x8xf32>
    %504 = arith.truncf %503 : vector<24x8xf32> to vector<24x8xbf16>
    %cst_225 = arith.constant dense<0.000000e+00> : vector<24x24xf32>
    %505 = tpu.matmul %500, %502, %cst_225 {dimension_numbers = #tpu.dot_dimension_numbers<[1], [1], [0], [0], [0, 0, 1, 0], [], []>} : vector<24x8xbf16>, vector<24x8xbf16>, vector<24x24xf32> -> vector<24x24xf32>
    %cst_226 = arith.constant 0.353553385 : f32
    %506 = vector.broadcast %cst_226 : f32 to vector<24x24xf32>
    %507 = arith.mulf %505, %506 : vector<24x24xf32>
    %508 = vector.broadcast %18 : vector<1x24xf32> to vector<24x24xf32>
    %509 = arith.addf %507, %508 : vector<24x24xf32>
    %cst_227 = arith.constant dense<0xFF800000> : vector<24xf32>
    %510 = vector.multi_reduction <maximumf>, %509, %cst_227 [1] : vector<24x24xf32> to vector<24xf32>
    %511 = vector.shape_cast %510 : vector<24xf32> to vector<24x1xf32>
    %512 = vector.broadcast %511 : vector<24x1xf32> to vector<24x24xf32>
    %513 = arith.subf %509, %512 : vector<24x24xf32>
    %514 = math.exp %513 : vector<24x24xf32>
    %cst_228 = arith.constant dense<0.000000e+00> : vector<24xf32>
    %515 = vector.multi_reduction <add>, %514, %cst_228 [1] : vector<24x24xf32> to vector<24xf32>
    %516 = vector.shape_cast %515 : vector<24xf32> to vector<24x1xf32>
    %517 = tpu.reciprocal %516 {approx = true} : vector<24x1xf32> -> vector<24x1xf32>
    %518 = vector.broadcast %517 : vector<24x1xf32> to vector<24x24xf32>
    %519 = arith.mulf %514, %518 : vector<24x24xf32>
    %c1_229 = arith.constant 1 : index
    %c7_230 = arith.constant 7 : index
    %c1_231 = arith.constant 1 : index
    %520 = vector.load %arg5[%c1_229, %c7_230, %c1_231] : memref<4x8x128xf32, #tpu.memory_space<vmem>>, vector<1x1x1xf32>
    %521 = vector.shape_cast %520 : vector<1x1x1xf32> to vector<1x1xf32>
    %522 = vector.broadcast %521 : vector<1x1xf32> to vector<24x24xf32>
    %523 = arith.mulf %522, %519 : vector<24x24xf32>
    %c1_232 = arith.constant 1 : index
    %c1_233 = arith.constant 1 : index
    %c0_234 = arith.constant 0 : index
    %c0_235 = arith.constant 0 : index
    %524 = vector.load %arg6[%c1_232, %c1_233, %c0_234, %c0_235] : memref<2x4x24x24xf32, #tpu.memory_space<vmem>>, vector<1x1x24x24xf32>
    %525 = vector.shape_cast %524 : vector<1x1x24x24xf32> to vector<24x24xf32>
    %526 = arith.addf %523, %525 : vector<24x24xf32>
    %cst_236 = arith.constant dense<0.000000e+00> : vector<24xf32>
    %527 = vector.multi_reduction <add>, %526, %cst_236 [1] : vector<24x24xf32> to vector<24xf32>
    %528 = vector.shape_cast %527 : vector<24xf32> to vector<24x1xf32>
    %529 = vector.broadcast %528 : vector<24x1xf32> to vector<24x24xf32>
    %530 = arith.divf %526, %529 : vector<24x24xf32>
    %531 = arith.truncf %530 : vector<24x24xf32> to vector<24x24xbf16>
    %cst_237 = arith.constant dense<0.000000e+00> : vector<24x8xf32>
    %532 = tpu.matmul %531, %504, %cst_237 {dimension_numbers = #tpu.dot_dimension_numbers<[1], [0], [0], [1], [0, 0, 1, 1], [], []>} : vector<24x24xbf16>, vector<24x8xbf16>, vector<24x8xf32> -> vector<24x8xf32>
    %533 = vector.extract_strided_slice %464 {offsets = [0, 16], sizes = [24, 8], strides = [1, 1]} : vector<24x96xf32> to vector<24x8xf32>
    %534 = arith.truncf %533 : vector<24x8xf32> to vector<24x8xbf16>
    %535 = vector.extract_strided_slice %464 {offsets = [0, 48], sizes = [24, 8], strides = [1, 1]} : vector<24x96xf32> to vector<24x8xf32>
    %536 = arith.truncf %535 : vector<24x8xf32> to vector<24x8xbf16>
    %537 = vector.extract_strided_slice %464 {offsets = [0, 80], sizes = [24, 8], strides = [1, 1]} : vector<24x96xf32> to vector<24x8xf32>
    %538 = arith.truncf %537 : vector<24x8xf32> to vector<24x8xbf16>
    %cst_238 = arith.constant dense<0.000000e+00> : vector<24x24xf32>
    %539 = tpu.matmul %534, %536, %cst_238 {dimension_numbers = #tpu.dot_dimension_numbers<[1], [1], [0], [0], [0, 0, 1, 0], [], []>} : vector<24x8xbf16>, vector<24x8xbf16>, vector<24x24xf32> -> vector<24x24xf32>
    %cst_239 = arith.constant 0.353553385 : f32
    %540 = vector.broadcast %cst_239 : f32 to vector<24x24xf32>
    %541 = arith.mulf %539, %540 : vector<24x24xf32>
    %542 = vector.broadcast %18 : vector<1x24xf32> to vector<24x24xf32>
    %543 = arith.addf %541, %542 : vector<24x24xf32>
    %cst_240 = arith.constant dense<0xFF800000> : vector<24xf32>
    %544 = vector.multi_reduction <maximumf>, %543, %cst_240 [1] : vector<24x24xf32> to vector<24xf32>
    %545 = vector.shape_cast %544 : vector<24xf32> to vector<24x1xf32>
    %546 = vector.broadcast %545 : vector<24x1xf32> to vector<24x24xf32>
    %547 = arith.subf %543, %546 : vector<24x24xf32>
    %548 = math.exp %547 : vector<24x24xf32>
    %cst_241 = arith.constant dense<0.000000e+00> : vector<24xf32>
    %549 = vector.multi_reduction <add>, %548, %cst_241 [1] : vector<24x24xf32> to vector<24xf32>
    %550 = vector.shape_cast %549 : vector<24xf32> to vector<24x1xf32>
    %551 = tpu.reciprocal %550 {approx = true} : vector<24x1xf32> -> vector<24x1xf32>
    %552 = vector.broadcast %551 : vector<24x1xf32> to vector<24x24xf32>
    %553 = arith.mulf %548, %552 : vector<24x24xf32>
    %c1_242 = arith.constant 1 : index
    %c7_243 = arith.constant 7 : index
    %c2_244 = arith.constant 2 : index
    %554 = vector.load %arg5[%c1_242, %c7_243, %c2_244] : memref<4x8x128xf32, #tpu.memory_space<vmem>>, vector<1x1x1xf32>
    %555 = vector.shape_cast %554 : vector<1x1x1xf32> to vector<1x1xf32>
    %556 = vector.broadcast %555 : vector<1x1xf32> to vector<24x24xf32>
    %557 = arith.mulf %556, %553 : vector<24x24xf32>
    %c1_245 = arith.constant 1 : index
    %c2_246 = arith.constant 2 : index
    %c0_247 = arith.constant 0 : index
    %c0_248 = arith.constant 0 : index
    %558 = vector.load %arg6[%c1_245, %c2_246, %c0_247, %c0_248] : memref<2x4x24x24xf32, #tpu.memory_space<vmem>>, vector<1x1x24x24xf32>
    %559 = vector.shape_cast %558 : vector<1x1x24x24xf32> to vector<24x24xf32>
    %560 = arith.addf %557, %559 : vector<24x24xf32>
    %cst_249 = arith.constant dense<0.000000e+00> : vector<24xf32>
    %561 = vector.multi_reduction <add>, %560, %cst_249 [1] : vector<24x24xf32> to vector<24xf32>
    %562 = vector.shape_cast %561 : vector<24xf32> to vector<24x1xf32>
    %563 = vector.broadcast %562 : vector<24x1xf32> to vector<24x24xf32>
    %564 = arith.divf %560, %563 : vector<24x24xf32>
    %565 = arith.truncf %564 : vector<24x24xf32> to vector<24x24xbf16>
    %cst_250 = arith.constant dense<0.000000e+00> : vector<24x8xf32>
    %566 = tpu.matmul %565, %538, %cst_250 {dimension_numbers = #tpu.dot_dimension_numbers<[1], [0], [0], [1], [0, 0, 1, 1], [], []>} : vector<24x24xbf16>, vector<24x8xbf16>, vector<24x8xf32> -> vector<24x8xf32>
    %567 = vector.extract_strided_slice %464 {offsets = [0, 24], sizes = [24, 8], strides = [1, 1]} : vector<24x96xf32> to vector<24x8xf32>
    %568 = arith.truncf %567 : vector<24x8xf32> to vector<24x8xbf16>
    %569 = vector.extract_strided_slice %464 {offsets = [0, 56], sizes = [24, 8], strides = [1, 1]} : vector<24x96xf32> to vector<24x8xf32>
    %570 = arith.truncf %569 : vector<24x8xf32> to vector<24x8xbf16>
    %571 = vector.extract_strided_slice %464 {offsets = [0, 88], sizes = [24, 8], strides = [1, 1]} : vector<24x96xf32> to vector<24x8xf32>
    %572 = arith.truncf %571 : vector<24x8xf32> to vector<24x8xbf16>
    %cst_251 = arith.constant dense<0.000000e+00> : vector<24x24xf32>
    %573 = tpu.matmul %568, %570, %cst_251 {dimension_numbers = #tpu.dot_dimension_numbers<[1], [1], [0], [0], [0, 0, 1, 0], [], []>} : vector<24x8xbf16>, vector<24x8xbf16>, vector<24x24xf32> -> vector<24x24xf32>
    %cst_252 = arith.constant 0.353553385 : f32
    %574 = vector.broadcast %cst_252 : f32 to vector<24x24xf32>
    %575 = arith.mulf %573, %574 : vector<24x24xf32>
    %576 = vector.broadcast %18 : vector<1x24xf32> to vector<24x24xf32>
    %577 = arith.addf %575, %576 : vector<24x24xf32>
    %cst_253 = arith.constant dense<0xFF800000> : vector<24xf32>
    %578 = vector.multi_reduction <maximumf>, %577, %cst_253 [1] : vector<24x24xf32> to vector<24xf32>
    %579 = vector.shape_cast %578 : vector<24xf32> to vector<24x1xf32>
    %580 = vector.broadcast %579 : vector<24x1xf32> to vector<24x24xf32>
    %581 = arith.subf %577, %580 : vector<24x24xf32>
    %582 = math.exp %581 : vector<24x24xf32>
    %cst_254 = arith.constant dense<0.000000e+00> : vector<24xf32>
    %583 = vector.multi_reduction <add>, %582, %cst_254 [1] : vector<24x24xf32> to vector<24xf32>
    %584 = vector.shape_cast %583 : vector<24xf32> to vector<24x1xf32>
    %585 = tpu.reciprocal %584 {approx = true} : vector<24x1xf32> -> vector<24x1xf32>
    %586 = vector.broadcast %585 : vector<24x1xf32> to vector<24x24xf32>
    %587 = arith.mulf %582, %586 : vector<24x24xf32>
    %c1_255 = arith.constant 1 : index
    %c7_256 = arith.constant 7 : index
    %c3_257 = arith.constant 3 : index
    %588 = vector.load %arg5[%c1_255, %c7_256, %c3_257] : memref<4x8x128xf32, #tpu.memory_space<vmem>>, vector<1x1x1xf32>
    %589 = vector.shape_cast %588 : vector<1x1x1xf32> to vector<1x1xf32>
    %590 = vector.broadcast %589 : vector<1x1xf32> to vector<24x24xf32>
    %591 = arith.mulf %590, %587 : vector<24x24xf32>
    %c1_258 = arith.constant 1 : index
    %c3_259 = arith.constant 3 : index
    %c0_260 = arith.constant 0 : index
    %c0_261 = arith.constant 0 : index
    %592 = vector.load %arg6[%c1_258, %c3_259, %c0_260, %c0_261] : memref<2x4x24x24xf32, #tpu.memory_space<vmem>>, vector<1x1x24x24xf32>
    %593 = vector.shape_cast %592 : vector<1x1x24x24xf32> to vector<24x24xf32>
    %594 = arith.addf %591, %593 : vector<24x24xf32>
    %cst_262 = arith.constant dense<0.000000e+00> : vector<24xf32>
    %595 = vector.multi_reduction <add>, %594, %cst_262 [1] : vector<24x24xf32> to vector<24xf32>
    %596 = vector.shape_cast %595 : vector<24xf32> to vector<24x1xf32>
    %597 = vector.broadcast %596 : vector<24x1xf32> to vector<24x24xf32>
    %598 = arith.divf %594, %597 : vector<24x24xf32>
    %599 = arith.truncf %598 : vector<24x24xf32> to vector<24x24xbf16>
    %cst_263 = arith.constant dense<0.000000e+00> : vector<24x8xf32>
    %600 = tpu.matmul %599, %572, %cst_263 {dimension_numbers = #tpu.dot_dimension_numbers<[1], [0], [0], [1], [0, 0, 1, 1], [], []>} : vector<24x24xbf16>, vector<24x8xbf16>, vector<24x8xf32> -> vector<24x8xf32>
    %601 = tpu.concatenate %498, %532, %566, %600 in 1 : vector<24x8xf32>, vector<24x8xf32>, vector<24x8xf32>, vector<24x8xf32> -> vector<24x32xf32>
    %602 = vector.extract_strided_slice %463 {offsets = [24, 0], sizes = [24, 96], strides = [1, 1]} : vector<48x96xf32> to vector<24x96xf32>
    %603 = vector.extract_strided_slice %602 {offsets = [0, 0], sizes = [24, 8], strides = [1, 1]} : vector<24x96xf32> to vector<24x8xf32>
    %604 = arith.truncf %603 : vector<24x8xf32> to vector<24x8xbf16>
    %605 = vector.extract_strided_slice %602 {offsets = [0, 32], sizes = [24, 8], strides = [1, 1]} : vector<24x96xf32> to vector<24x8xf32>
    %606 = arith.truncf %605 : vector<24x8xf32> to vector<24x8xbf16>
    %607 = vector.extract_strided_slice %602 {offsets = [0, 64], sizes = [24, 8], strides = [1, 1]} : vector<24x96xf32> to vector<24x8xf32>
    %608 = arith.truncf %607 : vector<24x8xf32> to vector<24x8xbf16>
    %cst_264 = arith.constant dense<0.000000e+00> : vector<24x24xf32>
    %609 = tpu.matmul %604, %606, %cst_264 {dimension_numbers = #tpu.dot_dimension_numbers<[1], [1], [0], [0], [0, 0, 1, 0], [], []>} : vector<24x8xbf16>, vector<24x8xbf16>, vector<24x24xf32> -> vector<24x24xf32>
    %cst_265 = arith.constant 0.353553385 : f32
    %610 = vector.broadcast %cst_265 : f32 to vector<24x24xf32>
    %611 = arith.mulf %609, %610 : vector<24x24xf32>
    %612 = vector.broadcast %18 : vector<1x24xf32> to vector<24x24xf32>
    %613 = arith.addf %611, %612 : vector<24x24xf32>
    %cst_266 = arith.constant dense<0xFF800000> : vector<24xf32>
    %614 = vector.multi_reduction <maximumf>, %613, %cst_266 [1] : vector<24x24xf32> to vector<24xf32>
    %615 = vector.shape_cast %614 : vector<24xf32> to vector<24x1xf32>
    %616 = vector.broadcast %615 : vector<24x1xf32> to vector<24x24xf32>
    %617 = arith.subf %613, %616 : vector<24x24xf32>
    %618 = math.exp %617 : vector<24x24xf32>
    %cst_267 = arith.constant dense<0.000000e+00> : vector<24xf32>
    %619 = vector.multi_reduction <add>, %618, %cst_267 [1] : vector<24x24xf32> to vector<24xf32>
    %620 = vector.shape_cast %619 : vector<24xf32> to vector<24x1xf32>
    %621 = tpu.reciprocal %620 {approx = true} : vector<24x1xf32> -> vector<24x1xf32>
    %622 = vector.broadcast %621 : vector<24x1xf32> to vector<24x24xf32>
    %623 = arith.mulf %618, %622 : vector<24x24xf32>
    %c1_268 = arith.constant 1 : index
    %c7_269 = arith.constant 7 : index
    %c0_270 = arith.constant 0 : index
    %624 = vector.load %arg5[%c1_268, %c7_269, %c0_270] : memref<4x8x128xf32, #tpu.memory_space<vmem>>, vector<1x1x1xf32>
    %625 = vector.shape_cast %624 : vector<1x1x1xf32> to vector<1x1xf32>
    %626 = vector.broadcast %625 : vector<1x1xf32> to vector<24x24xf32>
    %627 = arith.mulf %626, %623 : vector<24x24xf32>
    %c1_271 = arith.constant 1 : index
    %c0_272 = arith.constant 0 : index
    %c0_273 = arith.constant 0 : index
    %c0_274 = arith.constant 0 : index
    %628 = vector.load %arg6[%c1_271, %c0_272, %c0_273, %c0_274] : memref<2x4x24x24xf32, #tpu.memory_space<vmem>>, vector<1x1x24x24xf32>
    %629 = vector.shape_cast %628 : vector<1x1x24x24xf32> to vector<24x24xf32>
    %630 = arith.addf %627, %629 : vector<24x24xf32>
    %cst_275 = arith.constant dense<0.000000e+00> : vector<24xf32>
    %631 = vector.multi_reduction <add>, %630, %cst_275 [1] : vector<24x24xf32> to vector<24xf32>
    %632 = vector.shape_cast %631 : vector<24xf32> to vector<24x1xf32>
    %633 = vector.broadcast %632 : vector<24x1xf32> to vector<24x24xf32>
    %634 = arith.divf %630, %633 : vector<24x24xf32>
    %635 = arith.truncf %634 : vector<24x24xf32> to vector<24x24xbf16>
    %cst_276 = arith.constant dense<0.000000e+00> : vector<24x8xf32>
    %636 = tpu.matmul %635, %608, %cst_276 {dimension_numbers = #tpu.dot_dimension_numbers<[1], [0], [0], [1], [0, 0, 1, 1], [], []>} : vector<24x24xbf16>, vector<24x8xbf16>, vector<24x8xf32> -> vector<24x8xf32>
    %637 = vector.extract_strided_slice %602 {offsets = [0, 8], sizes = [24, 8], strides = [1, 1]} : vector<24x96xf32> to vector<24x8xf32>
    %638 = arith.truncf %637 : vector<24x8xf32> to vector<24x8xbf16>
    %639 = vector.extract_strided_slice %602 {offsets = [0, 40], sizes = [24, 8], strides = [1, 1]} : vector<24x96xf32> to vector<24x8xf32>
    %640 = arith.truncf %639 : vector<24x8xf32> to vector<24x8xbf16>
    %641 = vector.extract_strided_slice %602 {offsets = [0, 72], sizes = [24, 8], strides = [1, 1]} : vector<24x96xf32> to vector<24x8xf32>
    %642 = arith.truncf %641 : vector<24x8xf32> to vector<24x8xbf16>
    %cst_277 = arith.constant dense<0.000000e+00> : vector<24x24xf32>
    %643 = tpu.matmul %638, %640, %cst_277 {dimension_numbers = #tpu.dot_dimension_numbers<[1], [1], [0], [0], [0, 0, 1, 0], [], []>} : vector<24x8xbf16>, vector<24x8xbf16>, vector<24x24xf32> -> vector<24x24xf32>
    %cst_278 = arith.constant 0.353553385 : f32
    %644 = vector.broadcast %cst_278 : f32 to vector<24x24xf32>
    %645 = arith.mulf %643, %644 : vector<24x24xf32>
    %646 = vector.broadcast %18 : vector<1x24xf32> to vector<24x24xf32>
    %647 = arith.addf %645, %646 : vector<24x24xf32>
    %cst_279 = arith.constant dense<0xFF800000> : vector<24xf32>
    %648 = vector.multi_reduction <maximumf>, %647, %cst_279 [1] : vector<24x24xf32> to vector<24xf32>
    %649 = vector.shape_cast %648 : vector<24xf32> to vector<24x1xf32>
    %650 = vector.broadcast %649 : vector<24x1xf32> to vector<24x24xf32>
    %651 = arith.subf %647, %650 : vector<24x24xf32>
    %652 = math.exp %651 : vector<24x24xf32>
    %cst_280 = arith.constant dense<0.000000e+00> : vector<24xf32>
    %653 = vector.multi_reduction <add>, %652, %cst_280 [1] : vector<24x24xf32> to vector<24xf32>
    %654 = vector.shape_cast %653 : vector<24xf32> to vector<24x1xf32>
    %655 = tpu.reciprocal %654 {approx = true} : vector<24x1xf32> -> vector<24x1xf32>
    %656 = vector.broadcast %655 : vector<24x1xf32> to vector<24x24xf32>
    %657 = arith.mulf %652, %656 : vector<24x24xf32>
    %c1_281 = arith.constant 1 : index
    %c7_282 = arith.constant 7 : index
    %c1_283 = arith.constant 1 : index
    %658 = vector.load %arg5[%c1_281, %c7_282, %c1_283] : memref<4x8x128xf32, #tpu.memory_space<vmem>>, vector<1x1x1xf32>
    %659 = vector.shape_cast %658 : vector<1x1x1xf32> to vector<1x1xf32>
    %660 = vector.broadcast %659 : vector<1x1xf32> to vector<24x24xf32>
    %661 = arith.mulf %660, %657 : vector<24x24xf32>
    %c1_284 = arith.constant 1 : index
    %c1_285 = arith.constant 1 : index
    %c0_286 = arith.constant 0 : index
    %c0_287 = arith.constant 0 : index
    %662 = vector.load %arg6[%c1_284, %c1_285, %c0_286, %c0_287] : memref<2x4x24x24xf32, #tpu.memory_space<vmem>>, vector<1x1x24x24xf32>
    %663 = vector.shape_cast %662 : vector<1x1x24x24xf32> to vector<24x24xf32>
    %664 = arith.addf %661, %663 : vector<24x24xf32>
    %cst_288 = arith.constant dense<0.000000e+00> : vector<24xf32>
    %665 = vector.multi_reduction <add>, %664, %cst_288 [1] : vector<24x24xf32> to vector<24xf32>
    %666 = vector.shape_cast %665 : vector<24xf32> to vector<24x1xf32>
    %667 = vector.broadcast %666 : vector<24x1xf32> to vector<24x24xf32>
    %668 = arith.divf %664, %667 : vector<24x24xf32>
    %669 = arith.truncf %668 : vector<24x24xf32> to vector<24x24xbf16>
    %cst_289 = arith.constant dense<0.000000e+00> : vector<24x8xf32>
    %670 = tpu.matmul %669, %642, %cst_289 {dimension_numbers = #tpu.dot_dimension_numbers<[1], [0], [0], [1], [0, 0, 1, 1], [], []>} : vector<24x24xbf16>, vector<24x8xbf16>, vector<24x8xf32> -> vector<24x8xf32>
    %671 = vector.extract_strided_slice %602 {offsets = [0, 16], sizes = [24, 8], strides = [1, 1]} : vector<24x96xf32> to vector<24x8xf32>
    %672 = arith.truncf %671 : vector<24x8xf32> to vector<24x8xbf16>
    %673 = vector.extract_strided_slice %602 {offsets = [0, 48], sizes = [24, 8], strides = [1, 1]} : vector<24x96xf32> to vector<24x8xf32>
    %674 = arith.truncf %673 : vector<24x8xf32> to vector<24x8xbf16>
    %675 = vector.extract_strided_slice %602 {offsets = [0, 80], sizes = [24, 8], strides = [1, 1]} : vector<24x96xf32> to vector<24x8xf32>
    %676 = arith.truncf %675 : vector<24x8xf32> to vector<24x8xbf16>
    %cst_290 = arith.constant dense<0.000000e+00> : vector<24x24xf32>
    %677 = tpu.matmul %672, %674, %cst_290 {dimension_numbers = #tpu.dot_dimension_numbers<[1], [1], [0], [0], [0, 0, 1, 0], [], []>} : vector<24x8xbf16>, vector<24x8xbf16>, vector<24x24xf32> -> vector<24x24xf32>
    %cst_291 = arith.constant 0.353553385 : f32
    %678 = vector.broadcast %cst_291 : f32 to vector<24x24xf32>
    %679 = arith.mulf %677, %678 : vector<24x24xf32>
    %680 = vector.broadcast %18 : vector<1x24xf32> to vector<24x24xf32>
    %681 = arith.addf %679, %680 : vector<24x24xf32>
    %cst_292 = arith.constant dense<0xFF800000> : vector<24xf32>
    %682 = vector.multi_reduction <maximumf>, %681, %cst_292 [1] : vector<24x24xf32> to vector<24xf32>
    %683 = vector.shape_cast %682 : vector<24xf32> to vector<24x1xf32>
    %684 = vector.broadcast %683 : vector<24x1xf32> to vector<24x24xf32>
    %685 = arith.subf %681, %684 : vector<24x24xf32>
    %686 = math.exp %685 : vector<24x24xf32>
    %cst_293 = arith.constant dense<0.000000e+00> : vector<24xf32>
    %687 = vector.multi_reduction <add>, %686, %cst_293 [1] : vector<24x24xf32> to vector<24xf32>
    %688 = vector.shape_cast %687 : vector<24xf32> to vector<24x1xf32>
    %689 = tpu.reciprocal %688 {approx = true} : vector<24x1xf32> -> vector<24x1xf32>
    %690 = vector.broadcast %689 : vector<24x1xf32> to vector<24x24xf32>
    %691 = arith.mulf %686, %690 : vector<24x24xf32>
    %c1_294 = arith.constant 1 : index
    %c7_295 = arith.constant 7 : index
    %c2_296 = arith.constant 2 : index
    %692 = vector.load %arg5[%c1_294, %c7_295, %c2_296] : memref<4x8x128xf32, #tpu.memory_space<vmem>>, vector<1x1x1xf32>
    %693 = vector.shape_cast %692 : vector<1x1x1xf32> to vector<1x1xf32>
    %694 = vector.broadcast %693 : vector<1x1xf32> to vector<24x24xf32>
    %695 = arith.mulf %694, %691 : vector<24x24xf32>
    %c1_297 = arith.constant 1 : index
    %c2_298 = arith.constant 2 : index
    %c0_299 = arith.constant 0 : index
    %c0_300 = arith.constant 0 : index
    %696 = vector.load %arg6[%c1_297, %c2_298, %c0_299, %c0_300] : memref<2x4x24x24xf32, #tpu.memory_space<vmem>>, vector<1x1x24x24xf32>
    %697 = vector.shape_cast %696 : vector<1x1x24x24xf32> to vector<24x24xf32>
    %698 = arith.addf %695, %697 : vector<24x24xf32>
    %cst_301 = arith.constant dense<0.000000e+00> : vector<24xf32>
    %699 = vector.multi_reduction <add>, %698, %cst_301 [1] : vector<24x24xf32> to vector<24xf32>
    %700 = vector.shape_cast %699 : vector<24xf32> to vector<24x1xf32>
    %701 = vector.broadcast %700 : vector<24x1xf32> to vector<24x24xf32>
    %702 = arith.divf %698, %701 : vector<24x24xf32>
    %703 = arith.truncf %702 : vector<24x24xf32> to vector<24x24xbf16>
    %cst_302 = arith.constant dense<0.000000e+00> : vector<24x8xf32>
    %704 = tpu.matmul %703, %676, %cst_302 {dimension_numbers = #tpu.dot_dimension_numbers<[1], [0], [0], [1], [0, 0, 1, 1], [], []>} : vector<24x24xbf16>, vector<24x8xbf16>, vector<24x8xf32> -> vector<24x8xf32>
    %705 = vector.extract_strided_slice %602 {offsets = [0, 24], sizes = [24, 8], strides = [1, 1]} : vector<24x96xf32> to vector<24x8xf32>
    %706 = arith.truncf %705 : vector<24x8xf32> to vector<24x8xbf16>
    %707 = vector.extract_strided_slice %602 {offsets = [0, 56], sizes = [24, 8], strides = [1, 1]} : vector<24x96xf32> to vector<24x8xf32>
    %708 = arith.truncf %707 : vector<24x8xf32> to vector<24x8xbf16>
    %709 = vector.extract_strided_slice %602 {offsets = [0, 88], sizes = [24, 8], strides = [1, 1]} : vector<24x96xf32> to vector<24x8xf32>
    %710 = arith.truncf %709 : vector<24x8xf32> to vector<24x8xbf16>
    %cst_303 = arith.constant dense<0.000000e+00> : vector<24x24xf32>
    %711 = tpu.matmul %706, %708, %cst_303 {dimension_numbers = #tpu.dot_dimension_numbers<[1], [1], [0], [0], [0, 0, 1, 0], [], []>} : vector<24x8xbf16>, vector<24x8xbf16>, vector<24x24xf32> -> vector<24x24xf32>
    %cst_304 = arith.constant 0.353553385 : f32
    %712 = vector.broadcast %cst_304 : f32 to vector<24x24xf32>
    %713 = arith.mulf %711, %712 : vector<24x24xf32>
    %714 = vector.broadcast %18 : vector<1x24xf32> to vector<24x24xf32>
    %715 = arith.addf %713, %714 : vector<24x24xf32>
    %cst_305 = arith.constant dense<0xFF800000> : vector<24xf32>
    %716 = vector.multi_reduction <maximumf>, %715, %cst_305 [1] : vector<24x24xf32> to vector<24xf32>
    %717 = vector.shape_cast %716 : vector<24xf32> to vector<24x1xf32>
    %718 = vector.broadcast %717 : vector<24x1xf32> to vector<24x24xf32>
    %719 = arith.subf %715, %718 : vector<24x24xf32>
    %720 = math.exp %719 : vector<24x24xf32>
    %cst_306 = arith.constant dense<0.000000e+00> : vector<24xf32>
    %721 = vector.multi_reduction <add>, %720, %cst_306 [1] : vector<24x24xf32> to vector<24xf32>
    %722 = vector.shape_cast %721 : vector<24xf32> to vector<24x1xf32>
    %723 = tpu.reciprocal %722 {approx = true} : vector<24x1xf32> -> vector<24x1xf32>
    %724 = vector.broadcast %723 : vector<24x1xf32> to vector<24x24xf32>
    %725 = arith.mulf %720, %724 : vector<24x24xf32>
    %c1_307 = arith.constant 1 : index
    %c7_308 = arith.constant 7 : index
    %c3_309 = arith.constant 3 : index
    %726 = vector.load %arg5[%c1_307, %c7_308, %c3_309] : memref<4x8x128xf32, #tpu.memory_space<vmem>>, vector<1x1x1xf32>
    %727 = vector.shape_cast %726 : vector<1x1x1xf32> to vector<1x1xf32>
    %728 = vector.broadcast %727 : vector<1x1xf32> to vector<24x24xf32>
    %729 = arith.mulf %728, %725 : vector<24x24xf32>
    %c1_310 = arith.constant 1 : index
    %c3_311 = arith.constant 3 : index
    %c0_312 = arith.constant 0 : index
    %c0_313 = arith.constant 0 : index
    %730 = vector.load %arg6[%c1_310, %c3_311, %c0_312, %c0_313] : memref<2x4x24x24xf32, #tpu.memory_space<vmem>>, vector<1x1x24x24xf32>
    %731 = vector.shape_cast %730 : vector<1x1x24x24xf32> to vector<24x24xf32>
    %732 = arith.addf %729, %731 : vector<24x24xf32>
    %cst_314 = arith.constant dense<0.000000e+00> : vector<24xf32>
    %733 = vector.multi_reduction <add>, %732, %cst_314 [1] : vector<24x24xf32> to vector<24xf32>
    %734 = vector.shape_cast %733 : vector<24xf32> to vector<24x1xf32>
    %735 = vector.broadcast %734 : vector<24x1xf32> to vector<24x24xf32>
    %736 = arith.divf %732, %735 : vector<24x24xf32>
    %737 = arith.truncf %736 : vector<24x24xf32> to vector<24x24xbf16>
    %cst_315 = arith.constant dense<0.000000e+00> : vector<24x8xf32>
    %738 = tpu.matmul %737, %710, %cst_315 {dimension_numbers = #tpu.dot_dimension_numbers<[1], [0], [0], [1], [0, 0, 1, 1], [], []>} : vector<24x24xbf16>, vector<24x8xbf16>, vector<24x8xf32> -> vector<24x8xf32>
    %739 = tpu.concatenate %636, %670, %704, %738 in 1 : vector<24x8xf32>, vector<24x8xf32>, vector<24x8xf32>, vector<24x8xf32> -> vector<24x32xf32>
    %740 = tpu.concatenate %601, %739 in 0 : vector<24x32xf32>, vector<24x32xf32> -> vector<48x32xf32>
    %741 = arith.truncf %740 : vector<48x32xf32> to vector<48x32xbf16>
    %cst_316 = arith.constant dense<0.000000e+00> : vector<48x32xf32>
    %742 = tpu.matmul %741, %437, %cst_316 {dimension_numbers = #tpu.dot_dimension_numbers<[1], [0], [0], [1], [0, 0, 1, 1], [], []>} : vector<48x32xbf16>, vector<32x32xbf16>, vector<48x32xf32> -> vector<48x32xf32>
    %743 = arith.addf %419, %742 : vector<48x32xf32>
    %744 = vector.broadcast %425 : vector<1x32xf32> to vector<48x32xf32>
    %745 = arith.addf %743, %744 : vector<48x32xf32>
    %cst_317 = arith.constant dense<0.000000e+00> : vector<48xf32>
    %746 = vector.multi_reduction <add>, %745, %cst_317 [1] : vector<48x32xf32> to vector<48xf32>
    %747 = vector.shape_cast %746 : vector<48xf32> to vector<48x1xf32>
    %cst_318 = arith.constant 3.200000e+01 : f32
    %748 = vector.broadcast %cst_318 : f32 to vector<48x1xf32>
    %749 = arith.divf %747, %748 : vector<48x1xf32>
    %750 = vector.broadcast %749 : vector<48x1xf32> to vector<48x32xf32>
    %751 = arith.subf %745, %750 : vector<48x32xf32>
    %752 = arith.mulf %751, %751 : vector<48x32xf32>
    %cst_319 = arith.constant dense<0.000000e+00> : vector<48xf32>
    %753 = vector.multi_reduction <add>, %752, %cst_319 [1] : vector<48x32xf32> to vector<48xf32>
    %754 = vector.shape_cast %753 : vector<48xf32> to vector<48x1xf32>
    %cst_320 = arith.constant 3.200000e+01 : f32
    %755 = vector.broadcast %cst_320 : f32 to vector<48x1xf32>
    %756 = arith.divf %754, %755 : vector<48x1xf32>
    %cst_321 = arith.constant 9.99999974E-6 : f32
    %757 = vector.broadcast %cst_321 : f32 to vector<48x1xf32>
    %758 = arith.addf %756, %757 : vector<48x1xf32>
    %759 = math.rsqrt %758 : vector<48x1xf32>
    %760 = vector.broadcast %759 : vector<48x1xf32> to vector<48x32xf32>
    %761 = arith.mulf %751, %760 : vector<48x32xf32>
    %762 = vector.broadcast %427 : vector<1x32xf32> to vector<48x32xf32>
    %763 = arith.mulf %761, %762 : vector<48x32xf32>
    %764 = vector.broadcast %429 : vector<1x32xf32> to vector<48x32xf32>
    %765 = arith.addf %763, %764 : vector<48x32xf32>
    %766 = arith.truncf %765 : vector<48x32xf32> to vector<48x32xbf16>
    %cst_322 = arith.constant dense<0.000000e+00> : vector<48x128xf32>
    %767 = tpu.matmul %766, %439, %cst_322 {dimension_numbers = #tpu.dot_dimension_numbers<[1], [0], [0], [1], [0, 0, 1, 1], [], []>} : vector<48x32xbf16>, vector<32x128xbf16>, vector<48x128xf32> -> vector<48x128xf32>
    %768 = vector.broadcast %431 : vector<1x128xf32> to vector<48x128xf32>
    %769 = arith.addf %767, %768 : vector<48x128xf32>
    %cst_323 = arith.constant 5.000000e-01 : f32
    %770 = vector.broadcast %cst_323 : f32 to vector<48x128xf32>
    %771 = arith.mulf %770, %769 : vector<48x128xf32>
    %cst_324 = arith.constant 0.707106769 : f32
    %772 = vector.broadcast %cst_324 : f32 to vector<48x128xf32>
    %773 = arith.mulf %769, %772 : vector<48x128xf32>
    %cst_325 = arith.constant 0.000000e+00 : f32
    %774 = vector.broadcast %cst_325 : f32 to vector<48x128xf32>
    %775 = arith.cmpf oge, %773, %774 : vector<48x128xf32>
    %cst_326 = arith.constant 1.000000e+00 : f32
    %cst_327 = arith.constant -1.000000e+00 : f32
    %776 = vector.broadcast %cst_326 : f32 to vector<48x128xf32>
    %777 = vector.broadcast %cst_327 : f32 to vector<48x128xf32>
    %778 = arith.select %775, %776, %777 : vector<48x128xi1>, vector<48x128xf32>
    %779 = math.absf %773 : vector<48x128xf32>
    %cst_328 = arith.constant 0.327591091 : f32
    %780 = vector.broadcast %cst_328 : f32 to vector<48x128xf32>
    %781 = arith.mulf %780, %779 : vector<48x128xf32>
    %cst_329 = arith.constant 1.000000e+00 : f32
    %782 = vector.broadcast %cst_329 : f32 to vector<48x128xf32>
    %783 = arith.addf %782, %781 : vector<48x128xf32>
    %cst_330 = arith.constant 1.000000e+00 : f32
    %784 = vector.broadcast %cst_330 : f32 to vector<48x128xf32>
    %785 = arith.divf %784, %783 : vector<48x128xf32>
    %cst_331 = arith.constant 1.06140542 : f32
    %786 = vector.broadcast %cst_331 : f32 to vector<48x128xf32>
    %787 = arith.mulf %786, %785 : vector<48x128xf32>
    %cst_332 = arith.constant -1.45315206 : f32
    %788 = vector.broadcast %cst_332 : f32 to vector<48x128xf32>
    %789 = arith.addf %787, %788 : vector<48x128xf32>
    %790 = arith.mulf %789, %785 : vector<48x128xf32>
    %cst_333 = arith.constant 1.42141378 : f32
    %791 = vector.broadcast %cst_333 : f32 to vector<48x128xf32>
    %792 = arith.addf %790, %791 : vector<48x128xf32>
    %793 = arith.mulf %792, %785 : vector<48x128xf32>
    %cst_334 = arith.constant -0.284496725 : f32
    %794 = vector.broadcast %cst_334 : f32 to vector<48x128xf32>
    %795 = arith.addf %793, %794 : vector<48x128xf32>
    %796 = arith.mulf %795, %785 : vector<48x128xf32>
    %cst_335 = arith.constant 0.254829586 : f32
    %797 = vector.broadcast %cst_335 : f32 to vector<48x128xf32>
    %798 = arith.addf %796, %797 : vector<48x128xf32>
    %799 = arith.mulf %798, %785 : vector<48x128xf32>
    %cst_336 = arith.constant 0.000000e+00 : f32
    %800 = vector.broadcast %cst_336 : f32 to vector<48x128xf32>
    %801 = arith.subf %800, %779 : vector<48x128xf32>
    %802 = arith.mulf %801, %779 : vector<48x128xf32>
    %803 = math.exp %802 : vector<48x128xf32>
    %804 = arith.mulf %799, %803 : vector<48x128xf32>
    %cst_337 = arith.constant 1.000000e+00 : f32
    %805 = vector.broadcast %cst_337 : f32 to vector<48x128xf32>
    %806 = arith.subf %805, %804 : vector<48x128xf32>
    %807 = arith.mulf %778, %806 : vector<48x128xf32>
    %cst_338 = arith.constant 1.000000e+00 : f32
    %808 = vector.broadcast %cst_338 : f32 to vector<48x128xf32>
    %809 = arith.addf %808, %807 : vector<48x128xf32>
    %810 = arith.mulf %771, %809 : vector<48x128xf32>
    %811 = arith.truncf %810 : vector<48x128xf32> to vector<48x128xbf16>
    %cst_339 = arith.constant dense<0.000000e+00> : vector<48x32xf32>
    %812 = tpu.matmul %811, %441, %cst_339 {dimension_numbers = #tpu.dot_dimension_numbers<[1], [0], [0], [1], [0, 0, 1, 1], [], []>} : vector<48x128xbf16>, vector<128x32xbf16>, vector<48x32xf32> -> vector<48x32xf32>
    %813 = arith.addf %745, %812 : vector<48x32xf32>
    %814 = vector.broadcast %433 : vector<1x32xf32> to vector<48x32xf32>
    %815 = arith.addf %813, %814 : vector<48x32xf32>
    %c16 = arith.constant 16 : index
    %c0_340 = arith.constant 0 : index
    %816 = vector.load %arg2[%c16, %c0_340] : memref<24x128xf32, #tpu.memory_space<vmem>>, vector<1x32xf32>
    %817 = tpu.iota {dimensions = array<i32: 0>} : vector<48x1xi32>
    %c24_i32 = arith.constant 24 : i32
    %c0_i32 = arith.constant 0 : i32
    %818 = arith.cmpi eq, %c24_i32, %c0_i32 : i32
    %c1_i32 = arith.constant 1 : i32
    %819 = arith.select %818, %c1_i32, %c24_i32 : i32
    %820 = vector.broadcast %819 : i32 to vector<48x1xi32>
    %821 = arith.remsi %817, %820 : vector<48x1xi32>
    %c0_i32_341 = arith.constant 0 : i32
    %822 = vector.broadcast %c0_i32_341 : i32 to vector<48x1xi32>
    %823 = arith.cmpi ne, %821, %822 : vector<48x1xi32>
    %c0_i32_342 = arith.constant 0 : i32
    %824 = vector.broadcast %c0_i32_342 : i32 to vector<48x1xi32>
    %825 = arith.cmpi slt, %821, %824 : vector<48x1xi32>
    %c0_i32_343 = arith.constant 0 : i32
    %826 = arith.cmpi slt, %819, %c0_i32_343 : i32
    %827 = vector.broadcast %826 : i1 to vector<48x1xi1>
    %828 = vector.broadcast %827 : vector<48x1xi1> to vector<48x1xi1>
    %829 = arith.xori %825, %828 : vector<48x1xi1>
    %830 = arith.andi %829, %823 : vector<48x1xi1>
    %831 = vector.broadcast %819 : i32 to vector<48x1xi32>
    %832 = arith.addi %821, %831 : vector<48x1xi32>
    %833 = arith.select %830, %832, %821 : vector<48x1xi1>, vector<48x1xi32>
    %c16_i32_344 = arith.constant 16 : i32
    %834 = vector.broadcast %c16_i32_344 : i32 to vector<48x1xi32>
    %835 = arith.cmpi eq, %833, %834 : vector<48x1xi32>
    %836 = vector.shape_cast %835 : vector<48x1xi1> to vector<48x1xi1>
    %837 = vector.broadcast %836 : vector<48x1xi1> to vector<48x32xi1>
    %838 = vector.shape_cast %816 : vector<1x32xf32> to vector<1x32xf32>
    %839 = vector.broadcast %838 : vector<1x32xf32> to vector<48x32xf32>
    %840 = arith.select %837, %839, %815 : vector<48x32xi1>, vector<48x32xf32>
    %c2_345 = arith.constant 2 : index
    %c0_346 = arith.constant 0 : index
    %c0_347 = arith.constant 0 : index
    %841 = vector.load %arg5[%c2_345, %c0_346, %c0_347] : memref<4x8x128xf32, #tpu.memory_space<vmem>>, vector<1x1x32xf32>
    %842 = vector.shape_cast %841 : vector<1x1x32xf32> to vector<1x32xf32>
    %c2_348 = arith.constant 2 : index
    %c1_349 = arith.constant 1 : index
    %c0_350 = arith.constant 0 : index
    %843 = vector.load %arg5[%c2_348, %c1_349, %c0_350] : memref<4x8x128xf32, #tpu.memory_space<vmem>>, vector<1x1x32xf32>
    %844 = vector.shape_cast %843 : vector<1x1x32xf32> to vector<1x32xf32>
    %c2_351 = arith.constant 2 : index
    %c2_352 = arith.constant 2 : index
    %c0_353 = arith.constant 0 : index
    %845 = vector.load %arg5[%c2_351, %c2_352, %c0_353] : memref<4x8x128xf32, #tpu.memory_space<vmem>>, vector<1x1x32xf32>
    %846 = vector.shape_cast %845 : vector<1x1x32xf32> to vector<1x32xf32>
    %c2_354 = arith.constant 2 : index
    %c3_355 = arith.constant 3 : index
    %c0_356 = arith.constant 0 : index
    %847 = vector.load %arg5[%c2_354, %c3_355, %c0_356] : memref<4x8x128xf32, #tpu.memory_space<vmem>>, vector<1x1x32xf32>
    %848 = vector.shape_cast %847 : vector<1x1x32xf32> to vector<1x32xf32>
    %c2_357 = arith.constant 2 : index
    %c4_358 = arith.constant 4 : index
    %c0_359 = arith.constant 0 : index
    %849 = vector.load %arg5[%c2_357, %c4_358, %c0_359] : memref<4x8x128xf32, #tpu.memory_space<vmem>>, vector<1x1x32xf32>
    %850 = vector.shape_cast %849 : vector<1x1x32xf32> to vector<1x32xf32>
    %c2_360 = arith.constant 2 : index
    %c5_361 = arith.constant 5 : index
    %c0_362 = arith.constant 0 : index
    %851 = vector.load %arg5[%c2_360, %c5_361, %c0_362] : memref<4x8x128xf32, #tpu.memory_space<vmem>>, vector<1x1x128xf32>
    %852 = vector.shape_cast %851 : vector<1x1x128xf32> to vector<1x128xf32>
    %c2_363 = arith.constant 2 : index
    %c6_364 = arith.constant 6 : index
    %c0_365 = arith.constant 0 : index
    %853 = vector.load %arg5[%c2_363, %c6_364, %c0_365] : memref<4x8x128xf32, #tpu.memory_space<vmem>>, vector<1x1x32xf32>
    %854 = vector.shape_cast %853 : vector<1x1x32xf32> to vector<1x32xf32>
    %c2_366 = arith.constant 2 : index
    %c0_367 = arith.constant 0 : index
    %c0_368 = arith.constant 0 : index
    %855 = vector.load %arg4[%c2_366, %c0_367, %c0_368] : memref<4x128x288xbf16, #tpu.memory_space<vmem>>, vector<1x32x96xbf16>
    %856 = vector.shape_cast %855 : vector<1x32x96xbf16> to vector<32x96xbf16>
    %c2_369 = arith.constant 2 : index
    %c0_370 = arith.constant 0 : index
    %c96_371 = arith.constant 96 : index
    %857 = vector.load %arg4[%c2_369, %c0_370, %c96_371] : memref<4x128x288xbf16, #tpu.memory_space<vmem>>, vector<1x32x32xbf16>
    %858 = vector.shape_cast %857 : vector<1x32x32xbf16> to vector<32x32xbf16>
    %c2_372 = arith.constant 2 : index
    %c0_373 = arith.constant 0 : index
    %c128_374 = arith.constant 128 : index
    %859 = vector.load %arg4[%c2_372, %c0_373, %c128_374] : memref<4x128x288xbf16, #tpu.memory_space<vmem>>, vector<1x32x128xbf16>
    %860 = vector.shape_cast %859 : vector<1x32x128xbf16> to vector<32x128xbf16>
    %c2_375 = arith.constant 2 : index
    %c0_376 = arith.constant 0 : index
    %c256_377 = arith.constant 256 : index
    %861 = vector.load %arg4[%c2_375, %c0_376, %c256_377] : memref<4x128x288xbf16, #tpu.memory_space<vmem>>, vector<1x128x32xbf16>
    %862 = vector.shape_cast %861 : vector<1x128x32xbf16> to vector<128x32xbf16>
    %cst_378 = arith.constant dense<0.000000e+00> : vector<48xf32>
    %863 = vector.multi_reduction <add>, %840, %cst_378 [1] : vector<48x32xf32> to vector<48xf32>
    %864 = vector.shape_cast %863 : vector<48xf32> to vector<48x1xf32>
    %cst_379 = arith.constant 3.200000e+01 : f32
    %865 = vector.broadcast %cst_379 : f32 to vector<48x1xf32>
    %866 = arith.divf %864, %865 : vector<48x1xf32>
    %867 = vector.broadcast %866 : vector<48x1xf32> to vector<48x32xf32>
    %868 = arith.subf %840, %867 : vector<48x32xf32>
    %869 = arith.mulf %868, %868 : vector<48x32xf32>
    %cst_380 = arith.constant dense<0.000000e+00> : vector<48xf32>
    %870 = vector.multi_reduction <add>, %869, %cst_380 [1] : vector<48x32xf32> to vector<48xf32>
    %871 = vector.shape_cast %870 : vector<48xf32> to vector<48x1xf32>
    %cst_381 = arith.constant 3.200000e+01 : f32
    %872 = vector.broadcast %cst_381 : f32 to vector<48x1xf32>
    %873 = arith.divf %871, %872 : vector<48x1xf32>
    %cst_382 = arith.constant 9.99999974E-6 : f32
    %874 = vector.broadcast %cst_382 : f32 to vector<48x1xf32>
    %875 = arith.addf %873, %874 : vector<48x1xf32>
    %876 = math.rsqrt %875 : vector<48x1xf32>
    %877 = vector.broadcast %876 : vector<48x1xf32> to vector<48x32xf32>
    %878 = arith.mulf %868, %877 : vector<48x32xf32>
    %879 = vector.broadcast %842 : vector<1x32xf32> to vector<48x32xf32>
    %880 = arith.mulf %878, %879 : vector<48x32xf32>
    %881 = vector.broadcast %844 : vector<1x32xf32> to vector<48x32xf32>
    %882 = arith.addf %880, %881 : vector<48x32xf32>
    %883 = arith.truncf %882 : vector<48x32xf32> to vector<48x32xbf16>
    %cst_383 = arith.constant dense<0.000000e+00> : vector<48x96xf32>
    %884 = tpu.matmul %883, %856, %cst_383 {dimension_numbers = #tpu.dot_dimension_numbers<[1], [0], [0], [1], [0, 0, 1, 1], [], []>} : vector<48x32xbf16>, vector<32x96xbf16>, vector<48x96xf32> -> vector<48x96xf32>
    %885 = vector.extract_strided_slice %884 {offsets = [0, 0], sizes = [24, 96], strides = [1, 1]} : vector<48x96xf32> to vector<24x96xf32>
    %886 = vector.extract_strided_slice %885 {offsets = [0, 0], sizes = [24, 8], strides = [1, 1]} : vector<24x96xf32> to vector<24x8xf32>
    %887 = arith.truncf %886 : vector<24x8xf32> to vector<24x8xbf16>
    %888 = vector.extract_strided_slice %885 {offsets = [0, 32], sizes = [24, 8], strides = [1, 1]} : vector<24x96xf32> to vector<24x8xf32>
    %889 = arith.truncf %888 : vector<24x8xf32> to vector<24x8xbf16>
    %890 = vector.extract_strided_slice %885 {offsets = [0, 64], sizes = [24, 8], strides = [1, 1]} : vector<24x96xf32> to vector<24x8xf32>
    %891 = arith.truncf %890 : vector<24x8xf32> to vector<24x8xbf16>
    %cst_384 = arith.constant dense<0.000000e+00> : vector<24x24xf32>
    %892 = tpu.matmul %887, %889, %cst_384 {dimension_numbers = #tpu.dot_dimension_numbers<[1], [1], [0], [0], [0, 0, 1, 0], [], []>} : vector<24x8xbf16>, vector<24x8xbf16>, vector<24x24xf32> -> vector<24x24xf32>
    %cst_385 = arith.constant 0.353553385 : f32
    %893 = vector.broadcast %cst_385 : f32 to vector<24x24xf32>
    %894 = arith.mulf %892, %893 : vector<24x24xf32>
    %895 = vector.broadcast %23 : vector<1x24xf32> to vector<24x24xf32>
    %896 = arith.addf %894, %895 : vector<24x24xf32>
    %cst_386 = arith.constant dense<0xFF800000> : vector<24xf32>
    %897 = vector.multi_reduction <maximumf>, %896, %cst_386 [1] : vector<24x24xf32> to vector<24xf32>
    %898 = vector.shape_cast %897 : vector<24xf32> to vector<24x1xf32>
    %899 = vector.broadcast %898 : vector<24x1xf32> to vector<24x24xf32>
    %900 = arith.subf %896, %899 : vector<24x24xf32>
    %901 = math.exp %900 : vector<24x24xf32>
    %cst_387 = arith.constant dense<0.000000e+00> : vector<24xf32>
    %902 = vector.multi_reduction <add>, %901, %cst_387 [1] : vector<24x24xf32> to vector<24xf32>
    %903 = vector.shape_cast %902 : vector<24xf32> to vector<24x1xf32>
    %904 = tpu.reciprocal %903 {approx = true} : vector<24x1xf32> -> vector<24x1xf32>
    %905 = vector.broadcast %904 : vector<24x1xf32> to vector<24x24xf32>
    %906 = arith.mulf %901, %905 : vector<24x24xf32>
    %907 = arith.truncf %906 : vector<24x24xf32> to vector<24x24xbf16>
    %cst_388 = arith.constant dense<0.000000e+00> : vector<24x8xf32>
    %908 = tpu.matmul %907, %891, %cst_388 {dimension_numbers = #tpu.dot_dimension_numbers<[1], [0], [0], [1], [0, 0, 1, 1], [], []>} : vector<24x24xbf16>, vector<24x8xbf16>, vector<24x8xf32> -> vector<24x8xf32>
    %909 = vector.extract_strided_slice %885 {offsets = [0, 8], sizes = [24, 8], strides = [1, 1]} : vector<24x96xf32> to vector<24x8xf32>
    %910 = arith.truncf %909 : vector<24x8xf32> to vector<24x8xbf16>
    %911 = vector.extract_strided_slice %885 {offsets = [0, 40], sizes = [24, 8], strides = [1, 1]} : vector<24x96xf32> to vector<24x8xf32>
    %912 = arith.truncf %911 : vector<24x8xf32> to vector<24x8xbf16>
    %913 = vector.extract_strided_slice %885 {offsets = [0, 72], sizes = [24, 8], strides = [1, 1]} : vector<24x96xf32> to vector<24x8xf32>
    %914 = arith.truncf %913 : vector<24x8xf32> to vector<24x8xbf16>
    %cst_389 = arith.constant dense<0.000000e+00> : vector<24x24xf32>
    %915 = tpu.matmul %910, %912, %cst_389 {dimension_numbers = #tpu.dot_dimension_numbers<[1], [1], [0], [0], [0, 0, 1, 0], [], []>} : vector<24x8xbf16>, vector<24x8xbf16>, vector<24x24xf32> -> vector<24x24xf32>
    %cst_390 = arith.constant 0.353553385 : f32
    %916 = vector.broadcast %cst_390 : f32 to vector<24x24xf32>
    %917 = arith.mulf %915, %916 : vector<24x24xf32>
    %918 = vector.broadcast %23 : vector<1x24xf32> to vector<24x24xf32>
    %919 = arith.addf %917, %918 : vector<24x24xf32>
    %cst_391 = arith.constant dense<0xFF800000> : vector<24xf32>
    %920 = vector.multi_reduction <maximumf>, %919, %cst_391 [1] : vector<24x24xf32> to vector<24xf32>
    %921 = vector.shape_cast %920 : vector<24xf32> to vector<24x1xf32>
    %922 = vector.broadcast %921 : vector<24x1xf32> to vector<24x24xf32>
    %923 = arith.subf %919, %922 : vector<24x24xf32>
    %924 = math.exp %923 : vector<24x24xf32>
    %cst_392 = arith.constant dense<0.000000e+00> : vector<24xf32>
    %925 = vector.multi_reduction <add>, %924, %cst_392 [1] : vector<24x24xf32> to vector<24xf32>
    %926 = vector.shape_cast %925 : vector<24xf32> to vector<24x1xf32>
    %927 = tpu.reciprocal %926 {approx = true} : vector<24x1xf32> -> vector<24x1xf32>
    %928 = vector.broadcast %927 : vector<24x1xf32> to vector<24x24xf32>
    %929 = arith.mulf %924, %928 : vector<24x24xf32>
    %930 = arith.truncf %929 : vector<24x24xf32> to vector<24x24xbf16>
    %cst_393 = arith.constant dense<0.000000e+00> : vector<24x8xf32>
    %931 = tpu.matmul %930, %914, %cst_393 {dimension_numbers = #tpu.dot_dimension_numbers<[1], [0], [0], [1], [0, 0, 1, 1], [], []>} : vector<24x24xbf16>, vector<24x8xbf16>, vector<24x8xf32> -> vector<24x8xf32>
    %932 = vector.extract_strided_slice %885 {offsets = [0, 16], sizes = [24, 8], strides = [1, 1]} : vector<24x96xf32> to vector<24x8xf32>
    %933 = arith.truncf %932 : vector<24x8xf32> to vector<24x8xbf16>
    %934 = vector.extract_strided_slice %885 {offsets = [0, 48], sizes = [24, 8], strides = [1, 1]} : vector<24x96xf32> to vector<24x8xf32>
    %935 = arith.truncf %934 : vector<24x8xf32> to vector<24x8xbf16>
    %936 = vector.extract_strided_slice %885 {offsets = [0, 80], sizes = [24, 8], strides = [1, 1]} : vector<24x96xf32> to vector<24x8xf32>
    %937 = arith.truncf %936 : vector<24x8xf32> to vector<24x8xbf16>
    %cst_394 = arith.constant dense<0.000000e+00> : vector<24x24xf32>
    %938 = tpu.matmul %933, %935, %cst_394 {dimension_numbers = #tpu.dot_dimension_numbers<[1], [1], [0], [0], [0, 0, 1, 0], [], []>} : vector<24x8xbf16>, vector<24x8xbf16>, vector<24x24xf32> -> vector<24x24xf32>
    %cst_395 = arith.constant 0.353553385 : f32
    %939 = vector.broadcast %cst_395 : f32 to vector<24x24xf32>
    %940 = arith.mulf %938, %939 : vector<24x24xf32>
    %941 = vector.broadcast %23 : vector<1x24xf32> to vector<24x24xf32>
    %942 = arith.addf %940, %941 : vector<24x24xf32>
    %cst_396 = arith.constant dense<0xFF800000> : vector<24xf32>
    %943 = vector.multi_reduction <maximumf>, %942, %cst_396 [1] : vector<24x24xf32> to vector<24xf32>
    %944 = vector.shape_cast %943 : vector<24xf32> to vector<24x1xf32>
    %945 = vector.broadcast %944 : vector<24x1xf32> to vector<24x24xf32>
    %946 = arith.subf %942, %945 : vector<24x24xf32>
    %947 = math.exp %946 : vector<24x24xf32>
    %cst_397 = arith.constant dense<0.000000e+00> : vector<24xf32>
    %948 = vector.multi_reduction <add>, %947, %cst_397 [1] : vector<24x24xf32> to vector<24xf32>
    %949 = vector.shape_cast %948 : vector<24xf32> to vector<24x1xf32>
    %950 = tpu.reciprocal %949 {approx = true} : vector<24x1xf32> -> vector<24x1xf32>
    %951 = vector.broadcast %950 : vector<24x1xf32> to vector<24x24xf32>
    %952 = arith.mulf %947, %951 : vector<24x24xf32>
    %953 = arith.truncf %952 : vector<24x24xf32> to vector<24x24xbf16>
    %cst_398 = arith.constant dense<0.000000e+00> : vector<24x8xf32>
    %954 = tpu.matmul %953, %937, %cst_398 {dimension_numbers = #tpu.dot_dimension_numbers<[1], [0], [0], [1], [0, 0, 1, 1], [], []>} : vector<24x24xbf16>, vector<24x8xbf16>, vector<24x8xf32> -> vector<24x8xf32>
    %955 = vector.extract_strided_slice %885 {offsets = [0, 24], sizes = [24, 8], strides = [1, 1]} : vector<24x96xf32> to vector<24x8xf32>
    %956 = arith.truncf %955 : vector<24x8xf32> to vector<24x8xbf16>
    %957 = vector.extract_strided_slice %885 {offsets = [0, 56], sizes = [24, 8], strides = [1, 1]} : vector<24x96xf32> to vector<24x8xf32>
    %958 = arith.truncf %957 : vector<24x8xf32> to vector<24x8xbf16>
    %959 = vector.extract_strided_slice %885 {offsets = [0, 88], sizes = [24, 8], strides = [1, 1]} : vector<24x96xf32> to vector<24x8xf32>
    %960 = arith.truncf %959 : vector<24x8xf32> to vector<24x8xbf16>
    %cst_399 = arith.constant dense<0.000000e+00> : vector<24x24xf32>
    %961 = tpu.matmul %956, %958, %cst_399 {dimension_numbers = #tpu.dot_dimension_numbers<[1], [1], [0], [0], [0, 0, 1, 0], [], []>} : vector<24x8xbf16>, vector<24x8xbf16>, vector<24x24xf32> -> vector<24x24xf32>
    %cst_400 = arith.constant 0.353553385 : f32
    %962 = vector.broadcast %cst_400 : f32 to vector<24x24xf32>
    %963 = arith.mulf %961, %962 : vector<24x24xf32>
    %964 = vector.broadcast %23 : vector<1x24xf32> to vector<24x24xf32>
    %965 = arith.addf %963, %964 : vector<24x24xf32>
    %cst_401 = arith.constant dense<0xFF800000> : vector<24xf32>
    %966 = vector.multi_reduction <maximumf>, %965, %cst_401 [1] : vector<24x24xf32> to vector<24xf32>
    %967 = vector.shape_cast %966 : vector<24xf32> to vector<24x1xf32>
    %968 = vector.broadcast %967 : vector<24x1xf32> to vector<24x24xf32>
    %969 = arith.subf %965, %968 : vector<24x24xf32>
    %970 = math.exp %969 : vector<24x24xf32>
    %cst_402 = arith.constant dense<0.000000e+00> : vector<24xf32>
    %971 = vector.multi_reduction <add>, %970, %cst_402 [1] : vector<24x24xf32> to vector<24xf32>
    %972 = vector.shape_cast %971 : vector<24xf32> to vector<24x1xf32>
    %973 = tpu.reciprocal %972 {approx = true} : vector<24x1xf32> -> vector<24x1xf32>
    %974 = vector.broadcast %973 : vector<24x1xf32> to vector<24x24xf32>
    %975 = arith.mulf %970, %974 : vector<24x24xf32>
    %976 = arith.truncf %975 : vector<24x24xf32> to vector<24x24xbf16>
    %cst_403 = arith.constant dense<0.000000e+00> : vector<24x8xf32>
    %977 = tpu.matmul %976, %960, %cst_403 {dimension_numbers = #tpu.dot_dimension_numbers<[1], [0], [0], [1], [0, 0, 1, 1], [], []>} : vector<24x24xbf16>, vector<24x8xbf16>, vector<24x8xf32> -> vector<24x8xf32>
    %978 = tpu.concatenate %908, %931, %954, %977 in 1 : vector<24x8xf32>, vector<24x8xf32>, vector<24x8xf32>, vector<24x8xf32> -> vector<24x32xf32>
    %979 = vector.extract_strided_slice %884 {offsets = [24, 0], sizes = [24, 96], strides = [1, 1]} : vector<48x96xf32> to vector<24x96xf32>
    %980 = vector.extract_strided_slice %979 {offsets = [0, 0], sizes = [24, 8], strides = [1, 1]} : vector<24x96xf32> to vector<24x8xf32>
    %981 = arith.truncf %980 : vector<24x8xf32> to vector<24x8xbf16>
    %982 = vector.extract_strided_slice %979 {offsets = [0, 32], sizes = [24, 8], strides = [1, 1]} : vector<24x96xf32> to vector<24x8xf32>
    %983 = arith.truncf %982 : vector<24x8xf32> to vector<24x8xbf16>
    %984 = vector.extract_strided_slice %979 {offsets = [0, 64], sizes = [24, 8], strides = [1, 1]} : vector<24x96xf32> to vector<24x8xf32>
    %985 = arith.truncf %984 : vector<24x8xf32> to vector<24x8xbf16>
    %cst_404 = arith.constant dense<0.000000e+00> : vector<24x24xf32>
    %986 = tpu.matmul %981, %983, %cst_404 {dimension_numbers = #tpu.dot_dimension_numbers<[1], [1], [0], [0], [0, 0, 1, 0], [], []>} : vector<24x8xbf16>, vector<24x8xbf16>, vector<24x24xf32> -> vector<24x24xf32>
    %cst_405 = arith.constant 0.353553385 : f32
    %987 = vector.broadcast %cst_405 : f32 to vector<24x24xf32>
    %988 = arith.mulf %986, %987 : vector<24x24xf32>
    %989 = vector.broadcast %23 : vector<1x24xf32> to vector<24x24xf32>
    %990 = arith.addf %988, %989 : vector<24x24xf32>
    %cst_406 = arith.constant dense<0xFF800000> : vector<24xf32>
    %991 = vector.multi_reduction <maximumf>, %990, %cst_406 [1] : vector<24x24xf32> to vector<24xf32>
    %992 = vector.shape_cast %991 : vector<24xf32> to vector<24x1xf32>
    %993 = vector.broadcast %992 : vector<24x1xf32> to vector<24x24xf32>
    %994 = arith.subf %990, %993 : vector<24x24xf32>
    %995 = math.exp %994 : vector<24x24xf32>
    %cst_407 = arith.constant dense<0.000000e+00> : vector<24xf32>
    %996 = vector.multi_reduction <add>, %995, %cst_407 [1] : vector<24x24xf32> to vector<24xf32>
    %997 = vector.shape_cast %996 : vector<24xf32> to vector<24x1xf32>
    %998 = tpu.reciprocal %997 {approx = true} : vector<24x1xf32> -> vector<24x1xf32>
    %999 = vector.broadcast %998 : vector<24x1xf32> to vector<24x24xf32>
    %1000 = arith.mulf %995, %999 : vector<24x24xf32>
    %1001 = arith.truncf %1000 : vector<24x24xf32> to vector<24x24xbf16>
    %cst_408 = arith.constant dense<0.000000e+00> : vector<24x8xf32>
    %1002 = tpu.matmul %1001, %985, %cst_408 {dimension_numbers = #tpu.dot_dimension_numbers<[1], [0], [0], [1], [0, 0, 1, 1], [], []>} : vector<24x24xbf16>, vector<24x8xbf16>, vector<24x8xf32> -> vector<24x8xf32>
    %1003 = vector.extract_strided_slice %979 {offsets = [0, 8], sizes = [24, 8], strides = [1, 1]} : vector<24x96xf32> to vector<24x8xf32>
    %1004 = arith.truncf %1003 : vector<24x8xf32> to vector<24x8xbf16>
    %1005 = vector.extract_strided_slice %979 {offsets = [0, 40], sizes = [24, 8], strides = [1, 1]} : vector<24x96xf32> to vector<24x8xf32>
    %1006 = arith.truncf %1005 : vector<24x8xf32> to vector<24x8xbf16>
    %1007 = vector.extract_strided_slice %979 {offsets = [0, 72], sizes = [24, 8], strides = [1, 1]} : vector<24x96xf32> to vector<24x8xf32>
    %1008 = arith.truncf %1007 : vector<24x8xf32> to vector<24x8xbf16>
    %cst_409 = arith.constant dense<0.000000e+00> : vector<24x24xf32>
    %1009 = tpu.matmul %1004, %1006, %cst_409 {dimension_numbers = #tpu.dot_dimension_numbers<[1], [1], [0], [0], [0, 0, 1, 0], [], []>} : vector<24x8xbf16>, vector<24x8xbf16>, vector<24x24xf32> -> vector<24x24xf32>
    %cst_410 = arith.constant 0.353553385 : f32
    %1010 = vector.broadcast %cst_410 : f32 to vector<24x24xf32>
    %1011 = arith.mulf %1009, %1010 : vector<24x24xf32>
    %1012 = vector.broadcast %23 : vector<1x24xf32> to vector<24x24xf32>
    %1013 = arith.addf %1011, %1012 : vector<24x24xf32>
    %cst_411 = arith.constant dense<0xFF800000> : vector<24xf32>
    %1014 = vector.multi_reduction <maximumf>, %1013, %cst_411 [1] : vector<24x24xf32> to vector<24xf32>
    %1015 = vector.shape_cast %1014 : vector<24xf32> to vector<24x1xf32>
    %1016 = vector.broadcast %1015 : vector<24x1xf32> to vector<24x24xf32>
    %1017 = arith.subf %1013, %1016 : vector<24x24xf32>
    %1018 = math.exp %1017 : vector<24x24xf32>
    %cst_412 = arith.constant dense<0.000000e+00> : vector<24xf32>
    %1019 = vector.multi_reduction <add>, %1018, %cst_412 [1] : vector<24x24xf32> to vector<24xf32>
    %1020 = vector.shape_cast %1019 : vector<24xf32> to vector<24x1xf32>
    %1021 = tpu.reciprocal %1020 {approx = true} : vector<24x1xf32> -> vector<24x1xf32>
    %1022 = vector.broadcast %1021 : vector<24x1xf32> to vector<24x24xf32>
    %1023 = arith.mulf %1018, %1022 : vector<24x24xf32>
    %1024 = arith.truncf %1023 : vector<24x24xf32> to vector<24x24xbf16>
    %cst_413 = arith.constant dense<0.000000e+00> : vector<24x8xf32>
    %1025 = tpu.matmul %1024, %1008, %cst_413 {dimension_numbers = #tpu.dot_dimension_numbers<[1], [0], [0], [1], [0, 0, 1, 1], [], []>} : vector<24x24xbf16>, vector<24x8xbf16>, vector<24x8xf32> -> vector<24x8xf32>
    %1026 = vector.extract_strided_slice %979 {offsets = [0, 16], sizes = [24, 8], strides = [1, 1]} : vector<24x96xf32> to vector<24x8xf32>
    %1027 = arith.truncf %1026 : vector<24x8xf32> to vector<24x8xbf16>
    %1028 = vector.extract_strided_slice %979 {offsets = [0, 48], sizes = [24, 8], strides = [1, 1]} : vector<24x96xf32> to vector<24x8xf32>
    %1029 = arith.truncf %1028 : vector<24x8xf32> to vector<24x8xbf16>
    %1030 = vector.extract_strided_slice %979 {offsets = [0, 80], sizes = [24, 8], strides = [1, 1]} : vector<24x96xf32> to vector<24x8xf32>
    %1031 = arith.truncf %1030 : vector<24x8xf32> to vector<24x8xbf16>
    %cst_414 = arith.constant dense<0.000000e+00> : vector<24x24xf32>
    %1032 = tpu.matmul %1027, %1029, %cst_414 {dimension_numbers = #tpu.dot_dimension_numbers<[1], [1], [0], [0], [0, 0, 1, 0], [], []>} : vector<24x8xbf16>, vector<24x8xbf16>, vector<24x24xf32> -> vector<24x24xf32>
    %cst_415 = arith.constant 0.353553385 : f32
    %1033 = vector.broadcast %cst_415 : f32 to vector<24x24xf32>
    %1034 = arith.mulf %1032, %1033 : vector<24x24xf32>
    %1035 = vector.broadcast %23 : vector<1x24xf32> to vector<24x24xf32>
    %1036 = arith.addf %1034, %1035 : vector<24x24xf32>
    %cst_416 = arith.constant dense<0xFF800000> : vector<24xf32>
    %1037 = vector.multi_reduction <maximumf>, %1036, %cst_416 [1] : vector<24x24xf32> to vector<24xf32>
    %1038 = vector.shape_cast %1037 : vector<24xf32> to vector<24x1xf32>
    %1039 = vector.broadcast %1038 : vector<24x1xf32> to vector<24x24xf32>
    %1040 = arith.subf %1036, %1039 : vector<24x24xf32>
    %1041 = math.exp %1040 : vector<24x24xf32>
    %cst_417 = arith.constant dense<0.000000e+00> : vector<24xf32>
    %1042 = vector.multi_reduction <add>, %1041, %cst_417 [1] : vector<24x24xf32> to vector<24xf32>
    %1043 = vector.shape_cast %1042 : vector<24xf32> to vector<24x1xf32>
    %1044 = tpu.reciprocal %1043 {approx = true} : vector<24x1xf32> -> vector<24x1xf32>
    %1045 = vector.broadcast %1044 : vector<24x1xf32> to vector<24x24xf32>
    %1046 = arith.mulf %1041, %1045 : vector<24x24xf32>
    %1047 = arith.truncf %1046 : vector<24x24xf32> to vector<24x24xbf16>
    %cst_418 = arith.constant dense<0.000000e+00> : vector<24x8xf32>
    %1048 = tpu.matmul %1047, %1031, %cst_418 {dimension_numbers = #tpu.dot_dimension_numbers<[1], [0], [0], [1], [0, 0, 1, 1], [], []>} : vector<24x24xbf16>, vector<24x8xbf16>, vector<24x8xf32> -> vector<24x8xf32>
    %1049 = vector.extract_strided_slice %979 {offsets = [0, 24], sizes = [24, 8], strides = [1, 1]} : vector<24x96xf32> to vector<24x8xf32>
    %1050 = arith.truncf %1049 : vector<24x8xf32> to vector<24x8xbf16>
    %1051 = vector.extract_strided_slice %979 {offsets = [0, 56], sizes = [24, 8], strides = [1, 1]} : vector<24x96xf32> to vector<24x8xf32>
    %1052 = arith.truncf %1051 : vector<24x8xf32> to vector<24x8xbf16>
    %1053 = vector.extract_strided_slice %979 {offsets = [0, 88], sizes = [24, 8], strides = [1, 1]} : vector<24x96xf32> to vector<24x8xf32>
    %1054 = arith.truncf %1053 : vector<24x8xf32> to vector<24x8xbf16>
    %cst_419 = arith.constant dense<0.000000e+00> : vector<24x24xf32>
    %1055 = tpu.matmul %1050, %1052, %cst_419 {dimension_numbers = #tpu.dot_dimension_numbers<[1], [1], [0], [0], [0, 0, 1, 0], [], []>} : vector<24x8xbf16>, vector<24x8xbf16>, vector<24x24xf32> -> vector<24x24xf32>
    %cst_420 = arith.constant 0.353553385 : f32
    %1056 = vector.broadcast %cst_420 : f32 to vector<24x24xf32>
    %1057 = arith.mulf %1055, %1056 : vector<24x24xf32>
    %1058 = vector.broadcast %23 : vector<1x24xf32> to vector<24x24xf32>
    %1059 = arith.addf %1057, %1058 : vector<24x24xf32>
    %cst_421 = arith.constant dense<0xFF800000> : vector<24xf32>
    %1060 = vector.multi_reduction <maximumf>, %1059, %cst_421 [1] : vector<24x24xf32> to vector<24xf32>
    %1061 = vector.shape_cast %1060 : vector<24xf32> to vector<24x1xf32>
    %1062 = vector.broadcast %1061 : vector<24x1xf32> to vector<24x24xf32>
    %1063 = arith.subf %1059, %1062 : vector<24x24xf32>
    %1064 = math.exp %1063 : vector<24x24xf32>
    %cst_422 = arith.constant dense<0.000000e+00> : vector<24xf32>
    %1065 = vector.multi_reduction <add>, %1064, %cst_422 [1] : vector<24x24xf32> to vector<24xf32>
    %1066 = vector.shape_cast %1065 : vector<24xf32> to vector<24x1xf32>
    %1067 = tpu.reciprocal %1066 {approx = true} : vector<24x1xf32> -> vector<24x1xf32>
    %1068 = vector.broadcast %1067 : vector<24x1xf32> to vector<24x24xf32>
    %1069 = arith.mulf %1064, %1068 : vector<24x24xf32>
    %1070 = arith.truncf %1069 : vector<24x24xf32> to vector<24x24xbf16>
    %cst_423 = arith.constant dense<0.000000e+00> : vector<24x8xf32>
    %1071 = tpu.matmul %1070, %1054, %cst_423 {dimension_numbers = #tpu.dot_dimension_numbers<[1], [0], [0], [1], [0, 0, 1, 1], [], []>} : vector<24x24xbf16>, vector<24x8xbf16>, vector<24x8xf32> -> vector<24x8xf32>
    %1072 = tpu.concatenate %1002, %1025, %1048, %1071 in 1 : vector<24x8xf32>, vector<24x8xf32>, vector<24x8xf32>, vector<24x8xf32> -> vector<24x32xf32>
    %1073 = tpu.concatenate %978, %1072 in 0 : vector<24x32xf32>, vector<24x32xf32> -> vector<48x32xf32>
    %1074 = arith.truncf %1073 : vector<48x32xf32> to vector<48x32xbf16>
    %cst_424 = arith.constant dense<0.000000e+00> : vector<48x32xf32>
    %1075 = tpu.matmul %1074, %858, %cst_424 {dimension_numbers = #tpu.dot_dimension_numbers<[1], [0], [0], [1], [0, 0, 1, 1], [], []>} : vector<48x32xbf16>, vector<32x32xbf16>, vector<48x32xf32> -> vector<48x32xf32>
    %1076 = arith.addf %840, %1075 : vector<48x32xf32>
    %1077 = vector.broadcast %846 : vector<1x32xf32> to vector<48x32xf32>
    %1078 = arith.addf %1076, %1077 : vector<48x32xf32>
    %cst_425 = arith.constant dense<0.000000e+00> : vector<48xf32>
    %1079 = vector.multi_reduction <add>, %1078, %cst_425 [1] : vector<48x32xf32> to vector<48xf32>
    %1080 = vector.shape_cast %1079 : vector<48xf32> to vector<48x1xf32>
    %cst_426 = arith.constant 3.200000e+01 : f32
    %1081 = vector.broadcast %cst_426 : f32 to vector<48x1xf32>
    %1082 = arith.divf %1080, %1081 : vector<48x1xf32>
    %1083 = vector.broadcast %1082 : vector<48x1xf32> to vector<48x32xf32>
    %1084 = arith.subf %1078, %1083 : vector<48x32xf32>
    %1085 = arith.mulf %1084, %1084 : vector<48x32xf32>
    %cst_427 = arith.constant dense<0.000000e+00> : vector<48xf32>
    %1086 = vector.multi_reduction <add>, %1085, %cst_427 [1] : vector<48x32xf32> to vector<48xf32>
    %1087 = vector.shape_cast %1086 : vector<48xf32> to vector<48x1xf32>
    %cst_428 = arith.constant 3.200000e+01 : f32
    %1088 = vector.broadcast %cst_428 : f32 to vector<48x1xf32>
    %1089 = arith.divf %1087, %1088 : vector<48x1xf32>
    %cst_429 = arith.constant 9.99999974E-6 : f32
    %1090 = vector.broadcast %cst_429 : f32 to vector<48x1xf32>
    %1091 = arith.addf %1089, %1090 : vector<48x1xf32>
    %1092 = math.rsqrt %1091 : vector<48x1xf32>
    %1093 = vector.broadcast %1092 : vector<48x1xf32> to vector<48x32xf32>
    %1094 = arith.mulf %1084, %1093 : vector<48x32xf32>
    %1095 = vector.broadcast %848 : vector<1x32xf32> to vector<48x32xf32>
    %1096 = arith.mulf %1094, %1095 : vector<48x32xf32>
    %1097 = vector.broadcast %850 : vector<1x32xf32> to vector<48x32xf32>
    %1098 = arith.addf %1096, %1097 : vector<48x32xf32>
    %1099 = arith.truncf %1098 : vector<48x32xf32> to vector<48x32xbf16>
    %cst_430 = arith.constant dense<0.000000e+00> : vector<48x128xf32>
    %1100 = tpu.matmul %1099, %860, %cst_430 {dimension_numbers = #tpu.dot_dimension_numbers<[1], [0], [0], [1], [0, 0, 1, 1], [], []>} : vector<48x32xbf16>, vector<32x128xbf16>, vector<48x128xf32> -> vector<48x128xf32>
    %1101 = vector.broadcast %852 : vector<1x128xf32> to vector<48x128xf32>
    %1102 = arith.addf %1100, %1101 : vector<48x128xf32>
    %cst_431 = arith.constant 5.000000e-01 : f32
    %1103 = vector.broadcast %cst_431 : f32 to vector<48x128xf32>
    %1104 = arith.mulf %1103, %1102 : vector<48x128xf32>
    %cst_432 = arith.constant 0.707106769 : f32
    %1105 = vector.broadcast %cst_432 : f32 to vector<48x128xf32>
    %1106 = arith.mulf %1102, %1105 : vector<48x128xf32>
    %cst_433 = arith.constant 0.000000e+00 : f32
    %1107 = vector.broadcast %cst_433 : f32 to vector<48x128xf32>
    %1108 = arith.cmpf oge, %1106, %1107 : vector<48x128xf32>
    %cst_434 = arith.constant 1.000000e+00 : f32
    %cst_435 = arith.constant -1.000000e+00 : f32
    %1109 = vector.broadcast %cst_434 : f32 to vector<48x128xf32>
    %1110 = vector.broadcast %cst_435 : f32 to vector<48x128xf32>
    %1111 = arith.select %1108, %1109, %1110 : vector<48x128xi1>, vector<48x128xf32>
    %1112 = math.absf %1106 : vector<48x128xf32>
    %cst_436 = arith.constant 0.327591091 : f32
    %1113 = vector.broadcast %cst_436 : f32 to vector<48x128xf32>
    %1114 = arith.mulf %1113, %1112 : vector<48x128xf32>
    %cst_437 = arith.constant 1.000000e+00 : f32
    %1115 = vector.broadcast %cst_437 : f32 to vector<48x128xf32>
    %1116 = arith.addf %1115, %1114 : vector<48x128xf32>
    %cst_438 = arith.constant 1.000000e+00 : f32
    %1117 = vector.broadcast %cst_438 : f32 to vector<48x128xf32>
    %1118 = arith.divf %1117, %1116 : vector<48x128xf32>
    %cst_439 = arith.constant 1.06140542 : f32
    %1119 = vector.broadcast %cst_439 : f32 to vector<48x128xf32>
    %1120 = arith.mulf %1119, %1118 : vector<48x128xf32>
    %cst_440 = arith.constant -1.45315206 : f32
    %1121 = vector.broadcast %cst_440 : f32 to vector<48x128xf32>
    %1122 = arith.addf %1120, %1121 : vector<48x128xf32>
    %1123 = arith.mulf %1122, %1118 : vector<48x128xf32>
    %cst_441 = arith.constant 1.42141378 : f32
    %1124 = vector.broadcast %cst_441 : f32 to vector<48x128xf32>
    %1125 = arith.addf %1123, %1124 : vector<48x128xf32>
    %1126 = arith.mulf %1125, %1118 : vector<48x128xf32>
    %cst_442 = arith.constant -0.284496725 : f32
    %1127 = vector.broadcast %cst_442 : f32 to vector<48x128xf32>
    %1128 = arith.addf %1126, %1127 : vector<48x128xf32>
    %1129 = arith.mulf %1128, %1118 : vector<48x128xf32>
    %cst_443 = arith.constant 0.254829586 : f32
    %1130 = vector.broadcast %cst_443 : f32 to vector<48x128xf32>
    %1131 = arith.addf %1129, %1130 : vector<48x128xf32>
    %1132 = arith.mulf %1131, %1118 : vector<48x128xf32>
    %cst_444 = arith.constant 0.000000e+00 : f32
    %1133 = vector.broadcast %cst_444 : f32 to vector<48x128xf32>
    %1134 = arith.subf %1133, %1112 : vector<48x128xf32>
    %1135 = arith.mulf %1134, %1112 : vector<48x128xf32>
    %1136 = math.exp %1135 : vector<48x128xf32>
    %1137 = arith.mulf %1132, %1136 : vector<48x128xf32>
    %cst_445 = arith.constant 1.000000e+00 : f32
    %1138 = vector.broadcast %cst_445 : f32 to vector<48x128xf32>
    %1139 = arith.subf %1138, %1137 : vector<48x128xf32>
    %1140 = arith.mulf %1111, %1139 : vector<48x128xf32>
    %cst_446 = arith.constant 1.000000e+00 : f32
    %1141 = vector.broadcast %cst_446 : f32 to vector<48x128xf32>
    %1142 = arith.addf %1141, %1140 : vector<48x128xf32>
    %1143 = arith.mulf %1104, %1142 : vector<48x128xf32>
    %1144 = arith.truncf %1143 : vector<48x128xf32> to vector<48x128xbf16>
    %cst_447 = arith.constant dense<0.000000e+00> : vector<48x32xf32>
    %1145 = tpu.matmul %1144, %862, %cst_447 {dimension_numbers = #tpu.dot_dimension_numbers<[1], [0], [0], [1], [0, 0, 1, 1], [], []>} : vector<48x128xbf16>, vector<128x32xbf16>, vector<48x32xf32> -> vector<48x32xf32>
    %1146 = arith.addf %1078, %1145 : vector<48x32xf32>
    %1147 = vector.broadcast %854 : vector<1x32xf32> to vector<48x32xf32>
    %1148 = arith.addf %1146, %1147 : vector<48x32xf32>
    %c3_448 = arith.constant 3 : index
    %c0_449 = arith.constant 0 : index
    %c0_450 = arith.constant 0 : index
    %1149 = vector.load %arg5[%c3_448, %c0_449, %c0_450] : memref<4x8x128xf32, #tpu.memory_space<vmem>>, vector<1x1x32xf32>
    %1150 = vector.shape_cast %1149 : vector<1x1x32xf32> to vector<1x32xf32>
    %c3_451 = arith.constant 3 : index
    %c1_452 = arith.constant 1 : index
    %c0_453 = arith.constant 0 : index
    %1151 = vector.load %arg5[%c3_451, %c1_452, %c0_453] : memref<4x8x128xf32, #tpu.memory_space<vmem>>, vector<1x1x32xf32>
    %1152 = vector.shape_cast %1151 : vector<1x1x32xf32> to vector<1x32xf32>
    %c3_454 = arith.constant 3 : index
    %c2_455 = arith.constant 2 : index
    %c0_456 = arith.constant 0 : index
    %1153 = vector.load %arg5[%c3_454, %c2_455, %c0_456] : memref<4x8x128xf32, #tpu.memory_space<vmem>>, vector<1x1x32xf32>
    %1154 = vector.shape_cast %1153 : vector<1x1x32xf32> to vector<1x32xf32>
    %c3_457 = arith.constant 3 : index
    %c3_458 = arith.constant 3 : index
    %c0_459 = arith.constant 0 : index
    %1155 = vector.load %arg5[%c3_457, %c3_458, %c0_459] : memref<4x8x128xf32, #tpu.memory_space<vmem>>, vector<1x1x32xf32>
    %1156 = vector.shape_cast %1155 : vector<1x1x32xf32> to vector<1x32xf32>
    %c3_460 = arith.constant 3 : index
    %c4_461 = arith.constant 4 : index
    %c0_462 = arith.constant 0 : index
    %1157 = vector.load %arg5[%c3_460, %c4_461, %c0_462] : memref<4x8x128xf32, #tpu.memory_space<vmem>>, vector<1x1x32xf32>
    %1158 = vector.shape_cast %1157 : vector<1x1x32xf32> to vector<1x32xf32>
    %c3_463 = arith.constant 3 : index
    %c5_464 = arith.constant 5 : index
    %c0_465 = arith.constant 0 : index
    %1159 = vector.load %arg5[%c3_463, %c5_464, %c0_465] : memref<4x8x128xf32, #tpu.memory_space<vmem>>, vector<1x1x128xf32>
    %1160 = vector.shape_cast %1159 : vector<1x1x128xf32> to vector<1x128xf32>
    %c3_466 = arith.constant 3 : index
    %c6_467 = arith.constant 6 : index
    %c0_468 = arith.constant 0 : index
    %1161 = vector.load %arg5[%c3_466, %c6_467, %c0_468] : memref<4x8x128xf32, #tpu.memory_space<vmem>>, vector<1x1x32xf32>
    %1162 = vector.shape_cast %1161 : vector<1x1x32xf32> to vector<1x32xf32>
    %c3_469 = arith.constant 3 : index
    %c0_470 = arith.constant 0 : index
    %c0_471 = arith.constant 0 : index
    %1163 = vector.load %arg4[%c3_469, %c0_470, %c0_471] : memref<4x128x288xbf16, #tpu.memory_space<vmem>>, vector<1x32x96xbf16>
    %1164 = vector.shape_cast %1163 : vector<1x32x96xbf16> to vector<32x96xbf16>
    %c3_472 = arith.constant 3 : index
    %c0_473 = arith.constant 0 : index
    %c96_474 = arith.constant 96 : index
    %1165 = vector.load %arg4[%c3_472, %c0_473, %c96_474] : memref<4x128x288xbf16, #tpu.memory_space<vmem>>, vector<1x32x32xbf16>
    %1166 = vector.shape_cast %1165 : vector<1x32x32xbf16> to vector<32x32xbf16>
    %c3_475 = arith.constant 3 : index
    %c0_476 = arith.constant 0 : index
    %c128_477 = arith.constant 128 : index
    %1167 = vector.load %arg4[%c3_475, %c0_476, %c128_477] : memref<4x128x288xbf16, #tpu.memory_space<vmem>>, vector<1x32x128xbf16>
    %1168 = vector.shape_cast %1167 : vector<1x32x128xbf16> to vector<32x128xbf16>
    %c3_478 = arith.constant 3 : index
    %c0_479 = arith.constant 0 : index
    %c256_480 = arith.constant 256 : index
    %1169 = vector.load %arg4[%c3_478, %c0_479, %c256_480] : memref<4x128x288xbf16, #tpu.memory_space<vmem>>, vector<1x128x32xbf16>
    %1170 = vector.shape_cast %1169 : vector<1x128x32xbf16> to vector<128x32xbf16>
    %cst_481 = arith.constant dense<0.000000e+00> : vector<48xf32>
    %1171 = vector.multi_reduction <add>, %1148, %cst_481 [1] : vector<48x32xf32> to vector<48xf32>
    %1172 = vector.shape_cast %1171 : vector<48xf32> to vector<48x1xf32>
    %cst_482 = arith.constant 3.200000e+01 : f32
    %1173 = vector.broadcast %cst_482 : f32 to vector<48x1xf32>
    %1174 = arith.divf %1172, %1173 : vector<48x1xf32>
    %1175 = vector.broadcast %1174 : vector<48x1xf32> to vector<48x32xf32>
    %1176 = arith.subf %1148, %1175 : vector<48x32xf32>
    %1177 = arith.mulf %1176, %1176 : vector<48x32xf32>
    %cst_483 = arith.constant dense<0.000000e+00> : vector<48xf32>
    %1178 = vector.multi_reduction <add>, %1177, %cst_483 [1] : vector<48x32xf32> to vector<48xf32>
    %1179 = vector.shape_cast %1178 : vector<48xf32> to vector<48x1xf32>
    %cst_484 = arith.constant 3.200000e+01 : f32
    %1180 = vector.broadcast %cst_484 : f32 to vector<48x1xf32>
    %1181 = arith.divf %1179, %1180 : vector<48x1xf32>
    %cst_485 = arith.constant 9.99999974E-6 : f32
    %1182 = vector.broadcast %cst_485 : f32 to vector<48x1xf32>
    %1183 = arith.addf %1181, %1182 : vector<48x1xf32>
    %1184 = math.rsqrt %1183 : vector<48x1xf32>
    %1185 = vector.broadcast %1184 : vector<48x1xf32> to vector<48x32xf32>
    %1186 = arith.mulf %1176, %1185 : vector<48x32xf32>
    %1187 = vector.broadcast %1150 : vector<1x32xf32> to vector<48x32xf32>
    %1188 = arith.mulf %1186, %1187 : vector<48x32xf32>
    %1189 = vector.broadcast %1152 : vector<1x32xf32> to vector<48x32xf32>
    %1190 = arith.addf %1188, %1189 : vector<48x32xf32>
    %1191 = arith.truncf %1190 : vector<48x32xf32> to vector<48x32xbf16>
    %cst_486 = arith.constant dense<0.000000e+00> : vector<48x96xf32>
    %1192 = tpu.matmul %1191, %1164, %cst_486 {dimension_numbers = #tpu.dot_dimension_numbers<[1], [0], [0], [1], [0, 0, 1, 1], [], []>} : vector<48x32xbf16>, vector<32x96xbf16>, vector<48x96xf32> -> vector<48x96xf32>
    %1193 = vector.extract_strided_slice %1192 {offsets = [0, 0], sizes = [24, 96], strides = [1, 1]} : vector<48x96xf32> to vector<24x96xf32>
    %1194 = vector.extract_strided_slice %1193 {offsets = [0, 0], sizes = [24, 8], strides = [1, 1]} : vector<24x96xf32> to vector<24x8xf32>
    %1195 = arith.truncf %1194 : vector<24x8xf32> to vector<24x8xbf16>
    %1196 = vector.extract_strided_slice %1193 {offsets = [0, 32], sizes = [24, 8], strides = [1, 1]} : vector<24x96xf32> to vector<24x8xf32>
    %1197 = arith.truncf %1196 : vector<24x8xf32> to vector<24x8xbf16>
    %1198 = vector.extract_strided_slice %1193 {offsets = [0, 64], sizes = [24, 8], strides = [1, 1]} : vector<24x96xf32> to vector<24x8xf32>
    %1199 = arith.truncf %1198 : vector<24x8xf32> to vector<24x8xbf16>
    %cst_487 = arith.constant dense<0.000000e+00> : vector<24x24xf32>
    %1200 = tpu.matmul %1195, %1197, %cst_487 {dimension_numbers = #tpu.dot_dimension_numbers<[1], [1], [0], [0], [0, 0, 1, 0], [], []>} : vector<24x8xbf16>, vector<24x8xbf16>, vector<24x24xf32> -> vector<24x24xf32>
    %cst_488 = arith.constant 0.353553385 : f32
    %1201 = vector.broadcast %cst_488 : f32 to vector<24x24xf32>
    %1202 = arith.mulf %1200, %1201 : vector<24x24xf32>
    %1203 = vector.broadcast %23 : vector<1x24xf32> to vector<24x24xf32>
    %1204 = arith.addf %1202, %1203 : vector<24x24xf32>
    %cst_489 = arith.constant dense<0xFF800000> : vector<24xf32>
    %1205 = vector.multi_reduction <maximumf>, %1204, %cst_489 [1] : vector<24x24xf32> to vector<24xf32>
    %1206 = vector.shape_cast %1205 : vector<24xf32> to vector<24x1xf32>
    %1207 = vector.broadcast %1206 : vector<24x1xf32> to vector<24x24xf32>
    %1208 = arith.subf %1204, %1207 : vector<24x24xf32>
    %1209 = math.exp %1208 : vector<24x24xf32>
    %cst_490 = arith.constant dense<0.000000e+00> : vector<24xf32>
    %1210 = vector.multi_reduction <add>, %1209, %cst_490 [1] : vector<24x24xf32> to vector<24xf32>
    %1211 = vector.shape_cast %1210 : vector<24xf32> to vector<24x1xf32>
    %1212 = tpu.reciprocal %1211 {approx = true} : vector<24x1xf32> -> vector<24x1xf32>
    %1213 = vector.broadcast %1212 : vector<24x1xf32> to vector<24x24xf32>
    %1214 = arith.mulf %1209, %1213 : vector<24x24xf32>
    %1215 = arith.truncf %1214 : vector<24x24xf32> to vector<24x24xbf16>
    %cst_491 = arith.constant dense<0.000000e+00> : vector<24x8xf32>
    %1216 = tpu.matmul %1215, %1199, %cst_491 {dimension_numbers = #tpu.dot_dimension_numbers<[1], [0], [0], [1], [0, 0, 1, 1], [], []>} : vector<24x24xbf16>, vector<24x8xbf16>, vector<24x8xf32> -> vector<24x8xf32>
    %1217 = vector.extract_strided_slice %1193 {offsets = [0, 8], sizes = [24, 8], strides = [1, 1]} : vector<24x96xf32> to vector<24x8xf32>
    %1218 = arith.truncf %1217 : vector<24x8xf32> to vector<24x8xbf16>
    %1219 = vector.extract_strided_slice %1193 {offsets = [0, 40], sizes = [24, 8], strides = [1, 1]} : vector<24x96xf32> to vector<24x8xf32>
    %1220 = arith.truncf %1219 : vector<24x8xf32> to vector<24x8xbf16>
    %1221 = vector.extract_strided_slice %1193 {offsets = [0, 72], sizes = [24, 8], strides = [1, 1]} : vector<24x96xf32> to vector<24x8xf32>
    %1222 = arith.truncf %1221 : vector<24x8xf32> to vector<24x8xbf16>
    %cst_492 = arith.constant dense<0.000000e+00> : vector<24x24xf32>
    %1223 = tpu.matmul %1218, %1220, %cst_492 {dimension_numbers = #tpu.dot_dimension_numbers<[1], [1], [0], [0], [0, 0, 1, 0], [], []>} : vector<24x8xbf16>, vector<24x8xbf16>, vector<24x24xf32> -> vector<24x24xf32>
    %cst_493 = arith.constant 0.353553385 : f32
    %1224 = vector.broadcast %cst_493 : f32 to vector<24x24xf32>
    %1225 = arith.mulf %1223, %1224 : vector<24x24xf32>
    %1226 = vector.broadcast %23 : vector<1x24xf32> to vector<24x24xf32>
    %1227 = arith.addf %1225, %1226 : vector<24x24xf32>
    %cst_494 = arith.constant dense<0xFF800000> : vector<24xf32>
    %1228 = vector.multi_reduction <maximumf>, %1227, %cst_494 [1] : vector<24x24xf32> to vector<24xf32>
    %1229 = vector.shape_cast %1228 : vector<24xf32> to vector<24x1xf32>
    %1230 = vector.broadcast %1229 : vector<24x1xf32> to vector<24x24xf32>
    %1231 = arith.subf %1227, %1230 : vector<24x24xf32>
    %1232 = math.exp %1231 : vector<24x24xf32>
    %cst_495 = arith.constant dense<0.000000e+00> : vector<24xf32>
    %1233 = vector.multi_reduction <add>, %1232, %cst_495 [1] : vector<24x24xf32> to vector<24xf32>
    %1234 = vector.shape_cast %1233 : vector<24xf32> to vector<24x1xf32>
    %1235 = tpu.reciprocal %1234 {approx = true} : vector<24x1xf32> -> vector<24x1xf32>
    %1236 = vector.broadcast %1235 : vector<24x1xf32> to vector<24x24xf32>
    %1237 = arith.mulf %1232, %1236 : vector<24x24xf32>
    %1238 = arith.truncf %1237 : vector<24x24xf32> to vector<24x24xbf16>
    %cst_496 = arith.constant dense<0.000000e+00> : vector<24x8xf32>
    %1239 = tpu.matmul %1238, %1222, %cst_496 {dimension_numbers = #tpu.dot_dimension_numbers<[1], [0], [0], [1], [0, 0, 1, 1], [], []>} : vector<24x24xbf16>, vector<24x8xbf16>, vector<24x8xf32> -> vector<24x8xf32>
    %1240 = vector.extract_strided_slice %1193 {offsets = [0, 16], sizes = [24, 8], strides = [1, 1]} : vector<24x96xf32> to vector<24x8xf32>
    %1241 = arith.truncf %1240 : vector<24x8xf32> to vector<24x8xbf16>
    %1242 = vector.extract_strided_slice %1193 {offsets = [0, 48], sizes = [24, 8], strides = [1, 1]} : vector<24x96xf32> to vector<24x8xf32>
    %1243 = arith.truncf %1242 : vector<24x8xf32> to vector<24x8xbf16>
    %1244 = vector.extract_strided_slice %1193 {offsets = [0, 80], sizes = [24, 8], strides = [1, 1]} : vector<24x96xf32> to vector<24x8xf32>
    %1245 = arith.truncf %1244 : vector<24x8xf32> to vector<24x8xbf16>
    %cst_497 = arith.constant dense<0.000000e+00> : vector<24x24xf32>
    %1246 = tpu.matmul %1241, %1243, %cst_497 {dimension_numbers = #tpu.dot_dimension_numbers<[1], [1], [0], [0], [0, 0, 1, 0], [], []>} : vector<24x8xbf16>, vector<24x8xbf16>, vector<24x24xf32> -> vector<24x24xf32>
    %cst_498 = arith.constant 0.353553385 : f32
    %1247 = vector.broadcast %cst_498 : f32 to vector<24x24xf32>
    %1248 = arith.mulf %1246, %1247 : vector<24x24xf32>
    %1249 = vector.broadcast %23 : vector<1x24xf32> to vector<24x24xf32>
    %1250 = arith.addf %1248, %1249 : vector<24x24xf32>
    %cst_499 = arith.constant dense<0xFF800000> : vector<24xf32>
    %1251 = vector.multi_reduction <maximumf>, %1250, %cst_499 [1] : vector<24x24xf32> to vector<24xf32>
    %1252 = vector.shape_cast %1251 : vector<24xf32> to vector<24x1xf32>
    %1253 = vector.broadcast %1252 : vector<24x1xf32> to vector<24x24xf32>
    %1254 = arith.subf %1250, %1253 : vector<24x24xf32>
    %1255 = math.exp %1254 : vector<24x24xf32>
    %cst_500 = arith.constant dense<0.000000e+00> : vector<24xf32>
    %1256 = vector.multi_reduction <add>, %1255, %cst_500 [1] : vector<24x24xf32> to vector<24xf32>
    %1257 = vector.shape_cast %1256 : vector<24xf32> to vector<24x1xf32>
    %1258 = tpu.reciprocal %1257 {approx = true} : vector<24x1xf32> -> vector<24x1xf32>
    %1259 = vector.broadcast %1258 : vector<24x1xf32> to vector<24x24xf32>
    %1260 = arith.mulf %1255, %1259 : vector<24x24xf32>
    %1261 = arith.truncf %1260 : vector<24x24xf32> to vector<24x24xbf16>
    %cst_501 = arith.constant dense<0.000000e+00> : vector<24x8xf32>
    %1262 = tpu.matmul %1261, %1245, %cst_501 {dimension_numbers = #tpu.dot_dimension_numbers<[1], [0], [0], [1], [0, 0, 1, 1], [], []>} : vector<24x24xbf16>, vector<24x8xbf16>, vector<24x8xf32> -> vector<24x8xf32>
    %1263 = vector.extract_strided_slice %1193 {offsets = [0, 24], sizes = [24, 8], strides = [1, 1]} : vector<24x96xf32> to vector<24x8xf32>
    %1264 = arith.truncf %1263 : vector<24x8xf32> to vector<24x8xbf16>
    %1265 = vector.extract_strided_slice %1193 {offsets = [0, 56], sizes = [24, 8], strides = [1, 1]} : vector<24x96xf32> to vector<24x8xf32>
    %1266 = arith.truncf %1265 : vector<24x8xf32> to vector<24x8xbf16>
    %1267 = vector.extract_strided_slice %1193 {offsets = [0, 88], sizes = [24, 8], strides = [1, 1]} : vector<24x96xf32> to vector<24x8xf32>
    %1268 = arith.truncf %1267 : vector<24x8xf32> to vector<24x8xbf16>
    %cst_502 = arith.constant dense<0.000000e+00> : vector<24x24xf32>
    %1269 = tpu.matmul %1264, %1266, %cst_502 {dimension_numbers = #tpu.dot_dimension_numbers<[1], [1], [0], [0], [0, 0, 1, 0], [], []>} : vector<24x8xbf16>, vector<24x8xbf16>, vector<24x24xf32> -> vector<24x24xf32>
    %cst_503 = arith.constant 0.353553385 : f32
    %1270 = vector.broadcast %cst_503 : f32 to vector<24x24xf32>
    %1271 = arith.mulf %1269, %1270 : vector<24x24xf32>
    %1272 = vector.broadcast %23 : vector<1x24xf32> to vector<24x24xf32>
    %1273 = arith.addf %1271, %1272 : vector<24x24xf32>
    %cst_504 = arith.constant dense<0xFF800000> : vector<24xf32>
    %1274 = vector.multi_reduction <maximumf>, %1273, %cst_504 [1] : vector<24x24xf32> to vector<24xf32>
    %1275 = vector.shape_cast %1274 : vector<24xf32> to vector<24x1xf32>
    %1276 = vector.broadcast %1275 : vector<24x1xf32> to vector<24x24xf32>
    %1277 = arith.subf %1273, %1276 : vector<24x24xf32>
    %1278 = math.exp %1277 : vector<24x24xf32>
    %cst_505 = arith.constant dense<0.000000e+00> : vector<24xf32>
    %1279 = vector.multi_reduction <add>, %1278, %cst_505 [1] : vector<24x24xf32> to vector<24xf32>
    %1280 = vector.shape_cast %1279 : vector<24xf32> to vector<24x1xf32>
    %1281 = tpu.reciprocal %1280 {approx = true} : vector<24x1xf32> -> vector<24x1xf32>
    %1282 = vector.broadcast %1281 : vector<24x1xf32> to vector<24x24xf32>
    %1283 = arith.mulf %1278, %1282 : vector<24x24xf32>
    %1284 = arith.truncf %1283 : vector<24x24xf32> to vector<24x24xbf16>
    %cst_506 = arith.constant dense<0.000000e+00> : vector<24x8xf32>
    %1285 = tpu.matmul %1284, %1268, %cst_506 {dimension_numbers = #tpu.dot_dimension_numbers<[1], [0], [0], [1], [0, 0, 1, 1], [], []>} : vector<24x24xbf16>, vector<24x8xbf16>, vector<24x8xf32> -> vector<24x8xf32>
    %1286 = tpu.concatenate %1216, %1239, %1262, %1285 in 1 : vector<24x8xf32>, vector<24x8xf32>, vector<24x8xf32>, vector<24x8xf32> -> vector<24x32xf32>
    %1287 = vector.extract_strided_slice %1192 {offsets = [24, 0], sizes = [24, 96], strides = [1, 1]} : vector<48x96xf32> to vector<24x96xf32>
    %1288 = vector.extract_strided_slice %1287 {offsets = [0, 0], sizes = [24, 8], strides = [1, 1]} : vector<24x96xf32> to vector<24x8xf32>
    %1289 = arith.truncf %1288 : vector<24x8xf32> to vector<24x8xbf16>
    %1290 = vector.extract_strided_slice %1287 {offsets = [0, 32], sizes = [24, 8], strides = [1, 1]} : vector<24x96xf32> to vector<24x8xf32>
    %1291 = arith.truncf %1290 : vector<24x8xf32> to vector<24x8xbf16>
    %1292 = vector.extract_strided_slice %1287 {offsets = [0, 64], sizes = [24, 8], strides = [1, 1]} : vector<24x96xf32> to vector<24x8xf32>
    %1293 = arith.truncf %1292 : vector<24x8xf32> to vector<24x8xbf16>
    %cst_507 = arith.constant dense<0.000000e+00> : vector<24x24xf32>
    %1294 = tpu.matmul %1289, %1291, %cst_507 {dimension_numbers = #tpu.dot_dimension_numbers<[1], [1], [0], [0], [0, 0, 1, 0], [], []>} : vector<24x8xbf16>, vector<24x8xbf16>, vector<24x24xf32> -> vector<24x24xf32>
    %cst_508 = arith.constant 0.353553385 : f32
    %1295 = vector.broadcast %cst_508 : f32 to vector<24x24xf32>
    %1296 = arith.mulf %1294, %1295 : vector<24x24xf32>
    %1297 = vector.broadcast %23 : vector<1x24xf32> to vector<24x24xf32>
    %1298 = arith.addf %1296, %1297 : vector<24x24xf32>
    %cst_509 = arith.constant dense<0xFF800000> : vector<24xf32>
    %1299 = vector.multi_reduction <maximumf>, %1298, %cst_509 [1] : vector<24x24xf32> to vector<24xf32>
    %1300 = vector.shape_cast %1299 : vector<24xf32> to vector<24x1xf32>
    %1301 = vector.broadcast %1300 : vector<24x1xf32> to vector<24x24xf32>
    %1302 = arith.subf %1298, %1301 : vector<24x24xf32>
    %1303 = math.exp %1302 : vector<24x24xf32>
    %cst_510 = arith.constant dense<0.000000e+00> : vector<24xf32>
    %1304 = vector.multi_reduction <add>, %1303, %cst_510 [1] : vector<24x24xf32> to vector<24xf32>
    %1305 = vector.shape_cast %1304 : vector<24xf32> to vector<24x1xf32>
    %1306 = tpu.reciprocal %1305 {approx = true} : vector<24x1xf32> -> vector<24x1xf32>
    %1307 = vector.broadcast %1306 : vector<24x1xf32> to vector<24x24xf32>
    %1308 = arith.mulf %1303, %1307 : vector<24x24xf32>
    %1309 = arith.truncf %1308 : vector<24x24xf32> to vector<24x24xbf16>
    %cst_511 = arith.constant dense<0.000000e+00> : vector<24x8xf32>
    %1310 = tpu.matmul %1309, %1293, %cst_511 {dimension_numbers = #tpu.dot_dimension_numbers<[1], [0], [0], [1], [0, 0, 1, 1], [], []>} : vector<24x24xbf16>, vector<24x8xbf16>, vector<24x8xf32> -> vector<24x8xf32>
    %1311 = vector.extract_strided_slice %1287 {offsets = [0, 8], sizes = [24, 8], strides = [1, 1]} : vector<24x96xf32> to vector<24x8xf32>
    %1312 = arith.truncf %1311 : vector<24x8xf32> to vector<24x8xbf16>
    %1313 = vector.extract_strided_slice %1287 {offsets = [0, 40], sizes = [24, 8], strides = [1, 1]} : vector<24x96xf32> to vector<24x8xf32>
    %1314 = arith.truncf %1313 : vector<24x8xf32> to vector<24x8xbf16>
    %1315 = vector.extract_strided_slice %1287 {offsets = [0, 72], sizes = [24, 8], strides = [1, 1]} : vector<24x96xf32> to vector<24x8xf32>
    %1316 = arith.truncf %1315 : vector<24x8xf32> to vector<24x8xbf16>
    %cst_512 = arith.constant dense<0.000000e+00> : vector<24x24xf32>
    %1317 = tpu.matmul %1312, %1314, %cst_512 {dimension_numbers = #tpu.dot_dimension_numbers<[1], [1], [0], [0], [0, 0, 1, 0], [], []>} : vector<24x8xbf16>, vector<24x8xbf16>, vector<24x24xf32> -> vector<24x24xf32>
    %cst_513 = arith.constant 0.353553385 : f32
    %1318 = vector.broadcast %cst_513 : f32 to vector<24x24xf32>
    %1319 = arith.mulf %1317, %1318 : vector<24x24xf32>
    %1320 = vector.broadcast %23 : vector<1x24xf32> to vector<24x24xf32>
    %1321 = arith.addf %1319, %1320 : vector<24x24xf32>
    %cst_514 = arith.constant dense<0xFF800000> : vector<24xf32>
    %1322 = vector.multi_reduction <maximumf>, %1321, %cst_514 [1] : vector<24x24xf32> to vector<24xf32>
    %1323 = vector.shape_cast %1322 : vector<24xf32> to vector<24x1xf32>
    %1324 = vector.broadcast %1323 : vector<24x1xf32> to vector<24x24xf32>
    %1325 = arith.subf %1321, %1324 : vector<24x24xf32>
    %1326 = math.exp %1325 : vector<24x24xf32>
    %cst_515 = arith.constant dense<0.000000e+00> : vector<24xf32>
    %1327 = vector.multi_reduction <add>, %1326, %cst_515 [1] : vector<24x24xf32> to vector<24xf32>
    %1328 = vector.shape_cast %1327 : vector<24xf32> to vector<24x1xf32>
    %1329 = tpu.reciprocal %1328 {approx = true} : vector<24x1xf32> -> vector<24x1xf32>
    %1330 = vector.broadcast %1329 : vector<24x1xf32> to vector<24x24xf32>
    %1331 = arith.mulf %1326, %1330 : vector<24x24xf32>
    %1332 = arith.truncf %1331 : vector<24x24xf32> to vector<24x24xbf16>
    %cst_516 = arith.constant dense<0.000000e+00> : vector<24x8xf32>
    %1333 = tpu.matmul %1332, %1316, %cst_516 {dimension_numbers = #tpu.dot_dimension_numbers<[1], [0], [0], [1], [0, 0, 1, 1], [], []>} : vector<24x24xbf16>, vector<24x8xbf16>, vector<24x8xf32> -> vector<24x8xf32>
    %1334 = vector.extract_strided_slice %1287 {offsets = [0, 16], sizes = [24, 8], strides = [1, 1]} : vector<24x96xf32> to vector<24x8xf32>
    %1335 = arith.truncf %1334 : vector<24x8xf32> to vector<24x8xbf16>
    %1336 = vector.extract_strided_slice %1287 {offsets = [0, 48], sizes = [24, 8], strides = [1, 1]} : vector<24x96xf32> to vector<24x8xf32>
    %1337 = arith.truncf %1336 : vector<24x8xf32> to vector<24x8xbf16>
    %1338 = vector.extract_strided_slice %1287 {offsets = [0, 80], sizes = [24, 8], strides = [1, 1]} : vector<24x96xf32> to vector<24x8xf32>
    %1339 = arith.truncf %1338 : vector<24x8xf32> to vector<24x8xbf16>
    %cst_517 = arith.constant dense<0.000000e+00> : vector<24x24xf32>
    %1340 = tpu.matmul %1335, %1337, %cst_517 {dimension_numbers = #tpu.dot_dimension_numbers<[1], [1], [0], [0], [0, 0, 1, 0], [], []>} : vector<24x8xbf16>, vector<24x8xbf16>, vector<24x24xf32> -> vector<24x24xf32>
    %cst_518 = arith.constant 0.353553385 : f32
    %1341 = vector.broadcast %cst_518 : f32 to vector<24x24xf32>
    %1342 = arith.mulf %1340, %1341 : vector<24x24xf32>
    %1343 = vector.broadcast %23 : vector<1x24xf32> to vector<24x24xf32>
    %1344 = arith.addf %1342, %1343 : vector<24x24xf32>
    %cst_519 = arith.constant dense<0xFF800000> : vector<24xf32>
    %1345 = vector.multi_reduction <maximumf>, %1344, %cst_519 [1] : vector<24x24xf32> to vector<24xf32>
    %1346 = vector.shape_cast %1345 : vector<24xf32> to vector<24x1xf32>
    %1347 = vector.broadcast %1346 : vector<24x1xf32> to vector<24x24xf32>
    %1348 = arith.subf %1344, %1347 : vector<24x24xf32>
    %1349 = math.exp %1348 : vector<24x24xf32>
    %cst_520 = arith.constant dense<0.000000e+00> : vector<24xf32>
    %1350 = vector.multi_reduction <add>, %1349, %cst_520 [1] : vector<24x24xf32> to vector<24xf32>
    %1351 = vector.shape_cast %1350 : vector<24xf32> to vector<24x1xf32>
    %1352 = tpu.reciprocal %1351 {approx = true} : vector<24x1xf32> -> vector<24x1xf32>
    %1353 = vector.broadcast %1352 : vector<24x1xf32> to vector<24x24xf32>
    %1354 = arith.mulf %1349, %1353 : vector<24x24xf32>
    %1355 = arith.truncf %1354 : vector<24x24xf32> to vector<24x24xbf16>
    %cst_521 = arith.constant dense<0.000000e+00> : vector<24x8xf32>
    %1356 = tpu.matmul %1355, %1339, %cst_521 {dimension_numbers = #tpu.dot_dimension_numbers<[1], [0], [0], [1], [0, 0, 1, 1], [], []>} : vector<24x24xbf16>, vector<24x8xbf16>, vector<24x8xf32> -> vector<24x8xf32>
    %1357 = vector.extract_strided_slice %1287 {offsets = [0, 24], sizes = [24, 8], strides = [1, 1]} : vector<24x96xf32> to vector<24x8xf32>
    %1358 = arith.truncf %1357 : vector<24x8xf32> to vector<24x8xbf16>
    %1359 = vector.extract_strided_slice %1287 {offsets = [0, 56], sizes = [24, 8], strides = [1, 1]} : vector<24x96xf32> to vector<24x8xf32>
    %1360 = arith.truncf %1359 : vector<24x8xf32> to vector<24x8xbf16>
    %1361 = vector.extract_strided_slice %1287 {offsets = [0, 88], sizes = [24, 8], strides = [1, 1]} : vector<24x96xf32> to vector<24x8xf32>
    %1362 = arith.truncf %1361 : vector<24x8xf32> to vector<24x8xbf16>
    %cst_522 = arith.constant dense<0.000000e+00> : vector<24x24xf32>
    %1363 = tpu.matmul %1358, %1360, %cst_522 {dimension_numbers = #tpu.dot_dimension_numbers<[1], [1], [0], [0], [0, 0, 1, 0], [], []>} : vector<24x8xbf16>, vector<24x8xbf16>, vector<24x24xf32> -> vector<24x24xf32>
    %cst_523 = arith.constant 0.353553385 : f32
    %1364 = vector.broadcast %cst_523 : f32 to vector<24x24xf32>
    %1365 = arith.mulf %1363, %1364 : vector<24x24xf32>
    %1366 = vector.broadcast %23 : vector<1x24xf32> to vector<24x24xf32>
    %1367 = arith.addf %1365, %1366 : vector<24x24xf32>
    %cst_524 = arith.constant dense<0xFF800000> : vector<24xf32>
    %1368 = vector.multi_reduction <maximumf>, %1367, %cst_524 [1] : vector<24x24xf32> to vector<24xf32>
    %1369 = vector.shape_cast %1368 : vector<24xf32> to vector<24x1xf32>
    %1370 = vector.broadcast %1369 : vector<24x1xf32> to vector<24x24xf32>
    %1371 = arith.subf %1367, %1370 : vector<24x24xf32>
    %1372 = math.exp %1371 : vector<24x24xf32>
    %cst_525 = arith.constant dense<0.000000e+00> : vector<24xf32>
    %1373 = vector.multi_reduction <add>, %1372, %cst_525 [1] : vector<24x24xf32> to vector<24xf32>
    %1374 = vector.shape_cast %1373 : vector<24xf32> to vector<24x1xf32>
    %1375 = tpu.reciprocal %1374 {approx = true} : vector<24x1xf32> -> vector<24x1xf32>
    %1376 = vector.broadcast %1375 : vector<24x1xf32> to vector<24x24xf32>
    %1377 = arith.mulf %1372, %1376 : vector<24x24xf32>
    %1378 = arith.truncf %1377 : vector<24x24xf32> to vector<24x24xbf16>
    %cst_526 = arith.constant dense<0.000000e+00> : vector<24x8xf32>
    %1379 = tpu.matmul %1378, %1362, %cst_526 {dimension_numbers = #tpu.dot_dimension_numbers<[1], [0], [0], [1], [0, 0, 1, 1], [], []>} : vector<24x24xbf16>, vector<24x8xbf16>, vector<24x8xf32> -> vector<24x8xf32>
    %1380 = tpu.concatenate %1310, %1333, %1356, %1379 in 1 : vector<24x8xf32>, vector<24x8xf32>, vector<24x8xf32>, vector<24x8xf32> -> vector<24x32xf32>
    %1381 = tpu.concatenate %1286, %1380 in 0 : vector<24x32xf32>, vector<24x32xf32> -> vector<48x32xf32>
    %1382 = arith.truncf %1381 : vector<48x32xf32> to vector<48x32xbf16>
    %cst_527 = arith.constant dense<0.000000e+00> : vector<48x32xf32>
    %1383 = tpu.matmul %1382, %1166, %cst_527 {dimension_numbers = #tpu.dot_dimension_numbers<[1], [0], [0], [1], [0, 0, 1, 1], [], []>} : vector<48x32xbf16>, vector<32x32xbf16>, vector<48x32xf32> -> vector<48x32xf32>
    %1384 = arith.addf %1148, %1383 : vector<48x32xf32>
    %1385 = vector.broadcast %1154 : vector<1x32xf32> to vector<48x32xf32>
    %1386 = arith.addf %1384, %1385 : vector<48x32xf32>
    %cst_528 = arith.constant dense<0.000000e+00> : vector<48xf32>
    %1387 = vector.multi_reduction <add>, %1386, %cst_528 [1] : vector<48x32xf32> to vector<48xf32>
    %1388 = vector.shape_cast %1387 : vector<48xf32> to vector<48x1xf32>
    %cst_529 = arith.constant 3.200000e+01 : f32
    %1389 = vector.broadcast %cst_529 : f32 to vector<48x1xf32>
    %1390 = arith.divf %1388, %1389 : vector<48x1xf32>
    %1391 = vector.broadcast %1390 : vector<48x1xf32> to vector<48x32xf32>
    %1392 = arith.subf %1386, %1391 : vector<48x32xf32>
    %1393 = arith.mulf %1392, %1392 : vector<48x32xf32>
    %cst_530 = arith.constant dense<0.000000e+00> : vector<48xf32>
    %1394 = vector.multi_reduction <add>, %1393, %cst_530 [1] : vector<48x32xf32> to vector<48xf32>
    %1395 = vector.shape_cast %1394 : vector<48xf32> to vector<48x1xf32>
    %cst_531 = arith.constant 3.200000e+01 : f32
    %1396 = vector.broadcast %cst_531 : f32 to vector<48x1xf32>
    %1397 = arith.divf %1395, %1396 : vector<48x1xf32>
    %cst_532 = arith.constant 9.99999974E-6 : f32
    %1398 = vector.broadcast %cst_532 : f32 to vector<48x1xf32>
    %1399 = arith.addf %1397, %1398 : vector<48x1xf32>
    %1400 = math.rsqrt %1399 : vector<48x1xf32>
    %1401 = vector.broadcast %1400 : vector<48x1xf32> to vector<48x32xf32>
    %1402 = arith.mulf %1392, %1401 : vector<48x32xf32>
    %1403 = vector.broadcast %1156 : vector<1x32xf32> to vector<48x32xf32>
    %1404 = arith.mulf %1402, %1403 : vector<48x32xf32>
    %1405 = vector.broadcast %1158 : vector<1x32xf32> to vector<48x32xf32>
    %1406 = arith.addf %1404, %1405 : vector<48x32xf32>
    %1407 = arith.truncf %1406 : vector<48x32xf32> to vector<48x32xbf16>
    %cst_533 = arith.constant dense<0.000000e+00> : vector<48x128xf32>
    %1408 = tpu.matmul %1407, %1168, %cst_533 {dimension_numbers = #tpu.dot_dimension_numbers<[1], [0], [0], [1], [0, 0, 1, 1], [], []>} : vector<48x32xbf16>, vector<32x128xbf16>, vector<48x128xf32> -> vector<48x128xf32>
    %1409 = vector.broadcast %1160 : vector<1x128xf32> to vector<48x128xf32>
    %1410 = arith.addf %1408, %1409 : vector<48x128xf32>
    %cst_534 = arith.constant 5.000000e-01 : f32
    %1411 = vector.broadcast %cst_534 : f32 to vector<48x128xf32>
    %1412 = arith.mulf %1411, %1410 : vector<48x128xf32>
    %cst_535 = arith.constant 0.707106769 : f32
    %1413 = vector.broadcast %cst_535 : f32 to vector<48x128xf32>
    %1414 = arith.mulf %1410, %1413 : vector<48x128xf32>
    %cst_536 = arith.constant 0.000000e+00 : f32
    %1415 = vector.broadcast %cst_536 : f32 to vector<48x128xf32>
    %1416 = arith.cmpf oge, %1414, %1415 : vector<48x128xf32>
    %cst_537 = arith.constant 1.000000e+00 : f32
    %cst_538 = arith.constant -1.000000e+00 : f32
    %1417 = vector.broadcast %cst_537 : f32 to vector<48x128xf32>
    %1418 = vector.broadcast %cst_538 : f32 to vector<48x128xf32>
    %1419 = arith.select %1416, %1417, %1418 : vector<48x128xi1>, vector<48x128xf32>
    %1420 = math.absf %1414 : vector<48x128xf32>
    %cst_539 = arith.constant 0.327591091 : f32
    %1421 = vector.broadcast %cst_539 : f32 to vector<48x128xf32>
    %1422 = arith.mulf %1421, %1420 : vector<48x128xf32>
    %cst_540 = arith.constant 1.000000e+00 : f32
    %1423 = vector.broadcast %cst_540 : f32 to vector<48x128xf32>
    %1424 = arith.addf %1423, %1422 : vector<48x128xf32>
    %cst_541 = arith.constant 1.000000e+00 : f32
    %1425 = vector.broadcast %cst_541 : f32 to vector<48x128xf32>
    %1426 = arith.divf %1425, %1424 : vector<48x128xf32>
    %cst_542 = arith.constant 1.06140542 : f32
    %1427 = vector.broadcast %cst_542 : f32 to vector<48x128xf32>
    %1428 = arith.mulf %1427, %1426 : vector<48x128xf32>
    %cst_543 = arith.constant -1.45315206 : f32
    %1429 = vector.broadcast %cst_543 : f32 to vector<48x128xf32>
    %1430 = arith.addf %1428, %1429 : vector<48x128xf32>
    %1431 = arith.mulf %1430, %1426 : vector<48x128xf32>
    %cst_544 = arith.constant 1.42141378 : f32
    %1432 = vector.broadcast %cst_544 : f32 to vector<48x128xf32>
    %1433 = arith.addf %1431, %1432 : vector<48x128xf32>
    %1434 = arith.mulf %1433, %1426 : vector<48x128xf32>
    %cst_545 = arith.constant -0.284496725 : f32
    %1435 = vector.broadcast %cst_545 : f32 to vector<48x128xf32>
    %1436 = arith.addf %1434, %1435 : vector<48x128xf32>
    %1437 = arith.mulf %1436, %1426 : vector<48x128xf32>
    %cst_546 = arith.constant 0.254829586 : f32
    %1438 = vector.broadcast %cst_546 : f32 to vector<48x128xf32>
    %1439 = arith.addf %1437, %1438 : vector<48x128xf32>
    %1440 = arith.mulf %1439, %1426 : vector<48x128xf32>
    %cst_547 = arith.constant 0.000000e+00 : f32
    %1441 = vector.broadcast %cst_547 : f32 to vector<48x128xf32>
    %1442 = arith.subf %1441, %1420 : vector<48x128xf32>
    %1443 = arith.mulf %1442, %1420 : vector<48x128xf32>
    %1444 = math.exp %1443 : vector<48x128xf32>
    %1445 = arith.mulf %1440, %1444 : vector<48x128xf32>
    %cst_548 = arith.constant 1.000000e+00 : f32
    %1446 = vector.broadcast %cst_548 : f32 to vector<48x128xf32>
    %1447 = arith.subf %1446, %1445 : vector<48x128xf32>
    %1448 = arith.mulf %1419, %1447 : vector<48x128xf32>
    %cst_549 = arith.constant 1.000000e+00 : f32
    %1449 = vector.broadcast %cst_549 : f32 to vector<48x128xf32>
    %1450 = arith.addf %1449, %1448 : vector<48x128xf32>
    %1451 = arith.mulf %1412, %1450 : vector<48x128xf32>
    %1452 = arith.truncf %1451 : vector<48x128xf32> to vector<48x128xbf16>
    %cst_550 = arith.constant dense<0.000000e+00> : vector<48x32xf32>
    %1453 = tpu.matmul %1452, %1170, %cst_550 {dimension_numbers = #tpu.dot_dimension_numbers<[1], [0], [0], [1], [0, 0, 1, 1], [], []>} : vector<48x128xbf16>, vector<128x32xbf16>, vector<48x32xf32> -> vector<48x32xf32>
    %1454 = arith.addf %1386, %1453 : vector<48x32xf32>
    %1455 = vector.broadcast %1162 : vector<1x32xf32> to vector<48x32xf32>
    %1456 = arith.addf %1454, %1455 : vector<48x32xf32>
    %1457 = vector.extract_strided_slice %1456 {offsets = [16, 0], sizes = [1, 32], strides = [1, 1]} : vector<48x32xf32> to vector<1x32xf32>
    %1458 = vector.extract_strided_slice %1456 {offsets = [40, 0], sizes = [1, 32], strides = [1, 1]} : vector<48x32xf32> to vector<1x32xf32>
    %cst_551 = arith.constant 0.000000e+00 : f32
    %1459 = vector.broadcast %cst_551 : f32 to vector<6x32xf32>
    %1460 = tpu.concatenate %1457, %1458, %1459 in 0 : vector<1x32xf32>, vector<1x32xf32>, vector<6x32xf32> -> vector<8x32xf32>
    %c17 = arith.constant 17 : index
    %c0_552 = arith.constant 0 : index
    %1461 = vector.load %arg2[%c17, %c0_552] : memref<24x128xf32, #tpu.memory_space<vmem>>, vector<1x32xf32>
    %c18 = arith.constant 18 : index
    %c0_553 = arith.constant 0 : index
    %1462 = vector.load %arg2[%c18, %c0_553] : memref<24x128xf32, #tpu.memory_space<vmem>>, vector<1x32xf32>
    %c19 = arith.constant 19 : index
    %c0_554 = arith.constant 0 : index
    %1463 = vector.load %arg2[%c19, %c0_554] : memref<24x128xf32, #tpu.memory_space<vmem>>, vector<1x128xf32>
    %cst_555 = arith.constant dense<0.000000e+00> : vector<8xf32>
    %1464 = vector.multi_reduction <add>, %1460, %cst_555 [1] : vector<8x32xf32> to vector<8xf32>
    %1465 = vector.shape_cast %1464 : vector<8xf32> to vector<8x1xf32>
    %cst_556 = arith.constant 3.200000e+01 : f32
    %1466 = vector.broadcast %cst_556 : f32 to vector<8x1xf32>
    %1467 = arith.divf %1465, %1466 : vector<8x1xf32>
    %1468 = vector.broadcast %1467 : vector<8x1xf32> to vector<8x32xf32>
    %1469 = arith.subf %1460, %1468 : vector<8x32xf32>
    %1470 = arith.mulf %1469, %1469 : vector<8x32xf32>
    %cst_557 = arith.constant dense<0.000000e+00> : vector<8xf32>
    %1471 = vector.multi_reduction <add>, %1470, %cst_557 [1] : vector<8x32xf32> to vector<8xf32>
    %1472 = vector.shape_cast %1471 : vector<8xf32> to vector<8x1xf32>
    %cst_558 = arith.constant 3.200000e+01 : f32
    %1473 = vector.broadcast %cst_558 : f32 to vector<8x1xf32>
    %1474 = arith.divf %1472, %1473 : vector<8x1xf32>
    %cst_559 = arith.constant 9.99999974E-6 : f32
    %1475 = vector.broadcast %cst_559 : f32 to vector<8x1xf32>
    %1476 = arith.addf %1474, %1475 : vector<8x1xf32>
    %1477 = math.rsqrt %1476 : vector<8x1xf32>
    %1478 = vector.broadcast %1477 : vector<8x1xf32> to vector<8x32xf32>
    %1479 = arith.mulf %1469, %1478 : vector<8x32xf32>
    %1480 = vector.broadcast %1461 : vector<1x32xf32> to vector<8x32xf32>
    %1481 = arith.mulf %1479, %1480 : vector<8x32xf32>
    %1482 = vector.broadcast %1462 : vector<1x32xf32> to vector<8x32xf32>
    %1483 = arith.addf %1481, %1482 : vector<8x32xf32>
    %1484 = arith.truncf %1483 : vector<8x32xf32> to vector<8x32xbf16>
    %c0_560 = arith.constant 0 : index
    %c0_561 = arith.constant 0 : index
    %1485 = vector.load %arg7[%c0_560, %c0_561] : memref<32x128xbf16, #tpu.memory_space<vmem>>, vector<32x128xbf16>
    %cst_562 = arith.constant dense<0.000000e+00> : vector<8x128xf32>
    %1486 = tpu.matmul %1484, %1485, %cst_562 {dimension_numbers = #tpu.dot_dimension_numbers<[1], [0], [0], [1], [0, 0, 1, 1], [], []>} : vector<8x32xbf16>, vector<32x128xbf16>, vector<8x128xf32> -> vector<8x128xf32>
    %1487 = vector.broadcast %1463 : vector<1x128xf32> to vector<8x128xf32>
    %1488 = arith.addf %1486, %1487 : vector<8x128xf32>
    %c0_563 = arith.constant 0 : index
    %c0_564 = arith.constant 0 : index
    %c0_565 = arith.constant 0 : index
    %1489 = vector.load %arg8[%c0_563, %c0_564, %c0_565] : memref<1x8x128xf32, #tpu.memory_space<vmem>>, vector<1x8x128xf32>
    %1490 = vector.shape_cast %1489 : vector<1x8x128xf32> to vector<8x128xf32>
    %1491 = vector.shape_cast %1488 : vector<8x128xf32> to vector<1x8x128xf32>
    tpu.vector_store %arg8[%c0_563, %c0_564, %c0_565], %1491 {strides = array<i32>} : memref<1x8x128xf32, #tpu.memory_space<vmem>>, vector<1x8x128xf32>,
    return
  }
  func.func @transform_0(%arg0: i32) -> (i32, i32, i32) {
    %c0_i32 = arith.constant 0 : i32
    %c0_i32_0 = arith.constant 0 : i32
    %c0_i32_1 = arith.constant 0 : i32
    return %arg0, %c0_i32, %c0_i32_0 : i32, i32, i32
  }
  func.func @transform_1(%arg0: i32) -> (i32, i32) {
    %c0_i32 = arith.constant 0 : i32
    %c0_i32_0 = arith.constant 0 : i32
    %c0_i32_1 = arith.constant 0 : i32
    return %c0_i32, %c0_i32_0 : i32, i32
  }
  func.func @transform_2(%arg0: i32) -> (i32, i32) {
    %c0_i32 = arith.constant 0 : i32
    %c0_i32_0 = arith.constant 0 : i32
    %c0_i32_1 = arith.constant 0 : i32
    return %c0_i32, %c0_i32_0 : i32, i32
  }
  func.func @transform_3(%arg0: i32) -> (i32, i32, i32) {
    %c0_i32 = arith.constant 0 : i32
    %c0_i32_0 = arith.constant 0 : i32
    %c0_i32_1 = arith.constant 0 : i32
    %c0_i32_2 = arith.constant 0 : i32
    return %c0_i32, %c0_i32_0, %c0_i32_1 : i32, i32, i32
  }
  func.func @transform_4(%arg0: i32) -> (i32, i32, i32) {
    %c0_i32 = arith.constant 0 : i32
    %c0_i32_0 = arith.constant 0 : i32
    %c0_i32_1 = arith.constant 0 : i32
    %c0_i32_2 = arith.constant 0 : i32
    return %c0_i32, %c0_i32_0, %c0_i32_1 : i32, i32, i32
  }
  func.func @transform_5(%arg0: i32) -> (i32, i32, i32, i32) {
    %c0_i32 = arith.constant 0 : i32
    %c0_i32_0 = arith.constant 0 : i32
    %c0_i32_1 = arith.constant 0 : i32
    %c0_i32_2 = arith.constant 0 : i32
    %c0_i32_3 = arith.constant 0 : i32
    return %c0_i32, %c0_i32_0, %c0_i32_1, %c0_i32_2 : i32, i32, i32, i32
  }
  func.func @transform_6(%arg0: i32) -> (i32, i32) {
    %c0_i32 = arith.constant 0 : i32
    %c0_i32_0 = arith.constant 0 : i32
    %c0_i32_1 = arith.constant 0 : i32
    return %c0_i32, %c0_i32_0 : i32, i32
  }
  func.func @transform_7(%arg0: i32) -> (i32, i32, i32) {
    %c0_i32 = arith.constant 0 : i32
    %c0_i32_0 = arith.constant 0 : i32
    %c0_i32_1 = arith.constant 0 : i32
    return %arg0, %c0_i32, %c0_i32_0 : i32, i32, i32
  }
}

</mosaic_0001>

<llo_original>
// kernel: custom-call
$region0: #{custom-call}
  %s0 = inlined_call_operand.vmem [shape: f32[2,10], index: 0, kind: output, shape index: {}]

// kernel: _convit_forward_impl.1
$region0: #{_convit_forward_impl.1}
  #allocation0 [shape = 'u32[]', space=smem, size = 0x4, offset = 0x4, fixed_abs, tag = 'smem constant byte address 0x4 - core index']
  #allocation1 [shape = 'u32[72,128]{1,0:T(1,128)}', space=vmem, size = 0x9000, scoped, tag = 'internal scratch']
  %s0 = inlined_call_operand.vmem [shape: bf16[2,16,48], index: 0, kind: input, shape index: {}]
  %s1 = inlined_call_operand.vmem [shape: f32[24,128], index: 1, kind: input, shape index: {}]
  %s2 = inlined_call_operand.vmem [shape: bf16[48,32], index: 2, kind: input, shape index: {}]
  %s3 = inlined_call_operand.vmem [shape: bf16[4,128,288], index: 3, kind: input, shape index: {}]
  %s4 = inlined_call_operand.vmem [shape: f32[4,8,128], index: 4, kind: input, shape index: {}]
  %s5 = inlined_call_operand.vmem [shape: f32[2,4,24,24], index: 5, kind: input, shape index: {}]
  %s6 = inlined_call_operand.vmem [shape: bf16[32,128], index: 6, kind: input, shape index: {}]
  %s7 = inlined_call_operand.vmem [shape: f32[1,8,128], index: 7, kind: output, shape index: {}]
  %s8 = sld [smem:[#allocation0]]
  $region38: #{_convit_forward_impl.1} parent=0
    _
  %s10 = ssub.s32 1, %s8
  %s11 = scalar_select 0, %s10, %s8
  // Predicated region
  $region2: #{_convit_forward_impl.1} parent=0 // pred_check
    _
  $region3: #{_convit_forward_impl.1} parent=0 // pred_check_branch
    %13 = sbr.rel (0) target = $region5
  $region4: #{_convit_forward_impl.1} parent=0 // pred_region
    _
  $region5: #{_convit_forward_impl.1} parent=0 // pred_fallthru
    _
  // Predicated region
  $region6: #{_convit_forward_impl.1} parent=0 // pred_check
    _
  $region7: #{_convit_forward_impl.1} parent=0 // pred_check_branch
    %15 = sbr.rel (0) target = $region9
  $region8: #{_convit_forward_impl.1} parent=0 // pred_region
    _
  $region9: #{_convit_forward_impl.1} parent=0 // pred_fallthru
    _
  // Predicated region
  $region10: #{_convit_forward_impl.1} parent=0 // pred_check
    _
  $region11: #{_convit_forward_impl.1} parent=0 // pred_check_branch
    %17 = sbr.rel (0) target = $region13
  $region12: #{_convit_forward_impl.1} parent=0 // pred_region
    _
  $region13: #{_convit_forward_impl.1} parent=0 // pred_fallthru
    _
  // Predicated region
  $region14: #{_convit_forward_impl.1} parent=0 // pred_check
    _
  $region15: #{_convit_forward_impl.1} parent=0 // pred_check_branch
    %19 = sbr.rel (0) target = $region17
  $region16: #{_convit_forward_impl.1} parent=0 // pred_region
    _
  $region17: #{_convit_forward_impl.1} parent=0 // pred_fallthru
    _
  // Predicated region
  $region18: #{_convit_forward_impl.1} parent=0 // pred_check
    _
  $region19: #{_convit_forward_impl.1} parent=0 // pred_check_branch
    %21 = sbr.rel (0) target = $region21
  $region20: #{_convit_forward_impl.1} parent=0 // pred_region
    _
  $region21: #{_convit_forward_impl.1} parent=0 // pred_fallthru
    _
  // Predicated region
  $region22: #{_convit_forward_impl.1} parent=0 // pred_check
    _
  $region23: #{_convit_forward_impl.1} parent=0 // pred_check_branch
    %23 = sbr.rel (0) target = $region25
  $region24: #{_convit_forward_impl.1} parent=0 // pred_region
    _
  $region25: #{_convit_forward_impl.1} parent=0 // pred_fallthru
    _
  // Predicated region
  $region26: #{_convit_forward_impl.1} parent=0 // pred_check
    _
  $region27: #{_convit_forward_impl.1} parent=0 // pred_check_branch
    %25 = sbr.rel (0) target = $region29
  $region28: #{_convit_forward_impl.1} parent=0 // pred_region
    _
  $region29: #{_convit_forward_impl.1} parent=0 // pred_fallthru
    _
  %v27 = vld [vmem:[%s1] sm:$0xff]
  %v28 = vld [vmem:[%s1 + $0x8] sm:$0xff]
  %v29 = vld [vmem:[%s2] sm:$0xf]
  %v30 = vld [vmem:[%s2 + $0x4] sm:$0xf]
  %v31 = vld [vmem:[%s2 + $0x8] sm:$0xf]
  %v32 = vld [vmem:[%s2 + $0xc] sm:$0xf]
  %v33 = vld [vmem:[%s2 + $0x10] sm:$0xf]
  %v34 = vld [vmem:[%s2 + $0x14] sm:$0xf]
  %v35 = vld [vmem:[%s0] sm:$0xf]
  %v36 = vld [vmem:[%s0 + $0x4] sm:$0xf]
  %v39 = vunpack.c.l.b16 %v35
  %v40 = vunpack.c.l.b16 %v36
  %v41 = vpack.c.b16 %v40, %v39
  %v48 = vunpack.c.l.b16 %v29
  %v49 = vunpack.c.l.b16 %v30
  %v50 = vunpack.c.l.b16 %v31
  %v51 = vunpack.c.l.b16 %v32
  %v52 = vunpack.c.l.b16 %v33
  %v53 = vunpack.c.l.b16 %v34
  %v54 = vpack.c.b16 %v49, %v48
  %v55 = vpack.c.b16 %v51, %v50
  %v56 = vpack.c.b16 %v53, %v52
  %vm60 = vcmask 392192
  %v62 = vsel %vm60, %v41, 0
  %64 = vmatpush.bf16.msra.mxu0 0
  %65 = vmatpush.bf16.msra.mxu0 0
  %66 = vmatpush.bf16.msra.mxu0 0
  %67 = vmatpush.bf16.msra.mxu0 0
  %68 = vmatpush.bf16.msra.mxu0 0
  %69 = vmatpush.bf16.msra.mxu0 %v56
  %70 = vmatpush.bf16.msra.mxu0 %v55
  %71 = vmatpush.bf16.msra.mxu0 %v54
  %72 = vmatmul.bf16.gmra.mxu0 %v62
  %v73 = vpop.f32.mrf.mxu0
  %v74 = vadd.f32 %v27, %v73
  %v75 = vpop.f32.mrf.mxu0
  %v76 = vadd.f32 %v28, %v75
  %77 = vdwg.mxu0
  %s78 = scalar_lea.vmem %s0, 8
  %v79 = vld [vmem:[%s78] sm:$0xf]
  %v80 = vld [vmem:[%s78 + $0x4] sm:$0xf]
  %v83 = vunpack.c.l.b16 %v79
  %v84 = vunpack.c.l.b16 %v80
  %v85 = vpack.c.b16 %v84, %v83
  %v87 = vsel %vm60, %v85, 0
  %89 = vmatpush.bf16.msra.mxu0 0
  %90 = vmatpush.bf16.msra.mxu0 0
  %91 = vmatpush.bf16.msra.mxu0 0
  %92 = vmatpush.bf16.msra.mxu0 0
  %93 = vmatpush.bf16.msra.mxu0 0
  %94 = vmatpush.bf16.msra.mxu0 %v56
  %95 = vmatpush.bf16.msra.mxu0 %v55
  %96 = vmatpush.bf16.msra.mxu0 %v54
  %97 = vmatmul.bf16.gmra.mxu0 %v87
  %v98 = vpop.f32.mrf.mxu0
  %v99 = vadd.f32 %v27, %v98
  %v100 = vpop.f32.mrf.mxu0
  %v101 = vadd.f32 %v28, %v100
  %102 = vdwg.mxu0
  %v103 = vlaneseq
  %v104 = vand.u32 %v103, 127
  %vm105 = vcmp.lt.s32.totalorder %v104, 16
  %v106 = vsel %vm105, 0.0, -1e+30
  %vm107 = vcmp.lt.s32.totalorder %v104, 17
  %v108 = vsel %vm107, 0.0, -1e+30
  %v109 = vld [vmem:[%s4] sm:$0x1]
  %v110 = vld [vmem:[%s4 + $0x1] sm:$0x1]
  %v111 = vld [vmem:[%s4 + $0x2] sm:$0x1]
  %v112 = vld [vmem:[%s4 + $0x3] sm:$0x1]
  %v113 = vld [vmem:[%s4 + $0x4] sm:$0x1]
  %v114 = vld [vmem:[%s4 + $0x5] sm:$0x1]
  %v115 = vld [vmem:[%s4 + $0x6] sm:$0x1]
  %v116 = vld [vmem:[%s3] sm:$0xf]
  %v117 = vld [vmem:[%s3 + $0xc] sm:$0xf]
  %v118 = vld [vmem:[%s3 + $0x18] sm:$0xf]
  %v119 = vld [vmem:[%s3 + $0x24] sm:$0xf]
  %v120 = vld [vmem:[%s3 + $0x4] sm:$0xf]
  %v121 = vld [vmem:[%s3 + $0x10] sm:$0xf]
  %v122 = vld [vmem:[%s3 + $0x1c] sm:$0xf]
  %v123 = vld [vmem:[%s3 + $0x28] sm:$0xf]
  %v124 = vld [vmem:[%s3 + $0x8] sm:$0xf]
  %v125 = vld [vmem:[%s3 + $0x14] sm:$0xf]
  %v126 = vld [vmem:[%s3 + $0x20] sm:$0xf]
  %v127 = vld [vmem:[%s3 + $0x2c] sm:$0xf]
  %v128 = vld [vmem:[%s3 + $0x38] sm:$0xf]
  %v129 = vld [vmem:[%s3 + $0x44] sm:$0xf]
  %v130 = vld [vmem:[%s3 + $0x50] sm:$0xf]
  %v131 = vld [vmem:[%s3 + $0x5c] sm:$0xf]
  %v132 = vld [vmem:[%s3 + $0x68] sm:$0xf]
  %v133 = vld [vmem:[%s3 + $0x74] sm:$0xf]
  %v134 = vld [vmem:[%s3 + $0x80] sm:$0xf]
  %v135 = vld [vmem:[%s3 + $0x8c] sm:$0xf]
  %v136 = vld [vmem:[%s3 + $0x98] sm:$0xf]
  %v137 = vld [vmem:[%s3 + $0xa4] sm:$0xf]
  %v138 = vld [vmem:[%s3 + $0xb0] sm:$0xf]
  %v139 = vld [vmem:[%s3 + $0xbc] sm:$0xf]
  %vm140 = vcmask 261120
  %v141 = vsel %vm140, %v74, 0.0
  %142 = vadd.xlane.f32.xlu0 %v141
  %v143 = vpop.xlane.xlu0 %142
  %v144 = vsel %vm140, %v76, 0.0
  %145 = vadd.xlane.f32.xlu0 %v144
  %v146 = vpop.xlane.xlu0 %145
  %147 = vadd.xlane.f32.xlu0 0.0
  %v148 = vpop.xlane.xlu0 %147
  %v149 = vsel %vm140, %v99, 0.0
  %150 = vadd.xlane.f32.xlu0 %v149
  %v151 = vpop.xlane.xlu0 %150
  %v152 = vsel %vm140, %v101, 0.0
  %153 = vadd.xlane.f32.xlu0 %v152
  %v154 = vpop.xlane.xlu0 %153
  %v155 = vrcp.pop 32.0
  %v156 = vmul.f32 32.0, %v155
  %v157 = vsub.f32 1.0, %v156
  %v158 = vmul.f32 %v155, %v157
  %v159 = vadd.f32 %v155, %v158
  %vm160 = vweird.f32 %v155
  %v161 = vsel %vm160, %v155, %v159
  %v162 = vmul.f32 %v143, %v161
  %v163 = vmul.f32 %v146, %v161
  %v164 = vmul.f32 %v148, %v161
  %v165 = vmul.f32 %v151, %v161
  %v166 = vmul.f32 %v154, %v161
  %v167 = vsub.f32 %v74, %v162
  %v168 = vsub.f32 %v76, %v163
  %v169 = vsub.f32 0.0, %v164
  %v170 = vsub.f32 %v99, %v165
  %v171 = vsub.f32 %v101, %v166
  %v172 = vmul.f32 %v167, %v167
  %v173 = vmul.f32 %v168, %v168
  %v174 = vmul.f32 %v169, %v169
  %v175 = vmul.f32 %v170, %v170
  %v176 = vmul.f32 %v171, %v171
  %v177 = vsel %vm140, %v172, 0.0
  %178 = vadd.xlane.f32.xlu0 %v177
  %v179 = vpop.xlane.xlu0 %178
  %v180 = vsel %vm140, %v173, 0.0
  %181 = vadd.xlane.f32.xlu0 %v180
  %v182 = vpop.xlane.xlu0 %181
  %v183 = vsel %vm140, %v174, 0.0
  %184 = vadd.xlane.f32.xlu0 %v183
  %v185 = vpop.xlane.xlu0 %184
  %v186 = vsel %vm140, %v175, 0.0
  %187 = vadd.xlane.f32.xlu0 %v186
  %v188 = vpop.xlane.xlu0 %187
  %v189 = vsel %vm140, %v176, 0.0
  %190 = vadd.xlane.f32.xlu0 %v189
  %v191 = vpop.xlane.xlu0 %190
  %v192 = vmul.f32 %v179, %v161
  %v193 = vmul.f32 %v182, %v161
  %v194 = vmul.f32 %v185, %v161
  %v195 = vmul.f32 %v188, %v161
  %v196 = vmul.f32 %v191, %v161
  %v197 = vadd.f32 %v192, 1e-05
  %v198 = vadd.f32 %v193, 1e-05
  %v199 = vadd.f32 %v194, 1e-05
  %v200 = vadd.f32 %v195, 1e-05
  %v201 = vadd.f32 %v196, 1e-05
  %v202 = vrsqrt.pop %v197
  %v203 = vmul.f32 %v202, %v197
  %v204 = vmul.f32 %v203, %v202
  %v205 = vmul.f32 0.5, %v204
  %v206 = vsub.f32 1.5, %v205
  %v207 = vmul.f32 %v202, %v206
  %vm208 = vweird.f32 %v197
  %vm209 = vweird.f32 %v202
  %vm210 = vmor %vm208, %vm209
  %v211 = vsel %vm210, %v202, %v207
  %v212 = vrsqrt.pop %v198
  %v213 = vmul.f32 %v212, %v198
  %v214 = vmul.f32 %v213, %v212
  %v215 = vmul.f32 0.5, %v214
  %v216 = vsub.f32 1.5, %v215
  %v217 = vmul.f32 %v212, %v216
  %vm218 = vweird.f32 %v198
  %vm219 = vweird.f32 %v212
  %vm220 = vmor %vm218, %vm219
  %v221 = vsel %vm220, %v212, %v217
  %v222 = vrsqrt.pop %v199
  %v223 = vmul.f32 %v222, %v199
  %v224 = vmul.f32 %v223, %v222
  %v225 = vmul.f32 0.5, %v224
  %v226 = vsub.f32 1.5, %v225
  %v227 = vmul.f32 %v222, %v226
  %vm228 = vweird.f32 %v199
  %vm229 = vweird.f32 %v222
  %vm230 = vmor %vm228, %vm229
  %v231 = vsel %vm230, %v222, %v227
  %v232 = vrsqrt.pop %v200
  %v233 = vmul.f32 %v232, %v200
  %v234 = vmul.f32 %v233, %v232
  %v235 = vmul.f32 0.5, %v234
  %v236 = vsub.f32 1.5, %v235
  %v237 = vmul.f32 %v232, %v236
  %vm238 = vweird.f32 %v200
  %vm239 = vweird.f32 %v232
  %vm240 = vmor %vm238, %vm239
  %v241 = vsel %vm240, %v232, %v237
  %v242 = vrsqrt.pop %v201
  %v243 = vmul.f32 %v242, %v201
  %v244 = vmul.f32 %v243, %v242
  %v245 = vmul.f32 0.5, %v244
  %v246 = vsub.f32 1.5, %v245
  %v247 = vmul.f32 %v242, %v246
  %vm248 = vweird.f32 %v201
  %vm249 = vweird.f32 %v242
  %vm250 = vmor %vm248, %vm249
  %v251 = vsel %vm250, %v242, %v247
  %v252 = vmul.f32 %v167, %v211
  %v253 = vmul.f32 %v168, %v221
  %v254 = vmul.f32 %v169, %v231
  %v255 = vmul.f32 %v170, %v241
  %v256 = vmul.f32 %v171, %v251
  %v257 = vperm.slane %v109, 0
  %v258 = vmul.f32 %v252, %v257
  %v259 = vmul.f32 %v253, %v257
  %v260 = vmul.f32 %v254, %v257
  %v261 = vmul.f32 %v255, %v257
  %v262 = vmul.f32 %v256, %v257
  %v263 = vperm.slane %v110, 0
  %v264 = vadd.f32 %v258, %v263
  %v265 = vadd.f32 %v259, %v263
  %v266 = vadd.f32 %v260, %v263
  %v267 = vadd.f32 %v261, %v263
  %v268 = vadd.f32 %v262, %v263
  %v269 = vpack.c.bf16 %v265, %v264
  %v270 = vpack.c.bf16 %v267, %v266
  %v271 = vpack.c.bf16 %v266, %v268
  %v276 = vunpack.c.l.b16 %v116
  %v277 = vunpack.c.l.b16 %v117
  %v278 = vunpack.c.l.b16 %v118
  %v279 = vunpack.c.l.b16 %v119
  %v280 = vpack.c.b16 %v277, %v276
  %v281 = vpack.c.b16 %v279, %v278
  %v285 = vsel %vm140, %v269, 0
  %v288 = vsel %vm140, %v270, 0
  %v291 = vsel %vm140, %v271, 0
  %293 = vmatpush.bf16.msra.mxu0 0
  %294 = vmatpush.bf16.msra.mxu0 0
  %295 = vmatpush.bf16.msra.mxu0 0
  %296 = vmatpush.bf16.msra.mxu0 0
  %297 = vmatpush.bf16.msra.mxu0 0
  %298 = vmatpush.bf16.msra.mxu0 0
  %299 = vmatpush.bf16.msra.mxu0 %v281
  %300 = vmatpush.bf16.msra.mxu0 %v280
  %301 = vmatmul.bf16.gmra.mxu0 %v285
  %v302 = vpop.f32.mrf.mxu0
  %v303 = vadd.f32 0.0, %v302
  %v304 = vpop.f32.mrf.mxu0
  %v305 = vadd.f32 0.0, %v304
  %306 = vmatmul.bf16.gmra.mxu0 %v288
  %v307 = vpop.f32.mrf.mxu0
  %v308 = vadd.f32 0.0, %v307
  %v309 = vpop.f32.mrf.mxu0
  %v310 = vadd.f32 0.0, %v309
  %311 = vmatmul.bf16.gmra.mxu0 %v291
  %v312 = vpop.f32.mrf.mxu0
  %v313 = vadd.f32 0.0, %v312
  %v314 = vpop.f32.mrf.mxu0
  %v315 = vadd.f32 0.0, %v314
  %316 = vdwg.mxu0
  %v317 = vpack.c.bf16 %v305, %v303
  %v318 = vpack.c.bf16 %v308, %v308
  %321 = vrot.lane.b32.xlu0 %v317, 96
  %v322 = vpop.permute.xlu0 %321
  %323 = vrot.lane.b32.xlu0 %v318, 96
  %v324 = vpop.permute.xlu0 %323
  %vm325 = vcmask 64512
  %v327 = vsel %vm325, %v317, 0
  %v330 = vsel %vm325, %v318, 0
  %v333 = vsel %vm325, %v322, 0
  %v336 = vsel %vm325, %v324, 0
  %338 = vmatpush.bf16.xpose.msra.mxu0 0
  %339 = vmatpush.bf16.xpose.msra.mxu0 0
  %340 = vmatpush.bf16.xpose.msra.mxu0 0
  %341 = vmatpush.bf16.xpose.msra.mxu0 0
  %342 = vmatpush.bf16.xpose.msra.mxu0 0
  %343 = vmatpush.bf16.xpose.msra.mxu0 0
  %344 = vmatpush.bf16.xpose.msra.mxu0 %v336
  %345 = vmatpush.bf16.xpose.msra.mxu0 %v333
  %346 = vmatmul.bf16.gmra.mxu0 %v327
  %v347 = vpop.f32.mrf.mxu0
  %v348 = vadd.f32 0.0, %v347
  %v349 = vpop.f32.mrf.mxu0
  %v350 = vadd.f32 0.0, %v349
  %351 = vmatmul.bf16.gmra.mxu0 %v330
  %v352 = vpop.f32.mrf.mxu0
  %v353 = vadd.f32 0.0, %v352
  %v354 = vpop.f32.mrf.mxu0
  %355 = vdwg.mxu0
  %v356 = vmul.f32 %v348, 0.35355338
  %v357 = vmul.f32 %v350, 0.35355338
  %v358 = vmul.f32 %v353, 0.35355338
  %v359 = vadd.f32 %v356, %v106
  %v360 = vadd.f32 %v357, %v106
  %v361 = vadd.f32 %v358, %v106
  %vm362 = vcmask 195584
  %v363 = vsel %vm362, %v359, -inf
  %364 = vmax.xlane.f32.xlu0 %v363
  %v365 = vpop.xlane.xlu0 %364
  %v366 = vsel %vm362, %v360, -inf
  %367 = vmax.xlane.f32.xlu0 %v366
  %v368 = vpop.xlane.xlu0 %367
  %v369 = vsel %vm362, %v361, -inf
  %370 = vmax.xlane.f32.xlu0 %v369
  %v371 = vpop.xlane.xlu0 %370
  %v372 = vsub.f32 %v359, %v365
  %v373 = vsub.f32 %v360, %v368
  %v374 = vsub.f32 %v361, %v371
  %v375 = vmul.f32 %v372, 1.442695
  %v376 = vpow.pop %v375
  %v377 = vmul.f32 %v373, 1.442695
  %v378 = vpow.pop %v377
  %v379 = vmul.f32 %v374, 1.442695
  %v380 = vpow.pop %v379
  %v381 = vsel %vm362, %v376, 0.0
  %382 = vadd.xlane.f32.xlu0 %v381
  %v383 = vpop.xlane.xlu0 %382
  %v384 = vsel %vm362, %v378, 0.0
  %385 = vadd.xlane.f32.xlu0 %v384
  %v386 = vpop.xlane.xlu0 %385
  %v387 = vsel %vm362, %v380, 0.0
  %388 = vadd.xlane.f32.xlu0 %v387
  %v389 = vpop.xlane.xlu0 %388
  %v390 = vrcp.pop %v383
  %v391 = vrcp.pop %v386
  %v392 = vrcp.pop %v389
  %v393 = vmul.f32 %v376, %v390
  %v394 = vmul.f32 %v378, %v391
  %v395 = vmul.f32 %v380, %v392
  %v396 = vld [vmem:[%s4 + $0x7] sm:$0x1]
  %s398 = vtos %v396
  %v399 = vstv %s398
  %v401 = vmul.f32 %v399, %v393
  %v402 = vmul.f32 %v399, %v394
  %v403 = vmul.f32 %v399, %v395
  %v404 = vld [vmem:[%s5] sm:$0xff]
  %v405 = vld [vmem:[%s5 + $0x8] sm:$0xff]
  %v406 = vld [vmem:[%s5 + $0x10] sm:$0xff]
  %v407 = vadd.f32 %v401, %v404
  %v408 = vadd.f32 %v402, %v405
  %v409 = vadd.f32 %v403, %v406
  %v410 = vsel %vm362, %v407, 0.0
  %411 = vadd.xlane.f32.xlu0 %v410
  %v412 = vpop.xlane.xlu0 %411
  %v413 = vsel %vm362, %v408, 0.0
  %414 = vadd.xlane.f32.xlu0 %v413
  %v415 = vpop.xlane.xlu0 %414
  %v416 = vsel %vm362, %v409, 0.0
  %417 = vadd.xlane.f32.xlu0 %v416
  %v418 = vpop.xlane.xlu0 %417
  %v419 = vrcp.pop %v412
  %v420 = vmul.f32 %v412, %v419
  %v421 = vsub.f32 1.0, %v420
  %v422 = vmul.f32 %v419, %v421
  %v423 = vadd.f32 %v419, %v422
  %vm424 = vweird.f32 %v412
  %vm425 = vweird.f32 %v419
  %vm426 = vmor %vm424, %vm425
  %v427 = vsel %vm426, %v419, %v423
  %v428 = vand.u32 2147483647, %v412
  %vm429 = vcmp.eq.f32.partialorder %v428, 8.507059e+37
  %v430 = vand.u32 %v412, 2147483648
  %v431 = vor.u32 1.1754944e-38, %v430
  %v432 = vsel %vm429, %v431, %v427
  %v433 = vmul.f32 %v407, %v432
  %v434 = vrcp.pop %v415
  %v435 = vmul.f32 %v415, %v434
  %v436 = vsub.f32 1.0, %v435
  %v437 = vmul.f32 %v434, %v436
  %v438 = vadd.f32 %v434, %v437
  %vm439 = vweird.f32 %v415
  %vm440 = vweird.f32 %v434
  %vm441 = vmor %vm439, %vm440
  %v442 = vsel %vm441, %v434, %v438
  %v443 = vand.u32 2147483647, %v415
  %vm444 = vcmp.eq.f32.partialorder %v443, 8.507059e+37
  %v445 = vand.u32 %v415, 2147483648
  %v446 = vor.u32 1.1754944e-38, %v445
  %v447 = vsel %vm444, %v446, %v442
  %v448 = vmul.f32 %v408, %v447
  %v449 = vrcp.pop %v418
  %v450 = vmul.f32 %v418, %v449
  %v451 = vsub.f32 1.0, %v450
  %v452 = vmul.f32 %v449, %v451
  %v453 = vadd.f32 %v449, %v452
  %vm454 = vweird.f32 %v418
  %vm455 = vweird.f32 %v449
  %vm456 = vmor %vm454, %vm455
  %v457 = vsel %vm456, %v449, %v453
  %v458 = vand.u32 2147483647, %v418
  %vm459 = vcmp.eq.f32.partialorder %v458, 8.507059e+37
  %v460 = vand.u32 %v418, 2147483648
  %v461 = vor.u32 1.1754944e-38, %v460
  %v462 = vsel %vm459, %v461, %v457
  %v463 = vmul.f32 %v409, %v462
  %v464 = vpack.c.bf16 %v448, %v433
  %v465 = vpack.c.bf16 %v463, %v463
  %466 = vrot.lane.b32.xlu0 %v317, 64
  %v467 = vpop.permute.xlu0 %466
  %468 = vrot.lane.b32.xlu0 %v318, 64
  %v469 = vpop.permute.xlu0 %468
  %v472 = vsel %vm362, %v464, 0
  %v475 = vsel %vm362, %v465, 0
  %vm477 = vcmask 1043456
  %v479 = vsel %vm477, %v469, 0
  %481 = vmatpush.bf16.msra.mxu0 0
  %482 = vmatpush.bf16.msra.mxu0 0
  %483 = vmatpush.bf16.msra.mxu0 0
  %484 = vmatpush.bf16.msra.mxu0 0
  %485 = vmatpush.bf16.msra.mxu0 0
  %486 = vmatpush.bf16.msra.mxu0 0
  %487 = vmatpush.bf16.msra.mxu0 %v479
  %488 = vmatpush.bf16.msra.mxu0 %v467
  %489 = vmatmul.bf16.gmra.mxu0 %v472
  %v490 = vpop.f32.mrf.mxu0
  %v491 = vadd.f32 0.0, %v490
  %v492 = vpop.f32.mrf.mxu0
  %v493 = vadd.f32 0.0, %v492
  %494 = vmatmul.bf16.gmra.mxu0 %v475
  %v495 = vpop.f32.mrf.mxu0
  %v496 = vadd.f32 0.0, %v495
  %v497 = vpop.f32.mrf.mxu0
  %498 = vdwg.mxu0
  %499 = vrot.lane.b32.xlu0 %v317, 120
  %v500 = vpop.permute.xlu0 %499
  %501 = vrot.lane.b32.xlu0 %v318, 120
  %v502 = vpop.permute.xlu0 %501
  %503 = vrot.lane.b32.xlu0 %v317, 88
  %v504 = vpop.permute.xlu0 %503
  %505 = vrot.lane.b32.xlu0 %v318, 88
  %v506 = vpop.permute.xlu0 %505
  %v508 = vsel %vm325, %v500, 0
  %v511 = vsel %vm325, %v502, 0
  %v514 = vsel %vm325, %v504, 0
  %v517 = vsel %vm325, %v506, 0
  %519 = vmatpush.bf16.xpose.msra.mxu0 0
  %520 = vmatpush.bf16.xpose.msra.mxu0 0
  %521 = vmatpush.bf16.xpose.msra.mxu0 0
  %522 = vmatpush.bf16.xpose.msra.mxu0 0
  %523 = vmatpush.bf16.xpose.msra.mxu0 0
  %524 = vmatpush.bf16.xpose.msra.mxu0 0
  %525 = vmatpush.bf16.xpose.msra.mxu0 %v517
  %526 = vmatpush.bf16.xpose.msra.mxu0 %v514
  %527 = vmatmul.bf16.gmra.mxu0 %v508
  %v528 = vpop.f32.mrf.mxu0
  %v529 = vadd.f32 0.0, %v528
  %v530 = vpop.f32.mrf.mxu0
  %v531 = vadd.f32 0.0, %v530
  %532 = vmatmul.bf16.gmra.mxu0 %v511
  %v533 = vpop.f32.mrf.mxu0
  %v534 = vadd.f32 0.0, %v533
  %v535 = vpop.f32.mrf.mxu0
  %536 = vdwg.mxu0
  %v537 = vmul.f32 %v529, 0.35355338
  %v538 = vmul.f32 %v531, 0.35355338
  %v539 = vmul.f32 %v534, 0.35355338
  %v540 = vadd.f32 %v537, %v106
  %v541 = vadd.f32 %v538, %v106
  %v542 = vadd.f32 %v539, %v106
  %v543 = vsel %vm362, %v540, -inf
  %544 = vmax.xlane.f32.xlu0 %v543
  %v545 = vpop.xlane.xlu0 %544
  %v546 = vsel %vm362, %v541, -inf
  %547 = vmax.xlane.f32.xlu0 %v546
  %v548 = vpop.xlane.xlu0 %547
  %v549 = vsel %vm362, %v542, -inf
  %550 = vmax.xlane.f32.xlu0 %v549
  %v551 = vpop.xlane.xlu0 %550
  %v552 = vsub.f32 %v540, %v545
  %v553 = vsub.f32 %v541, %v548
  %v554 = vsub.f32 %v542, %v551
  %v555 = vmul.f32 %v552, 1.442695
  %v556 = vpow.pop %v555
  %v557 = vmul.f32 %v553, 1.442695
  %v558 = vpow.pop %v557
  %v559 = vmul.f32 %v554, 1.442695
  %v560 = vpow.pop %v559
  %v561 = vsel %vm362, %v556, 0.0
  %562 = vadd.xlane.f32.xlu0 %v561
  %v563 = vpop.xlane.xlu0 %562
  %v564 = vsel %vm362, %v558, 0.0
  %565 = vadd.xlane.f32.xlu0 %v564
  %v566 = vpop.xlane.xlu0 %565
  %v567 = vsel %vm362, %v560, 0.0
  %568 = vadd.xlane.f32.xlu0 %v567
  %v569 = vpop.xlane.xlu0 %568
  %v570 = vrcp.pop %v563
  %v571 = vrcp.pop %v566
  %v572 = vrcp.pop %v569
  %v573 = vmul.f32 %v556, %v570
  %v574 = vmul.f32 %v558, %v571
  %v575 = vmul.f32 %v560, %v572
  %576 = vrot.lane.b32.xlu0 %v396, 127
  %v577 = vpop.permute.xlu0 %576
  %s578 = vtos %v577
  %v579 = vstv %s578
  %v581 = vmul.f32 %v579, %v573
  %v582 = vmul.f32 %v579, %v574
  %v583 = vmul.f32 %v579, %v575
  %s584 = scalar_lea.vmem %s5, 24
  %v585 = vld [vmem:[%s584] sm:$0xff]
  %v586 = vld [vmem:[%s584 + $0x8] sm:$0xff]
  %v587 = vld [vmem:[%s584 + $0x10] sm:$0xff]
  %v588 = vadd.f32 %v581, %v585
  %v589 = vadd.f32 %v582, %v586
  %v590 = vadd.f32 %v583, %v587
  %v591 = vsel %vm362, %v588, 0.0
  %592 = vadd.xlane.f32.xlu0 %v591
  %v593 = vpop.xlane.xlu0 %592
  %v594 = vsel %vm362, %v589, 0.0
  %595 = vadd.xlane.f32.xlu0 %v594
  %v596 = vpop.xlane.xlu0 %595
  %v597 = vsel %vm362, %v590, 0.0
  %598 = vadd.xlane.f32.xlu0 %v597
  %v599 = vpop.xlane.xlu0 %598
  %v600 = vrcp.pop %v593
  %v601 = vmul.f32 %v593, %v600
  %v602 = vsub.f32 1.0, %v601
  %v603 = vmul.f32 %v600, %v602
  %v604 = vadd.f32 %v600, %v603
  %vm605 = vweird.f32 %v593
  %vm606 = vweird.f32 %v600
  %vm607 = vmor %vm605, %vm606
  %v608 = vsel %vm607, %v600, %v604
  %v609 = vand.u32 2147483647, %v593
  %vm610 = vcmp.eq.f32.partialorder %v609, 8.507059e+37
  %v611 = vand.u32 %v593, 2147483648
  %v612 = vor.u32 1.1754944e-38, %v611
  %v613 = vsel %vm610, %v612, %v608
  %v614 = vmul.f32 %v588, %v613
  %v615 = vrcp.pop %v596
  %v616 = vmul.f32 %v596, %v615
  %v617 = vsub.f32 1.0, %v616
  %v618 = vmul.f32 %v615, %v617
  %v619 = vadd.f32 %v615, %v618
  %vm620 = vweird.f32 %v596
  %vm621 = vweird.f32 %v615
  %vm622 = vmor %vm620, %vm621
  %v623 = vsel %vm622, %v615, %v619
  %v624 = vand.u32 2147483647, %v596
  %vm625 = vcmp.eq.f32.partialorder %v624, 8.507059e+37
  %v626 = vand.u32 %v596, 2147483648
  %v627 = vor.u32 1.1754944e-38, %v626
  %v628 = vsel %vm625, %v627, %v623
  %v629 = vmul.f32 %v589, %v628
  %v630 = vrcp.pop %v599
  %v631 = vmul.f32 %v599, %v630
  %v632 = vsub.f32 1.0, %v631
  %v633 = vmul.f32 %v630, %v632
  %v634 = vadd.f32 %v630, %v633
  %vm635 = vweird.f32 %v599
  %vm636 = vweird.f32 %v630
  %vm637 = vmor %vm635, %vm636
  %v638 = vsel %vm637, %v630, %v634
  %v639 = vand.u32 2147483647, %v599
  %vm640 = vcmp.eq.f32.partialorder %v639, 8.507059e+37
  %v641 = vand.u32 %v599, 2147483648
  %v642 = vor.u32 1.1754944e-38, %v641
  %v643 = vsel %vm640, %v642, %v638
  %v644 = vmul.f32 %v590, %v643
  %v645 = vpack.c.bf16 %v629, %v614
  %v646 = vpack.c.bf16 %v644, %v644
  %647 = vrot.lane.b32.xlu0 %v317, 56
  %v648 = vpop.permute.xlu0 %647
  %649 = vrot.lane.b32.xlu0 %v318, 56
  %v650 = vpop.permute.xlu0 %649
  %v653 = vsel %vm362, %v645, 0
  %v656 = vsel %vm362, %v646, 0
  %v659 = vsel %vm477, %v650, 0
  %661 = vmatpush.bf16.msra.mxu0 0
  %662 = vmatpush.bf16.msra.mxu0 0
  %663 = vmatpush.bf16.msra.mxu0 0
  %664 = vmatpush.bf16.msra.mxu0 0
  %665 = vmatpush.bf16.msra.mxu0 0
  %666 = vmatpush.bf16.msra.mxu0 0
  %667 = vmatpush.bf16.msra.mxu0 %v659
  %668 = vmatpush.bf16.msra.mxu0 %v648
  %669 = vmatmul.bf16.gmra.mxu0 %v653
  %v670 = vpop.f32.mrf.mxu0
  %v671 = vadd.f32 0.0, %v670
  %v672 = vpop.f32.mrf.mxu0
  %v673 = vadd.f32 0.0, %v672
  %674 = vmatmul.bf16.gmra.mxu0 %v656
  %v675 = vpop.f32.mrf.mxu0
  %v676 = vadd.f32 0.0, %v675
  %v677 = vpop.f32.mrf.mxu0
  %678 = vdwg.mxu0
  %679 = vrot.lane.b32.xlu0 %v317, 112
  %v680 = vpop.permute.xlu0 %679
  %681 = vrot.lane.b32.xlu0 %v318, 112
  %v682 = vpop.permute.xlu0 %681
  %683 = vrot.lane.b32.xlu0 %v317, 80
  %v684 = vpop.permute.xlu0 %683
  %685 = vrot.lane.b32.xlu0 %v318, 80
  %v686 = vpop.permute.xlu0 %685
  %v688 = vsel %vm325, %v680, 0
  %v691 = vsel %vm325, %v682, 0
  %v694 = vsel %vm325, %v684, 0
  %v697 = vsel %vm325, %v686, 0
  %699 = vmatpush.bf16.xpose.msra.mxu0 0
  %700 = vmatpush.bf16.xpose.msra.mxu0 0
  %701 = vmatpush.bf16.xpose.msra.mxu0 0
  %702 = vmatpush.bf16.xpose.msra.mxu0 0
  %703 = vmatpush.bf16.xpose.msra.mxu0 0
  %704 = vmatpush.bf16.xpose.msra.mxu0 0
  %705 = vmatpush.bf16.xpose.msra.mxu0 %v697
  %706 = vmatpush.bf16.xpose.msra.mxu0 %v694
  %707 = vmatmul.bf16.gmra.mxu0 %v688
  %v708 = vpop.f32.mrf.mxu0
  %v709 = vadd.f32 0.0, %v708
  %v710 = vpop.f32.mrf.mxu0
  %v711 = vadd.f32 0.0, %v710
  %712 = vmatmul.bf16.gmra.mxu0 %v691
  %v713 = vpop.f32.mrf.mxu0
  %v714 = vadd.f32 0.0, %v713
  %v715 = vpop.f32.mrf.mxu0
  %716 = vdwg.mxu0
  %v717 = vmul.f32 %v709, 0.35355338
  %v718 = vmul.f32 %v711, 0.35355338
  %v719 = vmul.f32 %v714, 0.35355338
  %v720 = vadd.f32 %v717, %v106
  %v721 = vadd.f32 %v718, %v106
  %v722 = vadd.f32 %v719, %v106
  %v723 = vsel %vm362, %v720, -inf
  %724 = vmax.xlane.f32.xlu0 %v723
  %v725 = vpop.xlane.xlu0 %724
  %v726 = vsel %vm362, %v721, -inf
  %727 = vmax.xlane.f32.xlu0 %v726
  %v728 = vpop.xlane.xlu0 %727
  %v729 = vsel %vm362, %v722, -inf
  %730 = vmax.xlane.f32.xlu0 %v729
  %v731 = vpop.xlane.xlu0 %730
  %v732 = vsub.f32 %v720, %v725
  %v733 = vsub.f32 %v721, %v728
  %v734 = vsub.f32 %v722, %v731
  %v735 = vmul.f32 %v732, 1.442695
  %v736 = vpow.pop %v735
  %v737 = vmul.f32 %v733, 1.442695
  %v738 = vpow.pop %v737
  %v739 = vmul.f32 %v734, 1.442695
  %v740 = vpow.pop %v739
  %v741 = vsel %vm362, %v736, 0.0
  %742 = vadd.xlane.f32.xlu0 %v741
  %v743 = vpop.xlane.xlu0 %742
  %v744 = vsel %vm362, %v738, 0.0
  %745 = vadd.xlane.f32.xlu0 %v744
  %v746 = vpop.xlane.xlu0 %745
  %v747 = vsel %vm362, %v740, 0.0
  %748 = vadd.xlane.f32.xlu0 %v747
  %v749 = vpop.xlane.xlu0 %748
  %v750 = vrcp.pop %v743
  %v751 = vrcp.pop %v746
  %v752 = vrcp.pop %v749
  %v753 = vmul.f32 %v736, %v750
  %v754 = vmul.f32 %v738, %v751
  %v755 = vmul.f32 %v740, %v752
  %756 = vrot.lane.b32.xlu0 %v396, 126
  %v757 = vpop.permute.xlu0 %756
  %s758 = vtos %v757
  %v759 = vstv %s758
  %v761 = vmul.f32 %v759, %v753
  %v762 = vmul.f32 %v759, %v754
  %v763 = vmul.f32 %v759, %v755
  %s764 = scalar_lea.vmem %s5, 48
  %v765 = vld [vmem:[%s764] sm:$0xff]
  %v766 = vld [vmem:[%s764 + $0x8] sm:$0xff]
  %v767 = vld [vmem:[%s764 + $0x10] sm:$0xff]
  %v768 = vadd.f32 %v761, %v765
  %v769 = vadd.f32 %v762, %v766
  %v770 = vadd.f32 %v763, %v767
  %v771 = vsel %vm362, %v768, 0.0
  %772 = vadd.xlane.f32.xlu0 %v771
  %v773 = vpop.xlane.xlu0 %772
  %v774 = vsel %vm362, %v769, 0.0
  %775 = vadd.xlane.f32.xlu0 %v774
  %v776 = vpop.xlane.xlu0 %775
  %v777 = vsel %vm362, %v770, 0.0
  %778 = vadd.xlane.f32.xlu0 %v777
  %v779 = vpop.xlane.xlu0 %778
  %v780 = vrcp.pop %v773
  %v781 = vmul.f32 %v773, %v780
  %v782 = vsub.f32 1.0, %v781
  %v783 = vmul.f32 %v780, %v782
  %v784 = vadd.f32 %v780, %v783
  %vm785 = vweird.f32 %v773
  %vm786 = vweird.f32 %v780
  %vm787 = vmor %vm785, %vm786
  %v788 = vsel %vm787, %v780, %v784
  %v789 = vand.u32 2147483647, %v773
  %vm790 = vcmp.eq.f32.partialorder %v789, 8.507059e+37
  %v791 = vand.u32 %v773, 2147483648
  %v792 = vor.u32 1.1754944e-38, %v791
  %v793 = vsel %vm790, %v792, %v788
  %v794 = vmul.f32 %v768, %v793
  %v795 = vrcp.pop %v776
  %v796 = vmul.f32 %v776, %v795
  %v797 = vsub.f32 1.0, %v796
  %v798 = vmul.f32 %v795, %v797
  %v799 = vadd.f32 %v795, %v798
  %vm800 = vweird.f32 %v776
  %vm801 = vweird.f32 %v795
  %vm802 = vmor %vm800, %vm801
  %v803 = vsel %vm802, %v795, %v799
  %v804 = vand.u32 2147483647, %v776
  %vm805 = vcmp.eq.f32.partialorder %v804, 8.507059e+37
  %v806 = vand.u32 %v776, 2147483648
  %v807 = vor.u32 1.1754944e-38, %v806
  %v808 = vsel %vm805, %v807, %v803
  %v809 = vmul.f32 %v769, %v808
  %v810 = vrcp.pop %v779
  %v811 = vmul.f32 %v779, %v810
  %v812 = vsub.f32 1.0, %v811
  %v813 = vmul.f32 %v810, %v812
  %v814 = vadd.f32 %v810, %v813
  %vm815 = vweird.f32 %v779
  %vm816 = vweird.f32 %v810
  %vm817 = vmor %vm815, %vm816
  %v818 = vsel %vm817, %v810, %v814
  %v819 = vand.u32 2147483647, %v779
  %vm820 = vcmp.eq.f32.partialorder %v819, 8.507059e+37
  %v821 = vand.u32 %v779, 2147483648
  %v822 = vor.u32 1.1754944e-38, %v821
  %v823 = vsel %vm820, %v822, %v818
  %v824 = vmul.f32 %v770, %v823
  %v825 = vpack.c.bf16 %v809, %v794
  %v826 = vpack.c.bf16 %v824, %v824
  %827 = vrot.lane.b32.xlu0 %v317, 48
  %v828 = vpop.permute.xlu0 %827
  %829 = vrot.lane.b32.xlu0 %v318, 48
  %v830 = vpop.permute.xlu0 %829
  %v833 = vsel %vm362, %v825, 0
  %v836 = vsel %vm362, %v826, 0
  %v839 = vsel %vm477, %v830, 0
  %841 = vmatpush.bf16.msra.mxu0 0
  %842 = vmatpush.bf16.msra.mxu0 0
  %843 = vmatpush.bf16.msra.mxu0 0
  %844 = vmatpush.bf16.msra.mxu0 0
  %845 = vmatpush.bf16.msra.mxu0 0
  %846 = vmatpush.bf16.msra.mxu0 0
  %847 = vmatpush.bf16.msra.mxu0 %v839
  %848 = vmatpush.bf16.msra.mxu0 %v828
  %849 = vmatmul.bf16.gmra.mxu0 %v833
  %v850 = vpop.f32.mrf.mxu0
  %v851 = vadd.f32 0.0, %v850
  %v852 = vpop.f32.mrf.mxu0
  %v853 = vadd.f32 0.0, %v852
  %854 = vmatmul.bf16.gmra.mxu0 %v836
  %v855 = vpop.f32.mrf.mxu0
  %v856 = vadd.f32 0.0, %v855
  %v857 = vpop.f32.mrf.mxu0
  %858 = vdwg.mxu0
  %859 = vrot.lane.b32.xlu0 %v317, 104
  %v860 = vpop.permute.xlu0 %859
  %861 = vrot.lane.b32.xlu0 %v318, 104
  %v862 = vpop.permute.xlu0 %861
  %863 = vrot.lane.b32.xlu0 %v317, 72
  %v864 = vpop.permute.xlu0 %863
  %865 = vrot.lane.b32.xlu0 %v318, 72
  %v866 = vpop.permute.xlu0 %865
  %v868 = vsel %vm325, %v860, 0
  %v871 = vsel %vm325, %v862, 0
  %v874 = vsel %vm325, %v864, 0
  %v877 = vsel %vm325, %v866, 0
  %879 = vmatpush.bf16.xpose.msra.mxu0 0
  %880 = vmatpush.bf16.xpose.msra.mxu0 0
  %881 = vmatpush.bf16.xpose.msra.mxu0 0
  %882 = vmatpush.bf16.xpose.msra.mxu0 0
  %883 = vmatpush.bf16.xpose.msra.mxu0 0
  %884 = vmatpush.bf16.xpose.msra.mxu0 0
  %885 = vmatpush.bf16.xpose.msra.mxu0 %v877
  %886 = vmatpush.bf16.xpose.msra.mxu0 %v874
  %887 = vmatmul.bf16.gmra.mxu0 %v868
  %v888 = vpop.f32.mrf.mxu0
  %v889 = vadd.f32 0.0, %v888
  %v890 = vpop.f32.mrf.mxu0
  %v891 = vadd.f32 0.0, %v890
  %892 = vmatmul.bf16.gmra.mxu0 %v871
  %v893 = vpop.f32.mrf.mxu0
  %v894 = vadd.f32 0.0, %v893
  %v895 = vpop.f32.mrf.mxu0
  %896 = vdwg.mxu0
  %v897 = vmul.f32 %v889, 0.35355338
  %v898 = vmul.f32 %v891, 0.35355338
  %v899 = vmul.f32 %v894, 0.35355338
  %v900 = vadd.f32 %v897, %v106
  %v901 = vadd.f32 %v898, %v106
  %v902 = vadd.f32 %v899, %v106
  %v903 = vsel %vm362, %v900, -inf
  %904 = vmax.xlane.f32.xlu0 %v903
  %v905 = vpop.xlane.xlu0 %904
  %v906 = vsel %vm362, %v901, -inf
  %907 = vmax.xlane.f32.xlu0 %v906
  %v908 = vpop.xlane.xlu0 %907
  %v909 = vsel %vm362, %v902, -inf
  %910 = vmax.xlane.f32.xlu0 %v909
  %v911 = vpop.xlane.xlu0 %910
  %v912 = vsub.f32 %v900, %v905
  %v913 = vsub.f32 %v901, %v908
  %v914 = vsub.f32 %v902, %v911
  %v915 = vmul.f32 %v912, 1.442695
  %v916 = vpow.pop %v915
  %v917 = vmul.f32 %v913, 1.442695
  %v918 = vpow.pop %v917
  %v919 = vmul.f32 %v914, 1.442695
  %v920 = vpow.pop %v919
  %v921 = vsel %vm362, %v916, 0.0
  %922 = vadd.xlane.f32.xlu0 %v921
  %v923 = vpop.xlane.xlu0 %922
  %v924 = vsel %vm362, %v918, 0.0
  %925 = vadd.xlane.f32.xlu0 %v924
  %v926 = vpop.xlane.xlu0 %925
  %v927 = vsel %vm362, %v920, 0.0
  %928 = vadd.xlane.f32.xlu0 %v927
  %v929 = vpop.xlane.xlu0 %928
  %v930 = vrcp.pop %v923
  %v931 = vrcp.pop %v926
  %v932 = vrcp.pop %v929
  %v933 = vmul.f32 %v916, %v930
  %v934 = vmul.f32 %v918, %v931
  %v935 = vmul.f32 %v920, %v932
  %936 = vrot.lane.b32.xlu0 %v396, 125
  %v937 = vpop.permute.xlu0 %936
  %s938 = vtos %v937
  %v939 = vstv %s938
  %v941 = vmul.f32 %v939, %v933
  %v942 = vmul.f32 %v939, %v934
  %v943 = vmul.f32 %v939, %v935
  %s944 = scalar_lea.vmem %s5, 72
  %v945 = vld [vmem:[%s944] sm:$0xff]
  %v946 = vld [vmem:[%s944 + $0x8] sm:$0xff]
  %v947 = vld [vmem:[%s944 + $0x10] sm:$0xff]
  %v948 = vadd.f32 %v941, %v945
  %v949 = vadd.f32 %v942, %v946
  %v950 = vadd.f32 %v943, %v947
  %v951 = vsel %vm362, %v948, 0.0
  %952 = vadd.xlane.f32.xlu0 %v951
  %v953 = vpop.xlane.xlu0 %952
  %v954 = vsel %vm362, %v949, 0.0
  %955 = vadd.xlane.f32.xlu0 %v954
  %v956 = vpop.xlane.xlu0 %955
  %v957 = vsel %vm362, %v950, 0.0
  %958 = vadd.xlane.f32.xlu0 %v957
  %v959 = vpop.xlane.xlu0 %958
  %v960 = vrcp.pop %v953
  %v961 = vmul.f32 %v953, %v960
  %v962 = vsub.f32 1.0, %v961
  %v963 = vmul.f32 %v960, %v962
  %v964 = vadd.f32 %v960, %v963
  %vm965 = vweird.f32 %v953
  %vm966 = vweird.f32 %v960
  %vm967 = vmor %vm965, %vm966
  %v968 = vsel %vm967, %v960, %v964
  %v969 = vand.u32 2147483647, %v953
  %vm970 = vcmp.eq.f32.partialorder %v969, 8.507059e+37
  %v971 = vand.u32 %v953, 2147483648
  %v972 = vor.u32 1.1754944e-38, %v971
  %v973 = vsel %vm970, %v972, %v968
  %v974 = vmul.f32 %v948, %v973
  %v975 = vrcp.pop %v956
  %v976 = vmul.f32 %v956, %v975
  %v977 = vsub.f32 1.0, %v976
  %v978 = vmul.f32 %v975, %v977
  %v979 = vadd.f32 %v975, %v978
  %vm980 = vweird.f32 %v956
  %vm981 = vweird.f32 %v975
  %vm982 = vmor %vm980, %vm981
  %v983 = vsel %vm982, %v975, %v979
  %v984 = vand.u32 2147483647, %v956
  %vm985 = vcmp.eq.f32.partialorder %v984, 8.507059e+37
  %v986 = vand.u32 %v956, 2147483648
  %v987 = vor.u32 1.1754944e-38, %v986
  %v988 = vsel %vm985, %v987, %v983
  %v989 = vmul.f32 %v949, %v988
  %v990 = vrcp.pop %v959
  %v991 = vmul.f32 %v959, %v990
  %v992 = vsub.f32 1.0, %v991
  %v993 = vmul.f32 %v990, %v992
  %v994 = vadd.f32 %v990, %v993
  %vm995 = vweird.f32 %v959
  %vm996 = vweird.f32 %v990
  %vm997 = vmor %vm995, %vm996
  %v998 = vsel %vm997, %v990, %v994
  %v999 = vand.u32 2147483647, %v959
  %vm1000 = vcmp.eq.f32.partialorder %v999, 8.507059e+37
  %v1001 = vand.u32 %v959, 2147483648
  %v1002 = vor.u32 1.1754944e-38, %v1001
  %v1003 = vsel %vm1000, %v1002, %v998
  %v1004 = vmul.f32 %v950, %v1003
  %v1005 = vpack.c.bf16 %v989, %v974
  %v1006 = vpack.c.bf16 %v1004, %v1004
  %1007 = vrot.lane.b32.xlu0 %v317, 40
  %v1008 = vpop.permute.xlu0 %1007
  %1009 = vrot.lane.b32.xlu0 %v318, 40
  %v1010 = vpop.permute.xlu0 %1009
  %v1013 = vsel %vm362, %v1005, 0
  %v1016 = vsel %vm362, %v1006, 0
  %v1019 = vsel %vm477, %v1010, 0
  %1021 = vmatpush.bf16.msra.mxu0 0
  %1022 = vmatpush.bf16.msra.mxu0 0
  %1023 = vmatpush.bf16.msra.mxu0 0
  %1024 = vmatpush.bf16.msra.mxu0 0
  %1025 = vmatpush.bf16.msra.mxu0 0
  %1026 = vmatpush.bf16.msra.mxu0 0
  %1027 = vmatpush.bf16.msra.mxu0 %v1019
  %1028 = vmatpush.bf16.msra.mxu0 %v1008
  %1029 = vmatmul.bf16.gmra.mxu0 %v1013
  %v1030 = vpop.f32.mrf.mxu0
  %v1031 = vadd.f32 0.0, %v1030
  %v1032 = vpop.f32.mrf.mxu0
  %v1033 = vadd.f32 0.0, %v1032
  %1034 = vmatmul.bf16.gmra.mxu0 %v1016
  %v1035 = vpop.f32.mrf.mxu0
  %v1036 = vadd.f32 0.0, %v1035
  %v1037 = vpop.f32.mrf.mxu0
  %1038 = vdwg.mxu0
  %1042 = vrot.lane.b32.xlu0 %v671, 8
  %v1043 = vpop.permute.xlu0 %1042
  %1044 = vrot.lane.b32.xlu0 %v673, 8
  %v1045 = vpop.permute.xlu0 %1044
  %1046 = vrot.lane.b32.xlu0 %v676, 8
  %v1047 = vpop.permute.xlu0 %1046
  %1054 = vrot.lane.b32.xlu0 %v851, 16
  %v1055 = vpop.permute.xlu0 %1054
  %1056 = vrot.lane.b32.xlu0 %v853, 16
  %v1057 = vpop.permute.xlu0 %1056
  %1058 = vrot.lane.b32.xlu0 %v856, 16
  %v1059 = vpop.permute.xlu0 %1058
  %1066 = vrot.lane.b32.xlu0 %v1031, 24
  %v1067 = vpop.permute.xlu0 %1066
  %1068 = vrot.lane.b32.xlu0 %v1033, 24
  %v1069 = vpop.permute.xlu0 %1068
  %1070 = vrot.lane.b32.xlu0 %v1036, 24
  %v1071 = vpop.permute.xlu0 %1070
  %v1075 = vsel %vm325, %v491, %v1043
  %v1076 = vsel %vm325, %v493, %v1045
  %v1077 = vsel %vm325, %v496, %v1047
  %vm1078 = vcmask 130048
  %v1079 = vsel %vm1078, %v1075, %v1055
  %v1080 = vsel %vm1078, %v1076, %v1057
  %v1081 = vsel %vm1078, %v1077, %v1059
  %v1082 = vsel %vm362, %v1079, %v1067
  %v1083 = vsel %vm362, %v1080, %v1069
  %v1084 = vsel %vm362, %v1081, %v1071
  %v1085 = vpack.c.bf16 %v313, %v310
  %v1086 = vpack.c.bf16 %v315, %v315
  %1089 = vrot.lane.b32.xlu0 %v1085, 96
  %v1090 = vpop.permute.xlu0 %1089
  %1091 = vrot.lane.b32.xlu0 %v1086, 96
  %v1092 = vpop.permute.xlu0 %1091
  %v1094 = vsel %vm325, %v1085, 0
  %v1097 = vsel %vm325, %v1086, 0
  %v1100 = vsel %vm325, %v1090, 0
  %v1103 = vsel %vm325, %v1092, 0
  %1105 = vmatpush.bf16.xpose.msra.mxu0 0
  %1106 = vmatpush.bf16.xpose.msra.mxu0 0
  %1107 = vmatpush.bf16.xpose.msra.mxu0 0
  %1108 = vmatpush.bf16.xpose.msra.mxu0 0
  %1109 = vmatpush.bf16.xpose.msra.mxu0 0
  %1110 = vmatpush.bf16.xpose.msra.mxu0 0
  %1111 = vmatpush.bf16.xpose.msra.mxu0 %v1103
  %1112 = vmatpush.bf16.xpose.msra.mxu0 %v1100
  %1113 = vmatmul.bf16.gmra.mxu0 %v1094
  %v1114 = vpop.f32.mrf.mxu0
  %v1115 = vadd.f32 0.0, %v1114
  %v1116 = vpop.f32.mrf.mxu0
  %v1117 = vadd.f32 0.0, %v1116
  %1118 = vmatmul.bf16.gmra.mxu0 %v1097
  %v1119 = vpop.f32.mrf.mxu0
  %v1120 = vadd.f32 0.0, %v1119
  %v1121 = vpop.f32.mrf.mxu0
  %1122 = vdwg.mxu0
  %v1123 = vmul.f32 %v1115, 0.35355338
  %v1124 = vmul.f32 %v1117, 0.35355338
  %v1125 = vmul.f32 %v1120, 0.35355338
  %v1126 = vadd.f32 %v1123, %v106
  %v1127 = vadd.f32 %v1124, %v106
  %v1128 = vadd.f32 %v1125, %v106
  %v1129 = vsel %vm362, %v1126, -inf
  %1130 = vmax.xlane.f32.xlu0 %v1129
  %v1131 = vpop.xlane.xlu0 %1130
  %v1132 = vsel %vm362, %v1127, -inf
  %1133 = vmax.xlane.f32.xlu0 %v1132
  %v1134 = vpop.xlane.xlu0 %1133
  %v1135 = vsel %vm362, %v1128, -inf
  %1136 = vmax.xlane.f32.xlu0 %v1135
  %v1137 = vpop.xlane.xlu0 %1136
  %v1138 = vsub.f32 %v1126, %v1131
  %v1139 = vsub.f32 %v1127, %v1134
  %v1140 = vsub.f32 %v1128, %v1137
  %v1141 = vmul.f32 %v1138, 1.442695
  %v1142 = vpow.pop %v1141
  %v1143 = vmul.f32 %v1139, 1.442695
  %v1144 = vpow.pop %v1143
  %v1145 = vmul.f32 %v1140, 1.442695
  %v1146 = vpow.pop %v1145
  %v1147 = vsel %vm362, %v1142, 0.0
  %1148 = vadd.xlane.f32.xlu0 %v1147
  %v1149 = vpop.xlane.xlu0 %1148
  %v1150 = vsel %vm362, %v1144, 0.0
  %1151 = vadd.xlane.f32.xlu0 %v1150
  %v1152 = vpop.xlane.xlu0 %1151
  %v1153 = vsel %vm362, %v1146, 0.0
  %1154 = vadd.xlane.f32.xlu0 %v1153
  %v1155 = vpop.xlane.xlu0 %1154
  %v1156 = vrcp.pop %v1149
  %v1157 = vrcp.pop %v1152
  %v1158 = vrcp.pop %v1155
  %v1159 = vmul.f32 %v1142, %v1156
  %v1160 = vmul.f32 %v1144, %v1157
  %v1161 = vmul.f32 %v1146, %v1158
  %v1162 = vmul.f32 %v399, %v1159
  %v1163 = vmul.f32 %v399, %v1160
  %v1164 = vmul.f32 %v399, %v1161
  %v1165 = vadd.f32 %v1162, %v404
  %v1166 = vadd.f32 %v1163, %v405
  %v1167 = vadd.f32 %v1164, %v406
  %v1168 = vsel %vm362, %v1165, 0.0
  %1169 = vadd.xlane.f32.xlu0 %v1168
  %v1170 = vpop.xlane.xlu0 %1169
  %v1171 = vsel %vm362, %v1166, 0.0
  %1172 = vadd.xlane.f32.xlu0 %v1171
  %v1173 = vpop.xlane.xlu0 %1172
  %v1174 = vsel %vm362, %v1167, 0.0
  %1175 = vadd.xlane.f32.xlu0 %v1174
  %v1176 = vpop.xlane.xlu0 %1175
  %v1177 = vrcp.pop %v1170
  %v1178 = vmul.f32 %v1170, %v1177
  %v1179 = vsub.f32 1.0, %v1178
  %v1180 = vmul.f32 %v1177, %v1179
  %v1181 = vadd.f32 %v1177, %v1180
  %vm1182 = vweird.f32 %v1170
  %vm1183 = vweird.f32 %v1177
  %vm1184 = vmor %vm1182, %vm1183
  %v1185 = vsel %vm1184, %v1177, %v1181
  %v1186 = vand.u32 2147483647, %v1170
  %vm1187 = vcmp.eq.f32.partialorder %v1186, 8.507059e+37
  %v1188 = vand.u32 %v1170, 2147483648
  %v1189 = vor.u32 1.1754944e-38, %v1188
  %v1190 = vsel %vm1187, %v1189, %v1185
  %v1191 = vmul.f32 %v1165, %v1190
  %v1192 = vrcp.pop %v1173
  %v1193 = vmul.f32 %v1173, %v1192
  %v1194 = vsub.f32 1.0, %v1193
  %v1195 = vmul.f32 %v1192, %v1194
  %v1196 = vadd.f32 %v1192, %v1195
  %vm1197 = vweird.f32 %v1173
  %vm1198 = vweird.f32 %v1192
  %vm1199 = vmor %vm1197, %vm1198
  %v1200 = vsel %vm1199, %v1192, %v1196
  %v1201 = vand.u32 2147483647, %v1173
  %vm1202 = vcmp.eq.f32.partialorder %v1201, 8.507059e+37
  %v1203 = vand.u32 %v1173, 2147483648
  %v1204 = vor.u32 1.1754944e-38, %v1203
  %v1205 = vsel %vm1202, %v1204, %v1200
  %v1206 = vmul.f32 %v1166, %v1205
  %v1207 = vrcp.pop %v1176
  %v1208 = vmul.f32 %v1176, %v1207
  %v1209 = vsub.f32 1.0, %v1208
  %v1210 = vmul.f32 %v1207, %v1209
  %v1211 = vadd.f32 %v1207, %v1210
  %vm1212 = vweird.f32 %v1176
  %vm1213 = vweird.f32 %v1207
  %vm1214 = vmor %vm1212, %vm1213
  %v1215 = vsel %vm1214, %v1207, %v1211
  %v1216 = vand.u32 2147483647, %v1176
  %vm1217 = vcmp.eq.f32.partialorder %v1216, 8.507059e+37
  %v1218 = vand.u32 %v1176, 2147483648
  %v1219 = vor.u32 1.1754944e-38, %v1218
  %v1220 = vsel %vm1217, %v1219, %v1215
  %v1221 = vmul.f32 %v1167, %v1220
  %v1222 = vpack.c.bf16 %v1206, %v1191
  %v1223 = vpack.c.bf16 %v1221, %v1221
  %1224 = vrot.lane.b32.xlu0 %v1085, 64
  %v1225 = vpop.permute.xlu0 %1224
  %1226 = vrot.lane.b32.xlu0 %v1086, 64
  %v1227 = vpop.permute.xlu0 %1226
  %v1230 = vsel %vm362, %v1222, 0
  %v1233 = vsel %vm362, %v1223, 0
  %v1236 = vsel %vm477, %v1227, 0
  %1238 = vmatpush.bf16.msra.mxu0 0
  %1239 = vmatpush.bf16.msra.mxu0 0
  %1240 = vmatpush.bf16.msra.mxu0 0
  %1241 = vmatpush.bf16.msra.mxu0 0
  %1242 = vmatpush.bf16.msra.mxu0 0
  %1243 = vmatpush.bf16.msra.mxu0 0
  %1244 = vmatpush.bf16.msra.mxu0 %v1236
  %1245 = vmatpush.bf16.msra.mxu0 %v1225
  %1246 = vmatmul.bf16.gmra.mxu0 %v1230
  %v1247 = vpop.f32.mrf.mxu0
  %v1248 = vadd.f32 0.0, %v1247
  %v1249 = vpop.f32.mrf.mxu0
  %v1250 = vadd.f32 0.0, %v1249
  %1251 = vmatmul.bf16.gmra.mxu0 %v1233
  %v1252 = vpop.f32.mrf.mxu0
  %v1253 = vadd.f32 0.0, %v1252
  %v1254 = vpop.f32.mrf.mxu0
  %1255 = vdwg.mxu0
  %1256 = vrot.lane.b32.xlu0 %v1085, 120
  %v1257 = vpop.permute.xlu0 %1256
  %1258 = vrot.lane.b32.xlu0 %v1086, 120
  %v1259 = vpop.permute.xlu0 %1258
  %1260 = vrot.lane.b32.xlu0 %v1085, 88
  %v1261 = vpop.permute.xlu0 %1260
  %1262 = vrot.lane.b32.xlu0 %v1086, 88
  %v1263 = vpop.permute.xlu0 %1262
  %v1265 = vsel %vm325, %v1257, 0
  %v1268 = vsel %vm325, %v1259, 0
  %v1271 = vsel %vm325, %v1261, 0
  %v1274 = vsel %vm325, %v1263, 0
  %1276 = vmatpush.bf16.xpose.msra.mxu0 0
  %1277 = vmatpush.bf16.xpose.msra.mxu0 0
  %1278 = vmatpush.bf16.xpose.msra.mxu0 0
  %1279 = vmatpush.bf16.xpose.msra.mxu0 0
  %1280 = vmatpush.bf16.xpose.msra.mxu0 0
  %1281 = vmatpush.bf16.xpose.msra.mxu0 0
  %1282 = vmatpush.bf16.xpose.msra.mxu0 %v1274
  %1283 = vmatpush.bf16.xpose.msra.mxu0 %v1271
  %1284 = vmatmul.bf16.gmra.mxu0 %v1265
  %v1285 = vpop.f32.mrf.mxu0
  %v1286 = vadd.f32 0.0, %v1285
  %v1287 = vpop.f32.mrf.mxu0
  %v1288 = vadd.f32 0.0, %v1287
  %1289 = vmatmul.bf16.gmra.mxu0 %v1268
  %v1290 = vpop.f32.mrf.mxu0
  %v1291 = vadd.f32 0.0, %v1290
  %v1292 = vpop.f32.mrf.mxu0
  %1293 = vdwg.mxu0
  %v1294 = vmul.f32 %v1286, 0.35355338
  %v1295 = vmul.f32 %v1288, 0.35355338
  %v1296 = vmul.f32 %v1291, 0.35355338
  %v1297 = vadd.f32 %v1294, %v106
  %v1298 = vadd.f32 %v1295, %v106
  %v1299 = vadd.f32 %v1296, %v106
  %v1300 = vsel %vm362, %v1297, -inf
  %1301 = vmax.xlane.f32.xlu0 %v1300
  %v1302 = vpop.xlane.xlu0 %1301
  %v1303 = vsel %vm362, %v1298, -inf
  %1304 = vmax.xlane.f32.xlu0 %v1303
  %v1305 = vpop.xlane.xlu0 %1304
  %v1306 = vsel %vm362, %v1299, -inf
  %1307 = vmax.xlane.f32.xlu0 %v1306
  %v1308 = vpop.xlane.xlu0 %1307
  %v1309 = vsub.f32 %v1297, %v1302
  %v1310 = vsub.f32 %v1298, %v1305
  %v1311 = vsub.f32 %v1299, %v1308
  %v1312 = vmul.f32 %v1309, 1.442695
  %v1313 = vpow.pop %v1312
  %v1314 = vmul.f32 %v1310, 1.442695
  %v1315 = vpow.pop %v1314
  %v1316 = vmul.f32 %v1311, 1.442695
  %v1317 = vpow.pop %v1316
  %v1318 = vsel %vm362, %v1313, 0.0
  %1319 = vadd.xlane.f32.xlu0 %v1318
  %v1320 = vpop.xlane.xlu0 %1319
  %v1321 = vsel %vm362, %v1315, 0.0
  %1322 = vadd.xlane.f32.xlu0 %v1321
  %v1323 = vpop.xlane.xlu0 %1322
  %v1324 = vsel %vm362, %v1317, 0.0
  %1325 = vadd.xlane.f32.xlu0 %v1324
  %v1326 = vpop.xlane.xlu0 %1325
  %v1327 = vrcp.pop %v1320
  %v1328 = vrcp.pop %v1323
  %v1329 = vrcp.pop %v1326
  %v1330 = vmul.f32 %v1313, %v1327
  %v1331 = vmul.f32 %v1315, %v1328
  %v1332 = vmul.f32 %v1317, %v1329
  %v1333 = vmul.f32 %v579, %v1330
  %v1334 = vmul.f32 %v579, %v1331
  %v1335 = vmul.f32 %v579, %v1332
  %v1336 = vadd.f32 %v1333, %v585
  %v1337 = vadd.f32 %v1334, %v586
  %v1338 = vadd.f32 %v1335, %v587
  %v1339 = vsel %vm362, %v1336, 0.0
  %1340 = vadd.xlane.f32.xlu0 %v1339
  %v1341 = vpop.xlane.xlu0 %1340
  %v1342 = vsel %vm362, %v1337, 0.0
  %1343 = vadd.xlane.f32.xlu0 %v1342
  %v1344 = vpop.xlane.xlu0 %1343
  %v1345 = vsel %vm362, %v1338, 0.0
  %1346 = vadd.xlane.f32.xlu0 %v1345
  %v1347 = vpop.xlane.xlu0 %1346
  %v1348 = vrcp.pop %v1341
  %v1349 = vmul.f32 %v1341, %v1348
  %v1350 = vsub.f32 1.0, %v1349
  %v1351 = vmul.f32 %v1348, %v1350
  %v1352 = vadd.f32 %v1348, %v1351
  %vm1353 = vweird.f32 %v1341
  %vm1354 = vweird.f32 %v1348
  %vm1355 = vmor %vm1353, %vm1354
  %v1356 = vsel %vm1355, %v1348, %v1352
  %v1357 = vand.u32 2147483647, %v1341
  %vm1358 = vcmp.eq.f32.partialorder %v1357, 8.507059e+37
  %v1359 = vand.u32 %v1341, 2147483648
  %v1360 = vor.u32 1.1754944e-38, %v1359
  %v1361 = vsel %vm1358, %v1360, %v1356
  %v1362 = vmul.f32 %v1336, %v1361
  %v1363 = vrcp.pop %v1344
  %v1364 = vmul.f32 %v1344, %v1363
  %v1365 = vsub.f32 1.0, %v1364
  %v1366 = vmul.f32 %v1363, %v1365
  %v1367 = vadd.f32 %v1363, %v1366
  %vm1368 = vweird.f32 %v1344
  %vm1369 = vweird.f32 %v1363
  %vm1370 = vmor %vm1368, %vm1369
  %v1371 = vsel %vm1370, %v1363, %v1367
  %v1372 = vand.u32 2147483647, %v1344
  %vm1373 = vcmp.eq.f32.partialorder %v1372, 8.507059e+37
  %v1374 = vand.u32 %v1344, 2147483648
  %v1375 = vor.u32 1.1754944e-38, %v1374
  %v1376 = vsel %vm1373, %v1375, %v1371
  %v1377 = vmul.f32 %v1337, %v1376
  %v1378 = vrcp.pop %v1347
  %v1379 = vmul.f32 %v1347, %v1378
  %v1380 = vsub.f32 1.0, %v1379
  %v1381 = vmul.f32 %v1378, %v1380
  %v1382 = vadd.f32 %v1378, %v1381
  %vm1383 = vweird.f32 %v1347
  %vm1384 = vweird.f32 %v1378
  %vm1385 = vmor %vm1383, %vm1384
  %v1386 = vsel %vm1385, %v1378, %v1382
  %v1387 = vand.u32 2147483647, %v1347
  %vm1388 = vcmp.eq.f32.partialorder %v1387, 8.507059e+37
  %v1389 = vand.u32 %v1347, 2147483648
  %v1390 = vor.u32 1.1754944e-38, %v1389
  %v1391 = vsel %vm1388, %v1390, %v1386
  %v1392 = vmul.f32 %v1338, %v1391
  %v1393 = vpack.c.bf16 %v1377, %v1362
  %v1394 = vpack.c.bf16 %v1392, %v1392
  %1395 = vrot.lane.b32.xlu0 %v1085, 56
  %v1396 = vpop.permute.xlu0 %1395
  %1397 = vrot.lane.b32.xlu0 %v1086, 56
  %v1398 = vpop.permute.xlu0 %1397
  %v1401 = vsel %vm362, %v1393, 0
  %v1404 = vsel %vm362, %v1394, 0
  %v1407 = vsel %vm477, %v1398, 0
  %1409 = vmatpush.bf16.msra.mxu0 0
  %1410 = vmatpush.bf16.msra.mxu0 0
  %1411 = vmatpush.bf16.msra.mxu0 0
  %1412 = vmatpush.bf16.msra.mxu0 0
  %1413 = vmatpush.bf16.msra.mxu0 0
  %1414 = vmatpush.bf16.msra.mxu0 0
  %1415 = vmatpush.bf16.msra.mxu0 %v1407
  %1416 = vmatpush.bf16.msra.mxu0 %v1396
  %1417 = vmatmul.bf16.gmra.mxu0 %v1401
  %v1418 = vpop.f32.mrf.mxu0
  %v1419 = vadd.f32 0.0, %v1418
  %v1420 = vpop.f32.mrf.mxu0
  %v1421 = vadd.f32 0.0, %v1420
  %1422 = vmatmul.bf16.gmra.mxu0 %v1404
  %v1423 = vpop.f32.mrf.mxu0
  %v1424 = vadd.f32 0.0, %v1423
  %v1425 = vpop.f32.mrf.mxu0
  %1426 = vdwg.mxu0
  %1427 = vrot.lane.b32.xlu0 %v1085, 112
  %v1428 = vpop.permute.xlu0 %1427
  %1429 = vrot.lane.b32.xlu0 %v1086, 112
  %v1430 = vpop.permute.xlu0 %1429
  %1431 = vrot.lane.b32.xlu0 %v1085, 80
  %v1432 = vpop.permute.xlu0 %1431
  %1433 = vrot.lane.b32.xlu0 %v1086, 80
  %v1434 = vpop.permute.xlu0 %1433
  %v1436 = vsel %vm325, %v1428, 0
  %v1439 = vsel %vm325, %v1430, 0
  %v1442 = vsel %vm325, %v1432, 0
  %v1445 = vsel %vm325, %v1434, 0
  %1447 = vmatpush.bf16.xpose.msra.mxu0 0
  %1448 = vmatpush.bf16.xpose.msra.mxu0 0
  %1449 = vmatpush.bf16.xpose.msra.mxu0 0
  %1450 = vmatpush.bf16.xpose.msra.mxu0 0
  %1451 = vmatpush.bf16.xpose.msra.mxu0 0
  %1452 = vmatpush.bf16.xpose.msra.mxu0 0
  %1453 = vmatpush.bf16.xpose.msra.mxu0 %v1445
  %1454 = vmatpush.bf16.xpose.msra.mxu0 %v1442
  %1455 = vmatmul.bf16.gmra.mxu0 %v1436
  %v1456 = vpop.f32.mrf.mxu0
  %v1457 = vadd.f32 0.0, %v1456
  %v1458 = vpop.f32.mrf.mxu0
  %v1459 = vadd.f32 0.0, %v1458
  %1460 = vmatmul.bf16.gmra.mxu0 %v1439
  %v1461 = vpop.f32.mrf.mxu0
  %v1462 = vadd.f32 0.0, %v1461
  %v1463 = vpop.f32.mrf.mxu0
  %1464 = vdwg.mxu0
  %v1465 = vmul.f32 %v1457, 0.35355338
  %v1466 = vmul.f32 %v1459, 0.35355338
  %v1467 = vmul.f32 %v1462, 0.35355338
  %v1468 = vadd.f32 %v1465, %v106
  %v1469 = vadd.f32 %v1466, %v106
  %v1470 = vadd.f32 %v1467, %v106
  %v1471 = vsel %vm362, %v1468, -inf
  %1472 = vmax.xlane.f32.xlu0 %v1471
  %v1473 = vpop.xlane.xlu0 %1472
  %v1474 = vsel %vm362, %v1469, -inf
  %1475 = vmax.xlane.f32.xlu0 %v1474
  %v1476 = vpop.xlane.xlu0 %1475
  %v1477 = vsel %vm362, %v1470, -inf
  %1478 = vmax.xlane.f32.xlu0 %v1477
  %v1479 = vpop.xlane.xlu0 %1478
  %v1480 = vsub.f32 %v1468, %v1473
  %v1481 = vsub.f32 %v1469, %v1476
  %v1482 = vsub.f32 %v1470, %v1479
  %v1483 = vmul.f32 %v1480, 1.442695
  %v1484 = vpow.pop %v1483
  %v1485 = vmul.f32 %v1481, 1.442695
  %v1486 = vpow.pop %v1485
  %v1487 = vmul.f32 %v1482, 1.442695
  %v1488 = vpow.pop %v1487
  %v1489 = vsel %vm362, %v1484, 0.0
  %1490 = vadd.xlane.f32.xlu0 %v1489
  %v1491 = vpop.xlane.xlu0 %1490
  %v1492 = vsel %vm362, %v1486, 0.0
  %1493 = vadd.xlane.f32.xlu0 %v1492
  %v1494 = vpop.xlane.xlu0 %1493
  %v1495 = vsel %vm362, %v1488, 0.0
  %1496 = vadd.xlane.f32.xlu0 %v1495
  %v1497 = vpop.xlane.xlu0 %1496
  %v1498 = vrcp.pop %v1491
  %v1499 = vrcp.pop %v1494
  %v1500 = vrcp.pop %v1497
  %v1501 = vmul.f32 %v1484, %v1498
  %v1502 = vmul.f32 %v1486, %v1499
  %v1503 = vmul.f32 %v1488, %v1500
  %v1504 = vmul.f32 %v759, %v1501
  %v1505 = vmul.f32 %v759, %v1502
  %v1506 = vmul.f32 %v759, %v1503
  %v1507 = vadd.f32 %v1504, %v765
  %v1508 = vadd.f32 %v1505, %v766
  %v1509 = vadd.f32 %v1506, %v767
  %v1510 = vsel %vm362, %v1507, 0.0
  %1511 = vadd.xlane.f32.xlu0 %v1510
  %v1512 = vpop.xlane.xlu0 %1511
  %v1513 = vsel %vm362, %v1508, 0.0
  %1514 = vadd.xlane.f32.xlu0 %v1513
  %v1515 = vpop.xlane.xlu0 %1514
  %v1516 = vsel %vm362, %v1509, 0.0
  %1517 = vadd.xlane.f32.xlu0 %v1516
  %v1518 = vpop.xlane.xlu0 %1517
  %v1519 = vrcp.pop %v1512
  %v1520 = vmul.f32 %v1512, %v1519
  %v1521 = vsub.f32 1.0, %v1520
  %v1522 = vmul.f32 %v1519, %v1521
  %v1523 = vadd.f32 %v1519, %v1522
  %vm1524 = vweird.f32 %v1512
  %vm1525 = vweird.f32 %v1519
  %vm1526 = vmor %vm1524, %vm1525
  %v1527 = vsel %vm1526, %v1519, %v1523
  %v1528 = vand.u32 2147483647, %v1512
  %vm1529 = vcmp.eq.f32.partialorder %v1528, 8.507059e+37
  %v1530 = vand.u32 %v1512, 2147483648
  %v1531 = vor.u32 1.1754944e-38, %v1530
  %v1532 = vsel %vm1529, %v1531, %v1527
  %v1533 = vmul.f32 %v1507, %v1532
  %v1534 = vrcp.pop %v1515
  %v1535 = vmul.f32 %v1515, %v1534
  %v1536 = vsub.f32 1.0, %v1535
  %v1537 = vmul.f32 %v1534, %v1536
  %v1538 = vadd.f32 %v1534, %v1537
  %vm1539 = vweird.f32 %v1515
  %vm1540 = vweird.f32 %v1534
  %vm1541 = vmor %vm1539, %vm1540
  %v1542 = vsel %vm1541, %v1534, %v1538
  %v1543 = vand.u32 2147483647, %v1515
  %vm1544 = vcmp.eq.f32.partialorder %v1543, 8.507059e+37
  %v1545 = vand.u32 %v1515, 2147483648
  %v1546 = vor.u32 1.1754944e-38, %v1545
  %v1547 = vsel %vm1544, %v1546, %v1542
  %v1548 = vmul.f32 %v1508, %v1547
  %v1549 = vrcp.pop %v1518
  %v1550 = vmul.f32 %v1518, %v1549
  %v1551 = vsub.f32 1.0, %v1550
  %v1552 = vmul.f32 %v1549, %v1551
  %v1553 = vadd.f32 %v1549, %v1552
  %vm1554 = vweird.f32 %v1518
  %vm1555 = vweird.f32 %v1549
  %vm1556 = vmor %vm1554, %vm1555
  %v1557 = vsel %vm1556, %v1549, %v1553
  %v1558 = vand.u32 2147483647, %v1518
  %vm1559 = vcmp.eq.f32.partialorder %v1558, 8.507059e+37
  %v1560 = vand.u32 %v1518, 2147483648
  %v1561 = vor.u32 1.1754944e-38, %v1560
  %v1562 = vsel %vm1559, %v1561, %v1557
  %v1563 = vmul.f32 %v1509, %v1562
  %v1564 = vpack.c.bf16 %v1548, %v1533
  %v1565 = vpack.c.bf16 %v1563, %v1563
  %1566 = vrot.lane.b32.xlu0 %v1085, 48
  %v1567 = vpop.permute.xlu0 %1566
  %1568 = vrot.lane.b32.xlu0 %v1086, 48
  %v1569 = vpop.permute.xlu0 %1568
  %v1572 = vsel %vm362, %v1564, 0
  %v1575 = vsel %vm362, %v1565, 0
  %v1578 = vsel %vm477, %v1569, 0
  %1580 = vmatpush.bf16.msra.mxu0 0
  %1581 = vmatpush.bf16.msra.mxu0 0
  %1582 = vmatpush.bf16.msra.mxu0 0
  %1583 = vmatpush.bf16.msra.mxu0 0
  %1584 = vmatpush.bf16.msra.mxu0 0
  %1585 = vmatpush.bf16.msra.mxu0 0
  %1586 = vmatpush.bf16.msra.mxu0 %v1578
  %1587 = vmatpush.bf16.msra.mxu0 %v1567
  %1588 = vmatmul.bf16.gmra.mxu0 %v1572
  %v1589 = vpop.f32.mrf.mxu0
  %v1590 = vadd.f32 0.0, %v1589
  %v1591 = vpop.f32.mrf.mxu0
  %v1592 = vadd.f32 0.0, %v1591
  %1593 = vmatmul.bf16.gmra.mxu0 %v1575
  %v1594 = vpop.f32.mrf.mxu0
  %v1595 = vadd.f32 0.0, %v1594
  %v1596 = vpop.f32.mrf.mxu0
  %1597 = vdwg.mxu0
  %1598 = vrot.lane.b32.xlu0 %v1085, 104
  %v1599 = vpop.permute.xlu0 %1598
  %1600 = vrot.lane.b32.xlu0 %v1086, 104
  %v1601 = vpop.permute.xlu0 %1600
  %1602 = vrot.lane.b32.xlu0 %v1085, 72
  %v1603 = vpop.permute.xlu0 %1602
  %1604 = vrot.lane.b32.xlu0 %v1086, 72
  %v1605 = vpop.permute.xlu0 %1604
  %v1607 = vsel %vm325, %v1599, 0
  %v1610 = vsel %vm325, %v1601, 0
  %v1613 = vsel %vm325, %v1603, 0
  %v1616 = vsel %vm325, %v1605, 0
  %1618 = vmatpush.bf16.xpose.msra.mxu0 0
  %1619 = vmatpush.bf16.xpose.msra.mxu0 0
  %1620 = vmatpush.bf16.xpose.msra.mxu0 0
  %1621 = vmatpush.bf16.xpose.msra.mxu0 0
  %1622 = vmatpush.bf16.xpose.msra.mxu0 0
  %1623 = vmatpush.bf16.xpose.msra.mxu0 0
  %1624 = vmatpush.bf16.xpose.msra.mxu0 %v1616
  %1625 = vmatpush.bf16.xpose.msra.mxu0 %v1613
  %1626 = vmatmul.bf16.gmra.mxu0 %v1607
  %v1627 = vpop.f32.mrf.mxu0
  %v1628 = vadd.f32 0.0, %v1627
  %v1629 = vpop.f32.mrf.mxu0
  %v1630 = vadd.f32 0.0, %v1629
  %1631 = vmatmul.bf16.gmra.mxu0 %v1610
  %v1632 = vpop.f32.mrf.mxu0
  %v1633 = vadd.f32 0.0, %v1632
  %v1634 = vpop.f32.mrf.mxu0
  %1635 = vdwg.mxu0
  %v1636 = vmul.f32 %v1628, 0.35355338
  %v1637 = vmul.f32 %v1630, 0.35355338
  %v1638 = vmul.f32 %v1633, 0.35355338
  %v1639 = vadd.f32 %v1636, %v106
  %v1640 = vadd.f32 %v1637, %v106
  %v1641 = vadd.f32 %v1638, %v106
  %v1642 = vsel %vm362, %v1639, -inf
  %1643 = vmax.xlane.f32.xlu0 %v1642
  %v1644 = vpop.xlane.xlu0 %1643
  %v1645 = vsel %vm362, %v1640, -inf
  %1646 = vmax.xlane.f32.xlu0 %v1645
  %v1647 = vpop.xlane.xlu0 %1646
  %v1648 = vsel %vm362, %v1641, -inf
  %1649 = vmax.xlane.f32.xlu0 %v1648
  %v1650 = vpop.xlane.xlu0 %1649
  %v1651 = vsub.f32 %v1639, %v1644
  %v1652 = vsub.f32 %v1640, %v1647
  %v1653 = vsub.f32 %v1641, %v1650
  %v1654 = vmul.f32 %v1651, 1.442695
  %v1655 = vpow.pop %v1654
  %v1656 = vmul.f32 %v1652, 1.442695
  %v1657 = vpow.pop %v1656
  %v1658 = vmul.f32 %v1653, 1.442695
  %v1659 = vpow.pop %v1658
  %v1660 = vsel %vm362, %v1655, 0.0
  %1661 = vadd.xlane.f32.xlu0 %v1660
  %v1662 = vpop.xlane.xlu0 %1661
  %v1663 = vsel %vm362, %v1657, 0.0
  %1664 = vadd.xlane.f32.xlu0 %v1663
  %v1665 = vpop.xlane.xlu0 %1664
  %v1666 = vsel %vm362, %v1659, 0.0
  %1667 = vadd.xlane.f32.xlu0 %v1666
  %v1668 = vpop.xlane.xlu0 %1667
  %v1669 = vrcp.pop %v1662
  %v1670 = vrcp.pop %v1665
  %v1671 = vrcp.pop %v1668
  %v1672 = vmul.f32 %v1655, %v1669
  %v1673 = vmul.f32 %v1657, %v1670
  %v1674 = vmul.f32 %v1659, %v1671
  %v1675 = vmul.f32 %v939, %v1672
  %v1676 = vmul.f32 %v939, %v1673
  %v1677 = vmul.f32 %v939, %v1674
  %v1678 = vadd.f32 %v1675, %v945
  %v1679 = vadd.f32 %v1676, %v946
  %v1680 = vadd.f32 %v1677, %v947
  %v1681 = vsel %vm362, %v1678, 0.0
  %1682 = vadd.xlane.f32.xlu0 %v1681
  %v1683 = vpop.xlane.xlu0 %1682
  %v1684 = vsel %vm362, %v1679, 0.0
  %1685 = vadd.xlane.f32.xlu0 %v1684
  %v1686 = vpop.xlane.xlu0 %1685
  %v1687 = vsel %vm362, %v1680, 0.0
  %1688 = vadd.xlane.f32.xlu0 %v1687
  %v1689 = vpop.xlane.xlu0 %1688
  %v1690 = vrcp.pop %v1683
  %v1691 = vmul.f32 %v1683, %v1690
  %v1692 = vsub.f32 1.0, %v1691
  %v1693 = vmul.f32 %v1690, %v1692
  %v1694 = vadd.f32 %v1690, %v1693
  %vm1695 = vweird.f32 %v1683
  %vm1696 = vweird.f32 %v1690
  %vm1697 = vmor %vm1695, %vm1696
  %v1698 = vsel %vm1697, %v1690, %v1694
  %v1699 = vand.u32 2147483647, %v1683
  %vm1700 = vcmp.eq.f32.partialorder %v1699, 8.507059e+37
  %v1701 = vand.u32 %v1683, 2147483648
  %v1702 = vor.u32 1.1754944e-38, %v1701
  %v1703 = vsel %vm1700, %v1702, %v1698
  %v1704 = vmul.f32 %v1678, %v1703
  %v1705 = vrcp.pop %v1686
  %v1706 = vmul.f32 %v1686, %v1705
  %v1707 = vsub.f32 1.0, %v1706
  %v1708 = vmul.f32 %v1705, %v1707
  %v1709 = vadd.f32 %v1705, %v1708
  %vm1710 = vweird.f32 %v1686
  %vm1711 = vweird.f32 %v1705
  %vm1712 = vmor %vm1710, %vm1711
  %v1713 = vsel %vm1712, %v1705, %v1709
  %v1714 = vand.u32 2147483647, %v1686
  %vm1715 = vcmp.eq.f32.partialorder %v1714, 8.507059e+37
  %v1716 = vand.u32 %v1686, 2147483648
  %v1717 = vor.u32 1.1754944e-38, %v1716
  %v1718 = vsel %vm1715, %v1717, %v1713
  %v1719 = vmul.f32 %v1679, %v1718
  %v1720 = vrcp.pop %v1689
  %v1721 = vmul.f32 %v1689, %v1720
  %v1722 = vsub.f32 1.0, %v1721
  %v1723 = vmul.f32 %v1720, %v1722
  %v1724 = vadd.f32 %v1720, %v1723
  %vm1725 = vweird.f32 %v1689
  %vm1726 = vweird.f32 %v1720
  %vm1727 = vmor %vm1725, %vm1726
  %v1728 = vsel %vm1727, %v1720, %v1724
  %v1729 = vand.u32 2147483647, %v1689
  %vm1730 = vcmp.eq.f32.partialorder %v1729, 8.507059e+37
  %v1731 = vand.u32 %v1689, 2147483648
  %v1732 = vor.u32 1.1754944e-38, %v1731
  %v1733 = vsel %vm1730, %v1732, %v1728
  %v1734 = vmul.f32 %v1680, %v1733
  %v1735 = vpack.c.bf16 %v1719, %v1704
  %v1736 = vpack.c.bf16 %v1734, %v1734
  %1737 = vrot.lane.b32.xlu0 %v1085, 40
  %v1738 = vpop.permute.xlu0 %1737
  %1739 = vrot.lane.b32.xlu0 %v1086, 40
  %v1740 = vpop.permute.xlu0 %1739
  %v1743 = vsel %vm362, %v1735, 0
  %v1746 = vsel %vm362, %v1736, 0
  %v1749 = vsel %vm477, %v1740, 0
  %1751 = vmatpush.bf16.msra.mxu0 0
  %1752 = vmatpush.bf16.msra.mxu0 0
  %1753 = vmatpush.bf16.msra.mxu0 0
  %1754 = vmatpush.bf16.msra.mxu0 0
  %1755 = vmatpush.bf16.msra.mxu0 0
  %1756 = vmatpush.bf16.msra.mxu0 0
  %1757 = vmatpush.bf16.msra.mxu0 %v1749
  %1758 = vmatpush.bf16.msra.mxu0 %v1738
  %1759 = vmatmul.bf16.gmra.mxu0 %v1743
  %v1760 = vpop.f32.mrf.mxu0
  %v1761 = vadd.f32 0.0, %v1760
  %v1762 = vpop.f32.mrf.mxu0
  %v1763 = vadd.f32 0.0, %v1762
  %1764 = vmatmul.bf16.gmra.mxu0 %v1746
  %v1765 = vpop.f32.mrf.mxu0
  %v1766 = vadd.f32 0.0, %v1765
  %v1767 = vpop.f32.mrf.mxu0
  %1768 = vdwg.mxu0
  %1772 = vrot.lane.b32.xlu0 %v1419, 8
  %v1773 = vpop.permute.xlu0 %1772
  %1774 = vrot.lane.b32.xlu0 %v1421, 8
  %v1775 = vpop.permute.xlu0 %1774
  %1776 = vrot.lane.b32.xlu0 %v1424, 8
  %v1777 = vpop.permute.xlu0 %1776
  %1784 = vrot.lane.b32.xlu0 %v1590, 16
  %v1785 = vpop.permute.xlu0 %1784
  %1786 = vrot.lane.b32.xlu0 %v1592, 16
  %v1787 = vpop.permute.xlu0 %1786
  %1788 = vrot.lane.b32.xlu0 %v1595, 16
  %v1789 = vpop.permute.xlu0 %1788
  %1796 = vrot.lane.b32.xlu0 %v1761, 24
  %v1797 = vpop.permute.xlu0 %1796
  %1798 = vrot.lane.b32.xlu0 %v1763, 24
  %v1799 = vpop.permute.xlu0 %1798
  %1800 = vrot.lane.b32.xlu0 %v1766, 24
  %v1801 = vpop.permute.xlu0 %1800
  %v1805 = vsel %vm325, %v1248, %v1773
  %v1806 = vsel %vm325, %v1250, %v1775
  %v1807 = vsel %vm325, %v1253, %v1777
  %v1808 = vsel %vm1078, %v1805, %v1785
  %v1809 = vsel %vm1078, %v1806, %v1787
  %v1810 = vsel %vm1078, %v1807, %v1789
  %v1811 = vsel %vm362, %v1808, %v1797
  %v1812 = vsel %vm362, %v1809, %v1799
  %v1813 = vsel %vm362, %v1810, %v1801
  %v1814 = vpack.c.bf16 %v1083, %v1082
  %v1815 = vpack.c.bf16 %v1811, %v1084
  %v1816 = vpack.c.bf16 %v1813, %v1812
  %1817 = vrot.lane.b32.xlu0 %v280, 32
  %v1818 = vpop.permute.xlu0 %1817
  %1819 = vrot.lane.b32.xlu0 %v281, 32
  %v1820 = vpop.permute.xlu0 %1819
  %v1824 = vsel %vm140, %v1814, 0
  %v1827 = vsel %vm140, %v1815, 0
  %v1830 = vsel %vm140, %v1816, 0
  %1832 = vmatpush.bf16.msra.mxu0 0
  %1833 = vmatpush.bf16.msra.mxu0 0
  %1834 = vmatpush.bf16.msra.mxu0 0
  %1835 = vmatpush.bf16.msra.mxu0 0
  %1836 = vmatpush.bf16.msra.mxu0 0
  %1837 = vmatpush.bf16.msra.mxu0 0
  %1838 = vmatpush.bf16.msra.mxu0 %v1820
  %1839 = vmatpush.bf16.msra.mxu0 %v1818
  %1840 = vmatmul.bf16.gmra.mxu0 %v1824
  %v1841 = vpop.f32.mrf.mxu0
  %v1842 = vadd.f32 0.0, %v1841
  %v1843 = vpop.f32.mrf.mxu0
  %v1844 = vadd.f32 0.0, %v1843
  %1845 = vmatmul.bf16.gmra.mxu0 %v1827
  %v1846 = vpop.f32.mrf.mxu0
  %v1847 = vadd.f32 0.0, %v1846
  %v1848 = vpop.f32.mrf.mxu0
  %v1849 = vadd.f32 0.0, %v1848
  %1850 = vmatmul.bf16.gmra.mxu0 %v1830
  %v1851 = vpop.f32.mrf.mxu0
  %v1852 = vadd.f32 0.0, %v1851
  %v1853 = vpop.f32.mrf.mxu0
  %v1854 = vadd.f32 0.0, %v1853
  %1855 = vdwg.mxu0
  %v1856 = vadd.f32 %v74, %v1842
  %v1857 = vadd.f32 %v76, %v1844
  %v1858 = vadd.f32 %v1847, 0.0
  %v1859 = vadd.f32 %v99, %v1849
  %v1860 = vadd.f32 %v101, %v1852
  %v1861 = vadd.f32 %v1854, 0.0
  %v1862 = vperm.slane %v111, 0
  %v1863 = vadd.f32 %v1856, %v1862
  %v1864 = vadd.f32 %v1857, %v1862
  %v1865 = vadd.f32 %v1858, %v1862
  %v1866 = vadd.f32 %v1859, %v1862
  %v1867 = vadd.f32 %v1860, %v1862
  %v1868 = vadd.f32 %v1861, %v1862
  %v1869 = vsel %vm140, %v1863, 0.0
  %1870 = vadd.xlane.f32.xlu0 %v1869
  %v1871 = vpop.xlane.xlu0 %1870
  %v1872 = vsel %vm140, %v1864, 0.0
  %1873 = vadd.xlane.f32.xlu0 %v1872
  %v1874 = vpop.xlane.xlu0 %1873
  %v1875 = vsel %vm140, %v1865, 0.0
  %1876 = vadd.xlane.f32.xlu0 %v1875
  %v1877 = vpop.xlane.xlu0 %1876
  %v1878 = vsel %vm140, %v1866, 0.0
  %1879 = vadd.xlane.f32.xlu0 %v1878
  %v1880 = vpop.xlane.xlu0 %1879
  %v1881 = vsel %vm140, %v1867, 0.0
  %1882 = vadd.xlane.f32.xlu0 %v1881
  %v1883 = vpop.xlane.xlu0 %1882
  %v1884 = vsel %vm140, %v1868, 0.0
  %1885 = vadd.xlane.f32.xlu0 %v1884
  %v1886 = vpop.xlane.xlu0 %1885
  %v1887 = vmul.f32 %v1871, %v161
  %v1888 = vmul.f32 %v1874, %v161
  %v1889 = vmul.f32 %v1877, %v161
  %v1890 = vmul.f32 %v1880, %v161
  %v1891 = vmul.f32 %v1883, %v161
  %v1892 = vmul.f32 %v1886, %v161
  %v1893 = vsub.f32 %v1863, %v1887
  %v1894 = vsub.f32 %v1864, %v1888
  %v1895 = vsub.f32 %v1865, %v1889
  %v1896 = vsub.f32 %v1866, %v1890
  %v1897 = vsub.f32 %v1867, %v1891
  %v1898 = vsub.f32 %v1868, %v1892
  %v1899 = vmul.f32 %v1893, %v1893
  %v1900 = vmul.f32 %v1894, %v1894
  %v1901 = vmul.f32 %v1895, %v1895
  %v1902 = vmul.f32 %v1896, %v1896
  %v1903 = vmul.f32 %v1897, %v1897
  %v1904 = vmul.f32 %v1898, %v1898
  %v1905 = vsel %vm140, %v1899, 0.0
  %1906 = vadd.xlane.f32.xlu0 %v1905
  %v1907 = vpop.xlane.xlu0 %1906
  %v1908 = vsel %vm140, %v1900, 0.0
  %1909 = vadd.xlane.f32.xlu0 %v1908
  %v1910 = vpop.xlane.xlu0 %1909
  %v1911 = vsel %vm140, %v1901, 0.0
  %1912 = vadd.xlane.f32.xlu0 %v1911
  %v1913 = vpop.xlane.xlu0 %1912
  %v1914 = vsel %vm140, %v1902, 0.0
  %1915 = vadd.xlane.f32.xlu0 %v1914
  %v1916 = vpop.xlane.xlu0 %1915
  %v1917 = vsel %vm140, %v1903, 0.0
  %1918 = vadd.xlane.f32.xlu0 %v1917
  %v1919 = vpop.xlane.xlu0 %1918
  %v1920 = vsel %vm140, %v1904, 0.0
  %1921 = vadd.xlane.f32.xlu0 %v1920
  %v1922 = vpop.xlane.xlu0 %1921
  %v1923 = vmul.f32 %v1907, %v161
  %v1924 = vmul.f32 %v1910, %v161
  %v1925 = vmul.f32 %v1913, %v161
  %v1926 = vmul.f32 %v1916, %v161
  %v1927 = vmul.f32 %v1919, %v161
  %v1928 = vmul.f32 %v1922, %v161
  %v1929 = vadd.f32 %v1923, 1e-05
  %v1930 = vadd.f32 %v1924, 1e-05
  %v1931 = vadd.f32 %v1925, 1e-05
  %v1932 = vadd.f32 %v1926, 1e-05
  %v1933 = vadd.f32 %v1927, 1e-05
  %v1934 = vadd.f32 %v1928, 1e-05
  %v1935 = vrsqrt.pop %v1929
  %v1936 = vmul.f32 %v1935, %v1929
  %v1937 = vmul.f32 %v1936, %v1935
  %v1938 = vmul.f32 0.5, %v1937
  %v1939 = vsub.f32 1.5, %v1938
  %v1940 = vmul.f32 %v1935, %v1939
  %vm1941 = vweird.f32 %v1929
  %vm1942 = vweird.f32 %v1935
  %vm1943 = vmor %vm1941, %vm1942
  %v1944 = vsel %vm1943, %v1935, %v1940
  %v1945 = vrsqrt.pop %v1930
  %v1946 = vmul.f32 %v1945, %v1930
  %v1947 = vmul.f32 %v1946, %v1945
  %v1948 = vmul.f32 0.5, %v1947
  %v1949 = vsub.f32 1.5, %v1948
  %v1950 = vmul.f32 %v1945, %v1949
  %vm1951 = vweird.f32 %v1930
  %vm1952 = vweird.f32 %v1945
  %vm1953 = vmor %vm1951, %vm1952
  %v1954 = vsel %vm1953, %v1945, %v1950
  %v1955 = vrsqrt.pop %v1931
  %v1956 = vmul.f32 %v1955, %v1931
  %v1957 = vmul.f32 %v1956, %v1955
  %v1958 = vmul.f32 0.5, %v1957
  %v1959 = vsub.f32 1.5, %v1958
  %v1960 = vmul.f32 %v1955, %v1959
  %vm1961 = vweird.f32 %v1931
  %vm1962 = vweird.f32 %v1955
  %vm1963 = vmor %vm1961, %vm1962
  %v1964 = vsel %vm1963, %v1955, %v1960
  %v1965 = vrsqrt.pop %v1932
  %v1966 = vmul.f32 %v1965, %v1932
  %v1967 = vmul.f32 %v1966, %v1965
  %v1968 = vmul.f32 0.5, %v1967
  %v1969 = vsub.f32 1.5, %v1968
  %v1970 = vmul.f32 %v1965, %v1969
  %vm1971 = vweird.f32 %v1932
  %vm1972 = vweird.f32 %v1965
  %vm1973 = vmor %vm1971, %vm1972
  %v1974 = vsel %vm1973, %v1965, %v1970
  %v1975 = vrsqrt.pop %v1933
  %v1976 = vmul.f32 %v1975, %v1933
  %v1977 = vmul.f32 %v1976, %v1975
  %v1978 = vmul.f32 0.5, %v1977
  %v1979 = vsub.f32 1.5, %v1978
  %v1980 = vmul.f32 %v1975, %v1979
  %vm1981 = vweird.f32 %v1933
  %vm1982 = vweird.f32 %v1975
  %vm1983 = vmor %vm1981, %vm1982
  %v1984 = vsel %vm1983, %v1975, %v1980
  %v1985 = vrsqrt.pop %v1934
  %v1986 = vmul.f32 %v1985, %v1934
  %v1987 = vmul.f32 %v1986, %v1985
  %v1988 = vmul.f32 0.5, %v1987
  %v1989 = vsub.f32 1.5, %v1988
  %v1990 = vmul.f32 %v1985, %v1989
  %vm1991 = vweird.f32 %v1934
  %vm1992 = vweird.f32 %v1985
  %vm1993 = vmor %vm1991, %vm1992
  %v1994 = vsel %vm1993, %v1985, %v1990
  %v1995 = vmul.f32 %v1893, %v1944
  %v1996 = vmul.f32 %v1894, %v1954
  %v1997 = vmul.f32 %v1895, %v1964
  %v1998 = vmul.f32 %v1896, %v1974
  %v1999 = vmul.f32 %v1897, %v1984
  %v2000 = vmul.f32 %v1898, %v1994
  %v2001 = vperm.slane %v112, 0
  %v2002 = vmul.f32 %v1995, %v2001
  %v2003 = vmul.f32 %v1996, %v2001
  %v2004 = vmul.f32 %v1997, %v2001
  %v2005 = vmul.f32 %v1998, %v2001
  %v2006 = vmul.f32 %v1999, %v2001
  %v2007 = vmul.f32 %v2000, %v2001
  %v2008 = vperm.slane %v113, 0
  %v2009 = vadd.f32 %v2002, %v2008
  %v2010 = vadd.f32 %v2003, %v2008
  %v2011 = vadd.f32 %v2004, %v2008
  %v2012 = vadd.f32 %v2005, %v2008
  %v2013 = vadd.f32 %v2006, %v2008
  %v2014 = vadd.f32 %v2007, %v2008
  %v2015 = vpack.c.bf16 %v2010, %v2009
  %v2016 = vpack.c.bf16 %v2012, %v2011
  %v2017 = vpack.c.bf16 %v2014, %v2013
  %v2018 = vperm.slane %v114, 0
  %v2023 = vunpack.c.l.b16 %v120
  %v2024 = vunpack.c.l.b16 %v121
  %v2025 = vunpack.c.l.b16 %v122
  %v2026 = vunpack.c.l.b16 %v123
  %v2027 = vpack.c.b16 %v2024, %v2023
  %v2028 = vpack.c.b16 %v2026, %v2025
  %v2032 = vsel %vm140, %v2015, 0
  %v2035 = vsel %vm140, %v2016, 0
  %v2038 = vsel %vm140, %v2017, 0
  %2040 = vmatpush.bf16.msra.mxu0 0
  %2041 = vmatpush.bf16.msra.mxu0 0
  %2042 = vmatpush.bf16.msra.mxu0 0
  %2043 = vmatpush.bf16.msra.mxu0 0
  %2044 = vmatpush.bf16.msra.mxu0 0
  %2045 = vmatpush.bf16.msra.mxu0 0
  %2046 = vmatpush.bf16.msra.mxu0 %v2028
  %2047 = vmatpush.bf16.msra.mxu0 %v2027
  %2048 = vmatmul.bf16.gmra.mxu0 %v2032
  %v2049 = vpop.f32.mrf.mxu0
  %v2050 = vadd.f32 %v2018, %v2049
  %v2051 = vpop.f32.mrf.mxu0
  %v2052 = vadd.f32 %v2018, %v2051
  %2053 = vmatmul.bf16.gmra.mxu0 %v2035
  %v2054 = vpop.f32.mrf.mxu0
  %v2055 = vadd.f32 %v2018, %v2054
  %v2056 = vpop.f32.mrf.mxu0
  %v2057 = vadd.f32 %v2018, %v2056
  %2058 = vmatmul.bf16.gmra.mxu0 %v2038
  %v2059 = vpop.f32.mrf.mxu0
  %v2060 = vadd.f32 %v2018, %v2059
  %v2061 = vpop.f32.mrf.mxu0
  %v2062 = vadd.f32 %v2018, %v2061
  %2063 = vdwg.mxu0
  %v2064 = vmul.f32 %v2050, 0.5
  %v2065 = vmul.f32 %v2052, 0.5
  %v2066 = vmul.f32 %v2055, 0.5
  %v2067 = vmul.f32 %v2057, 0.5
  %v2068 = vmul.f32 %v2060, 0.5
  %v2069 = vmul.f32 %v2062, 0.5
  %v2070 = vmul.f32 %v2050, 0.70710677
  %v2071 = vmul.f32 %v2052, 0.70710677
  %v2072 = vmul.f32 %v2055, 0.70710677
  %v2073 = vmul.f32 %v2057, 0.70710677
  %v2074 = vmul.f32 %v2060, 0.70710677
  %v2075 = vmul.f32 %v2062, 0.70710677
  %vm2076 = vcmp.ge.f32.partialorder %v2070, 0.0
  %vm2077 = vcmp.ge.f32.partialorder %v2071, 0.0
  %vm2078 = vcmp.ge.f32.partialorder %v2072, 0.0
  %vm2079 = vcmp.ge.f32.partialorder %v2073, 0.0
  %vm2080 = vcmp.ge.f32.partialorder %v2074, 0.0
  %vm2081 = vcmp.ge.f32.partialorder %v2075, 0.0
  %v2082 = vsel %vm2076, 1.0, -1.0
  %v2083 = vsel %vm2077, 1.0, -1.0
  %v2084 = vsel %vm2078, 1.0, -1.0
  %v2085 = vsel %vm2079, 1.0, -1.0
  %v2086 = vsel %vm2080, 1.0, -1.0
  %v2087 = vsel %vm2081, 1.0, -1.0
  %v2088 = vand.u32 2147483647, %v2070
  %v2089 = vand.u32 2147483647, %v2071
  %v2090 = vand.u32 2147483647, %v2072
  %v2091 = vand.u32 2147483647, %v2073
  %v2092 = vand.u32 2147483647, %v2074
  %v2093 = vand.u32 2147483647, %v2075
  %v2094 = vmul.f32 %v2088, 0.3275911
  %v2095 = vmul.f32 %v2089, 0.3275911
  %v2096 = vmul.f32 %v2090, 0.3275911
  %v2097 = vmul.f32 %v2091, 0.3275911
  %v2098 = vmul.f32 %v2092, 0.3275911
  %v2099 = vmul.f32 %v2093, 0.3275911
  %v2100 = vadd.f32 %v2094, 1.0
  %v2101 = vadd.f32 %v2095, 1.0
  %v2102 = vadd.f32 %v2096, 1.0
  %v2103 = vadd.f32 %v2097, 1.0
  %v2104 = vadd.f32 %v2098, 1.0
  %v2105 = vadd.f32 %v2099, 1.0
  %v2106 = vrcp.pop %v2100
  %v2107 = vmul.f32 %v2100, %v2106
  %v2108 = vsub.f32 1.0, %v2107
  %v2109 = vmul.f32 %v2106, %v2108
  %v2110 = vadd.f32 %v2106, %v2109
  %vm2111 = vweird.f32 %v2100
  %vm2112 = vweird.f32 %v2106
  %vm2113 = vmor %vm2111, %vm2112
  %v2114 = vsel %vm2113, %v2106, %v2110
  %v2115 = vand.u32 2147483647, %v2100
  %vm2116 = vcmp.eq.f32.partialorder %v2115, 8.507059e+37
  %v2117 = vand.u32 %v2100, 2147483648
  %v2118 = vor.u32 1.1754944e-38, %v2117
  %v2119 = vsel %vm2116, %v2118, %v2114
  %v2120 = vmul.f32 1.0, %v2119
  %v2121 = vrcp.pop %v2101
  %v2122 = vmul.f32 %v2101, %v2121
  %v2123 = vsub.f32 1.0, %v2122
  %v2124 = vmul.f32 %v2121, %v2123
  %v2125 = vadd.f32 %v2121, %v2124
  %vm2126 = vweird.f32 %v2101
  %vm2127 = vweird.f32 %v2121
  %vm2128 = vmor %vm2126, %vm2127
  %v2129 = vsel %vm2128, %v2121, %v2125
  %v2130 = vand.u32 2147483647, %v2101
  %vm2131 = vcmp.eq.f32.partialorder %v2130, 8.507059e+37
  %v2132 = vand.u32 %v2101, 2147483648
  %v2133 = vor.u32 1.1754944e-38, %v2132
  %v2134 = vsel %vm2131, %v2133, %v2129
  %v2135 = vmul.f32 1.0, %v2134
  %v2136 = vrcp.pop %v2102
  %v2137 = vmul.f32 %v2102, %v2136
  %v2138 = vsub.f32 1.0, %v2137
  %v2139 = vmul.f32 %v2136, %v2138
  %v2140 = vadd.f32 %v2136, %v2139
  %vm2141 = vweird.f32 %v2102
  %vm2142 = vweird.f32 %v2136
  %vm2143 = vmor %vm2141, %vm2142
  %v2144 = vsel %vm2143, %v2136, %v2140
  %v2145 = vand.u32 2147483647, %v2102
  %vm2146 = vcmp.eq.f32.partialorder %v2145, 8.507059e+37
  %v2147 = vand.u32 %v2102, 2147483648
  %v2148 = vor.u32 1.1754944e-38, %v2147
  %v2149 = vsel %vm2146, %v2148, %v2144
  %v2150 = vmul.f32 1.0, %v2149
  %v2151 = vrcp.pop %v2103
  %v2152 = vmul.f32 %v2103, %v2151
  %v2153 = vsub.f32 1.0, %v2152
  %v2154 = vmul.f32 %v2151, %v2153
  %v2155 = vadd.f32 %v2151, %v2154
  %vm2156 = vweird.f32 %v2103
  %vm2157 = vweird.f32 %v2151
  %vm2158 = vmor %vm2156, %vm2157
  %v2159 = vsel %vm2158, %v2151, %v2155
  %v2160 = vand.u32 2147483647, %v2103
  %vm2161 = vcmp.eq.f32.partialorder %v2160, 8.507059e+37
  %v2162 = vand.u32 %v2103, 2147483648
  %v2163 = vor.u32 1.1754944e-38, %v2162
  %v2164 = vsel %vm2161, %v2163, %v2159
  %v2165 = vmul.f32 1.0, %v2164
  %v2166 = vrcp.pop %v2104
  %v2167 = vmul.f32 %v2104, %v2166
  %v2168 = vsub.f32 1.0, %v2167
  %v2169 = vmul.f32 %v2166, %v2168
  %v2170 = vadd.f32 %v2166, %v2169
  %vm2171 = vweird.f32 %v2104
  %vm2172 = vweird.f32 %v2166
  %vm2173 = vmor %vm2171, %vm2172
  %v2174 = vsel %vm2173, %v2166, %v2170
  %v2175 = vand.u32 2147483647, %v2104
  %vm2176 = vcmp.eq.f32.partialorder %v2175, 8.507059e+37
  %v2177 = vand.u32 %v2104, 2147483648
  %v2178 = vor.u32 1.1754944e-38, %v2177
  %v2179 = vsel %vm2176, %v2178, %v2174
  %v2180 = vmul.f32 1.0, %v2179
  %v2181 = vrcp.pop %v2105
  %v2182 = vmul.f32 %v2105, %v2181
  %v2183 = vsub.f32 1.0, %v2182
  %v2184 = vmul.f32 %v2181, %v2183
  %v2185 = vadd.f32 %v2181, %v2184
  %vm2186 = vweird.f32 %v2105
  %vm2187 = vweird.f32 %v2181
  %vm2188 = vmor %vm2186, %vm2187
  %v2189 = vsel %vm2188, %v2181, %v2185
  %v2190 = vand.u32 2147483647, %v2105
  %vm2191 = vcmp.eq.f32.partialorder %v2190, 8.507059e+37
  %v2192 = vand.u32 %v2105, 2147483648
  %v2193 = vor.u32 1.1754944e-38, %v2192
  %v2194 = vsel %vm2191, %v2193, %v2189
  %v2195 = vmul.f32 1.0, %v2194
  %v2196 = vmul.f32 %v2120, 1.0614054
  %v2197 = vmul.f32 %v2135, 1.0614054
  %v2198 = vmul.f32 %v2150, 1.0614054
  %v2199 = vmul.f32 %v2165, 1.0614054
  %v2200 = vmul.f32 %v2180, 1.0614054
  %v2201 = vmul.f32 %v2195, 1.0614054
  %v2202 = vadd.f32 %v2196, -1.4531521
  %v2203 = vadd.f32 %v2197, -1.4531521
  %v2204 = vadd.f32 %v2198, -1.4531521
  %v2205 = vadd.f32 %v2199, -1.4531521
  %v2206 = vadd.f32 %v2200, -1.4531521
  %v2207 = vadd.f32 %v2201, -1.4531521
  %v2208 = vmul.f32 %v2202, %v2120
  %v2209 = vmul.f32 %v2203, %v2135
  %v2210 = vmul.f32 %v2204, %v2150
  %v2211 = vmul.f32 %v2205, %v2165
  %v2212 = vmul.f32 %v2206, %v2180
  %v2213 = vmul.f32 %v2207, %v2195
  %v2214 = vadd.f32 %v2208, 1.4214138
  %v2215 = vadd.f32 %v2209, 1.4214138
  %v2216 = vadd.f32 %v2210, 1.4214138
  %v2217 = vadd.f32 %v2211, 1.4214138
  %v2218 = vadd.f32 %v2212, 1.4214138
  %v2219 = vadd.f32 %v2213, 1.4214138
  %v2220 = vmul.f32 %v2214, %v2120
  %v2221 = vmul.f32 %v2215, %v2135
  %v2222 = vmul.f32 %v2216, %v2150
  %v2223 = vmul.f32 %v2217, %v2165
  %v2224 = vmul.f32 %v2218, %v2180
  %v2225 = vmul.f32 %v2219, %v2195
  %v2226 = vadd.f32 %v2220, -0.28449672
  %v2227 = vadd.f32 %v2221, -0.28449672
  %v2228 = vadd.f32 %v2222, -0.28449672
  %v2229 = vadd.f32 %v2223, -0.28449672
  %v2230 = vadd.f32 %v2224, -0.28449672
  %v2231 = vadd.f32 %v2225, -0.28449672
  %v2232 = vmul.f32 %v2226, %v2120
  %v2233 = vmul.f32 %v2227, %v2135
  %v2234 = vmul.f32 %v2228, %v2150
  %v2235 = vmul.f32 %v2229, %v2165
  %v2236 = vmul.f32 %v2230, %v2180
  %v2237 = vmul.f32 %v2231, %v2195
  %v2238 = vadd.f32 %v2232, 0.2548296
  %v2239 = vadd.f32 %v2233, 0.2548296
  %v2240 = vadd.f32 %v2234, 0.2548296
  %v2241 = vadd.f32 %v2235, 0.2548296
  %v2242 = vadd.f32 %v2236, 0.2548296
  %v2243 = vadd.f32 %v2237, 0.2548296
  %v2244 = vmul.f32 %v2238, %v2120
  %v2245 = vmul.f32 %v2239, %v2135
  %v2246 = vmul.f32 %v2240, %v2150
  %v2247 = vmul.f32 %v2241, %v2165
  %v2248 = vmul.f32 %v2242, %v2180
  %v2249 = vmul.f32 %v2243, %v2195
  %v2250 = vsub.f32 0.0, %v2088
  %v2251 = vsub.f32 0.0, %v2089
  %v2252 = vsub.f32 0.0, %v2090
  %v2253 = vsub.f32 0.0, %v2091
  %v2254 = vsub.f32 0.0, %v2092
  %v2255 = vsub.f32 0.0, %v2093
  %v2256 = vmul.f32 %v2250, %v2088
  %v2257 = vmul.f32 %v2251, %v2089
  %v2258 = vmul.f32 %v2252, %v2090
  %v2259 = vmul.f32 %v2253, %v2091
  %v2260 = vmul.f32 %v2254, %v2092
  %v2261 = vmul.f32 %v2255, %v2093
  %v2262 = vmul.f32 %v2256, 1.442695
  %v2263 = vpow.pop %v2262
  %v2264 = vmul.f32 %v2257, 1.442695
  %v2265 = vpow.pop %v2264
  %v2266 = vmul.f32 %v2258, 1.442695
  %v2267 = vpow.pop %v2266
  %v2268 = vmul.f32 %v2259, 1.442695
  %v2269 = vpow.pop %v2268
  %v2270 = vmul.f32 %v2260, 1.442695
  %v2271 = vpow.pop %v2270
  %v2272 = vmul.f32 %v2261, 1.442695
  %v2273 = vpow.pop %v2272
  %v2274 = vmul.f32 %v2244, %v2263
  %v2275 = vmul.f32 %v2245, %v2265
  %v2276 = vmul.f32 %v2246, %v2267
  %v2277 = vmul.f32 %v2247, %v2269
  %v2278 = vmul.f32 %v2248, %v2271
  %v2279 = vmul.f32 %v2249, %v2273
  %v2280 = vsub.f32 1.0, %v2274
  %v2281 = vsub.f32 1.0, %v2275
  %v2282 = vsub.f32 1.0, %v2276
  %v2283 = vsub.f32 1.0, %v2277
  %v2284 = vsub.f32 1.0, %v2278
  %v2285 = vsub.f32 1.0, %v2279
  %v2286 = vmul.f32 %v2082, %v2280
  %v2287 = vmul.f32 %v2083, %v2281
  %v2288 = vmul.f32 %v2084, %v2282
  %v2289 = vmul.f32 %v2085, %v2283
  %v2290 = vmul.f32 %v2086, %v2284
  %v2291 = vmul.f32 %v2087, %v2285
  %v2292 = vadd.f32 %v2286, 1.0
  %v2293 = vadd.f32 %v2287, 1.0
  %v2294 = vadd.f32 %v2288, 1.0
  %v2295 = vadd.f32 %v2289, 1.0
  %v2296 = vadd.f32 %v2290, 1.0
  %v2297 = vadd.f32 %v2291, 1.0
  %v2298 = vmul.f32 %v2064, %v2292
  %v2299 = vmul.f32 %v2065, %v2293
  %v2300 = vmul.f32 %v2066, %v2294
  %v2301 = vmul.f32 %v2067, %v2295
  %v2302 = vmul.f32 %v2068, %v2296
  %v2303 = vmul.f32 %v2069, %v2297
  %v2304 = vpack.c.bf16 %v2299, %v2298
  %v2305 = vpack.c.bf16 %v2301, %v2300
  %v2306 = vpack.c.bf16 %v2303, %v2302
  %v2323 = vunpack.c.l.b16 %v124
  %v2324 = vunpack.c.l.b16 %v125
  %v2325 = vunpack.c.l.b16 %v126
  %v2326 = vunpack.c.l.b16 %v127
  %v2327 = vunpack.c.l.b16 %v128
  %v2328 = vunpack.c.l.b16 %v129
  %v2329 = vunpack.c.l.b16 %v130
  %v2330 = vunpack.c.l.b16 %v131
  %v2331 = vunpack.c.l.b16 %v132
  %v2332 = vunpack.c.l.b16 %v133
  %v2333 = vunpack.c.l.b16 %v134
  %v2334 = vunpack.c.l.b16 %v135
  %v2335 = vunpack.c.l.b16 %v136
  %v2336 = vunpack.c.l.b16 %v137
  %v2337 = vunpack.c.l.b16 %v138
  %v2338 = vunpack.c.l.b16 %v139
  %v2339 = vpack.c.b16 %v2324, %v2323
  %v2340 = vpack.c.b16 %v2326, %v2325
  %v2341 = vpack.c.b16 %v2328, %v2327
  %v2342 = vpack.c.b16 %v2330, %v2329
  %v2343 = vpack.c.b16 %v2332, %v2331
  %v2344 = vpack.c.b16 %v2334, %v2333
  %v2345 = vpack.c.b16 %v2336, %v2335
  %v2346 = vpack.c.b16 %v2338, %v2337
  %2355 = vmatpush.bf16.msra.mxu0 %v2346
  %2356 = vmatpush.bf16.msra.mxu0 %v2345
  %2357 = vmatpush.bf16.msra.mxu0 %v2344
  %2358 = vmatpush.bf16.msra.mxu0 %v2343
  %2359 = vmatpush.bf16.msra.mxu0 %v2342
  %2360 = vmatpush.bf16.msra.mxu0 %v2341
  %2361 = vmatpush.bf16.msra.mxu0 %v2340
  %2362 = vmatpush.bf16.msra.mxu0 %v2339
  %2363 = vmatmul.bf16.gmra.mxu0 %v2304
  %v2364 = vpop.f32.mrf.mxu0
  %v2365 = vadd.f32 0.0, %v2364
  %v2366 = vpop.f32.mrf.mxu0
  %v2367 = vadd.f32 0.0, %v2366
  %2368 = vmatmul.bf16.gmra.mxu0 %v2305
  %v2369 = vpop.f32.mrf.mxu0
  %v2370 = vadd.f32 0.0, %v2369
  %v2371 = vpop.f32.mrf.mxu0
  %v2372 = vadd.f32 0.0, %v2371
  %2373 = vmatmul.bf16.gmra.mxu0 %v2306
  %v2374 = vpop.f32.mrf.mxu0
  %v2375 = vadd.f32 0.0, %v2374
  %v2376 = vpop.f32.mrf.mxu0
  %v2377 = vadd.f32 0.0, %v2376
  %2378 = vdwg.mxu0
  %v2379 = vadd.f32 %v1863, %v2365
  %v2380 = vadd.f32 %v1864, %v2367
  %v2381 = vadd.f32 %v1865, %v2370
  %v2382 = vadd.f32 %v1866, %v2372
  %v2383 = vadd.f32 %v1867, %v2375
  %v2384 = vadd.f32 %v1868, %v2377
  %v2385 = vperm.slane %v115, 0
  %v2386 = vadd.f32 %v2379, %v2385
  %v2387 = vadd.f32 %v2380, %v2385
  %v2388 = vadd.f32 %v2381, %v2385
  %v2389 = vadd.f32 %v2382, %v2385
  %v2390 = vadd.f32 %v2383, %v2385
  %v2391 = vadd.f32 %v2384, %v2385
  %s2392 = scalar_lea.vmem %s4, 8
  %v2393 = vld [vmem:[%s2392] sm:$0x1]
  %v2394 = vld [vmem:[%s2392 + $0x1] sm:$0x1]
  %v2395 = vld [vmem:[%s2392 + $0x2] sm:$0x1]
  %v2396 = vld [vmem:[%s2392 + $0x3] sm:$0x1]
  %v2397 = vld [vmem:[%s2392 + $0x4] sm:$0x1]
  %v2398 = vld [vmem:[%s2392 + $0x5] sm:$0x1]
  %v2399 = vld [vmem:[%s2392 + $0x6] sm:$0x1]
  %s2400 = scalar_lea.vmem %s3, 192
  %v2401 = vld [vmem:[%s2400] sm:$0xf]
  %v2402 = vld [vmem:[%s2400 + $0xc] sm:$0xf]
  %v2403 = vld [vmem:[%s2400 + $0x18] sm:$0xf]
  %v2404 = vld [vmem:[%s2400 + $0x24] sm:$0xf]
  %v2405 = vld [vmem:[%s2400 + $0x4] sm:$0xf]
  %v2406 = vld [vmem:[%s2400 + $0x10] sm:$0xf]
  %v2407 = vld [vmem:[%s2400 + $0x1c] sm:$0xf]
  %v2408 = vld [vmem:[%s2400 + $0x28] sm:$0xf]
  %v2409 = vld [vmem:[%s2400 + $0x8] sm:$0xf]
  %v2410 = vld [vmem:[%s2400 + $0x14] sm:$0xf]
  %v2411 = vld [vmem:[%s2400 + $0x20] sm:$0xf]
  %v2412 = vld [vmem:[%s2400 + $0x2c] sm:$0xf]
  %v2413 = vld [vmem:[%s2400 + $0x38] sm:$0xf]
  %v2414 = vld [vmem:[%s2400 + $0x44] sm:$0xf]
  %v2415 = vld [vmem:[%s2400 + $0x50] sm:$0xf]
  %v2416 = vld [vmem:[%s2400 + $0x5c] sm:$0xf]
  %v2417 = vld [vmem:[%s2400 + $0x68] sm:$0xf]
  %v2418 = vld [vmem:[%s2400 + $0x74] sm:$0xf]
  %v2419 = vld [vmem:[%s2400 + $0x80] sm:$0xf]
  %v2420 = vld [vmem:[%s2400 + $0x8c] sm:$0xf]
  %v2421 = vld [vmem:[%s2400 + $0x98] sm:$0xf]
  %v2422 = vld [vmem:[%s2400 + $0xa4] sm:$0xf]
  %v2423 = vld [vmem:[%s2400 + $0xb0] sm:$0xf]
  %v2424 = vld [vmem:[%s2400 + $0xbc] sm:$0xf]
  %v2425 = vsel %vm140, %v2386, 0.0
  %2426 = vadd.xlane.f32.xlu0 %v2425
  %v2427 = vpop.xlane.xlu0 %2426
  %v2428 = vsel %vm140, %v2387, 0.0
  %2429 = vadd.xlane.f32.xlu0 %v2428
  %v2430 = vpop.xlane.xlu0 %2429
  %v2431 = vsel %vm140, %v2388, 0.0
  %2432 = vadd.xlane.f32.xlu0 %v2431
  %v2433 = vpop.xlane.xlu0 %2432
  %v2434 = vsel %vm140, %v2389, 0.0
  %2435 = vadd.xlane.f32.xlu0 %v2434
  %v2436 = vpop.xlane.xlu0 %2435
  %v2437 = vsel %vm140, %v2390, 0.0
  %2438 = vadd.xlane.f32.xlu0 %v2437
  %v2439 = vpop.xlane.xlu0 %2438
  %v2440 = vsel %vm140, %v2391, 0.0
  %2441 = vadd.xlane.f32.xlu0 %v2440
  %v2442 = vpop.xlane.xlu0 %2441
  %v2443 = vmul.f32 %v2427, %v161
  %v2444 = vmul.f32 %v2430, %v161
  %v2445 = vmul.f32 %v2433, %v161
  %v2446 = vmul.f32 %v2436, %v161
  %v2447 = vmul.f32 %v2439, %v161
  %v2448 = vmul.f32 %v2442, %v161
  %v2449 = vsub.f32 %v2386, %v2443
  %v2450 = vsub.f32 %v2387, %v2444
  %v2451 = vsub.f32 %v2388, %v2445
  %v2452 = vsub.f32 %v2389, %v2446
  %v2453 = vsub.f32 %v2390, %v2447
  %v2454 = vsub.f32 %v2391, %v2448
  %v2455 = vmul.f32 %v2449, %v2449
  %v2456 = vmul.f32 %v2450, %v2450
  %v2457 = vmul.f32 %v2451, %v2451
  %v2458 = vmul.f32 %v2452, %v2452
  %v2459 = vmul.f32 %v2453, %v2453
  %v2460 = vmul.f32 %v2454, %v2454
  %v2461 = vsel %vm140, %v2455, 0.0
  %2462 = vadd.xlane.f32.xlu0 %v2461
  %v2463 = vpop.xlane.xlu0 %2462
  %v2464 = vsel %vm140, %v2456, 0.0
  %2465 = vadd.xlane.f32.xlu0 %v2464
  %v2466 = vpop.xlane.xlu0 %2465
  %v2467 = vsel %vm140, %v2457, 0.0
  %2468 = vadd.xlane.f32.xlu0 %v2467
  %v2469 = vpop.xlane.xlu0 %2468
  %v2470 = vsel %vm140, %v2458, 0.0
  %2471 = vadd.xlane.f32.xlu0 %v2470
  %v2472 = vpop.xlane.xlu0 %2471
  %v2473 = vsel %vm140, %v2459, 0.0
  %2474 = vadd.xlane.f32.xlu0 %v2473
  %v2475 = vpop.xlane.xlu0 %2474
  %v2476 = vsel %vm140, %v2460, 0.0
  %2477 = vadd.xlane.f32.xlu0 %v2476
  %v2478 = vpop.xlane.xlu0 %2477
  %v2479 = vmul.f32 %v2463, %v161
  %v2480 = vmul.f32 %v2466, %v161
  %v2481 = vmul.f32 %v2469, %v161
  %v2482 = vmul.f32 %v2472, %v161
  %v2483 = vmul.f32 %v2475, %v161
  %v2484 = vmul.f32 %v2478, %v161
  %v2485 = vadd.f32 %v2479, 1e-05
  %v2486 = vadd.f32 %v2480, 1e-05
  %v2487 = vadd.f32 %v2481, 1e-05
  %v2488 = vadd.f32 %v2482, 1e-05
  %v2489 = vadd.f32 %v2483, 1e-05
  %v2490 = vadd.f32 %v2484, 1e-05
  %v2491 = vrsqrt.pop %v2485
  %v2492 = vmul.f32 %v2491, %v2485
  %v2493 = vmul.f32 %v2492, %v2491
  %v2494 = vmul.f32 0.5, %v2493
  %v2495 = vsub.f32 1.5, %v2494
  %v2496 = vmul.f32 %v2491, %v2495
  %vm2497 = vweird.f32 %v2485
  %vm2498 = vweird.f32 %v2491
  %vm2499 = vmor %vm2497, %vm2498
  %v2500 = vsel %vm2499, %v2491, %v2496
  %v2501 = vrsqrt.pop %v2486
  %v2502 = vmul.f32 %v2501, %v2486
  %v2503 = vmul.f32 %v2502, %v2501
  %v2504 = vmul.f32 0.5, %v2503
  %v2505 = vsub.f32 1.5, %v2504
  %v2506 = vmul.f32 %v2501, %v2505
  %vm2507 = vweird.f32 %v2486
  %vm2508 = vweird.f32 %v2501
  %vm2509 = vmor %vm2507, %vm2508
  %v2510 = vsel %vm2509, %v2501, %v2506
  %v2511 = vrsqrt.pop %v2487
  %v2512 = vmul.f32 %v2511, %v2487
  %v2513 = vmul.f32 %v2512, %v2511
  %v2514 = vmul.f32 0.5, %v2513
  %v2515 = vsub.f32 1.5, %v2514
  %v2516 = vmul.f32 %v2511, %v2515
  %vm2517 = vweird.f32 %v2487
  %vm2518 = vweird.f32 %v2511
  %vm2519 = vmor %vm2517, %vm2518
  %v2520 = vsel %vm2519, %v2511, %v2516
  %v2521 = vrsqrt.pop %v2488
  %v2522 = vmul.f32 %v2521, %v2488
  %v2523 = vmul.f32 %v2522, %v2521
  %v2524 = vmul.f32 0.5, %v2523
  %v2525 = vsub.f32 1.5, %v2524
  %v2526 = vmul.f32 %v2521, %v2525
  %vm2527 = vweird.f32 %v2488
  %vm2528 = vweird.f32 %v2521
  %vm2529 = vmor %vm2527, %vm2528
  %v2530 = vsel %vm2529, %v2521, %v2526
  %v2531 = vrsqrt.pop %v2489
  %v2532 = vmul.f32 %v2531, %v2489
  %v2533 = vmul.f32 %v2532, %v2531
  %v2534 = vmul.f32 0.5, %v2533
  %v2535 = vsub.f32 1.5, %v2534
  %v2536 = vmul.f32 %v2531, %v2535
  %vm2537 = vweird.f32 %v2489
  %vm2538 = vweird.f32 %v2531
  %vm2539 = vmor %vm2537, %vm2538
  %v2540 = vsel %vm2539, %v2531, %v2536
  %v2541 = vrsqrt.pop %v2490
  %v2542 = vmul.f32 %v2541, %v2490
  %v2543 = vmul.f32 %v2542, %v2541
  %v2544 = vmul.f32 0.5, %v2543
  %v2545 = vsub.f32 1.5, %v2544
  %v2546 = vmul.f32 %v2541, %v2545
  %vm2547 = vweird.f32 %v2490
  %vm2548 = vweird.f32 %v2541
  %vm2549 = vmor %vm2547, %vm2548
  %v2550 = vsel %vm2549, %v2541, %v2546
  %v2551 = vmul.f32 %v2449, %v2500
  %v2552 = vmul.f32 %v2450, %v2510
  %v2553 = vmul.f32 %v2451, %v2520
  %v2554 = vmul.f32 %v2452, %v2530
  %v2555 = vmul.f32 %v2453, %v2540
  %v2556 = vmul.f32 %v2454, %v2550
  %v2557 = vperm.slane %v2393, 0
  %v2558 = vmul.f32 %v2551, %v2557
  %v2559 = vmul.f32 %v2552, %v2557
  %v2560 = vmul.f32 %v2553, %v2557
  %v2561 = vmul.f32 %v2554, %v2557
  %v2562 = vmul.f32 %v2555, %v2557
  %v2563 = vmul.f32 %v2556, %v2557
  %v2564 = vperm.slane %v2394, 0
  %v2565 = vadd.f32 %v2558, %v2564
  %v2566 = vadd.f32 %v2559, %v2564
  %v2567 = vadd.f32 %v2560, %v2564
  %v2568 = vadd.f32 %v2561, %v2564
  %v2569 = vadd.f32 %v2562, %v2564
  %v2570 = vadd.f32 %v2563, %v2564
  %v2571 = vpack.c.bf16 %v2566, %v2565
  %v2572 = vpack.c.bf16 %v2568, %v2567
  %v2573 = vpack.c.bf16 %v2570, %v2569
  %v2578 = vunpack.c.l.b16 %v2401
  %v2579 = vunpack.c.l.b16 %v2402
  %v2580 = vunpack.c.l.b16 %v2403
  %v2581 = vunpack.c.l.b16 %v2404
  %v2582 = vpack.c.b16 %v2579, %v2578
  %v2583 = vpack.c.b16 %v2581, %v2580
  %v2587 = vsel %vm140, %v2571, 0
  %v2590 = vsel %vm140, %v2572, 0
  %v2593 = vsel %vm140, %v2573, 0
  %2595 = vmatpush.bf16.msra.mxu0 0
  %2596 = vmatpush.bf16.msra.mxu0 0
  %2597 = vmatpush.bf16.msra.mxu0 0
  %2598 = vmatpush.bf16.msra.mxu0 0
  %2599 = vmatpush.bf16.msra.mxu0 0
  %2600 = vmatpush.bf16.msra.mxu0 0
  %2601 = vmatpush.bf16.msra.mxu0 %v2583
  %2602 = vmatpush.bf16.msra.mxu0 %v2582
  %2603 = vmatmul.bf16.gmra.mxu0 %v2587
  %v2604 = vpop.f32.mrf.mxu0
  %v2605 = vadd.f32 0.0, %v2604
  %v2606 = vpop.f32.mrf.mxu0
  %v2607 = vadd.f32 0.0, %v2606
  %2608 = vmatmul.bf16.gmra.mxu0 %v2590
  %v2609 = vpop.f32.mrf.mxu0
  %v2610 = vadd.f32 0.0, %v2609
  %v2611 = vpop.f32.mrf.mxu0
  %v2612 = vadd.f32 0.0, %v2611
  %2613 = vmatmul.bf16.gmra.mxu0 %v2593
  %v2614 = vpop.f32.mrf.mxu0
  %v2615 = vadd.f32 0.0, %v2614
  %v2616 = vpop.f32.mrf.mxu0
  %v2617 = vadd.f32 0.0, %v2616
  %2618 = vdwg.mxu0
  %v2619 = vpack.c.bf16 %v2607, %v2605
  %v2620 = vpack.c.bf16 %v2610, %v2610
  %2623 = vrot.lane.b32.xlu0 %v2619, 96
  %v2624 = vpop.permute.xlu0 %2623
  %2625 = vrot.lane.b32.xlu0 %v2620, 96
  %v2626 = vpop.permute.xlu0 %2625
  %v2628 = vsel %vm325, %v2619, 0
  %v2631 = vsel %vm325, %v2620, 0
  %v2634 = vsel %vm325, %v2624, 0
  %v2637 = vsel %vm325, %v2626, 0
  %2639 = vmatpush.bf16.xpose.msra.mxu0 0
  %2640 = vmatpush.bf16.xpose.msra.mxu0 0
  %2641 = vmatpush.bf16.xpose.msra.mxu0 0
  %2642 = vmatpush.bf16.xpose.msra.mxu0 0
  %2643 = vmatpush.bf16.xpose.msra.mxu0 0
  %2644 = vmatpush.bf16.xpose.msra.mxu0 0
  %2645 = vmatpush.bf16.xpose.msra.mxu0 %v2637
  %2646 = vmatpush.bf16.xpose.msra.mxu0 %v2634
  %2647 = vmatmul.bf16.gmra.mxu0 %v2628
  %v2648 = vpop.f32.mrf.mxu0
  %v2649 = vadd.f32 0.0, %v2648
  %v2650 = vpop.f32.mrf.mxu0
  %v2651 = vadd.f32 0.0, %v2650
  %2652 = vmatmul.bf16.gmra.mxu0 %v2631
  %v2653 = vpop.f32.mrf.mxu0
  %v2654 = vadd.f32 0.0, %v2653
  %v2655 = vpop.f32.mrf.mxu0
  %2656 = vdwg.mxu0
  %v2657 = vmul.f32 %v2649, 0.35355338
  %v2658 = vmul.f32 %v2651, 0.35355338
  %v2659 = vmul.f32 %v2654, 0.35355338
  %v2660 = vadd.f32 %v2657, %v106
  %v2661 = vadd.f32 %v2658, %v106
  %v2662 = vadd.f32 %v2659, %v106
  %v2663 = vsel %vm362, %v2660, -inf
  %2664 = vmax.xlane.f32.xlu0 %v2663
  %v2665 = vpop.xlane.xlu0 %2664
  %v2666 = vsel %vm362, %v2661, -inf
  %2667 = vmax.xlane.f32.xlu0 %v2666
  %v2668 = vpop.xlane.xlu0 %2667
  %v2669 = vsel %vm362, %v2662, -inf
  %2670 = vmax.xlane.f32.xlu0 %v2669
  %v2671 = vpop.xlane.xlu0 %2670
  %v2672 = vsub.f32 %v2660, %v2665
  %v2673 = vsub.f32 %v2661, %v2668
  %v2674 = vsub.f32 %v2662, %v2671
  %v2675 = vmul.f32 %v2672, 1.442695
  %v2676 = vpow.pop %v2675
  %v2677 = vmul.f32 %v2673, 1.442695
  %v2678 = vpow.pop %v2677
  %v2679 = vmul.f32 %v2674, 1.442695
  %v2680 = vpow.pop %v2679
  %v2681 = vsel %vm362, %v2676, 0.0
  %2682 = vadd.xlane.f32.xlu0 %v2681
  %v2683 = vpop.xlane.xlu0 %2682
  %v2684 = vsel %vm362, %v2678, 0.0
  %2685 = vadd.xlane.f32.xlu0 %v2684
  %v2686 = vpop.xlane.xlu0 %2685
  %v2687 = vsel %vm362, %v2680, 0.0
  %2688 = vadd.xlane.f32.xlu0 %v2687
  %v2689 = vpop.xlane.xlu0 %2688
  %v2690 = vrcp.pop %v2683
  %v2691 = vrcp.pop %v2686
  %v2692 = vrcp.pop %v2689
  %v2693 = vmul.f32 %v2676, %v2690
  %v2694 = vmul.f32 %v2678, %v2691
  %v2695 = vmul.f32 %v2680, %v2692
  %v2696 = vld [vmem:[%s2392 + $0x7] sm:$0x1]
  %s2698 = vtos %v2696
  %v2699 = vstv %s2698
  %v2701 = vmul.f32 %v2699, %v2693
  %v2702 = vmul.f32 %v2699, %v2694
  %v2703 = vmul.f32 %v2699, %v2695
  %s2704 = scalar_lea.vmem %s5, 96
  %v2705 = vld [vmem:[%s2704] sm:$0xff]
  %v2706 = vld [vmem:[%s2704 + $0x8] sm:$0xff]
  %v2707 = vld [vmem:[%s2704 + $0x10] sm:$0xff]
  %v2708 = vadd.f32 %v2701, %v2705
  %v2709 = vadd.f32 %v2702, %v2706
  %v2710 = vadd.f32 %v2703, %v2707
  %v2711 = vsel %vm362, %v2708, 0.0
  %2712 = vadd.xlane.f32.xlu0 %v2711
  %v2713 = vpop.xlane.xlu0 %2712
  %v2714 = vsel %vm362, %v2709, 0.0
  %2715 = vadd.xlane.f32.xlu0 %v2714
  %v2716 = vpop.xlane.xlu0 %2715
  %v2717 = vsel %vm362, %v2710, 0.0
  %2718 = vadd.xlane.f32.xlu0 %v2717
  %v2719 = vpop.xlane.xlu0 %2718
  %v2720 = vrcp.pop %v2713
  %v2721 = vmul.f32 %v2713, %v2720
  %v2722 = vsub.f32 1.0, %v2721
  %v2723 = vmul.f32 %v2720, %v2722
  %v2724 = vadd.f32 %v2720, %v2723
  %vm2725 = vweird.f32 %v2713
  %vm2726 = vweird.f32 %v2720
  %vm2727 = vmor %vm2725, %vm2726
  %v2728 = vsel %vm2727, %v2720, %v2724
  %v2729 = vand.u32 2147483647, %v2713
  %vm2730 = vcmp.eq.f32.partialorder %v2729, 8.507059e+37
  %v2731 = vand.u32 %v2713, 2147483648
  %v2732 = vor.u32 1.1754944e-38, %v2731
  %v2733 = vsel %vm2730, %v2732, %v2728
  %v2734 = vmul.f32 %v2708, %v2733
  %v2735 = vrcp.pop %v2716
  %v2736 = vmul.f32 %v2716, %v2735
  %v2737 = vsub.f32 1.0, %v2736
  %v2738 = vmul.f32 %v2735, %v2737
  %v2739 = vadd.f32 %v2735, %v2738
  %vm2740 = vweird.f32 %v2716
  %vm2741 = vweird.f32 %v2735
  %vm2742 = vmor %vm2740, %vm2741
  %v2743 = vsel %vm2742, %v2735, %v2739
  %v2744 = vand.u32 2147483647, %v2716
  %vm2745 = vcmp.eq.f32.partialorder %v2744, 8.507059e+37
  %v2746 = vand.u32 %v2716, 2147483648
  %v2747 = vor.u32 1.1754944e-38, %v2746
  %v2748 = vsel %vm2745, %v2747, %v2743
  %v2749 = vmul.f32 %v2709, %v2748
  %v2750 = vrcp.pop %v2719
  %v2751 = vmul.f32 %v2719, %v2750
  %v2752 = vsub.f32 1.0, %v2751
  %v2753 = vmul.f32 %v2750, %v2752
  %v2754 = vadd.f32 %v2750, %v2753
  %vm2755 = vweird.f32 %v2719
  %vm2756 = vweird.f32 %v2750
  %vm2757 = vmor %vm2755, %vm2756
  %v2758 = vsel %vm2757, %v2750, %v2754
  %v2759 = vand.u32 2147483647, %v2719
  %vm2760 = vcmp.eq.f32.partialorder %v2759, 8.507059e+37
  %v2761 = vand.u32 %v2719, 2147483648
  %v2762 = vor.u32 1.1754944e-38, %v2761
  %v2763 = vsel %vm2760, %v2762, %v2758
  %v2764 = vmul.f32 %v2710, %v2763
  %v2765 = vpack.c.bf16 %v2749, %v2734
  %v2766 = vpack.c.bf16 %v2764, %v2764
  %2767 = vrot.lane.b32.xlu0 %v2619, 64
  %v2768 = vpop.permute.xlu0 %2767
  %2769 = vrot.lane.b32.xlu0 %v2620, 64
  %v2770 = vpop.permute.xlu0 %2769
  %v2773 = vsel %vm362, %v2765, 0
  %v2776 = vsel %vm362, %v2766, 0
  %v2779 = vsel %vm477, %v2770, 0
  %2781 = vmatpush.bf16.msra.mxu0 0
  %2782 = vmatpush.bf16.msra.mxu0 0
  %2783 = vmatpush.bf16.msra.mxu0 0
  %2784 = vmatpush.bf16.msra.mxu0 0
  %2785 = vmatpush.bf16.msra.mxu0 0
  %2786 = vmatpush.bf16.msra.mxu0 0
  %2787 = vmatpush.bf16.msra.mxu0 %v2779
  %2788 = vmatpush.bf16.msra.mxu0 %v2768
  %2789 = vmatmul.bf16.gmra.mxu0 %v2773
  %v2790 = vpop.f32.mrf.mxu0
  %v2791 = vadd.f32 0.0, %v2790
  %v2792 = vpop.f32.mrf.mxu0
  %v2793 = vadd.f32 0.0, %v2792
  %2794 = vmatmul.bf16.gmra.mxu0 %v2776
  %v2795 = vpop.f32.mrf.mxu0
  %v2796 = vadd.f32 0.0, %v2795
  %v2797 = vpop.f32.mrf.mxu0
  %2798 = vdwg.mxu0
  %2799 = vrot.lane.b32.xlu0 %v2619, 120
  %v2800 = vpop.permute.xlu0 %2799
  %2801 = vrot.lane.b32.xlu0 %v2620, 120
  %v2802 = vpop.permute.xlu0 %2801
  %2803 = vrot.lane.b32.xlu0 %v2619, 88
  %v2804 = vpop.permute.xlu0 %2803
  %2805 = vrot.lane.b32.xlu0 %v2620, 88
  %v2806 = vpop.permute.xlu0 %2805
  %v2808 = vsel %vm325, %v2800, 0
  %v2811 = vsel %vm325, %v2802, 0
  %v2814 = vsel %vm325, %v2804, 0
  %v2817 = vsel %vm325, %v2806, 0
  %2819 = vmatpush.bf16.xpose.msra.mxu0 0
  %2820 = vmatpush.bf16.xpose.msra.mxu0 0
  %2821 = vmatpush.bf16.xpose.msra.mxu0 0
  %2822 = vmatpush.bf16.xpose.msra.mxu0 0
  %2823 = vmatpush.bf16.xpose.msra.mxu0 0
  %2824 = vmatpush.bf16.xpose.msra.mxu0 0
  %2825 = vmatpush.bf16.xpose.msra.mxu0 %v2817
  %2826 = vmatpush.bf16.xpose.msra.mxu0 %v2814
  %2827 = vmatmul.bf16.gmra.mxu0 %v2808
  %v2828 = vpop.f32.mrf.mxu0
  %v2829 = vadd.f32 0.0, %v2828
  %v2830 = vpop.f32.mrf.mxu0
  %v2831 = vadd.f32 0.0, %v2830
  %2832 = vmatmul.bf16.gmra.mxu0 %v2811
  %v2833 = vpop.f32.mrf.mxu0
  %v2834 = vadd.f32 0.0, %v2833
  %v2835 = vpop.f32.mrf.mxu0
  %2836 = vdwg.mxu0
  %v2837 = vmul.f32 %v2829, 0.35355338
  %v2838 = vmul.f32 %v2831, 0.35355338
  %v2839 = vmul.f32 %v2834, 0.35355338
  %v2840 = vadd.f32 %v2837, %v106
  %v2841 = vadd.f32 %v2838, %v106
  %v2842 = vadd.f32 %v2839, %v106
  %v2843 = vsel %vm362, %v2840, -inf
  %2844 = vmax.xlane.f32.xlu0 %v2843
  %v2845 = vpop.xlane.xlu0 %2844
  %v2846 = vsel %vm362, %v2841, -inf
  %2847 = vmax.xlane.f32.xlu0 %v2846
  %v2848 = vpop.xlane.xlu0 %2847
  %v2849 = vsel %vm362, %v2842, -inf
  %2850 = vmax.xlane.f32.xlu0 %v2849
  %v2851 = vpop.xlane.xlu0 %2850
  %v2852 = vsub.f32 %v2840, %v2845
  %v2853 = vsub.f32 %v2841, %v2848
  %v2854 = vsub.f32 %v2842, %v2851
  %v2855 = vmul.f32 %v2852, 1.442695
  %v2856 = vpow.pop %v2855
  %v2857 = vmul.f32 %v2853, 1.442695
  %v2858 = vpow.pop %v2857
  %v2859 = vmul.f32 %v2854, 1.442695
  %v2860 = vpow.pop %v2859
  %v2861 = vsel %vm362, %v2856, 0.0
  %2862 = vadd.xlane.f32.xlu0 %v2861
  %v2863 = vpop.xlane.xlu0 %2862
  %v2864 = vsel %vm362, %v2858, 0.0
  %2865 = vadd.xlane.f32.xlu0 %v2864
  %v2866 = vpop.xlane.xlu0 %2865
  %v2867 = vsel %vm362, %v2860, 0.0
  %2868 = vadd.xlane.f32.xlu0 %v2867
  %v2869 = vpop.xlane.xlu0 %2868
  %v2870 = vrcp.pop %v2863
  %v2871 = vrcp.pop %v2866
  %v2872 = vrcp.pop %v2869
  %v2873 = vmul.f32 %v2856, %v2870
  %v2874 = vmul.f32 %v2858, %v2871
  %v2875 = vmul.f32 %v2860, %v2872
  %2876 = vrot.lane.b32.xlu0 %v2696, 127
  %v2877 = vpop.permute.xlu0 %2876
  %s2878 = vtos %v2877
  %v2879 = vstv %s2878
  %v2881 = vmul.f32 %v2879, %v2873
  %v2882 = vmul.f32 %v2879, %v2874
  %v2883 = vmul.f32 %v2879, %v2875
  %s2884 = scalar_lea.vmem %s5, 120
  %v2885 = vld [vmem:[%s2884] sm:$0xff]
  %v2886 = vld [vmem:[%s2884 + $0x8] sm:$0xff]
  %v2887 = vld [vmem:[%s2884 + $0x10] sm:$0xff]
  %v2888 = vadd.f32 %v2881, %v2885
  %v2889 = vadd.f32 %v2882, %v2886
  %v2890 = vadd.f32 %v2883, %v2887
  %v2891 = vsel %vm362, %v2888, 0.0
  %2892 = vadd.xlane.f32.xlu0 %v2891
  %v2893 = vpop.xlane.xlu0 %2892
  %v2894 = vsel %vm362, %v2889, 0.0
  %2895 = vadd.xlane.f32.xlu0 %v2894
  %v2896 = vpop.xlane.xlu0 %2895
  %v2897 = vsel %vm362, %v2890, 0.0
  %2898 = vadd.xlane.f32.xlu0 %v2897
  %v2899 = vpop.xlane.xlu0 %2898
  %v2900 = vrcp.pop %v2893
  %v2901 = vmul.f32 %v2893, %v2900
  %v2902 = vsub.f32 1.0, %v2901
  %v2903 = vmul.f32 %v2900, %v2902
  %v2904 = vadd.f32 %v2900, %v2903
  %vm2905 = vweird.f32 %v2893
  %vm2906 = vweird.f32 %v2900
  %vm2907 = vmor %vm2905, %vm2906
  %v2908 = vsel %vm2907, %v2900, %v2904
  %v2909 = vand.u32 2147483647, %v2893
  %vm2910 = vcmp.eq.f32.partialorder %v2909, 8.507059e+37
  %v2911 = vand.u32 %v2893, 2147483648
  %v2912 = vor.u32 1.1754944e-38, %v2911
  %v2913 = vsel %vm2910, %v2912, %v2908
  %v2914 = vmul.f32 %v2888, %v2913
  %v2915 = vrcp.pop %v2896
  %v2916 = vmul.f32 %v2896, %v2915
  %v2917 = vsub.f32 1.0, %v2916
  %v2918 = vmul.f32 %v2915, %v2917
  %v2919 = vadd.f32 %v2915, %v2918
  %vm2920 = vweird.f32 %v2896
  %vm2921 = vweird.f32 %v2915
  %vm2922 = vmor %vm2920, %vm2921
  %v2923 = vsel %vm2922, %v2915, %v2919
  %v2924 = vand.u32 2147483647, %v2896
  %vm2925 = vcmp.eq.f32.partialorder %v2924, 8.507059e+37
  %v2926 = vand.u32 %v2896, 2147483648
  %v2927 = vor.u32 1.1754944e-38, %v2926
  %v2928 = vsel %vm2925, %v2927, %v2923
  %v2929 = vmul.f32 %v2889, %v2928
  %v2930 = vrcp.pop %v2899
  %v2931 = vmul.f32 %v2899, %v2930
  %v2932 = vsub.f32 1.0, %v2931
  %v2933 = vmul.f32 %v2930, %v2932
  %v2934 = vadd.f32 %v2930, %v2933
  %vm2935 = vweird.f32 %v2899
  %vm2936 = vweird.f32 %v2930
  %vm2937 = vmor %vm2935, %vm2936
  %v2938 = vsel %vm2937, %v2930, %v2934
  %v2939 = vand.u32 2147483647, %v2899
  %vm2940 = vcmp.eq.f32.partialorder %v2939, 8.507059e+37
  %v2941 = vand.u32 %v2899, 2147483648
  %v2942 = vor.u32 1.1754944e-38, %v2941
  %v2943 = vsel %vm2940, %v2942, %v2938
  %v2944 = vmul.f32 %v2890, %v2943
  %v2945 = vpack.c.bf16 %v2929, %v2914
  %v2946 = vpack.c.bf16 %v2944, %v2944
  %2947 = vrot.lane.b32.xlu0 %v2619, 56
  %v2948 = vpop.permute.xlu0 %2947
  %2949 = vrot.lane.b32.xlu0 %v2620, 56
  %v2950 = vpop.permute.xlu0 %2949
  %v2953 = vsel %vm362, %v2945, 0
  %v2956 = vsel %vm362, %v2946, 0
  %v2959 = vsel %vm477, %v2950, 0
  %2961 = vmatpush.bf16.msra.mxu0 0
  %2962 = vmatpush.bf16.msra.mxu0 0
  %2963 = vmatpush.bf16.msra.mxu0 0
  %2964 = vmatpush.bf16.msra.mxu0 0
  %2965 = vmatpush.bf16.msra.mxu0 0
  %2966 = vmatpush.bf16.msra.mxu0 0
  %2967 = vmatpush.bf16.msra.mxu0 %v2959
  %2968 = vmatpush.bf16.msra.mxu0 %v2948
  %2969 = vmatmul.bf16.gmra.mxu0 %v2953
  %v2970 = vpop.f32.mrf.mxu0
  %v2971 = vadd.f32 0.0, %v2970
  %v2972 = vpop.f32.mrf.mxu0
  %v2973 = vadd.f32 0.0, %v2972
  %2974 = vmatmul.bf16.gmra.mxu0 %v2956
  %v2975 = vpop.f32.mrf.mxu0
  %v2976 = vadd.f32 0.0, %v2975
  %v2977 = vpop.f32.mrf.mxu0
  %2978 = vdwg.mxu0
  %2979 = vrot.lane.b32.xlu0 %v2619, 112
  %v2980 = vpop.permute.xlu0 %2979
  %2981 = vrot.lane.b32.xlu0 %v2620, 112
  %v2982 = vpop.permute.xlu0 %2981
  %2983 = vrot.lane.b32.xlu0 %v2619, 80
  %v2984 = vpop.permute.xlu0 %2983
  %2985 = vrot.lane.b32.xlu0 %v2620, 80
  %v2986 = vpop.permute.xlu0 %2985
  %v2988 = vsel %vm325, %v2980, 0
  %v2991 = vsel %vm325, %v2982, 0
  %v2994 = vsel %vm325, %v2984, 0
  %v2997 = vsel %vm325, %v2986, 0
  %2999 = vmatpush.bf16.xpose.msra.mxu0 0
  %3000 = vmatpush.bf16.xpose.msra.mxu0 0
  %3001 = vmatpush.bf16.xpose.msra.mxu0 0
  %3002 = vmatpush.bf16.xpose.msra.mxu0 0
  %3003 = vmatpush.bf16.xpose.msra.mxu0 0
  %3004 = vmatpush.bf16.xpose.msra.mxu0 0
  %3005 = vmatpush.bf16.xpose.msra.mxu0 %v2997
  %3006 = vmatpush.bf16.xpose.msra.mxu0 %v2994
  %3007 = vmatmul.bf16.gmra.mxu0 %v2988
  %v3008 = vpop.f32.mrf.mxu0
  %v3009 = vadd.f32 0.0, %v3008
  %v3010 = vpop.f32.mrf.mxu0
  %v3011 = vadd.f32 0.0, %v3010
  %3012 = vmatmul.bf16.gmra.mxu0 %v2991
  %v3013 = vpop.f32.mrf.mxu0
  %v3014 = vadd.f32 0.0, %v3013
  %v3015 = vpop.f32.mrf.mxu0
  %3016 = vdwg.mxu0
  %v3017 = vmul.f32 %v3009, 0.35355338
  %v3018 = vmul.f32 %v3011, 0.35355338
  %v3019 = vmul.f32 %v3014, 0.35355338
  %v3020 = vadd.f32 %v3017, %v106
  %v3021 = vadd.f32 %v3018, %v106
  %v3022 = vadd.f32 %v3019, %v106
  %v3023 = vsel %vm362, %v3020, -inf
  %3024 = vmax.xlane.f32.xlu0 %v3023
  %v3025 = vpop.xlane.xlu0 %3024
  %v3026 = vsel %vm362, %v3021, -inf
  %3027 = vmax.xlane.f32.xlu0 %v3026
  %v3028 = vpop.xlane.xlu0 %3027
  %v3029 = vsel %vm362, %v3022, -inf
  %3030 = vmax.xlane.f32.xlu0 %v3029
  %v3031 = vpop.xlane.xlu0 %3030
  %v3032 = vsub.f32 %v3020, %v3025
  %v3033 = vsub.f32 %v3021, %v3028
  %v3034 = vsub.f32 %v3022, %v3031
  %v3035 = vmul.f32 %v3032, 1.442695
  %v3036 = vpow.pop %v3035
  %v3037 = vmul.f32 %v3033, 1.442695
  %v3038 = vpow.pop %v3037
  %v3039 = vmul.f32 %v3034, 1.442695
  %v3040 = vpow.pop %v3039
  %v3041 = vsel %vm362, %v3036, 0.0
  %3042 = vadd.xlane.f32.xlu0 %v3041
  %v3043 = vpop.xlane.xlu0 %3042
  %v3044 = vsel %vm362, %v3038, 0.0
  %3045 = vadd.xlane.f32.xlu0 %v3044
  %v3046 = vpop.xlane.xlu0 %3045
  %v3047 = vsel %vm362, %v3040, 0.0
  %3048 = vadd.xlane.f32.xlu0 %v3047
  %v3049 = vpop.xlane.xlu0 %3048
  %v3050 = vrcp.pop %v3043
  %v3051 = vrcp.pop %v3046
  %v3052 = vrcp.pop %v3049
  %v3053 = vmul.f32 %v3036, %v3050
  %v3054 = vmul.f32 %v3038, %v3051
  %v3055 = vmul.f32 %v3040, %v3052
  %3056 = vrot.lane.b32.xlu0 %v2696, 126
  %v3057 = vpop.permute.xlu0 %3056
  %s3058 = vtos %v3057
  %v3059 = vstv %s3058
  %v3061 = vmul.f32 %v3059, %v3053
  %v3062 = vmul.f32 %v3059, %v3054
  %v3063 = vmul.f32 %v3059, %v3055
  %s3064 = scalar_lea.vmem %s5, 144
  %v3065 = vld [vmem:[%s3064] sm:$0xff]
  %v3066 = vld [vmem:[%s3064 + $0x8] sm:$0xff]
  %v3067 = vld [vmem:[%s3064 + $0x10] sm:$0xff]
  %v3068 = vadd.f32 %v3061, %v3065
  %v3069 = vadd.f32 %v3062, %v3066
  %v3070 = vadd.f32 %v3063, %v3067
  %v3071 = vsel %vm362, %v3068, 0.0
  %3072 = vadd.xlane.f32.xlu0 %v3071
  %v3073 = vpop.xlane.xlu0 %3072
  %v3074 = vsel %vm362, %v3069, 0.0
  %3075 = vadd.xlane.f32.xlu0 %v3074
  %v3076 = vpop.xlane.xlu0 %3075
  %v3077 = vsel %vm362, %v3070, 0.0
  %3078 = vadd.xlane.f32.xlu0 %v3077
  %v3079 = vpop.xlane.xlu0 %3078
  %v3080 = vrcp.pop %v3073
  %v3081 = vmul.f32 %v3073, %v3080
  %v3082 = vsub.f32 1.0, %v3081
  %v3083 = vmul.f32 %v3080, %v3082
  %v3084 = vadd.f32 %v3080, %v3083
  %vm3085 = vweird.f32 %v3073
  %vm3086 = vweird.f32 %v3080
  %vm3087 = vmor %vm3085, %vm3086
  %v3088 = vsel %vm3087, %v3080, %v3084
  %v3089 = vand.u32 2147483647, %v3073
  %vm3090 = vcmp.eq.f32.partialorder %v3089, 8.507059e+37
  %v3091 = vand.u32 %v3073, 2147483648
  %v3092 = vor.u32 1.1754944e-38, %v3091
  %v3093 = vsel %vm3090, %v3092, %v3088
  %v3094 = vmul.f32 %v3068, %v3093
  %v3095 = vrcp.pop %v3076
  %v3096 = vmul.f32 %v3076, %v3095
  %v3097 = vsub.f32 1.0, %v3096
  %v3098 = vmul.f32 %v3095, %v3097
  %v3099 = vadd.f32 %v3095, %v3098
  %vm3100 = vweird.f32 %v3076
  %vm3101 = vweird.f32 %v3095
  %vm3102 = vmor %vm3100, %vm3101
  %v3103 = vsel %vm3102, %v3095, %v3099
  %v3104 = vand.u32 2147483647, %v3076
  %vm3105 = vcmp.eq.f32.partialorder %v3104, 8.507059e+37
  %v3106 = vand.u32 %v3076, 2147483648
  %v3107 = vor.u32 1.1754944e-38, %v3106
  %v3108 = vsel %vm3105, %v3107, %v3103
  %v3109 = vmul.f32 %v3069, %v3108
  %v3110 = vrcp.pop %v3079
  %v3111 = vmul.f32 %v3079, %v3110
  %v3112 = vsub.f32 1.0, %v3111
  %v3113 = vmul.f32 %v3110, %v3112
  %v3114 = vadd.f32 %v3110, %v3113
  %vm3115 = vweird.f32 %v3079
  %vm3116 = vweird.f32 %v3110
  %vm3117 = vmor %vm3115, %vm3116
  %v3118 = vsel %vm3117, %v3110, %v3114
  %v3119 = vand.u32 2147483647, %v3079
  %vm3120 = vcmp.eq.f32.partialorder %v3119, 8.507059e+37
  %v3121 = vand.u32 %v3079, 2147483648
  %v3122 = vor.u32 1.1754944e-38, %v3121
  %v3123 = vsel %vm3120, %v3122, %v3118
  %v3124 = vmul.f32 %v3070, %v3123
  %v3125 = vpack.c.bf16 %v3109, %v3094
  %v3126 = vpack.c.bf16 %v3124, %v3124
  %3127 = vrot.lane.b32.xlu0 %v2619, 48
  %v3128 = vpop.permute.xlu0 %3127
  %3129 = vrot.lane.b32.xlu0 %v2620, 48
  %v3130 = vpop.permute.xlu0 %3129
  %v3133 = vsel %vm362, %v3125, 0
  %v3136 = vsel %vm362, %v3126, 0
  %v3139 = vsel %vm477, %v3130, 0
  %3141 = vmatpush.bf16.msra.mxu0 0
  %3142 = vmatpush.bf16.msra.mxu0 0
  %3143 = vmatpush.bf16.msra.mxu0 0
  %3144 = vmatpush.bf16.msra.mxu0 0
  %3145 = vmatpush.bf16.msra.mxu0 0
  %3146 = vmatpush.bf16.msra.mxu0 0
  %3147 = vmatpush.bf16.msra.mxu0 %v3139
  %3148 = vmatpush.bf16.msra.mxu0 %v3128
  %3149 = vmatmul.bf16.gmra.mxu0 %v3133
  %v3150 = vpop.f32.mrf.mxu0
  %v3151 = vadd.f32 0.0, %v3150
  %v3152 = vpop.f32.mrf.mxu0
  %v3153 = vadd.f32 0.0, %v3152
  %3154 = vmatmul.bf16.gmra.mxu0 %v3136
  %v3155 = vpop.f32.mrf.mxu0
  %v3156 = vadd.f32 0.0, %v3155
  %v3157 = vpop.f32.mrf.mxu0
  %3158 = vdwg.mxu0
  %3159 = vrot.lane.b32.xlu0 %v2619, 104
  %v3160 = vpop.permute.xlu0 %3159
  %3161 = vrot.lane.b32.xlu0 %v2620, 104
  %v3162 = vpop.permute.xlu0 %3161
  %3163 = vrot.lane.b32.xlu0 %v2619, 72
  %v3164 = vpop.permute.xlu0 %3163
  %3165 = vrot.lane.b32.xlu0 %v2620, 72
  %v3166 = vpop.permute.xlu0 %3165
  %v3168 = vsel %vm325, %v3160, 0
  %v3171 = vsel %vm325, %v3162, 0
  %v3174 = vsel %vm325, %v3164, 0
  %v3177 = vsel %vm325, %v3166, 0
  %3179 = vmatpush.bf16.xpose.msra.mxu0 0
  %3180 = vmatpush.bf16.xpose.msra.mxu0 0
  %3181 = vmatpush.bf16.xpose.msra.mxu0 0
  %3182 = vmatpush.bf16.xpose.msra.mxu0 0
  %3183 = vmatpush.bf16.xpose.msra.mxu0 0
  %3184 = vmatpush.bf16.xpose.msra.mxu0 0
  %3185 = vmatpush.bf16.xpose.msra.mxu0 %v3177
  %3186 = vmatpush.bf16.xpose.msra.mxu0 %v3174
  %3187 = vmatmul.bf16.gmra.mxu0 %v3168
  %v3188 = vpop.f32.mrf.mxu0
  %v3189 = vadd.f32 0.0, %v3188
  %v3190 = vpop.f32.mrf.mxu0
  %v3191 = vadd.f32 0.0, %v3190
  %3192 = vmatmul.bf16.gmra.mxu0 %v3171
  %v3193 = vpop.f32.mrf.mxu0
  %v3194 = vadd.f32 0.0, %v3193
  %v3195 = vpop.f32.mrf.mxu0
  %3196 = vdwg.mxu0
  %v3197 = vmul.f32 %v3189, 0.35355338
  %v3198 = vmul.f32 %v3191, 0.35355338
  %v3199 = vmul.f32 %v3194, 0.35355338
  %v3200 = vadd.f32 %v3197, %v106
  %v3201 = vadd.f32 %v3198, %v106
  %v3202 = vadd.f32 %v3199, %v106
  %v3203 = vsel %vm362, %v3200, -inf
  %3204 = vmax.xlane.f32.xlu0 %v3203
  %v3205 = vpop.xlane.xlu0 %3204
  %v3206 = vsel %vm362, %v3201, -inf
  %3207 = vmax.xlane.f32.xlu0 %v3206
  %v3208 = vpop.xlane.xlu0 %3207
  %v3209 = vsel %vm362, %v3202, -inf
  %3210 = vmax.xlane.f32.xlu0 %v3209
  %v3211 = vpop.xlane.xlu0 %3210
  %v3212 = vsub.f32 %v3200, %v3205
  %v3213 = vsub.f32 %v3201, %v3208
  %v3214 = vsub.f32 %v3202, %v3211
  %v3215 = vmul.f32 %v3212, 1.442695
  %v3216 = vpow.pop %v3215
  %v3217 = vmul.f32 %v3213, 1.442695
  %v3218 = vpow.pop %v3217
  %v3219 = vmul.f32 %v3214, 1.442695
  %v3220 = vpow.pop %v3219
  %v3221 = vsel %vm362, %v3216, 0.0
  %3222 = vadd.xlane.f32.xlu0 %v3221
  %v3223 = vpop.xlane.xlu0 %3222
  %v3224 = vsel %vm362, %v3218, 0.0
  %3225 = vadd.xlane.f32.xlu0 %v3224
  %v3226 = vpop.xlane.xlu0 %3225
  %v3227 = vsel %vm362, %v3220, 0.0
  %3228 = vadd.xlane.f32.xlu0 %v3227
  %v3229 = vpop.xlane.xlu0 %3228
  %v3230 = vrcp.pop %v3223
  %v3231 = vrcp.pop %v3226
  %v3232 = vrcp.pop %v3229
  %v3233 = vmul.f32 %v3216, %v3230
  %v3234 = vmul.f32 %v3218, %v3231
  %v3235 = vmul.f32 %v3220, %v3232
  %3236 = vrot.lane.b32.xlu0 %v2696, 125
  %v3237 = vpop.permute.xlu0 %3236
  %s3238 = vtos %v3237
  %v3239 = vstv %s3238
  %v3241 = vmul.f32 %v3239, %v3233
  %v3242 = vmul.f32 %v3239, %v3234
  %v3243 = vmul.f32 %v3239, %v3235
  %s3244 = scalar_lea.vmem %s5, 168
  %v3245 = vld [vmem:[%s3244] sm:$0xff]
  %v3246 = vld [vmem:[%s3244 + $0x8] sm:$0xff]
  %v3247 = vld [vmem:[%s3244 + $0x10] sm:$0xff]
  %v3248 = vadd.f32 %v3241, %v3245
  %v3249 = vadd.f32 %v3242, %v3246
  %v3250 = vadd.f32 %v3243, %v3247
  %v3251 = vsel %vm362, %v3248, 0.0
  %3252 = vadd.xlane.f32.xlu0 %v3251
  %v3253 = vpop.xlane.xlu0 %3252
  %v3254 = vsel %vm362, %v3249, 0.0
  %3255 = vadd.xlane.f32.xlu0 %v3254
  %v3256 = vpop.xlane.xlu0 %3255
  %v3257 = vsel %vm362, %v3250, 0.0
  %3258 = vadd.xlane.f32.xlu0 %v3257
  %v3259 = vpop.xlane.xlu0 %3258
  %v3260 = vrcp.pop %v3253
  %v3261 = vmul.f32 %v3253, %v3260
  %v3262 = vsub.f32 1.0, %v3261
  %v3263 = vmul.f32 %v3260, %v3262
  %v3264 = vadd.f32 %v3260, %v3263
  %vm3265 = vweird.f32 %v3253
  %vm3266 = vweird.f32 %v3260
  %vm3267 = vmor %vm3265, %vm3266
  %v3268 = vsel %vm3267, %v3260, %v3264
  %v3269 = vand.u32 2147483647, %v3253
  %vm3270 = vcmp.eq.f32.partialorder %v3269, 8.507059e+37
  %v3271 = vand.u32 %v3253, 2147483648
  %v3272 = vor.u32 1.1754944e-38, %v3271
  %v3273 = vsel %vm3270, %v3272, %v3268
  %v3274 = vmul.f32 %v3248, %v3273
  %v3275 = vrcp.pop %v3256
  %v3276 = vmul.f32 %v3256, %v3275
  %v3277 = vsub.f32 1.0, %v3276
  %v3278 = vmul.f32 %v3275, %v3277
  %v3279 = vadd.f32 %v3275, %v3278
  %vm3280 = vweird.f32 %v3256
  %vm3281 = vweird.f32 %v3275
  %vm3282 = vmor %vm3280, %vm3281
  %v3283 = vsel %vm3282, %v3275, %v3279
  %v3284 = vand.u32 2147483647, %v3256
  %vm3285 = vcmp.eq.f32.partialorder %v3284, 8.507059e+37
  %v3286 = vand.u32 %v3256, 2147483648
  %v3287 = vor.u32 1.1754944e-38, %v3286
  %v3288 = vsel %vm3285, %v3287, %v3283
  %v3289 = vmul.f32 %v3249, %v3288
  %v3290 = vrcp.pop %v3259
  %v3291 = vmul.f32 %v3259, %v3290
  %v3292 = vsub.f32 1.0, %v3291
  %v3293 = vmul.f32 %v3290, %v3292
  %v3294 = vadd.f32 %v3290, %v3293
  %vm3295 = vweird.f32 %v3259
  %vm3296 = vweird.f32 %v3290
  %vm3297 = vmor %vm3295, %vm3296
  %v3298 = vsel %vm3297, %v3290, %v3294
  %v3299 = vand.u32 2147483647, %v3259
  %vm3300 = vcmp.eq.f32.partialorder %v3299, 8.507059e+37
  %v3301 = vand.u32 %v3259, 2147483648
  %v3302 = vor.u32 1.1754944e-38, %v3301
  %v3303 = vsel %vm3300, %v3302, %v3298
  %v3304 = vmul.f32 %v3250, %v3303
  %v3305 = vpack.c.bf16 %v3289, %v3274
  %v3306 = vpack.c.bf16 %v3304, %v3304
  %3307 = vrot.lane.b32.xlu0 %v2619, 40
  %v3308 = vpop.permute.xlu0 %3307
  %3309 = vrot.lane.b32.xlu0 %v2620, 40
  %v3310 = vpop.permute.xlu0 %3309
  %v3313 = vsel %vm362, %v3305, 0
  %v3316 = vsel %vm362, %v3306, 0
  %v3319 = vsel %vm477, %v3310, 0
  %3321 = vmatpush.bf16.msra.mxu0 0
  %3322 = vmatpush.bf16.msra.mxu0 0
  %3323 = vmatpush.bf16.msra.mxu0 0
  %3324 = vmatpush.bf16.msra.mxu0 0
  %3325 = vmatpush.bf16.msra.mxu0 0
  %3326 = vmatpush.bf16.msra.mxu0 0
  %3327 = vmatpush.bf16.msra.mxu0 %v3319
  %3328 = vmatpush.bf16.msra.mxu0 %v3308
  %3329 = vmatmul.bf16.gmra.mxu0 %v3313
  %v3330 = vpop.f32.mrf.mxu0
  %v3331 = vadd.f32 0.0, %v3330
  %v3332 = vpop.f32.mrf.mxu0
  %v3333 = vadd.f32 0.0, %v3332
  %3334 = vmatmul.bf16.gmra.mxu0 %v3316
  %v3335 = vpop.f32.mrf.mxu0
  %v3336 = vadd.f32 0.0, %v3335
  %v3337 = vpop.f32.mrf.mxu0
  %3338 = vdwg.mxu0
  %3342 = vrot.lane.b32.xlu0 %v2971, 8
  %v3343 = vpop.permute.xlu0 %3342
  %3344 = vrot.lane.b32.xlu0 %v2973, 8
  %v3345 = vpop.permute.xlu0 %3344
  %3346 = vrot.lane.b32.xlu0 %v2976, 8
  %v3347 = vpop.permute.xlu0 %3346
  %3354 = vrot.lane.b32.xlu0 %v3151, 16
  %v3355 = vpop.permute.xlu0 %3354
  %3356 = vrot.lane.b32.xlu0 %v3153, 16
  %v3357 = vpop.permute.xlu0 %3356
  %3358 = vrot.lane.b32.xlu0 %v3156, 16
  %v3359 = vpop.permute.xlu0 %3358
  %3366 = vrot.lane.b32.xlu0 %v3331, 24
  %v3367 = vpop.permute.xlu0 %3366
  %3368 = vrot.lane.b32.xlu0 %v3333, 24
  %v3369 = vpop.permute.xlu0 %3368
  %3370 = vrot.lane.b32.xlu0 %v3336, 24
  %v3371 = vpop.permute.xlu0 %3370
  %v3375 = vsel %vm325, %v2791, %v3343
  %v3376 = vsel %vm325, %v2793, %v3345
  %v3377 = vsel %vm325, %v2796, %v3347
  %v3378 = vsel %vm1078, %v3375, %v3355
  %v3379 = vsel %vm1078, %v3376, %v3357
  %v3380 = vsel %vm1078, %v3377, %v3359
  %v3381 = vsel %vm362, %v3378, %v3367
  %v3382 = vsel %vm362, %v3379, %v3369
  %v3383 = vsel %vm362, %v3380, %v3371
  %v3384 = vpack.c.bf16 %v2615, %v2612
  %v3385 = vpack.c.bf16 %v2617, %v2617
  %3388 = vrot.lane.b32.xlu0 %v3384, 96
  %v3389 = vpop.permute.xlu0 %3388
  %3390 = vrot.lane.b32.xlu0 %v3385, 96
  %v3391 = vpop.permute.xlu0 %3390
  %v3393 = vsel %vm325, %v3384, 0
  %v3396 = vsel %vm325, %v3385, 0
  %v3399 = vsel %vm325, %v3389, 0
  %v3402 = vsel %vm325, %v3391, 0
  %3404 = vmatpush.bf16.xpose.msra.mxu0 0
  %3405 = vmatpush.bf16.xpose.msra.mxu0 0
  %3406 = vmatpush.bf16.xpose.msra.mxu0 0
  %3407 = vmatpush.bf16.xpose.msra.mxu0 0
  %3408 = vmatpush.bf16.xpose.msra.mxu0 0
  %3409 = vmatpush.bf16.xpose.msra.mxu0 0
  %3410 = vmatpush.bf16.xpose.msra.mxu0 %v3402
  %3411 = vmatpush.bf16.xpose.msra.mxu0 %v3399
  %3412 = vmatmul.bf16.gmra.mxu0 %v3393
  %v3413 = vpop.f32.mrf.mxu0
  %v3414 = vadd.f32 0.0, %v3413
  %v3415 = vpop.f32.mrf.mxu0
  %v3416 = vadd.f32 0.0, %v3415
  %3417 = vmatmul.bf16.gmra.mxu0 %v3396
  %v3418 = vpop.f32.mrf.mxu0
  %v3419 = vadd.f32 0.0, %v3418
  %v3420 = vpop.f32.mrf.mxu0
  %3421 = vdwg.mxu0
  %v3422 = vmul.f32 %v3414, 0.35355338
  %v3423 = vmul.f32 %v3416, 0.35355338
  %v3424 = vmul.f32 %v3419, 0.35355338
  %v3425 = vadd.f32 %v3422, %v106
  %v3426 = vadd.f32 %v3423, %v106
  %v3427 = vadd.f32 %v3424, %v106
  %v3428 = vsel %vm362, %v3425, -inf
  %3429 = vmax.xlane.f32.xlu0 %v3428
  %v3430 = vpop.xlane.xlu0 %3429
  %v3431 = vsel %vm362, %v3426, -inf
  %3432 = vmax.xlane.f32.xlu0 %v3431
  %v3433 = vpop.xlane.xlu0 %3432
  %v3434 = vsel %vm362, %v3427, -inf
  %3435 = vmax.xlane.f32.xlu0 %v3434
  %v3436 = vpop.xlane.xlu0 %3435
  %v3437 = vsub.f32 %v3425, %v3430
  %v3438 = vsub.f32 %v3426, %v3433
  %v3439 = vsub.f32 %v3427, %v3436
  %v3440 = vmul.f32 %v3437, 1.442695
  %v3441 = vpow.pop %v3440
  %v3442 = vmul.f32 %v3438, 1.442695
  %v3443 = vpow.pop %v3442
  %v3444 = vmul.f32 %v3439, 1.442695
  %v3445 = vpow.pop %v3444
  %v3446 = vsel %vm362, %v3441, 0.0
  %3447 = vadd.xlane.f32.xlu0 %v3446
  %v3448 = vpop.xlane.xlu0 %3447
  %v3449 = vsel %vm362, %v3443, 0.0
  %3450 = vadd.xlane.f32.xlu0 %v3449
  %v3451 = vpop.xlane.xlu0 %3450
  %v3452 = vsel %vm362, %v3445, 0.0
  %3453 = vadd.xlane.f32.xlu0 %v3452
  %v3454 = vpop.xlane.xlu0 %3453
  %v3455 = vrcp.pop %v3448
  %v3456 = vrcp.pop %v3451
  %v3457 = vrcp.pop %v3454
  %v3458 = vmul.f32 %v3441, %v3455
  %v3459 = vmul.f32 %v3443, %v3456
  %v3460 = vmul.f32 %v3445, %v3457
  %v3461 = vmul.f32 %v2699, %v3458
  %v3462 = vmul.f32 %v2699, %v3459
  %v3463 = vmul.f32 %v2699, %v3460
  %v3464 = vadd.f32 %v3461, %v2705
  %v3465 = vadd.f32 %v3462, %v2706
  %v3466 = vadd.f32 %v3463, %v2707
  %v3467 = vsel %vm362, %v3464, 0.0
  %3468 = vadd.xlane.f32.xlu0 %v3467
  %v3469 = vpop.xlane.xlu0 %3468
  %v3470 = vsel %vm362, %v3465, 0.0
  %3471 = vadd.xlane.f32.xlu0 %v3470
  %v3472 = vpop.xlane.xlu0 %3471
  %v3473 = vsel %vm362, %v3466, 0.0
  %3474 = vadd.xlane.f32.xlu0 %v3473
  %v3475 = vpop.xlane.xlu0 %3474
  %v3476 = vrcp.pop %v3469
  %v3477 = vmul.f32 %v3469, %v3476
  %v3478 = vsub.f32 1.0, %v3477
  %v3479 = vmul.f32 %v3476, %v3478
  %v3480 = vadd.f32 %v3476, %v3479
  %vm3481 = vweird.f32 %v3469
  %vm3482 = vweird.f32 %v3476
  %vm3483 = vmor %vm3481, %vm3482
  %v3484 = vsel %vm3483, %v3476, %v3480
  %v3485 = vand.u32 2147483647, %v3469
  %vm3486 = vcmp.eq.f32.partialorder %v3485, 8.507059e+37
  %v3487 = vand.u32 %v3469, 2147483648
  %v3488 = vor.u32 1.1754944e-38, %v3487
  %v3489 = vsel %vm3486, %v3488, %v3484
  %v3490 = vmul.f32 %v3464, %v3489
  %v3491 = vrcp.pop %v3472
  %v3492 = vmul.f32 %v3472, %v3491
  %v3493 = vsub.f32 1.0, %v3492
  %v3494 = vmul.f32 %v3491, %v3493
  %v3495 = vadd.f32 %v3491, %v3494
  %vm3496 = vweird.f32 %v3472
  %vm3497 = vweird.f32 %v3491
  %vm3498 = vmor %vm3496, %vm3497
  %v3499 = vsel %vm3498, %v3491, %v3495
  %v3500 = vand.u32 2147483647, %v3472
  %vm3501 = vcmp.eq.f32.partialorder %v3500, 8.507059e+37
  %v3502 = vand.u32 %v3472, 2147483648
  %v3503 = vor.u32 1.1754944e-38, %v3502
  %v3504 = vsel %vm3501, %v3503, %v3499
  %v3505 = vmul.f32 %v3465, %v3504
  %v3506 = vrcp.pop %v3475
  %v3507 = vmul.f32 %v3475, %v3506
  %v3508 = vsub.f32 1.0, %v3507
  %v3509 = vmul.f32 %v3506, %v3508
  %v3510 = vadd.f32 %v3506, %v3509
  %vm3511 = vweird.f32 %v3475
  %vm3512 = vweird.f32 %v3506
  %vm3513 = vmor %vm3511, %vm3512
  %v3514 = vsel %vm3513, %v3506, %v3510
  %v3515 = vand.u32 2147483647, %v3475
  %vm3516 = vcmp.eq.f32.partialorder %v3515, 8.507059e+37
  %v3517 = vand.u32 %v3475, 2147483648
  %v3518 = vor.u32 1.1754944e-38, %v3517
  %v3519 = vsel %vm3516, %v3518, %v3514
  %v3520 = vmul.f32 %v3466, %v3519
  %v3521 = vpack.c.bf16 %v3505, %v3490
  %v3522 = vpack.c.bf16 %v3520, %v3520
  %3523 = vrot.lane.b32.xlu0 %v3384, 64
  %v3524 = vpop.permute.xlu0 %3523
  %3525 = vrot.lane.b32.xlu0 %v3385, 64
  %v3526 = vpop.permute.xlu0 %3525
  %v3529 = vsel %vm362, %v3521, 0
  %v3532 = vsel %vm362, %v3522, 0
  %v3535 = vsel %vm477, %v3526, 0
  %3537 = vmatpush.bf16.msra.mxu0 0
  %3538 = vmatpush.bf16.msra.mxu0 0
  %3539 = vmatpush.bf16.msra.mxu0 0
  %3540 = vmatpush.bf16.msra.mxu0 0
  %3541 = vmatpush.bf16.msra.mxu0 0
  %3542 = vmatpush.bf16.msra.mxu0 0
  %3543 = vmatpush.bf16.msra.mxu0 %v3535
  %3544 = vmatpush.bf16.msra.mxu0 %v3524
  %3545 = vmatmul.bf16.gmra.mxu0 %v3529
  %v3546 = vpop.f32.mrf.mxu0
  %v3547 = vadd.f32 0.0, %v3546
  %v3548 = vpop.f32.mrf.mxu0
  %v3549 = vadd.f32 0.0, %v3548
  %3550 = vmatmul.bf16.gmra.mxu0 %v3532
  %v3551 = vpop.f32.mrf.mxu0
  %v3552 = vadd.f32 0.0, %v3551
  %v3553 = vpop.f32.mrf.mxu0
  %3554 = vdwg.mxu0
  %3555 = vrot.lane.b32.xlu0 %v3384, 120
  %v3556 = vpop.permute.xlu0 %3555
  %3557 = vrot.lane.b32.xlu0 %v3385, 120
  %v3558 = vpop.permute.xlu0 %3557
  %3559 = vrot.lane.b32.xlu0 %v3384, 88
  %v3560 = vpop.permute.xlu0 %3559
  %3561 = vrot.lane.b32.xlu0 %v3385, 88
  %v3562 = vpop.permute.xlu0 %3561
  %v3564 = vsel %vm325, %v3556, 0
  %v3567 = vsel %vm325, %v3558, 0
  %v3570 = vsel %vm325, %v3560, 0
  %v3573 = vsel %vm325, %v3562, 0
  %3575 = vmatpush.bf16.xpose.msra.mxu0 0
  %3576 = vmatpush.bf16.xpose.msra.mxu0 0
  %3577 = vmatpush.bf16.xpose.msra.mxu0 0
  %3578 = vmatpush.bf16.xpose.msra.mxu0 0
  %3579 = vmatpush.bf16.xpose.msra.mxu0 0
  %3580 = vmatpush.bf16.xpose.msra.mxu0 0
  %3581 = vmatpush.bf16.xpose.msra.mxu0 %v3573
  %3582 = vmatpush.bf16.xpose.msra.mxu0 %v3570
  %3583 = vmatmul.bf16.gmra.mxu0 %v3564
  %v3584 = vpop.f32.mrf.mxu0
  %v3585 = vadd.f32 0.0, %v3584
  %v3586 = vpop.f32.mrf.mxu0
  %v3587 = vadd.f32 0.0, %v3586
  %3588 = vmatmul.bf16.gmra.mxu0 %v3567
  %v3589 = vpop.f32.mrf.mxu0
  %v3590 = vadd.f32 0.0, %v3589
  %v3591 = vpop.f32.mrf.mxu0
  %3592 = vdwg.mxu0
  %v3593 = vmul.f32 %v3585, 0.35355338
  %v3594 = vmul.f32 %v3587, 0.35355338
  %v3595 = vmul.f32 %v3590, 0.35355338
  %v3596 = vadd.f32 %v3593, %v106
  %v3597 = vadd.f32 %v3594, %v106
  %v3598 = vadd.f32 %v3595, %v106
  %v3599 = vsel %vm362, %v3596, -inf
  %3600 = vmax.xlane.f32.xlu0 %v3599
  %v3601 = vpop.xlane.xlu0 %3600
  %v3602 = vsel %vm362, %v3597, -inf
  %3603 = vmax.xlane.f32.xlu0 %v3602
  %v3604 = vpop.xlane.xlu0 %3603
  %v3605 = vsel %vm362, %v3598, -inf
  %3606 = vmax.xlane.f32.xlu0 %v3605
  %v3607 = vpop.xlane.xlu0 %3606
  %v3608 = vsub.f32 %v3596, %v3601
  %v3609 = vsub.f32 %v3597, %v3604
  %v3610 = vsub.f32 %v3598, %v3607
  %v3611 = vmul.f32 %v3608, 1.442695
  %v3612 = vpow.pop %v3611
  %v3613 = vmul.f32 %v3609, 1.442695
  %v3614 = vpow.pop %v3613
  %v3615 = vmul.f32 %v3610, 1.442695
  %v3616 = vpow.pop %v3615
  %v3617 = vsel %vm362, %v3612, 0.0
  %3618 = vadd.xlane.f32.xlu0 %v3617
  %v3619 = vpop.xlane.xlu0 %3618
  %v3620 = vsel %vm362, %v3614, 0.0
  %3621 = vadd.xlane.f32.xlu0 %v3620
  %v3622 = vpop.xlane.xlu0 %3621
  %v3623 = vsel %vm362, %v3616, 0.0
  %3624 = vadd.xlane.f32.xlu0 %v3623
  %v3625 = vpop.xlane.xlu0 %3624
  %v3626 = vrcp.pop %v3619
  %v3627 = vrcp.pop %v3622
  %v3628 = vrcp.pop %v3625
  %v3629 = vmul.f32 %v3612, %v3626
  %v3630 = vmul.f32 %v3614, %v3627
  %v3631 = vmul.f32 %v3616, %v3628
  %v3632 = vmul.f32 %v2879, %v3629
  %v3633 = vmul.f32 %v2879, %v3630
  %v3634 = vmul.f32 %v2879, %v3631
  %v3635 = vadd.f32 %v3632, %v2885
  %v3636 = vadd.f32 %v3633, %v2886
  %v3637 = vadd.f32 %v3634, %v2887
  %v3638 = vsel %vm362, %v3635, 0.0
  %3639 = vadd.xlane.f32.xlu0 %v3638
  %v3640 = vpop.xlane.xlu0 %3639
  %v3641 = vsel %vm362, %v3636, 0.0
  %3642 = vadd.xlane.f32.xlu0 %v3641
  %v3643 = vpop.xlane.xlu0 %3642
  %v3644 = vsel %vm362, %v3637, 0.0
  %3645 = vadd.xlane.f32.xlu0 %v3644
  %v3646 = vpop.xlane.xlu0 %3645
  %v3647 = vrcp.pop %v3640
  %v3648 = vmul.f32 %v3640, %v3647
  %v3649 = vsub.f32 1.0, %v3648
  %v3650 = vmul.f32 %v3647, %v3649
  %v3651 = vadd.f32 %v3647, %v3650
  %vm3652 = vweird.f32 %v3640
  %vm3653 = vweird.f32 %v3647
  %vm3654 = vmor %vm3652, %vm3653
  %v3655 = vsel %vm3654, %v3647, %v3651
  %v3656 = vand.u32 2147483647, %v3640
  %vm3657 = vcmp.eq.f32.partialorder %v3656, 8.507059e+37
  %v3658 = vand.u32 %v3640, 2147483648
  %v3659 = vor.u32 1.1754944e-38, %v3658
  %v3660 = vsel %vm3657, %v3659, %v3655
  %v3661 = vmul.f32 %v3635, %v3660
  %v3662 = vrcp.pop %v3643
  %v3663 = vmul.f32 %v3643, %v3662
  %v3664 = vsub.f32 1.0, %v3663
  %v3665 = vmul.f32 %v3662, %v3664
  %v3666 = vadd.f32 %v3662, %v3665
  %vm3667 = vweird.f32 %v3643
  %vm3668 = vweird.f32 %v3662
  %vm3669 = vmor %vm3667, %vm3668
  %v3670 = vsel %vm3669, %v3662, %v3666
  %v3671 = vand.u32 2147483647, %v3643
  %vm3672 = vcmp.eq.f32.partialorder %v3671, 8.507059e+37
  %v3673 = vand.u32 %v3643, 2147483648
  %v3674 = vor.u32 1.1754944e-38, %v3673
  %v3675 = vsel %vm3672, %v3674, %v3670
  %v3676 = vmul.f32 %v3636, %v3675
  %v3677 = vrcp.pop %v3646
  %v3678 = vmul.f32 %v3646, %v3677
  %v3679 = vsub.f32 1.0, %v3678
  %v3680 = vmul.f32 %v3677, %v3679
  %v3681 = vadd.f32 %v3677, %v3680
  %vm3682 = vweird.f32 %v3646
  %vm3683 = vweird.f32 %v3677
  %vm3684 = vmor %vm3682, %vm3683
  %v3685 = vsel %vm3684, %v3677, %v3681
  %v3686 = vand.u32 2147483647, %v3646
  %vm3687 = vcmp.eq.f32.partialorder %v3686, 8.507059e+37
  %v3688 = vand.u32 %v3646, 2147483648
  %v3689 = vor.u32 1.1754944e-38, %v3688
  %v3690 = vsel %vm3687, %v3689, %v3685
  %v3691 = vmul.f32 %v3637, %v3690
  %v3692 = vpack.c.bf16 %v3676, %v3661
  %v3693 = vpack.c.bf16 %v3691, %v3691
  %3694 = vrot.lane.b32.xlu0 %v3384, 56
  %v3695 = vpop.permute.xlu0 %3694
  %3696 = vrot.lane.b32.xlu0 %v3385, 56
  %v3697 = vpop.permute.xlu0 %3696
  %v3700 = vsel %vm362, %v3692, 0
  %v3703 = vsel %vm362, %v3693, 0
  %v3706 = vsel %vm477, %v3697, 0
  %3708 = vmatpush.bf16.msra.mxu0 0
  %3709 = vmatpush.bf16.msra.mxu0 0
  %3710 = vmatpush.bf16.msra.mxu0 0
  %3711 = vmatpush.bf16.msra.mxu0 0
  %3712 = vmatpush.bf16.msra.mxu0 0
  %3713 = vmatpush.bf16.msra.mxu0 0
  %3714 = vmatpush.bf16.msra.mxu0 %v3706
  %3715 = vmatpush.bf16.msra.mxu0 %v3695
  %3716 = vmatmul.bf16.gmra.mxu0 %v3700
  %v3717 = vpop.f32.mrf.mxu0
  %v3718 = vadd.f32 0.0, %v3717
  %v3719 = vpop.f32.mrf.mxu0
  %v3720 = vadd.f32 0.0, %v3719
  %3721 = vmatmul.bf16.gmra.mxu0 %v3703
  %v3722 = vpop.f32.mrf.mxu0
  %v3723 = vadd.f32 0.0, %v3722
  %v3724 = vpop.f32.mrf.mxu0
  %3725 = vdwg.mxu0
  %3726 = vrot.lane.b32.xlu0 %v3384, 112
  %v3727 = vpop.permute.xlu0 %3726
  %3728 = vrot.lane.b32.xlu0 %v3385, 112
  %v3729 = vpop.permute.xlu0 %3728
  %3730 = vrot.lane.b32.xlu0 %v3384, 80
  %v3731 = vpop.permute.xlu0 %3730
  %3732 = vrot.lane.b32.xlu0 %v3385, 80
  %v3733 = vpop.permute.xlu0 %3732
  %v3735 = vsel %vm325, %v3727, 0
  %v3738 = vsel %vm325, %v3729, 0
  %v3741 = vsel %vm325, %v3731, 0
  %v3744 = vsel %vm325, %v3733, 0
  %3746 = vmatpush.bf16.xpose.msra.mxu0 0
  %3747 = vmatpush.bf16.xpose.msra.mxu0 0
  %3748 = vmatpush.bf16.xpose.msra.mxu0 0
  %3749 = vmatpush.bf16.xpose.msra.mxu0 0
  %3750 = vmatpush.bf16.xpose.msra.mxu0 0
  %3751 = vmatpush.bf16.xpose.msra.mxu0 0
  %3752 = vmatpush.bf16.xpose.msra.mxu0 %v3744
  %3753 = vmatpush.bf16.xpose.msra.mxu0 %v3741
  %3754 = vmatmul.bf16.gmra.mxu0 %v3735
  %v3755 = vpop.f32.mrf.mxu0
  %v3756 = vadd.f32 0.0, %v3755
  %v3757 = vpop.f32.mrf.mxu0
  %v3758 = vadd.f32 0.0, %v3757
  %3759 = vmatmul.bf16.gmra.mxu0 %v3738
  %v3760 = vpop.f32.mrf.mxu0
  %v3761 = vadd.f32 0.0, %v3760
  %v3762 = vpop.f32.mrf.mxu0
  %3763 = vdwg.mxu0
  %v3764 = vmul.f32 %v3756, 0.35355338
  %v3765 = vmul.f32 %v3758, 0.35355338
  %v3766 = vmul.f32 %v3761, 0.35355338
  %v3767 = vadd.f32 %v3764, %v106
  %v3768 = vadd.f32 %v3765, %v106
  %v3769 = vadd.f32 %v3766, %v106
  %v3770 = vsel %vm362, %v3767, -inf
  %3771 = vmax.xlane.f32.xlu0 %v3770
  %v3772 = vpop.xlane.xlu0 %3771
  %v3773 = vsel %vm362, %v3768, -inf
  %3774 = vmax.xlane.f32.xlu0 %v3773
  %v3775 = vpop.xlane.xlu0 %3774
  %v3776 = vsel %vm362, %v3769, -inf
  %3777 = vmax.xlane.f32.xlu0 %v3776
  %v3778 = vpop.xlane.xlu0 %3777
  %v3779 = vsub.f32 %v3767, %v3772
  %v3780 = vsub.f32 %v3768, %v3775
  %v3781 = vsub.f32 %v3769, %v3778
  %v3782 = vmul.f32 %v3779, 1.442695
  %v3783 = vpow.pop %v3782
  %v3784 = vmul.f32 %v3780, 1.442695
  %v3785 = vpow.pop %v3784
  %v3786 = vmul.f32 %v3781, 1.442695
  %v3787 = vpow.pop %v3786
  %v3788 = vsel %vm362, %v3783, 0.0
  %3789 = vadd.xlane.f32.xlu0 %v3788
  %v3790 = vpop.xlane.xlu0 %3789
  %v3791 = vsel %vm362, %v3785, 0.0
  %3792 = vadd.xlane.f32.xlu0 %v3791
  %v3793 = vpop.xlane.xlu0 %3792
  %v3794 = vsel %vm362, %v3787, 0.0
  %3795 = vadd.xlane.f32.xlu0 %v3794
  %v3796 = vpop.xlane.xlu0 %3795
  %v3797 = vrcp.pop %v3790
  %v3798 = vrcp.pop %v3793
  %v3799 = vrcp.pop %v3796
  %v3800 = vmul.f32 %v3783, %v3797
  %v3801 = vmul.f32 %v3785, %v3798
  %v3802 = vmul.f32 %v3787, %v3799
  %v3803 = vmul.f32 %v3059, %v3800
  %v3804 = vmul.f32 %v3059, %v3801
  %v3805 = vmul.f32 %v3059, %v3802
  %v3806 = vadd.f32 %v3803, %v3065
  %v3807 = vadd.f32 %v3804, %v3066
  %v3808 = vadd.f32 %v3805, %v3067
  %v3809 = vsel %vm362, %v3806, 0.0
  %3810 = vadd.xlane.f32.xlu0 %v3809
  %v3811 = vpop.xlane.xlu0 %3810
  %v3812 = vsel %vm362, %v3807, 0.0
  %3813 = vadd.xlane.f32.xlu0 %v3812
  %v3814 = vpop.xlane.xlu0 %3813
  %v3815 = vsel %vm362, %v3808, 0.0
  %3816 = vadd.xlane.f32.xlu0 %v3815
  %v3817 = vpop.xlane.xlu0 %3816
  %v3818 = vrcp.pop %v3811
  %v3819 = vmul.f32 %v3811, %v3818
  %v3820 = vsub.f32 1.0, %v3819
  %v3821 = vmul.f32 %v3818, %v3820
  %v3822 = vadd.f32 %v3818, %v3821
  %vm3823 = vweird.f32 %v3811
  %vm3824 = vweird.f32 %v3818
  %vm3825 = vmor %vm3823, %vm3824
  %v3826 = vsel %vm3825, %v3818, %v3822
  %v3827 = vand.u32 2147483647, %v3811
  %vm3828 = vcmp.eq.f32.partialorder %v3827, 8.507059e+37
  %v3829 = vand.u32 %v3811, 2147483648
  %v3830 = vor.u32 1.1754944e-38, %v3829
  %v3831 = vsel %vm3828, %v3830, %v3826
  %v3832 = vmul.f32 %v3806, %v3831
  %v3833 = vrcp.pop %v3814
  %v3834 = vmul.f32 %v3814, %v3833
  %v3835 = vsub.f32 1.0, %v3834
  %v3836 = vmul.f32 %v3833, %v3835
  %v3837 = vadd.f32 %v3833, %v3836
  %vm3838 = vweird.f32 %v3814
  %vm3839 = vweird.f32 %v3833
  %vm3840 = vmor %vm3838, %vm3839
  %v3841 = vsel %vm3840, %v3833, %v3837
  %v3842 = vand.u32 2147483647, %v3814
  %vm3843 = vcmp.eq.f32.partialorder %v3842, 8.507059e+37
  %v3844 = vand.u32 %v3814, 2147483648
  %v3845 = vor.u32 1.1754944e-38, %v3844
  %v3846 = vsel %vm3843, %v3845, %v3841
  %v3847 = vmul.f32 %v3807, %v3846
  %v3848 = vrcp.pop %v3817
  %v3849 = vmul.f32 %v3817, %v3848
  %v3850 = vsub.f32 1.0, %v3849
  %v3851 = vmul.f32 %v3848, %v3850
  %v3852 = vadd.f32 %v3848, %v3851
  %vm3853 = vweird.f32 %v3817
  %vm3854 = vweird.f32 %v3848
  %vm3855 = vmor %vm3853, %vm3854
  %v3856 = vsel %vm3855, %v3848, %v3852
  %v3857 = vand.u32 2147483647, %v3817
  %vm3858 = vcmp.eq.f32.partialorder %v3857, 8.507059e+37
  %v3859 = vand.u32 %v3817, 2147483648
  %v3860 = vor.u32 1.1754944e-38, %v3859
  %v3861 = vsel %vm3858, %v3860, %v3856
  %v3862 = vmul.f32 %v3808, %v3861
  %v3863 = vpack.c.bf16 %v3847, %v3832
  %v3864 = vpack.c.bf16 %v3862, %v3862
  %3865 = vrot.lane.b32.xlu0 %v3384, 48
  %v3866 = vpop.permute.xlu0 %3865
  %3867 = vrot.lane.b32.xlu0 %v3385, 48
  %v3868 = vpop.permute.xlu0 %3867
  %v3871 = vsel %vm362, %v3863, 0
  %v3874 = vsel %vm362, %v3864, 0
  %v3877 = vsel %vm477, %v3868, 0
  %3879 = vmatpush.bf16.msra.mxu0 0
  %3880 = vmatpush.bf16.msra.mxu0 0
  %3881 = vmatpush.bf16.msra.mxu0 0
  %3882 = vmatpush.bf16.msra.mxu0 0
  %3883 = vmatpush.bf16.msra.mxu0 0
  %3884 = vmatpush.bf16.msra.mxu0 0
  %3885 = vmatpush.bf16.msra.mxu0 %v3877
  %3886 = vmatpush.bf16.msra.mxu0 %v3866
  %3887 = vmatmul.bf16.gmra.mxu0 %v3871
  %v3888 = vpop.f32.mrf.mxu0
  %v3889 = vadd.f32 0.0, %v3888
  %v3890 = vpop.f32.mrf.mxu0
  %v3891 = vadd.f32 0.0, %v3890
  %3892 = vmatmul.bf16.gmra.mxu0 %v3874
  %v3893 = vpop.f32.mrf.mxu0
  %v3894 = vadd.f32 0.0, %v3893
  %v3895 = vpop.f32.mrf.mxu0
  %3896 = vdwg.mxu0
  %3897 = vrot.lane.b32.xlu0 %v3384, 104
  %v3898 = vpop.permute.xlu0 %3897
  %3899 = vrot.lane.b32.xlu0 %v3385, 104
  %v3900 = vpop.permute.xlu0 %3899
  %3901 = vrot.lane.b32.xlu0 %v3384, 72
  %v3902 = vpop.permute.xlu0 %3901
  %3903 = vrot.lane.b32.xlu0 %v3385, 72
  %v3904 = vpop.permute.xlu0 %3903
  %v3906 = vsel %vm325, %v3898, 0
  %v3909 = vsel %vm325, %v3900, 0
  %v3912 = vsel %vm325, %v3902, 0
  %v3915 = vsel %vm325, %v3904, 0
  %3917 = vmatpush.bf16.xpose.msra.mxu0 0
  %3918 = vmatpush.bf16.xpose.msra.mxu0 0
  %3919 = vmatpush.bf16.xpose.msra.mxu0 0
  %3920 = vmatpush.bf16.xpose.msra.mxu0 0
  %3921 = vmatpush.bf16.xpose.msra.mxu0 0
  %3922 = vmatpush.bf16.xpose.msra.mxu0 0
  %3923 = vmatpush.bf16.xpose.msra.mxu0 %v3915
  %3924 = vmatpush.bf16.xpose.msra.mxu0 %v3912
  %3925 = vmatmul.bf16.gmra.mxu0 %v3906
  %v3926 = vpop.f32.mrf.mxu0
  %v3927 = vadd.f32 0.0, %v3926
  %v3928 = vpop.f32.mrf.mxu0
  %v3929 = vadd.f32 0.0, %v3928
  %3930 = vmatmul.bf16.gmra.mxu0 %v3909
  %v3931 = vpop.f32.mrf.mxu0
  %v3932 = vadd.f32 0.0, %v3931
  %v3933 = vpop.f32.mrf.mxu0
  %3934 = vdwg.mxu0
  %v3935 = vmul.f32 %v3927, 0.35355338
  %v3936 = vmul.f32 %v3929, 0.35355338
  %v3937 = vmul.f32 %v3932, 0.35355338
  %v3938 = vadd.f32 %v3935, %v106
  %v3939 = vadd.f32 %v3936, %v106
  %v3940 = vadd.f32 %v3937, %v106
  %v3941 = vsel %vm362, %v3938, -inf
  %3942 = vmax.xlane.f32.xlu0 %v3941
  %v3943 = vpop.xlane.xlu0 %3942
  %v3944 = vsel %vm362, %v3939, -inf
  %3945 = vmax.xlane.f32.xlu0 %v3944
  %v3946 = vpop.xlane.xlu0 %3945
  %v3947 = vsel %vm362, %v3940, -inf
  %3948 = vmax.xlane.f32.xlu0 %v3947
  %v3949 = vpop.xlane.xlu0 %3948
  %v3950 = vsub.f32 %v3938, %v3943
  %v3951 = vsub.f32 %v3939, %v3946
  %v3952 = vsub.f32 %v3940, %v3949
  %v3953 = vmul.f32 %v3950, 1.442695
  %v3954 = vpow.pop %v3953
  %v3955 = vmul.f32 %v3951, 1.442695
  %v3956 = vpow.pop %v3955
  %v3957 = vmul.f32 %v3952, 1.442695
  %v3958 = vpow.pop %v3957
  %v3959 = vsel %vm362, %v3954, 0.0
  %3960 = vadd.xlane.f32.xlu0 %v3959
  %v3961 = vpop.xlane.xlu0 %3960
  %v3962 = vsel %vm362, %v3956, 0.0
  %3963 = vadd.xlane.f32.xlu0 %v3962
  %v3964 = vpop.xlane.xlu0 %3963
  %v3965 = vsel %vm362, %v3958, 0.0
  %3966 = vadd.xlane.f32.xlu0 %v3965
  %v3967 = vpop.xlane.xlu0 %3966
  %v3968 = vrcp.pop %v3961
  %v3969 = vrcp.pop %v3964
  %v3970 = vrcp.pop %v3967
  %v3971 = vmul.f32 %v3954, %v3968
  %v3972 = vmul.f32 %v3956, %v3969
  %v3973 = vmul.f32 %v3958, %v3970
  %v3974 = vmul.f32 %v3239, %v3971
  %v3975 = vmul.f32 %v3239, %v3972
  %v3976 = vmul.f32 %v3239, %v3973
  %v3977 = vadd.f32 %v3974, %v3245
  %v3978 = vadd.f32 %v3975, %v3246
  %v3979 = vadd.f32 %v3976, %v3247
  %v3980 = vsel %vm362, %v3977, 0.0
  %3981 = vadd.xlane.f32.xlu0 %v3980
  %v3982 = vpop.xlane.xlu0 %3981
  %v3983 = vsel %vm362, %v3978, 0.0
  %3984 = vadd.xlane.f32.xlu0 %v3983
  %v3985 = vpop.xlane.xlu0 %3984
  %v3986 = vsel %vm362, %v3979, 0.0
  %3987 = vadd.xlane.f32.xlu0 %v3986
  %v3988 = vpop.xlane.xlu0 %3987
  %v3989 = vrcp.pop %v3982
  %v3990 = vmul.f32 %v3982, %v3989
  %v3991 = vsub.f32 1.0, %v3990
  %v3992 = vmul.f32 %v3989, %v3991
  %v3993 = vadd.f32 %v3989, %v3992
  %vm3994 = vweird.f32 %v3982
  %vm3995 = vweird.f32 %v3989
  %vm3996 = vmor %vm3994, %vm3995
  %v3997 = vsel %vm3996, %v3989, %v3993
  %v3998 = vand.u32 2147483647, %v3982
  %vm3999 = vcmp.eq.f32.partialorder %v3998, 8.507059e+37
  %v4000 = vand.u32 %v3982, 2147483648
  %v4001 = vor.u32 1.1754944e-38, %v4000
  %v4002 = vsel %vm3999, %v4001, %v3997
  %v4003 = vmul.f32 %v3977, %v4002
  %v4004 = vrcp.pop %v3985
  %v4005 = vmul.f32 %v3985, %v4004
  %v4006 = vsub.f32 1.0, %v4005
  %v4007 = vmul.f32 %v4004, %v4006
  %v4008 = vadd.f32 %v4004, %v4007
  %vm4009 = vweird.f32 %v3985
  %vm4010 = vweird.f32 %v4004
  %vm4011 = vmor %vm4009, %vm4010
  %v4012 = vsel %vm4011, %v4004, %v4008
  %v4013 = vand.u32 2147483647, %v3985
  %vm4014 = vcmp.eq.f32.partialorder %v4013, 8.507059e+37
  %v4015 = vand.u32 %v3985, 2147483648
  %v4016 = vor.u32 1.1754944e-38, %v4015
  %v4017 = vsel %vm4014, %v4016, %v4012
  %v4018 = vmul.f32 %v3978, %v4017
  %v4019 = vrcp.pop %v3988
  %v4020 = vmul.f32 %v3988, %v4019
  %v4021 = vsub.f32 1.0, %v4020
  %v4022 = vmul.f32 %v4019, %v4021
  %v4023 = vadd.f32 %v4019, %v4022
  %vm4024 = vweird.f32 %v3988
  %vm4025 = vweird.f32 %v4019
  %vm4026 = vmor %vm4024, %vm4025
  %v4027 = vsel %vm4026, %v4019, %v4023
  %v4028 = vand.u32 2147483647, %v3988
  %vm4029 = vcmp.eq.f32.partialorder %v4028, 8.507059e+37
  %v4030 = vand.u32 %v3988, 2147483648
  %v4031 = vor.u32 1.1754944e-38, %v4030
  %v4032 = vsel %vm4029, %v4031, %v4027
  %v4033 = vmul.f32 %v3979, %v4032
  %v4034 = vpack.c.bf16 %v4018, %v4003
  %v4035 = vpack.c.bf16 %v4033, %v4033
  %4036 = vrot.lane.b32.xlu0 %v3384, 40
  %v4037 = vpop.permute.xlu0 %4036
  %4038 = vrot.lane.b32.xlu0 %v3385, 40
  %v4039 = vpop.permute.xlu0 %4038
  %v4042 = vsel %vm362, %v4034, 0
  %v4045 = vsel %vm362, %v4035, 0
  %v4048 = vsel %vm477, %v4039, 0
  %4050 = vmatpush.bf16.msra.mxu0 0
  %4051 = vmatpush.bf16.msra.mxu0 0
  %4052 = vmatpush.bf16.msra.mxu0 0
  %4053 = vmatpush.bf16.msra.mxu0 0
  %4054 = vmatpush.bf16.msra.mxu0 0
  %4055 = vmatpush.bf16.msra.mxu0 0
  %4056 = vmatpush.bf16.msra.mxu0 %v4048
  %4057 = vmatpush.bf16.msra.mxu0 %v4037
  %4058 = vmatmul.bf16.gmra.mxu0 %v4042
  %v4059 = vpop.f32.mrf.mxu0
  %v4060 = vadd.f32 0.0, %v4059
  %v4061 = vpop.f32.mrf.mxu0
  %v4062 = vadd.f32 0.0, %v4061
  %4063 = vmatmul.bf16.gmra.mxu0 %v4045
  %v4064 = vpop.f32.mrf.mxu0
  %v4065 = vadd.f32 0.0, %v4064
  %v4066 = vpop.f32.mrf.mxu0
  %4067 = vdwg.mxu0
  %4071 = vrot.lane.b32.xlu0 %v3718, 8
  %v4072 = vpop.permute.xlu0 %4071
  %4073 = vrot.lane.b32.xlu0 %v3720, 8
  %v4074 = vpop.permute.xlu0 %4073
  %4075 = vrot.lane.b32.xlu0 %v3723, 8
  %v4076 = vpop.permute.xlu0 %4075
  %4083 = vrot.lane.b32.xlu0 %v3889, 16
  %v4084 = vpop.permute.xlu0 %4083
  %4085 = vrot.lane.b32.xlu0 %v3891, 16
  %v4086 = vpop.permute.xlu0 %4085
  %4087 = vrot.lane.b32.xlu0 %v3894, 16
  %v4088 = vpop.permute.xlu0 %4087
  %4095 = vrot.lane.b32.xlu0 %v4060, 24
  %v4096 = vpop.permute.xlu0 %4095
  %4097 = vrot.lane.b32.xlu0 %v4062, 24
  %v4098 = vpop.permute.xlu0 %4097
  %4099 = vrot.lane.b32.xlu0 %v4065, 24
  %v4100 = vpop.permute.xlu0 %4099
  %v4104 = vsel %vm325, %v3547, %v4072
  %v4105 = vsel %vm325, %v3549, %v4074
  %v4106 = vsel %vm325, %v3552, %v4076
  %v4107 = vsel %vm1078, %v4104, %v4084
  %v4108 = vsel %vm1078, %v4105, %v4086
  %v4109 = vsel %vm1078, %v4106, %v4088
  %v4110 = vsel %vm362, %v4107, %v4096
  %v4111 = vsel %vm362, %v4108, %v4098
  %v4112 = vsel %vm362, %v4109, %v4100
  %v4113 = vpack.c.bf16 %v3382, %v3381
  %v4114 = vpack.c.bf16 %v4110, %v3383
  %v4115 = vpack.c.bf16 %v4112, %v4111
  %4116 = vrot.lane.b32.xlu0 %v2582, 32
  %v4117 = vpop.permute.xlu0 %4116
  %4118 = vrot.lane.b32.xlu0 %v2583, 32
  %v4119 = vpop.permute.xlu0 %4118
  %v4123 = vsel %vm140, %v4113, 0
  %v4126 = vsel %vm140, %v4114, 0
  %v4129 = vsel %vm140, %v4115, 0
  %4131 = vmatpush.bf16.msra.mxu0 0
  %4132 = vmatpush.bf16.msra.mxu0 0
  %4133 = vmatpush.bf16.msra.mxu0 0
  %4134 = vmatpush.bf16.msra.mxu0 0
  %4135 = vmatpush.bf16.msra.mxu0 0
  %4136 = vmatpush.bf16.msra.mxu0 0
  %4137 = vmatpush.bf16.msra.mxu0 %v4119
  %4138 = vmatpush.bf16.msra.mxu0 %v4117
  %4139 = vmatmul.bf16.gmra.mxu0 %v4123
  %v4140 = vpop.f32.mrf.mxu0
  %v4141 = vadd.f32 0.0, %v4140
  %v4142 = vpop.f32.mrf.mxu0
  %v4143 = vadd.f32 0.0, %v4142
  %4144 = vmatmul.bf16.gmra.mxu0 %v4126
  %v4145 = vpop.f32.mrf.mxu0
  %v4146 = vadd.f32 0.0, %v4145
  %v4147 = vpop.f32.mrf.mxu0
  %v4148 = vadd.f32 0.0, %v4147
  %4149 = vmatmul.bf16.gmra.mxu0 %v4129
  %v4150 = vpop.f32.mrf.mxu0
  %v4151 = vadd.f32 0.0, %v4150
  %v4152 = vpop.f32.mrf.mxu0
  %v4153 = vadd.f32 0.0, %v4152
  %4154 = vdwg.mxu0
  %v4155 = vadd.f32 %v2386, %v4141
  %v4156 = vadd.f32 %v2387, %v4143
  %v4157 = vadd.f32 %v2388, %v4146
  %v4158 = vadd.f32 %v2389, %v4148
  %v4159 = vadd.f32 %v2390, %v4151
  %v4160 = vadd.f32 %v2391, %v4153
  %v4161 = vperm.slane %v2395, 0
  %v4162 = vadd.f32 %v4155, %v4161
  %v4163 = vadd.f32 %v4156, %v4161
  %v4164 = vadd.f32 %v4157, %v4161
  %v4165 = vadd.f32 %v4158, %v4161
  %v4166 = vadd.f32 %v4159, %v4161
  %v4167 = vadd.f32 %v4160, %v4161
  %v4168 = vsel %vm140, %v4162, 0.0
  %4169 = vadd.xlane.f32.xlu0 %v4168
  %v4170 = vpop.xlane.xlu0 %4169
  %v4171 = vsel %vm140, %v4163, 0.0
  %4172 = vadd.xlane.f32.xlu0 %v4171
  %v4173 = vpop.xlane.xlu0 %4172
  %v4174 = vsel %vm140, %v4164, 0.0
  %4175 = vadd.xlane.f32.xlu0 %v4174
  %v4176 = vpop.xlane.xlu0 %4175
  %v4177 = vsel %vm140, %v4165, 0.0
  %4178 = vadd.xlane.f32.xlu0 %v4177
  %v4179 = vpop.xlane.xlu0 %4178
  %v4180 = vsel %vm140, %v4166, 0.0
  %4181 = vadd.xlane.f32.xlu0 %v4180
  %v4182 = vpop.xlane.xlu0 %4181
  %v4183 = vsel %vm140, %v4167, 0.0
  %4184 = vadd.xlane.f32.xlu0 %v4183
  %v4185 = vpop.xlane.xlu0 %4184
  %v4186 = vmul.f32 %v4170, %v161
  %v4187 = vmul.f32 %v4173, %v161
  %v4188 = vmul.f32 %v4176, %v161
  %v4189 = vmul.f32 %v4179, %v161
  %v4190 = vmul.f32 %v4182, %v161
  %v4191 = vmul.f32 %v4185, %v161
  %v4192 = vsub.f32 %v4162, %v4186
  %v4193 = vsub.f32 %v4163, %v4187
  %v4194 = vsub.f32 %v4164, %v4188
  %v4195 = vsub.f32 %v4165, %v4189
  %v4196 = vsub.f32 %v4166, %v4190
  %v4197 = vsub.f32 %v4167, %v4191
  %v4198 = vmul.f32 %v4192, %v4192
  %v4199 = vmul.f32 %v4193, %v4193
  %v4200 = vmul.f32 %v4194, %v4194
  %v4201 = vmul.f32 %v4195, %v4195
  %v4202 = vmul.f32 %v4196, %v4196
  %v4203 = vmul.f32 %v4197, %v4197
  %v4204 = vsel %vm140, %v4198, 0.0
  %4205 = vadd.xlane.f32.xlu0 %v4204
  %v4206 = vpop.xlane.xlu0 %4205
  %v4207 = vsel %vm140, %v4199, 0.0
  %4208 = vadd.xlane.f32.xlu0 %v4207
  %v4209 = vpop.xlane.xlu0 %4208
  %v4210 = vsel %vm140, %v4200, 0.0
  %4211 = vadd.xlane.f32.xlu0 %v4210
  %v4212 = vpop.xlane.xlu0 %4211
  %v4213 = vsel %vm140, %v4201, 0.0
  %4214 = vadd.xlane.f32.xlu0 %v4213
  %v4215 = vpop.xlane.xlu0 %4214
  %v4216 = vsel %vm140, %v4202, 0.0
  %4217 = vadd.xlane.f32.xlu0 %v4216
  %v4218 = vpop.xlane.xlu0 %4217
  %v4219 = vsel %vm140, %v4203, 0.0
  %4220 = vadd.xlane.f32.xlu0 %v4219
  %v4221 = vpop.xlane.xlu0 %4220
  %v4222 = vmul.f32 %v4206, %v161
  %v4223 = vmul.f32 %v4209, %v161
  %v4224 = vmul.f32 %v4212, %v161
  %v4225 = vmul.f32 %v4215, %v161
  %v4226 = vmul.f32 %v4218, %v161
  %v4227 = vmul.f32 %v4221, %v161
  %v4228 = vadd.f32 %v4222, 1e-05
  %v4229 = vadd.f32 %v4223, 1e-05
  %v4230 = vadd.f32 %v4224, 1e-05
  %v4231 = vadd.f32 %v4225, 1e-05
  %v4232 = vadd.f32 %v4226, 1e-05
  %v4233 = vadd.f32 %v4227, 1e-05
  %v4234 = vrsqrt.pop %v4228
  %v4235 = vmul.f32 %v4234, %v4228
  %v4236 = vmul.f32 %v4235, %v4234
  %v4237 = vmul.f32 0.5, %v4236
  %v4238 = vsub.f32 1.5, %v4237
  %v4239 = vmul.f32 %v4234, %v4238
  %vm4240 = vweird.f32 %v4228
  %vm4241 = vweird.f32 %v4234
  %vm4242 = vmor %vm4240, %vm4241
  %v4243 = vsel %vm4242, %v4234, %v4239
  %v4244 = vrsqrt.pop %v4229
  %v4245 = vmul.f32 %v4244, %v4229
  %v4246 = vmul.f32 %v4245, %v4244
  %v4247 = vmul.f32 0.5, %v4246
  %v4248 = vsub.f32 1.5, %v4247
  %v4249 = vmul.f32 %v4244, %v4248
  %vm4250 = vweird.f32 %v4229
  %vm4251 = vweird.f32 %v4244
  %vm4252 = vmor %vm4250, %vm4251
  %v4253 = vsel %vm4252, %v4244, %v4249
  %v4254 = vrsqrt.pop %v4230
  %v4255 = vmul.f32 %v4254, %v4230
  %v4256 = vmul.f32 %v4255, %v4254
  %v4257 = vmul.f32 0.5, %v4256
  %v4258 = vsub.f32 1.5, %v4257
  %v4259 = vmul.f32 %v4254, %v4258
  %vm4260 = vweird.f32 %v4230
  %vm4261 = vweird.f32 %v4254
  %vm4262 = vmor %vm4260, %vm4261
  %v4263 = vsel %vm4262, %v4254, %v4259
  %v4264 = vrsqrt.pop %v4231
  %v4265 = vmul.f32 %v4264, %v4231
  %v4266 = vmul.f32 %v4265, %v4264
  %v4267 = vmul.f32 0.5, %v4266
  %v4268 = vsub.f32 1.5, %v4267
  %v4269 = vmul.f32 %v4264, %v4268
  %vm4270 = vweird.f32 %v4231
  %vm4271 = vweird.f32 %v4264
  %vm4272 = vmor %vm4270, %vm4271
  %v4273 = vsel %vm4272, %v4264, %v4269
  %v4274 = vrsqrt.pop %v4232
  %v4275 = vmul.f32 %v4274, %v4232
  %v4276 = vmul.f32 %v4275, %v4274
  %v4277 = vmul.f32 0.5, %v4276
  %v4278 = vsub.f32 1.5, %v4277
  %v4279 = vmul.f32 %v4274, %v4278
  %vm4280 = vweird.f32 %v4232
  %vm4281 = vweird.f32 %v4274
  %vm4282 = vmor %vm4280, %vm4281
  %v4283 = vsel %vm4282, %v4274, %v4279
  %v4284 = vrsqrt.pop %v4233
  %v4285 = vmul.f32 %v4284, %v4233
  %v4286 = vmul.f32 %v4285, %v4284
  %v4287 = vmul.f32 0.5, %v4286
  %v4288 = vsub.f32 1.5, %v4287
  %v4289 = vmul.f32 %v4284, %v4288
  %vm4290 = vweird.f32 %v4233
  %vm4291 = vweird.f32 %v4284
  %vm4292 = vmor %vm4290, %vm4291
  %v4293 = vsel %vm4292, %v4284, %v4289
  %v4294 = vmul.f32 %v4192, %v4243
  %v4295 = vmul.f32 %v4193, %v4253
  %v4296 = vmul.f32 %v4194, %v4263
  %v4297 = vmul.f32 %v4195, %v4273
  %v4298 = vmul.f32 %v4196, %v4283
  %v4299 = vmul.f32 %v4197, %v4293
  %v4300 = vperm.slane %v2396, 0
  %v4301 = vmul.f32 %v4294, %v4300
  %v4302 = vmul.f32 %v4295, %v4300
  %v4303 = vmul.f32 %v4296, %v4300
  %v4304 = vmul.f32 %v4297, %v4300
  %v4305 = vmul.f32 %v4298, %v4300
  %v4306 = vmul.f32 %v4299, %v4300
  %v4307 = vperm.slane %v2397, 0
  %v4308 = vadd.f32 %v4301, %v4307
  %v4309 = vadd.f32 %v4302, %v4307
  %v4310 = vadd.f32 %v4303, %v4307
  %v4311 = vadd.f32 %v4304, %v4307
  %v4312 = vadd.f32 %v4305, %v4307
  %v4313 = vadd.f32 %v4306, %v4307
  %v4314 = vpack.c.bf16 %v4309, %v4308
  %v4315 = vpack.c.bf16 %v4311, %v4310
  %v4316 = vpack.c.bf16 %v4313, %v4312
  %v4317 = vperm.slane %v2398, 0
  %v4322 = vunpack.c.l.b16 %v2405
  %v4323 = vunpack.c.l.b16 %v2406
  %v4324 = vunpack.c.l.b16 %v2407
  %v4325 = vunpack.c.l.b16 %v2408
  %v4326 = vpack.c.b16 %v4323, %v4322
  %v4327 = vpack.c.b16 %v4325, %v4324
  %v4331 = vsel %vm140, %v4314, 0
  %v4334 = vsel %vm140, %v4315, 0
  %v4337 = vsel %vm140, %v4316, 0
  %4339 = vmatpush.bf16.msra.mxu0 0
  %4340 = vmatpush.bf16.msra.mxu0 0
  %4341 = vmatpush.bf16.msra.mxu0 0
  %4342 = vmatpush.bf16.msra.mxu0 0
  %4343 = vmatpush.bf16.msra.mxu0 0
  %4344 = vmatpush.bf16.msra.mxu0 0
  %4345 = vmatpush.bf16.msra.mxu0 %v4327
  %4346 = vmatpush.bf16.msra.mxu0 %v4326
  %4347 = vmatmul.bf16.gmra.mxu0 %v4331
  %v4348 = vpop.f32.mrf.mxu0
  %v4349 = vadd.f32 %v4317, %v4348
  %v4350 = vpop.f32.mrf.mxu0
  %v4351 = vadd.f32 %v4317, %v4350
  %4352 = vmatmul.bf16.gmra.mxu0 %v4334
  %v4353 = vpop.f32.mrf.mxu0
  %v4354 = vadd.f32 %v4317, %v4353
  %v4355 = vpop.f32.mrf.mxu0
  %v4356 = vadd.f32 %v4317, %v4355
  %4357 = vmatmul.bf16.gmra.mxu0 %v4337
  %v4358 = vpop.f32.mrf.mxu0
  %v4359 = vadd.f32 %v4317, %v4358
  %v4360 = vpop.f32.mrf.mxu0
  %v4361 = vadd.f32 %v4317, %v4360
  %4362 = vdwg.mxu0
  %v4363 = vmul.f32 %v4349, 0.5
  %v4364 = vmul.f32 %v4351, 0.5
  %v4365 = vmul.f32 %v4354, 0.5
  %v4366 = vmul.f32 %v4356, 0.5
  %v4367 = vmul.f32 %v4359, 0.5
  %v4368 = vmul.f32 %v4361, 0.5
  %v4369 = vmul.f32 %v4349, 0.70710677
  %v4370 = vmul.f32 %v4351, 0.70710677
  %v4371 = vmul.f32 %v4354, 0.70710677
  %v4372 = vmul.f32 %v4356, 0.70710677
  %v4373 = vmul.f32 %v4359, 0.70710677
  %v4374 = vmul.f32 %v4361, 0.70710677
  %vm4375 = vcmp.ge.f32.partialorder %v4369, 0.0
  %vm4376 = vcmp.ge.f32.partialorder %v4370, 0.0
  %vm4377 = vcmp.ge.f32.partialorder %v4371, 0.0
  %vm4378 = vcmp.ge.f32.partialorder %v4372, 0.0
  %vm4379 = vcmp.ge.f32.partialorder %v4373, 0.0
  %vm4380 = vcmp.ge.f32.partialorder %v4374, 0.0
  %v4381 = vsel %vm4375, 1.0, -1.0
  %v4382 = vsel %vm4376, 1.0, -1.0
  %v4383 = vsel %vm4377, 1.0, -1.0
  %v4384 = vsel %vm4378, 1.0, -1.0
  %v4385 = vsel %vm4379, 1.0, -1.0
  %v4386 = vsel %vm4380, 1.0, -1.0
  %v4387 = vand.u32 2147483647, %v4369
  %v4388 = vand.u32 2147483647, %v4370
  %v4389 = vand.u32 2147483647, %v4371
  %v4390 = vand.u32 2147483647, %v4372
  %v4391 = vand.u32 2147483647, %v4373
  %v4392 = vand.u32 2147483647, %v4374
  %v4393 = vmul.f32 %v4387, 0.3275911
  %v4394 = vmul.f32 %v4388, 0.3275911
  %v4395 = vmul.f32 %v4389, 0.3275911
  %v4396 = vmul.f32 %v4390, 0.3275911
  %v4397 = vmul.f32 %v4391, 0.3275911
  %v4398 = vmul.f32 %v4392, 0.3275911
  %v4399 = vadd.f32 %v4393, 1.0
  %v4400 = vadd.f32 %v4394, 1.0
  %v4401 = vadd.f32 %v4395, 1.0
  %v4402 = vadd.f32 %v4396, 1.0
  %v4403 = vadd.f32 %v4397, 1.0
  %v4404 = vadd.f32 %v4398, 1.0
  %v4405 = vrcp.pop %v4399
  %v4406 = vmul.f32 %v4399, %v4405
  %v4407 = vsub.f32 1.0, %v4406
  %v4408 = vmul.f32 %v4405, %v4407
  %v4409 = vadd.f32 %v4405, %v4408
  %vm4410 = vweird.f32 %v4399
  %vm4411 = vweird.f32 %v4405
  %vm4412 = vmor %vm4410, %vm4411
  %v4413 = vsel %vm4412, %v4405, %v4409
  %v4414 = vand.u32 2147483647, %v4399
  %vm4415 = vcmp.eq.f32.partialorder %v4414, 8.507059e+37
  %v4416 = vand.u32 %v4399, 2147483648
  %v4417 = vor.u32 1.1754944e-38, %v4416
  %v4418 = vsel %vm4415, %v4417, %v4413
  %v4419 = vmul.f32 1.0, %v4418
  %v4420 = vrcp.pop %v4400
  %v4421 = vmul.f32 %v4400, %v4420
  %v4422 = vsub.f32 1.0, %v4421
  %v4423 = vmul.f32 %v4420, %v4422
  %v4424 = vadd.f32 %v4420, %v4423
  %vm4425 = vweird.f32 %v4400
  %vm4426 = vweird.f32 %v4420
  %vm4427 = vmor %vm4425, %vm4426
  %v4428 = vsel %vm4427, %v4420, %v4424
  %v4429 = vand.u32 2147483647, %v4400
  %vm4430 = vcmp.eq.f32.partialorder %v4429, 8.507059e+37
  %v4431 = vand.u32 %v4400, 2147483648
  %v4432 = vor.u32 1.1754944e-38, %v4431
  %v4433 = vsel %vm4430, %v4432, %v4428
  %v4434 = vmul.f32 1.0, %v4433
  %v4435 = vrcp.pop %v4401
  %v4436 = vmul.f32 %v4401, %v4435
  %v4437 = vsub.f32 1.0, %v4436
  %v4438 = vmul.f32 %v4435, %v4437
  %v4439 = vadd.f32 %v4435, %v4438
  %vm4440 = vweird.f32 %v4401
  %vm4441 = vweird.f32 %v4435
  %vm4442 = vmor %vm4440, %vm4441
  %v4443 = vsel %vm4442, %v4435, %v4439
  %v4444 = vand.u32 2147483647, %v4401
  %vm4445 = vcmp.eq.f32.partialorder %v4444, 8.507059e+37
  %v4446 = vand.u32 %v4401, 2147483648
  %v4447 = vor.u32 1.1754944e-38, %v4446
  %v4448 = vsel %vm4445, %v4447, %v4443
  %v4449 = vmul.f32 1.0, %v4448
  %v4450 = vrcp.pop %v4402
  %v4451 = vmul.f32 %v4402, %v4450
  %v4452 = vsub.f32 1.0, %v4451
  %v4453 = vmul.f32 %v4450, %v4452
  %v4454 = vadd.f32 %v4450, %v4453
  %vm4455 = vweird.f32 %v4402
  %vm4456 = vweird.f32 %v4450
  %vm4457 = vmor %vm4455, %vm4456
  %v4458 = vsel %vm4457, %v4450, %v4454
  %v4459 = vand.u32 2147483647, %v4402
  %vm4460 = vcmp.eq.f32.partialorder %v4459, 8.507059e+37
  %v4461 = vand.u32 %v4402, 2147483648
  %v4462 = vor.u32 1.1754944e-38, %v4461
  %v4463 = vsel %vm4460, %v4462, %v4458
  %v4464 = vmul.f32 1.0, %v4463
  %v4465 = vrcp.pop %v4403
  %v4466 = vmul.f32 %v4403, %v4465
  %v4467 = vsub.f32 1.0, %v4466
  %v4468 = vmul.f32 %v4465, %v4467
  %v4469 = vadd.f32 %v4465, %v4468
  %vm4470 = vweird.f32 %v4403
  %vm4471 = vweird.f32 %v4465
  %vm4472 = vmor %vm4470, %vm4471
  %v4473 = vsel %vm4472, %v4465, %v4469
  %v4474 = vand.u32 2147483647, %v4403
  %vm4475 = vcmp.eq.f32.partialorder %v4474, 8.507059e+37
  %v4476 = vand.u32 %v4403, 2147483648
  %v4477 = vor.u32 1.1754944e-38, %v4476
  %v4478 = vsel %vm4475, %v4477, %v4473
  %v4479 = vmul.f32 1.0, %v4478
  %v4480 = vrcp.pop %v4404
  %v4481 = vmul.f32 %v4404, %v4480
  %v4482 = vsub.f32 1.0, %v4481
  %v4483 = vmul.f32 %v4480, %v4482
  %v4484 = vadd.f32 %v4480, %v4483
  %vm4485 = vweird.f32 %v4404
  %vm4486 = vweird.f32 %v4480
  %vm4487 = vmor %vm4485, %vm4486
  %v4488 = vsel %vm4487, %v4480, %v4484
  %v4489 = vand.u32 2147483647, %v4404
  %vm4490 = vcmp.eq.f32.partialorder %v4489, 8.507059e+37
  %v4491 = vand.u32 %v4404, 2147483648
  %v4492 = vor.u32 1.1754944e-38, %v4491
  %v4493 = vsel %vm4490, %v4492, %v4488
  %v4494 = vmul.f32 1.0, %v4493
  %v4495 = vmul.f32 %v4419, 1.0614054
  %v4496 = vmul.f32 %v4434, 1.0614054
  %v4497 = vmul.f32 %v4449, 1.0614054
  %v4498 = vmul.f32 %v4464, 1.0614054
  %v4499 = vmul.f32 %v4479, 1.0614054
  %v4500 = vmul.f32 %v4494, 1.0614054
  %v4501 = vadd.f32 %v4495, -1.4531521
  %v4502 = vadd.f32 %v4496, -1.4531521
  %v4503 = vadd.f32 %v4497, -1.4531521
  %v4504 = vadd.f32 %v4498, -1.4531521
  %v4505 = vadd.f32 %v4499, -1.4531521
  %v4506 = vadd.f32 %v4500, -1.4531521
  %v4507 = vmul.f32 %v4501, %v4419
  %v4508 = vmul.f32 %v4502, %v4434
  %v4509 = vmul.f32 %v4503, %v4449
  %v4510 = vmul.f32 %v4504, %v4464
  %v4511 = vmul.f32 %v4505, %v4479
  %v4512 = vmul.f32 %v4506, %v4494
  %v4513 = vadd.f32 %v4507, 1.4214138
  %v4514 = vadd.f32 %v4508, 1.4214138
  %v4515 = vadd.f32 %v4509, 1.4214138
  %v4516 = vadd.f32 %v4510, 1.4214138
  %v4517 = vadd.f32 %v4511, 1.4214138
  %v4518 = vadd.f32 %v4512, 1.4214138
  %v4519 = vmul.f32 %v4513, %v4419
  %v4520 = vmul.f32 %v4514, %v4434
  %v4521 = vmul.f32 %v4515, %v4449
  %v4522 = vmul.f32 %v4516, %v4464
  %v4523 = vmul.f32 %v4517, %v4479
  %v4524 = vmul.f32 %v4518, %v4494
  %v4525 = vadd.f32 %v4519, -0.28449672
  %v4526 = vadd.f32 %v4520, -0.28449672
  %v4527 = vadd.f32 %v4521, -0.28449672
  %v4528 = vadd.f32 %v4522, -0.28449672
  %v4529 = vadd.f32 %v4523, -0.28449672
  %v4530 = vadd.f32 %v4524, -0.28449672
  %v4531 = vmul.f32 %v4525, %v4419
  %v4532 = vmul.f32 %v4526, %v4434
  %v4533 = vmul.f32 %v4527, %v4449
  %v4534 = vmul.f32 %v4528, %v4464
  %v4535 = vmul.f32 %v4529, %v4479
  %v4536 = vmul.f32 %v4530, %v4494
  %v4537 = vadd.f32 %v4531, 0.2548296
  %v4538 = vadd.f32 %v4532, 0.2548296
  %v4539 = vadd.f32 %v4533, 0.2548296
  %v4540 = vadd.f32 %v4534, 0.2548296
  %v4541 = vadd.f32 %v4535, 0.2548296
  %v4542 = vadd.f32 %v4536, 0.2548296
  %v4543 = vmul.f32 %v4537, %v4419
  %v4544 = vmul.f32 %v4538, %v4434
  %v4545 = vmul.f32 %v4539, %v4449
  %v4546 = vmul.f32 %v4540, %v4464
  %v4547 = vmul.f32 %v4541, %v4479
  %v4548 = vmul.f32 %v4542, %v4494
  %v4549 = vsub.f32 0.0, %v4387
  %v4550 = vsub.f32 0.0, %v4388
  %v4551 = vsub.f32 0.0, %v4389
  %v4552 = vsub.f32 0.0, %v4390
  %v4553 = vsub.f32 0.0, %v4391
  %v4554 = vsub.f32 0.0, %v4392
  %v4555 = vmul.f32 %v4549, %v4387
  %v4556 = vmul.f32 %v4550, %v4388
  %v4557 = vmul.f32 %v4551, %v4389
  %v4558 = vmul.f32 %v4552, %v4390
  %v4559 = vmul.f32 %v4553, %v4391
  %v4560 = vmul.f32 %v4554, %v4392
  %v4561 = vmul.f32 %v4555, 1.442695
  %v4562 = vpow.pop %v4561
  %v4563 = vmul.f32 %v4556, 1.442695
  %v4564 = vpow.pop %v4563
  %v4565 = vmul.f32 %v4557, 1.442695
  %v4566 = vpow.pop %v4565
  %v4567 = vmul.f32 %v4558, 1.442695
  %v4568 = vpow.pop %v4567
  %v4569 = vmul.f32 %v4559, 1.442695
  %v4570 = vpow.pop %v4569
  %v4571 = vmul.f32 %v4560, 1.442695
  %v4572 = vpow.pop %v4571
  %v4573 = vmul.f32 %v4543, %v4562
  %v4574 = vmul.f32 %v4544, %v4564
  %v4575 = vmul.f32 %v4545, %v4566
  %v4576 = vmul.f32 %v4546, %v4568
  %v4577 = vmul.f32 %v4547, %v4570
  %v4578 = vmul.f32 %v4548, %v4572
  %v4579 = vsub.f32 1.0, %v4573
  %v4580 = vsub.f32 1.0, %v4574
  %v4581 = vsub.f32 1.0, %v4575
  %v4582 = vsub.f32 1.0, %v4576
  %v4583 = vsub.f32 1.0, %v4577
  %v4584 = vsub.f32 1.0, %v4578
  %v4585 = vmul.f32 %v4381, %v4579
  %v4586 = vmul.f32 %v4382, %v4580
  %v4587 = vmul.f32 %v4383, %v4581
  %v4588 = vmul.f32 %v4384, %v4582
  %v4589 = vmul.f32 %v4385, %v4583
  %v4590 = vmul.f32 %v4386, %v4584
  %v4591 = vadd.f32 %v4585, 1.0
  %v4592 = vadd.f32 %v4586, 1.0
  %v4593 = vadd.f32 %v4587, 1.0
  %v4594 = vadd.f32 %v4588, 1.0
  %v4595 = vadd.f32 %v4589, 1.0
  %v4596 = vadd.f32 %v4590, 1.0
  %v4597 = vmul.f32 %v4363, %v4591
  %v4598 = vmul.f32 %v4364, %v4592
  %v4599 = vmul.f32 %v4365, %v4593
  %v4600 = vmul.f32 %v4366, %v4594
  %v4601 = vmul.f32 %v4367, %v4595
  %v4602 = vmul.f32 %v4368, %v4596
  %v4603 = vpack.c.bf16 %v4598, %v4597
  %v4604 = vpack.c.bf16 %v4600, %v4599
  %v4605 = vpack.c.bf16 %v4602, %v4601
  %v4622 = vunpack.c.l.b16 %v2409
  %v4623 = vunpack.c.l.b16 %v2410
  %v4624 = vunpack.c.l.b16 %v2411
  %v4625 = vunpack.c.l.b16 %v2412
  %v4626 = vunpack.c.l.b16 %v2413
  %v4627 = vunpack.c.l.b16 %v2414
  %v4628 = vunpack.c.l.b16 %v2415
  %v4629 = vunpack.c.l.b16 %v2416
  %v4630 = vunpack.c.l.b16 %v2417
  %v4631 = vunpack.c.l.b16 %v2418
  %v4632 = vunpack.c.l.b16 %v2419
  %v4633 = vunpack.c.l.b16 %v2420
  %v4634 = vunpack.c.l.b16 %v2421
  %v4635 = vunpack.c.l.b16 %v2422
  %v4636 = vunpack.c.l.b16 %v2423
  %v4637 = vunpack.c.l.b16 %v2424
  %v4638 = vpack.c.b16 %v4623, %v4622
  %v4639 = vpack.c.b16 %v4625, %v4624
  %v4640 = vpack.c.b16 %v4627, %v4626
  %v4641 = vpack.c.b16 %v4629, %v4628
  %v4642 = vpack.c.b16 %v4631, %v4630
  %v4643 = vpack.c.b16 %v4633, %v4632
  %v4644 = vpack.c.b16 %v4635, %v4634
  %v4645 = vpack.c.b16 %v4637, %v4636
  %4654 = vmatpush.bf16.msra.mxu0 %v4645
  %4655 = vmatpush.bf16.msra.mxu0 %v4644
  %4656 = vmatpush.bf16.msra.mxu0 %v4643
  %4657 = vmatpush.bf16.msra.mxu0 %v4642
  %4658 = vmatpush.bf16.msra.mxu0 %v4641
  %4659 = vmatpush.bf16.msra.mxu0 %v4640
  %4660 = vmatpush.bf16.msra.mxu0 %v4639
  %4661 = vmatpush.bf16.msra.mxu0 %v4638
  %4662 = vmatmul.bf16.gmra.mxu0 %v4603
  %v4663 = vpop.f32.mrf.mxu0
  %v4664 = vadd.f32 0.0, %v4663
  %v4665 = vpop.f32.mrf.mxu0
  %v4666 = vadd.f32 0.0, %v4665
  %4667 = vmatmul.bf16.gmra.mxu0 %v4604
  %v4668 = vpop.f32.mrf.mxu0
  %v4669 = vadd.f32 0.0, %v4668
  %v4670 = vpop.f32.mrf.mxu0
  %v4671 = vadd.f32 0.0, %v4670
  %4672 = vmatmul.bf16.gmra.mxu0 %v4605
  %v4673 = vpop.f32.mrf.mxu0
  %v4674 = vadd.f32 0.0, %v4673
  %v4675 = vpop.f32.mrf.mxu0
  %v4676 = vadd.f32 0.0, %v4675
  %4677 = vdwg.mxu0
  %v4678 = vadd.f32 %v4162, %v4664
  %v4679 = vadd.f32 %v4163, %v4666
  %v4680 = vadd.f32 %v4164, %v4669
  %v4681 = vadd.f32 %v4165, %v4671
  %v4682 = vadd.f32 %v4166, %v4674
  %v4683 = vadd.f32 %v4167, %v4676
  %v4684 = vperm.slane %v2399, 0
  %v4685 = vadd.f32 %v4678, %v4684
  %v4686 = vadd.f32 %v4679, %v4684
  %v4687 = vadd.f32 %v4680, %v4684
  %v4688 = vadd.f32 %v4681, %v4684
  %v4689 = vadd.f32 %v4682, %v4684
  %v4690 = vadd.f32 %v4683, %v4684
  %v4691 = vld [vmem:[%s1 + $0x10] sm:$0x1]
  %v4692 = vlaneseq
  %v4693 = vshrl.u32 %v4692, 7
  %v4694 = vadd.s32 %v4693, 8
  %v4695 = vadd.s32 %v4693, 16
  %v4696 = vadd.s32 %v4693, 24
  %v4697 = vadd.s32 %v4693, 32
  %v4698 = vadd.s32 %v4693, 40
  %vm4699 = vcmp.lt.s32.totalorder %v4693, 0
  %v4700 = vsub.s32 0, %v4693
  %v4701 = vsel %vm4699, %v4700, %v4693
  %v4702 = vand.u32 %v4701, 65535
  %v4703 = vshrl.u32 %v4701, 16
  %v4705 = vmul.u32 %v4702, 43691
  %v4706 = vmul.u32 %v4702, 43690
  %v4707 = vmul.u32 %v4703, 43691
  %v4708 = vmul.u32 %v4703, 43690
  %v4709 = vshll.u32 %v4706, 16
  %v4710 = vshrl.u32 %v4706, 16
  %v4711 = vshll.u32 %v4707, 16
  %v4712 = vshrl.u32 %v4707, 16
  %vm4713 = vc.u32 %v4705, %v4709
  %v4714 = vsel %vm4713, 1, 0
  %v4715 = vadd.s32 %v4705, %v4709
  %v4716 = vadd.s32 %v4708, %v4714
  %vm4717 = vc.u32 %v4715, %v4711
  %v4718 = vsel %vm4717, 1, 0
  %v4719 = vadd.s32 %v4715, %v4711
  %v4720 = vadd.s32 %v4716, %v4718
  %v4721 = vadd.s32 %v4720, %v4710
  %v4722 = vadd.s32 %v4721, %v4712
  %v4723 = vshrl.u32 %v4722, 4
  %v4724 = vmul.u32 %v4723, 24
  %v4725 = vsub.s32 %v4701, %v4724
  %v4726 = vsub.s32 0, %v4725
  %v4727 = vsel %vm4699, %v4726, %v4725
  %vm4728 = vcmp.lt.s32.totalorder %v4694, 0
  %v4729 = vsub.s32 0, %v4694
  %v4730 = vsel %vm4728, %v4729, %v4694
  %v4731 = vand.u32 %v4730, 65535
  %v4732 = vshrl.u32 %v4730, 16
  %v4734 = vmul.u32 %v4731, 43691
  %v4735 = vmul.u32 %v4731, 43690
  %v4736 = vmul.u32 %v4732, 43691
  %v4737 = vmul.u32 %v4732, 43690
  %v4738 = vshll.u32 %v4735, 16
  %v4739 = vshrl.u32 %v4735, 16
  %v4740 = vshll.u32 %v4736, 16
  %v4741 = vshrl.u32 %v4736, 16
  %vm4742 = vc.u32 %v4734, %v4738
  %v4743 = vsel %vm4742, 1, 0
  %v4744 = vadd.s32 %v4734, %v4738
  %v4745 = vadd.s32 %v4737, %v4743
  %vm4746 = vc.u32 %v4744, %v4740
  %v4747 = vsel %vm4746, 1, 0
  %v4748 = vadd.s32 %v4744, %v4740
  %v4749 = vadd.s32 %v4745, %v4747
  %v4750 = vadd.s32 %v4749, %v4739
  %v4751 = vadd.s32 %v4750, %v4741
  %v4752 = vshrl.u32 %v4751, 4
  %v4753 = vmul.u32 %v4752, 24
  %v4754 = vsub.s32 %v4730, %v4753
  %v4755 = vsub.s32 0, %v4754
  %v4756 = vsel %vm4728, %v4755, %v4754
  %vm4757 = vcmp.lt.s32.totalorder %v4695, 0
  %v4758 = vsub.s32 0, %v4695
  %v4759 = vsel %vm4757, %v4758, %v4695
  %v4760 = vand.u32 %v4759, 65535
  %v4761 = vshrl.u32 %v4759, 16
  %v4763 = vmul.u32 %v4760, 43691
  %v4764 = vmul.u32 %v4760, 43690
  %v4765 = vmul.u32 %v4761, 43691
  %v4766 = vmul.u32 %v4761, 43690
  %v4767 = vshll.u32 %v4764, 16
  %v4768 = vshrl.u32 %v4764, 16
  %v4769 = vshll.u32 %v4765, 16
  %v4770 = vshrl.u32 %v4765, 16
  %vm4771 = vc.u32 %v4763, %v4767
  %v4772 = vsel %vm4771, 1, 0
  %v4773 = vadd.s32 %v4763, %v4767
  %v4774 = vadd.s32 %v4766, %v4772
  %vm4775 = vc.u32 %v4773, %v4769
  %v4776 = vsel %vm4775, 1, 0
  %v4777 = vadd.s32 %v4773, %v4769
  %v4778 = vadd.s32 %v4774, %v4776
  %v4779 = vadd.s32 %v4778, %v4768
  %v4780 = vadd.s32 %v4779, %v4770
  %v4781 = vshrl.u32 %v4780, 4
  %v4782 = vmul.u32 %v4781, 24
  %v4783 = vsub.s32 %v4759, %v4782
  %v4784 = vsub.s32 0, %v4783
  %v4785 = vsel %vm4757, %v4784, %v4783
  %vm4786 = vcmp.lt.s32.totalorder %v4696, 0
  %v4787 = vsub.s32 0, %v4696
  %v4788 = vsel %vm4786, %v4787, %v4696
  %v4789 = vand.u32 %v4788, 65535
  %v4790 = vshrl.u32 %v4788, 16
  %v4792 = vmul.u32 %v4789, 43691
  %v4793 = vmul.u32 %v4789, 43690
  %v4794 = vmul.u32 %v4790, 43691
  %v4795 = vmul.u32 %v4790, 43690
  %v4796 = vshll.u32 %v4793, 16
  %v4797 = vshrl.u32 %v4793, 16
  %v4798 = vshll.u32 %v4794, 16
  %v4799 = vshrl.u32 %v4794, 16
  %vm4800 = vc.u32 %v4792, %v4796
  %v4801 = vsel %vm4800, 1, 0
  %v4802 = vadd.s32 %v4792, %v4796
  %v4803 = vadd.s32 %v4795, %v4801
  %vm4804 = vc.u32 %v4802, %v4798
  %v4805 = vsel %vm4804, 1, 0
  %v4806 = vadd.s32 %v4802, %v4798
  %v4807 = vadd.s32 %v4803, %v4805
  %v4808 = vadd.s32 %v4807, %v4797
  %v4809 = vadd.s32 %v4808, %v4799
  %v4810 = vshrl.u32 %v4809, 4
  %v4811 = vmul.u32 %v4810, 24
  %v4812 = vsub.s32 %v4788, %v4811
  %v4813 = vsub.s32 0, %v4812
  %v4814 = vsel %vm4786, %v4813, %v4812
  %vm4815 = vcmp.lt.s32.totalorder %v4697, 0
  %v4816 = vsub.s32 0, %v4697
  %v4817 = vsel %vm4815, %v4816, %v4697
  %v4818 = vand.u32 %v4817, 65535
  %v4819 = vshrl.u32 %v4817, 16
  %v4821 = vmul.u32 %v4818, 43691
  %v4822 = vmul.u32 %v4818, 43690
  %v4823 = vmul.u32 %v4819, 43691
  %v4824 = vmul.u32 %v4819, 43690
  %v4825 = vshll.u32 %v4822, 16
  %v4826 = vshrl.u32 %v4822, 16
  %v4827 = vshll.u32 %v4823, 16
  %v4828 = vshrl.u32 %v4823, 16
  %vm4829 = vc.u32 %v4821, %v4825
  %v4830 = vsel %vm4829, 1, 0
  %v4831 = vadd.s32 %v4821, %v4825
  %v4832 = vadd.s32 %v4824, %v4830
  %vm4833 = vc.u32 %v4831, %v4827
  %v4834 = vsel %vm4833, 1, 0
  %v4835 = vadd.s32 %v4831, %v4827
  %v4836 = vadd.s32 %v4832, %v4834
  %v4837 = vadd.s32 %v4836, %v4826
  %v4838 = vadd.s32 %v4837, %v4828
  %v4839 = vshrl.u32 %v4838, 4
  %v4840 = vmul.u32 %v4839, 24
  %v4841 = vsub.s32 %v4817, %v4840
  %v4842 = vsub.s32 0, %v4841
  %v4843 = vsel %vm4815, %v4842, %v4841
  %vm4844 = vcmp.lt.s32.totalorder %v4698, 0
  %v4845 = vsub.s32 0, %v4698
  %v4846 = vsel %vm4844, %v4845, %v4698
  %v4847 = vand.u32 %v4846, 65535
  %v4848 = vshrl.u32 %v4846, 16
  %v4850 = vmul.u32 %v4847, 43691
  %v4851 = vmul.u32 %v4847, 43690
  %v4852 = vmul.u32 %v4848, 43691
  %v4853 = vmul.u32 %v4848, 43690
  %v4854 = vshll.u32 %v4851, 16
  %v4855 = vshrl.u32 %v4851, 16
  %v4856 = vshll.u32 %v4852, 16
  %v4857 = vshrl.u32 %v4852, 16
  %vm4858 = vc.u32 %v4850, %v4854
  %v4859 = vsel %vm4858, 1, 0
  %v4860 = vadd.s32 %v4850, %v4854
  %v4861 = vadd.s32 %v4853, %v4859
  %vm4862 = vc.u32 %v4860, %v4856
  %v4863 = vsel %vm4862, 1, 0
  %v4864 = vadd.s32 %v4860, %v4856
  %v4865 = vadd.s32 %v4861, %v4863
  %v4866 = vadd.s32 %v4865, %v4855
  %v4867 = vadd.s32 %v4866, %v4857
  %v4868 = vshrl.u32 %v4867, 4
  %v4869 = vmul.u32 %v4868, 24
  %v4870 = vsub.s32 %v4846, %v4869
  %v4871 = vsub.s32 0, %v4870
  %v4872 = vsel %vm4844, %v4871, %v4870
  %vm4873 = vcmp.ne.s32.totalorder %v4727, 0
  %vm4874 = vcmp.ne.s32.totalorder %v4756, 0
  %vm4875 = vcmp.ne.s32.totalorder %v4785, 0
  %vm4876 = vcmp.ne.s32.totalorder %v4814, 0
  %vm4877 = vcmp.ne.s32.totalorder %v4843, 0
  %vm4878 = vcmp.ne.s32.totalorder %v4872, 0
  %vm4879 = vcmp.lt.s32.totalorder %v4727, 0
  %vm4880 = vcmp.lt.s32.totalorder %v4756, 0
  %vm4881 = vcmp.lt.s32.totalorder %v4785, 0
  %vm4882 = vcmp.lt.s32.totalorder %v4814, 0
  %vm4883 = vcmp.lt.s32.totalorder %v4843, 0
  %vm4884 = vcmp.lt.s32.totalorder %v4872, 0
  %vm4885 = vmand %vm4879, %vm4873
  %vm4886 = vmand %vm4880, %vm4874
  %vm4887 = vmand %vm4881, %vm4875
  %vm4888 = vmand %vm4882, %vm4876
  %vm4889 = vmand %vm4883, %vm4877
  %vm4890 = vmand %vm4884, %vm4878
  %v4891 = vadd.s32 %v4727, 24
  %v4892 = vadd.s32 %v4756, 24
  %v4893 = vadd.s32 %v4785, 24
  %v4894 = vadd.s32 %v4814, 24
  %v4895 = vadd.s32 %v4843, 24
  %v4896 = vadd.s32 %v4872, 24
  %v4897 = vsel %vm4885, %v4891, %v4727
  %v4898 = vsel %vm4886, %v4892, %v4756
  %v4899 = vsel %vm4887, %v4893, %v4785
  %v4900 = vsel %vm4888, %v4894, %v4814
  %v4901 = vsel %vm4889, %v4895, %v4843
  %v4902 = vsel %vm4890, %v4896, %v4872
  %vm4903 = vcmp.eq.s32.totalorder %v4897, 16
  %vm4904 = vcmp.eq.s32.totalorder %v4898, 16
  %vm4905 = vcmp.eq.s32.totalorder %v4899, 16
  %vm4906 = vcmp.eq.s32.totalorder %v4900, 16
  %vm4907 = vcmp.eq.s32.totalorder %v4901, 16
  %vm4908 = vcmp.eq.s32.totalorder %v4902, 16
  %v4909 = vsel %vm4903, 1, 0
  %v4910 = vsel %vm4904, 1, 0
  %v4911 = vsel %vm4905, 1, 0
  %v4912 = vsel %vm4906, 1, 0
  %v4913 = vsel %vm4907, 1, 0
  %v4914 = vsel %vm4908, 1, 0
  %vm4915 = vcmp.eq.s32.totalorder %v4909, 1
  %vm4916 = vcmp.eq.s32.totalorder %v4910, 1
  %vm4917 = vcmp.eq.s32.totalorder %v4911, 1
  %vm4918 = vcmp.eq.s32.totalorder %v4912, 1
  %vm4919 = vcmp.eq.s32.totalorder %v4913, 1
  %vm4920 = vcmp.eq.s32.totalorder %v4914, 1
  %v4921 = vperm.slane %v4691, 0
  %v4922 = vsel %vm4915, %v4921, %v4685
  %v4923 = vsel %vm4916, %v4921, %v4686
  %v4924 = vsel %vm4917, %v4921, %v4687
  %v4925 = vsel %vm4918, %v4921, %v4688
  %v4926 = vsel %vm4919, %v4921, %v4689
  %v4927 = vsel %vm4920, %v4921, %v4690
  %s4928 = scalar_lea.vmem %s4, 16
  %v4929 = vld [vmem:[%s4928] sm:$0x1]
  %v4930 = vld [vmem:[%s4928 + $0x1] sm:$0x1]
  %v4931 = vld [vmem:[%s4928 + $0x2] sm:$0x1]
  %v4932 = vld [vmem:[%s4928 + $0x3] sm:$0x1]
  %v4933 = vld [vmem:[%s4928 + $0x4] sm:$0x1]
  %v4934 = vld [vmem:[%s4928 + $0x5] sm:$0x1]
  %v4935 = vld [vmem:[%s4928 + $0x6] sm:$0x1]
  %s4936 = scalar_lea.vmem %s3, 384
  %v4937 = vld [vmem:[%s4936] sm:$0xf]
  %v4938 = vld [vmem:[%s4936 + $0xc] sm:$0xf]
  %v4939 = vld [vmem:[%s4936 + $0x18] sm:$0xf]
  %v4940 = vld [vmem:[%s4936 + $0x24] sm:$0xf]
  %v4941 = vld [vmem:[%s4936 + $0x4] sm:$0xf]
  %v4942 = vld [vmem:[%s4936 + $0x10] sm:$0xf]
  %v4943 = vld [vmem:[%s4936 + $0x1c] sm:$0xf]
  %v4944 = vld [vmem:[%s4936 + $0x28] sm:$0xf]
  %v4945 = vld [vmem:[%s4936 + $0x8] sm:$0xf]
  %v4946 = vld [vmem:[%s4936 + $0x14] sm:$0xf]
  %v4947 = vld [vmem:[%s4936 + $0x20] sm:$0xf]
  %v4948 = vld [vmem:[%s4936 + $0x2c] sm:$0xf]
  %v4949 = vld [vmem:[%s4936 + $0x38] sm:$0xf]
  %v4950 = vld [vmem:[%s4936 + $0x44] sm:$0xf]
  %v4951 = vld [vmem:[%s4936 + $0x50] sm:$0xf]
  %v4952 = vld [vmem:[%s4936 + $0x5c] sm:$0xf]
  %v4953 = vld [vmem:[%s4936 + $0x68] sm:$0xf]
  %v4954 = vld [vmem:[%s4936 + $0x74] sm:$0xf]
  %v4955 = vld [vmem:[%s4936 + $0x80] sm:$0xf]
  %v4956 = vld [vmem:[%s4936 + $0x8c] sm:$0xf]
  %v4957 = vld [vmem:[%s4936 + $0x98] sm:$0xf]
  %v4958 = vld [vmem:[%s4936 + $0xa4] sm:$0xf]
  %v4959 = vld [vmem:[%s4936 + $0xb0] sm:$0xf]
  %v4960 = vld [vmem:[%s4936 + $0xbc] sm:$0xf]
  %v4961 = vsel %vm140, %v4922, 0.0
  %4962 = vadd.xlane.f32.xlu0 %v4961
  %v4963 = vpop.xlane.xlu0 %4962
  %v4964 = vsel %vm140, %v4923, 0.0
  %4965 = vadd.xlane.f32.xlu0 %v4964
  %v4966 = vpop.xlane.xlu0 %4965
  %v4967 = vsel %vm140, %v4924, 0.0
  %4968 = vadd.xlane.f32.xlu0 %v4967
  %v4969 = vpop.xlane.xlu0 %4968
  %v4970 = vsel %vm140, %v4925, 0.0
  %4971 = vadd.xlane.f32.xlu0 %v4970
  %v4972 = vpop.xlane.xlu0 %4971
  %v4973 = vsel %vm140, %v4926, 0.0
  %4974 = vadd.xlane.f32.xlu0 %v4973
  %v4975 = vpop.xlane.xlu0 %4974
  %v4976 = vsel %vm140, %v4927, 0.0
  %4977 = vadd.xlane.f32.xlu0 %v4976
  %v4978 = vpop.xlane.xlu0 %4977
  %v4979 = vmul.f32 %v4963, %v161
  %v4980 = vmul.f32 %v4966, %v161
  %v4981 = vmul.f32 %v4969, %v161
  %v4982 = vmul.f32 %v4972, %v161
  %v4983 = vmul.f32 %v4975, %v161
  %v4984 = vmul.f32 %v4978, %v161
  %v4985 = vsub.f32 %v4922, %v4979
  %v4986 = vsub.f32 %v4923, %v4980
  %v4987 = vsub.f32 %v4924, %v4981
  %v4988 = vsub.f32 %v4925, %v4982
  %v4989 = vsub.f32 %v4926, %v4983
  %v4990 = vsub.f32 %v4927, %v4984
  %v4991 = vmul.f32 %v4985, %v4985
  %v4992 = vmul.f32 %v4986, %v4986
  %v4993 = vmul.f32 %v4987, %v4987
  %v4994 = vmul.f32 %v4988, %v4988
  %v4995 = vmul.f32 %v4989, %v4989
  %v4996 = vmul.f32 %v4990, %v4990
  %v4997 = vsel %vm140, %v4991, 0.0
  %4998 = vadd.xlane.f32.xlu0 %v4997
  %v4999 = vpop.xlane.xlu0 %4998
  %v5000 = vsel %vm140, %v4992, 0.0
  %5001 = vadd.xlane.f32.xlu0 %v5000
  %v5002 = vpop.xlane.xlu0 %5001
  %v5003 = vsel %vm140, %v4993, 0.0
  %5004 = vadd.xlane.f32.xlu0 %v5003
  %v5005 = vpop.xlane.xlu0 %5004
  %v5006 = vsel %vm140, %v4994, 0.0
  %5007 = vadd.xlane.f32.xlu0 %v5006
  %v5008 = vpop.xlane.xlu0 %5007
  %v5009 = vsel %vm140, %v4995, 0.0
  %5010 = vadd.xlane.f32.xlu0 %v5009
  %v5011 = vpop.xlane.xlu0 %5010
  %v5012 = vsel %vm140, %v4996, 0.0
  %5013 = vadd.xlane.f32.xlu0 %v5012
  %v5014 = vpop.xlane.xlu0 %5013
  %v5015 = vmul.f32 %v4999, %v161
  %v5016 = vmul.f32 %v5002, %v161
  %v5017 = vmul.f32 %v5005, %v161
  %v5018 = vmul.f32 %v5008, %v161
  %v5019 = vmul.f32 %v5011, %v161
  %v5020 = vmul.f32 %v5014, %v161
  %v5021 = vadd.f32 %v5015, 1e-05
  %v5022 = vadd.f32 %v5016, 1e-05
  %v5023 = vadd.f32 %v5017, 1e-05
  %v5024 = vadd.f32 %v5018, 1e-05
  %v5025 = vadd.f32 %v5019, 1e-05
  %v5026 = vadd.f32 %v5020, 1e-05
  %v5027 = vrsqrt.pop %v5021
  %v5028 = vmul.f32 %v5027, %v5021
  %v5029 = vmul.f32 %v5028, %v5027
  %v5030 = vmul.f32 0.5, %v5029
  %v5031 = vsub.f32 1.5, %v5030
  %v5032 = vmul.f32 %v5027, %v5031
  %vm5033 = vweird.f32 %v5021
  %vm5034 = vweird.f32 %v5027
  %vm5035 = vmor %vm5033, %vm5034
  %v5036 = vsel %vm5035, %v5027, %v5032
  %v5037 = vrsqrt.pop %v5022
  %v5038 = vmul.f32 %v5037, %v5022
  %v5039 = vmul.f32 %v5038, %v5037
  %v5040 = vmul.f32 0.5, %v5039
  %v5041 = vsub.f32 1.5, %v5040
  %v5042 = vmul.f32 %v5037, %v5041
  %vm5043 = vweird.f32 %v5022
  %vm5044 = vweird.f32 %v5037
  %vm5045 = vmor %vm5043, %vm5044
  %v5046 = vsel %vm5045, %v5037, %v5042
  %v5047 = vrsqrt.pop %v5023
  %v5048 = vmul.f32 %v5047, %v5023
  %v5049 = vmul.f32 %v5048, %v5047
  %v5050 = vmul.f32 0.5, %v5049
  %v5051 = vsub.f32 1.5, %v5050
  %v5052 = vmul.f32 %v5047, %v5051
  %vm5053 = vweird.f32 %v5023
  %vm5054 = vweird.f32 %v5047
  %vm5055 = vmor %vm5053, %vm5054
  %v5056 = vsel %vm5055, %v5047, %v5052
  %v5057 = vrsqrt.pop %v5024
  %v5058 = vmul.f32 %v5057, %v5024
  %v5059 = vmul.f32 %v5058, %v5057
  %v5060 = vmul.f32 0.5, %v5059
  %v5061 = vsub.f32 1.5, %v5060
  %v5062 = vmul.f32 %v5057, %v5061
  %vm5063 = vweird.f32 %v5024
  %vm5064 = vweird.f32 %v5057
  %vm5065 = vmor %vm5063, %vm5064
  %v5066 = vsel %vm5065, %v5057, %v5062
  %v5067 = vrsqrt.pop %v5025
  %v5068 = vmul.f32 %v5067, %v5025
  %v5069 = vmul.f32 %v5068, %v5067
  %v5070 = vmul.f32 0.5, %v5069
  %v5071 = vsub.f32 1.5, %v5070
  %v5072 = vmul.f32 %v5067, %v5071
  %vm5073 = vweird.f32 %v5025
  %vm5074 = vweird.f32 %v5067
  %vm5075 = vmor %vm5073, %vm5074
  %v5076 = vsel %vm5075, %v5067, %v5072
  %v5077 = vrsqrt.pop %v5026
  %v5078 = vmul.f32 %v5077, %v5026
  %v5079 = vmul.f32 %v5078, %v5077
  %v5080 = vmul.f32 0.5, %v5079
  %v5081 = vsub.f32 1.5, %v5080
  %v5082 = vmul.f32 %v5077, %v5081
  %vm5083 = vweird.f32 %v5026
  %vm5084 = vweird.f32 %v5077
  %vm5085 = vmor %vm5083, %vm5084
  %v5086 = vsel %vm5085, %v5077, %v5082
  %v5087 = vmul.f32 %v4985, %v5036
  %v5088 = vmul.f32 %v4986, %v5046
  %v5089 = vmul.f32 %v4987, %v5056
  %v5090 = vmul.f32 %v4988, %v5066
  %v5091 = vmul.f32 %v4989, %v5076
  %v5092 = vmul.f32 %v4990, %v5086
  %v5093 = vperm.slane %v4929, 0
  %v5094 = vmul.f32 %v5087, %v5093
  %v5095 = vmul.f32 %v5088, %v5093
  %v5096 = vmul.f32 %v5089, %v5093
  %v5097 = vmul.f32 %v5090, %v5093
  %v5098 = vmul.f32 %v5091, %v5093
  %v5099 = vmul.f32 %v5092, %v5093
  %v5100 = vperm.slane %v4930, 0
  %v5101 = vadd.f32 %v5094, %v5100
  %v5102 = vadd.f32 %v5095, %v5100
  %v5103 = vadd.f32 %v5096, %v5100
  %v5104 = vadd.f32 %v5097, %v5100
  %v5105 = vadd.f32 %v5098, %v5100
  %v5106 = vadd.f32 %v5099, %v5100
  %v5107 = vpack.c.bf16 %v5102, %v5101
  %v5108 = vpack.c.bf16 %v5104, %v5103
  %v5109 = vpack.c.bf16 %v5106, %v5105
  %v5114 = vunpack.c.l.b16 %v4937
  %v5115 = vunpack.c.l.b16 %v4938
  %v5116 = vunpack.c.l.b16 %v4939
  %v5117 = vunpack.c.l.b16 %v4940
  %v5118 = vpack.c.b16 %v5115, %v5114
  %v5119 = vpack.c.b16 %v5117, %v5116
  %v5123 = vsel %vm140, %v5107, 0
  %v5126 = vsel %vm140, %v5108, 0
  %v5129 = vsel %vm140, %v5109, 0
  %5131 = vmatpush.bf16.msra.mxu0 0
  %5132 = vmatpush.bf16.msra.mxu0 0
  %5133 = vmatpush.bf16.msra.mxu0 0
  %5134 = vmatpush.bf16.msra.mxu0 0
  %5135 = vmatpush.bf16.msra.mxu0 0
  %5136 = vmatpush.bf16.msra.mxu0 0
  %5137 = vmatpush.bf16.msra.mxu0 %v5119
  %5138 = vmatpush.bf16.msra.mxu0 %v5118
  %5139 = vmatmul.bf16.gmra.mxu0 %v5123
  %v5140 = vpop.f32.mrf.mxu0
  %v5141 = vadd.f32 0.0, %v5140
  %v5142 = vpop.f32.mrf.mxu0
  %v5143 = vadd.f32 0.0, %v5142
  %5144 = vmatmul.bf16.gmra.mxu0 %v5126
  %v5145 = vpop.f32.mrf.mxu0
  %v5146 = vadd.f32 0.0, %v5145
  %v5147 = vpop.f32.mrf.mxu0
  %v5148 = vadd.f32 0.0, %v5147
  %5149 = vmatmul.bf16.gmra.mxu0 %v5129
  %v5150 = vpop.f32.mrf.mxu0
  %v5151 = vadd.f32 0.0, %v5150
  %v5152 = vpop.f32.mrf.mxu0
  %v5153 = vadd.f32 0.0, %v5152
  %5154 = vdwg.mxu0
  %v5155 = vpack.c.bf16 %v5143, %v5141
  %v5156 = vpack.c.bf16 %v5146, %v5146
  %5159 = vrot.lane.b32.xlu0 %v5155, 96
  %v5160 = vpop.permute.xlu0 %5159
  %5161 = vrot.lane.b32.xlu0 %v5156, 96
  %v5162 = vpop.permute.xlu0 %5161
  %v5164 = vsel %vm325, %v5155, 0
  %v5167 = vsel %vm325, %v5156, 0
  %v5170 = vsel %vm325, %v5160, 0
  %v5173 = vsel %vm325, %v5162, 0
  %5175 = vmatpush.bf16.xpose.msra.mxu0 0
  %5176 = vmatpush.bf16.xpose.msra.mxu0 0
  %5177 = vmatpush.bf16.xpose.msra.mxu0 0
  %5178 = vmatpush.bf16.xpose.msra.mxu0 0
  %5179 = vmatpush.bf16.xpose.msra.mxu0 0
  %5180 = vmatpush.bf16.xpose.msra.mxu0 0
  %5181 = vmatpush.bf16.xpose.msra.mxu0 %v5173
  %5182 = vmatpush.bf16.xpose.msra.mxu0 %v5170
  %5183 = vmatmul.bf16.gmra.mxu0 %v5164
  %v5184 = vpop.f32.mrf.mxu0
  %v5185 = vadd.f32 0.0, %v5184
  %v5186 = vpop.f32.mrf.mxu0
  %v5187 = vadd.f32 0.0, %v5186
  %5188 = vmatmul.bf16.gmra.mxu0 %v5167
  %v5189 = vpop.f32.mrf.mxu0
  %v5190 = vadd.f32 0.0, %v5189
  %v5191 = vpop.f32.mrf.mxu0
  %5192 = vdwg.mxu0
  %v5193 = vmul.f32 %v5185, 0.35355338
  %v5194 = vmul.f32 %v5187, 0.35355338
  %v5195 = vmul.f32 %v5190, 0.35355338
  %v5196 = vadd.f32 %v5193, %v108
  %v5197 = vadd.f32 %v5194, %v108
  %v5198 = vadd.f32 %v5195, %v108
  %v5199 = vsel %vm362, %v5196, -inf
  %5200 = vmax.xlane.f32.xlu0 %v5199
  %v5201 = vpop.xlane.xlu0 %5200
  %v5202 = vsel %vm362, %v5197, -inf
  %5203 = vmax.xlane.f32.xlu0 %v5202
  %v5204 = vpop.xlane.xlu0 %5203
  %v5205 = vsel %vm362, %v5198, -inf
  %5206 = vmax.xlane.f32.xlu0 %v5205
  %v5207 = vpop.xlane.xlu0 %5206
  %v5208 = vsub.f32 %v5196, %v5201
  %v5209 = vsub.f32 %v5197, %v5204
  %v5210 = vsub.f32 %v5198, %v5207
  %v5211 = vmul.f32 %v5208, 1.442695
  %v5212 = vpow.pop %v5211
  %v5213 = vmul.f32 %v5209, 1.442695
  %v5214 = vpow.pop %v5213
  %v5215 = vmul.f32 %v5210, 1.442695
  %v5216 = vpow.pop %v5215
  %v5217 = vsel %vm362, %v5212, 0.0
  %5218 = vadd.xlane.f32.xlu0 %v5217
  %v5219 = vpop.xlane.xlu0 %5218
  %v5220 = vsel %vm362, %v5214, 0.0
  %5221 = vadd.xlane.f32.xlu0 %v5220
  %v5222 = vpop.xlane.xlu0 %5221
  %v5223 = vsel %vm362, %v5216, 0.0
  %5224 = vadd.xlane.f32.xlu0 %v5223
  %v5225 = vpop.xlane.xlu0 %5224
  %v5226 = vrcp.pop %v5219
  %v5227 = vrcp.pop %v5222
  %v5228 = vrcp.pop %v5225
  %v5229 = vmul.f32 %v5212, %v5226
  %v5230 = vmul.f32 %v5214, %v5227
  %v5231 = vmul.f32 %v5216, %v5228
  %v5232 = vpack.c.bf16 %v5230, %v5229
  %v5233 = vpack.c.bf16 %v5231, %v5231
  %5234 = vrot.lane.b32.xlu0 %v5155, 64
  %v5235 = vpop.permute.xlu0 %5234
  %5236 = vrot.lane.b32.xlu0 %v5156, 64
  %v5237 = vpop.permute.xlu0 %5236
  %v5240 = vsel %vm362, %v5232, 0
  %v5243 = vsel %vm362, %v5233, 0
  %v5246 = vsel %vm477, %v5237, 0
  %5248 = vmatpush.bf16.msra.mxu0 0
  %5249 = vmatpush.bf16.msra.mxu0 0
  %5250 = vmatpush.bf16.msra.mxu0 0
  %5251 = vmatpush.bf16.msra.mxu0 0
  %5252 = vmatpush.bf16.msra.mxu0 0
  %5253 = vmatpush.bf16.msra.mxu0 0
  %5254 = vmatpush.bf16.msra.mxu0 %v5246
  %5255 = vmatpush.bf16.msra.mxu0 %v5235
  %5256 = vmatmul.bf16.gmra.mxu0 %v5240
  %v5257 = vpop.f32.mrf.mxu0
  %v5258 = vadd.f32 0.0, %v5257
  %v5259 = vpop.f32.mrf.mxu0
  %v5260 = vadd.f32 0.0, %v5259
  %5261 = vmatmul.bf16.gmra.mxu0 %v5243
  %v5262 = vpop.f32.mrf.mxu0
  %v5263 = vadd.f32 0.0, %v5262
  %v5264 = vpop.f32.mrf.mxu0
  %5265 = vdwg.mxu0
  %5266 = vrot.lane.b32.xlu0 %v5155, 120
  %v5267 = vpop.permute.xlu0 %5266
  %5268 = vrot.lane.b32.xlu0 %v5156, 120
  %v5269 = vpop.permute.xlu0 %5268
  %5270 = vrot.lane.b32.xlu0 %v5155, 88
  %v5271 = vpop.permute.xlu0 %5270
  %5272 = vrot.lane.b32.xlu0 %v5156, 88
  %v5273 = vpop.permute.xlu0 %5272
  %v5275 = vsel %vm325, %v5267, 0
  %v5278 = vsel %vm325, %v5269, 0
  %v5281 = vsel %vm325, %v5271, 0
  %v5284 = vsel %vm325, %v5273, 0
  %5286 = vmatpush.bf16.xpose.msra.mxu0 0
  %5287 = vmatpush.bf16.xpose.msra.mxu0 0
  %5288 = vmatpush.bf16.xpose.msra.mxu0 0
  %5289 = vmatpush.bf16.xpose.msra.mxu0 0
  %5290 = vmatpush.bf16.xpose.msra.mxu0 0
  %5291 = vmatpush.bf16.xpose.msra.mxu0 0
  %5292 = vmatpush.bf16.xpose.msra.mxu0 %v5284
  %5293 = vmatpush.bf16.xpose.msra.mxu0 %v5281
  %5294 = vmatmul.bf16.gmra.mxu0 %v5275
  %v5295 = vpop.f32.mrf.mxu0
  %v5296 = vadd.f32 0.0, %v5295
  %v5297 = vpop.f32.mrf.mxu0
  %v5298 = vadd.f32 0.0, %v5297
  %5299 = vmatmul.bf16.gmra.mxu0 %v5278
  %v5300 = vpop.f32.mrf.mxu0
  %v5301 = vadd.f32 0.0, %v5300
  %v5302 = vpop.f32.mrf.mxu0
  %5303 = vdwg.mxu0
  %v5304 = vmul.f32 %v5296, 0.35355338
  %v5305 = vmul.f32 %v5298, 0.35355338
  %v5306 = vmul.f32 %v5301, 0.35355338
  %v5307 = vadd.f32 %v5304, %v108
  %v5308 = vadd.f32 %v5305, %v108
  %v5309 = vadd.f32 %v5306, %v108
  %v5310 = vsel %vm362, %v5307, -inf
  %5311 = vmax.xlane.f32.xlu0 %v5310
  %v5312 = vpop.xlane.xlu0 %5311
  %v5313 = vsel %vm362, %v5308, -inf
  %5314 = vmax.xlane.f32.xlu0 %v5313
  %v5315 = vpop.xlane.xlu0 %5314
  %v5316 = vsel %vm362, %v5309, -inf
  %5317 = vmax.xlane.f32.xlu0 %v5316
  %v5318 = vpop.xlane.xlu0 %5317
  %v5319 = vsub.f32 %v5307, %v5312
  %v5320 = vsub.f32 %v5308, %v5315
  %v5321 = vsub.f32 %v5309, %v5318
  %v5322 = vmul.f32 %v5319, 1.442695
  %v5323 = vpow.pop %v5322
  %v5324 = vmul.f32 %v5320, 1.442695
  %v5325 = vpow.pop %v5324
  %v5326 = vmul.f32 %v5321, 1.442695
  %v5327 = vpow.pop %v5326
  %v5328 = vsel %vm362, %v5323, 0.0
  %5329 = vadd.xlane.f32.xlu0 %v5328
  %v5330 = vpop.xlane.xlu0 %5329
  %v5331 = vsel %vm362, %v5325, 0.0
  %5332 = vadd.xlane.f32.xlu0 %v5331
  %v5333 = vpop.xlane.xlu0 %5332
  %v5334 = vsel %vm362, %v5327, 0.0
  %5335 = vadd.xlane.f32.xlu0 %v5334
  %v5336 = vpop.xlane.xlu0 %5335
  %v5337 = vrcp.pop %v5330
  %v5338 = vrcp.pop %v5333
  %v5339 = vrcp.pop %v5336
  %v5340 = vmul.f32 %v5323, %v5337
  %v5341 = vmul.f32 %v5325, %v5338
  %v5342 = vmul.f32 %v5327, %v5339
  %v5343 = vpack.c.bf16 %v5341, %v5340
  %v5344 = vpack.c.bf16 %v5342, %v5342
  %5345 = vrot.lane.b32.xlu0 %v5155, 56
  %v5346 = vpop.permute.xlu0 %5345
  %5347 = vrot.lane.b32.xlu0 %v5156, 56
  %v5348 = vpop.permute.xlu0 %5347
  %v5351 = vsel %vm362, %v5343, 0
  %v5354 = vsel %vm362, %v5344, 0
  %v5357 = vsel %vm477, %v5348, 0
  %5359 = vmatpush.bf16.msra.mxu0 0
  %5360 = vmatpush.bf16.msra.mxu0 0
  %5361 = vmatpush.bf16.msra.mxu0 0
  %5362 = vmatpush.bf16.msra.mxu0 0
  %5363 = vmatpush.bf16.msra.mxu0 0
  %5364 = vmatpush.bf16.msra.mxu0 0
  %5365 = vmatpush.bf16.msra.mxu0 %v5357
  %5366 = vmatpush.bf16.msra.mxu0 %v5346
  %5367 = vmatmul.bf16.gmra.mxu0 %v5351
  %v5368 = vpop.f32.mrf.mxu0
  %v5369 = vadd.f32 0.0, %v5368
  %v5370 = vpop.f32.mrf.mxu0
  %v5371 = vadd.f32 0.0, %v5370
  %5372 = vmatmul.bf16.gmra.mxu0 %v5354
  %v5373 = vpop.f32.mrf.mxu0
  %v5374 = vadd.f32 0.0, %v5373
  %v5375 = vpop.f32.mrf.mxu0
  %5376 = vdwg.mxu0
  %5377 = vrot.lane.b32.xlu0 %v5155, 112
  %v5378 = vpop.permute.xlu0 %5377
  %5379 = vrot.lane.b32.xlu0 %v5156, 112
  %v5380 = vpop.permute.xlu0 %5379
  %5381 = vrot.lane.b32.xlu0 %v5155, 80
  %v5382 = vpop.permute.xlu0 %5381
  %5383 = vrot.lane.b32.xlu0 %v5156, 80
  %v5384 = vpop.permute.xlu0 %5383
  %v5386 = vsel %vm325, %v5378, 0
  %v5389 = vsel %vm325, %v5380, 0
  %v5392 = vsel %vm325, %v5382, 0
  %v5395 = vsel %vm325, %v5384, 0
  %5397 = vmatpush.bf16.xpose.msra.mxu0 0
  %5398 = vmatpush.bf16.xpose.msra.mxu0 0
  %5399 = vmatpush.bf16.xpose.msra.mxu0 0
  %5400 = vmatpush.bf16.xpose.msra.mxu0 0
  %5401 = vmatpush.bf16.xpose.msra.mxu0 0
  %5402 = vmatpush.bf16.xpose.msra.mxu0 0
  %5403 = vmatpush.bf16.xpose.msra.mxu0 %v5395
  %5404 = vmatpush.bf16.xpose.msra.mxu0 %v5392
  %5405 = vmatmul.bf16.gmra.mxu0 %v5386
  %v5406 = vpop.f32.mrf.mxu0
  %v5407 = vadd.f32 0.0, %v5406
  %v5408 = vpop.f32.mrf.mxu0
  %v5409 = vadd.f32 0.0, %v5408
  %5410 = vmatmul.bf16.gmra.mxu0 %v5389
  %v5411 = vpop.f32.mrf.mxu0
  %v5412 = vadd.f32 0.0, %v5411
  %v5413 = vpop.f32.mrf.mxu0
  %5414 = vdwg.mxu0
  %v5415 = vmul.f32 %v5407, 0.35355338
  %v5416 = vmul.f32 %v5409, 0.35355338
  %v5417 = vmul.f32 %v5412, 0.35355338
  %v5418 = vadd.f32 %v5415, %v108
  %v5419 = vadd.f32 %v5416, %v108
  %v5420 = vadd.f32 %v5417, %v108
  %v5421 = vsel %vm362, %v5418, -inf
  %5422 = vmax.xlane.f32.xlu0 %v5421
  %v5423 = vpop.xlane.xlu0 %5422
  %v5424 = vsel %vm362, %v5419, -inf
  %5425 = vmax.xlane.f32.xlu0 %v5424
  %v5426 = vpop.xlane.xlu0 %5425
  %v5427 = vsel %vm362, %v5420, -inf
  %5428 = vmax.xlane.f32.xlu0 %v5427
  %v5429 = vpop.xlane.xlu0 %5428
  %v5430 = vsub.f32 %v5418, %v5423
  %v5431 = vsub.f32 %v5419, %v5426
  %v5432 = vsub.f32 %v5420, %v5429
  %v5433 = vmul.f32 %v5430, 1.442695
  %v5434 = vpow.pop %v5433
  %v5435 = vmul.f32 %v5431, 1.442695
  %v5436 = vpow.pop %v5435
  %v5437 = vmul.f32 %v5432, 1.442695
  %v5438 = vpow.pop %v5437
  %v5439 = vsel %vm362, %v5434, 0.0
  %5440 = vadd.xlane.f32.xlu0 %v5439
  %v5441 = vpop.xlane.xlu0 %5440
  %v5442 = vsel %vm362, %v5436, 0.0
  %5443 = vadd.xlane.f32.xlu0 %v5442
  %v5444 = vpop.xlane.xlu0 %5443
  %v5445 = vsel %vm362, %v5438, 0.0
  %5446 = vadd.xlane.f32.xlu0 %v5445
  %v5447 = vpop.xlane.xlu0 %5446
  %v5448 = vrcp.pop %v5441
  %v5449 = vrcp.pop %v5444
  %v5450 = vrcp.pop %v5447
  %v5451 = vmul.f32 %v5434, %v5448
  %v5452 = vmul.f32 %v5436, %v5449
  %v5453 = vmul.f32 %v5438, %v5450
  %v5454 = vpack.c.bf16 %v5452, %v5451
  %v5455 = vpack.c.bf16 %v5453, %v5453
  %5456 = vrot.lane.b32.xlu0 %v5155, 48
  %v5457 = vpop.permute.xlu0 %5456
  %5458 = vrot.lane.b32.xlu0 %v5156, 48
  %v5459 = vpop.permute.xlu0 %5458
  %v5462 = vsel %vm362, %v5454, 0
  %v5465 = vsel %vm362, %v5455, 0
  %v5468 = vsel %vm477, %v5459, 0
  %5470 = vmatpush.bf16.msra.mxu0 0
  %5471 = vmatpush.bf16.msra.mxu0 0
  %5472 = vmatpush.bf16.msra.mxu0 0
  %5473 = vmatpush.bf16.msra.mxu0 0
  %5474 = vmatpush.bf16.msra.mxu0 0
  %5475 = vmatpush.bf16.msra.mxu0 0
  %5476 = vmatpush.bf16.msra.mxu0 %v5468
  %5477 = vmatpush.bf16.msra.mxu0 %v5457
  %5478 = vmatmul.bf16.gmra.mxu0 %v5462
  %v5479 = vpop.f32.mrf.mxu0
  %v5480 = vadd.f32 0.0, %v5479
  %v5481 = vpop.f32.mrf.mxu0
  %v5482 = vadd.f32 0.0, %v5481
  %5483 = vmatmul.bf16.gmra.mxu0 %v5465
  %v5484 = vpop.f32.mrf.mxu0
  %v5485 = vadd.f32 0.0, %v5484
  %v5486 = vpop.f32.mrf.mxu0
  %5487 = vdwg.mxu0
  %5488 = vrot.lane.b32.xlu0 %v5155, 104
  %v5489 = vpop.permute.xlu0 %5488
  %5490 = vrot.lane.b32.xlu0 %v5156, 104
  %v5491 = vpop.permute.xlu0 %5490
  %5492 = vrot.lane.b32.xlu0 %v5155, 72
  %v5493 = vpop.permute.xlu0 %5492
  %5494 = vrot.lane.b32.xlu0 %v5156, 72
  %v5495 = vpop.permute.xlu0 %5494
  %v5497 = vsel %vm325, %v5489, 0
  %v5500 = vsel %vm325, %v5491, 0
  %v5503 = vsel %vm325, %v5493, 0
  %v5506 = vsel %vm325, %v5495, 0
  %5508 = vmatpush.bf16.xpose.msra.mxu0 0
  %5509 = vmatpush.bf16.xpose.msra.mxu0 0
  %5510 = vmatpush.bf16.xpose.msra.mxu0 0
  %5511 = vmatpush.bf16.xpose.msra.mxu0 0
  %5512 = vmatpush.bf16.xpose.msra.mxu0 0
  %5513 = vmatpush.bf16.xpose.msra.mxu0 0
  %5514 = vmatpush.bf16.xpose.msra.mxu0 %v5506
  %5515 = vmatpush.bf16.xpose.msra.mxu0 %v5503
  %5516 = vmatmul.bf16.gmra.mxu0 %v5497
  %v5517 = vpop.f32.mrf.mxu0
  %v5518 = vadd.f32 0.0, %v5517
  %v5519 = vpop.f32.mrf.mxu0
  %v5520 = vadd.f32 0.0, %v5519
  %5521 = vmatmul.bf16.gmra.mxu0 %v5500
  %v5522 = vpop.f32.mrf.mxu0
  %v5523 = vadd.f32 0.0, %v5522
  %v5524 = vpop.f32.mrf.mxu0
  %5525 = vdwg.mxu0
  %v5526 = vmul.f32 %v5518, 0.35355338
  %v5527 = vmul.f32 %v5520, 0.35355338
  %v5528 = vmul.f32 %v5523, 0.35355338
  %v5529 = vadd.f32 %v5526, %v108
  %v5530 = vadd.f32 %v5527, %v108
  %v5531 = vadd.f32 %v5528, %v108
  %v5532 = vsel %vm362, %v5529, -inf
  %5533 = vmax.xlane.f32.xlu0 %v5532
  %v5534 = vpop.xlane.xlu0 %5533
  %v5535 = vsel %vm362, %v5530, -inf
  %5536 = vmax.xlane.f32.xlu0 %v5535
  %v5537 = vpop.xlane.xlu0 %5536
  %v5538 = vsel %vm362, %v5531, -inf
  %5539 = vmax.xlane.f32.xlu0 %v5538
  %v5540 = vpop.xlane.xlu0 %5539
  %v5541 = vsub.f32 %v5529, %v5534
  %v5542 = vsub.f32 %v5530, %v5537
  %v5543 = vsub.f32 %v5531, %v5540
  %v5544 = vmul.f32 %v5541, 1.442695
  %v5545 = vpow.pop %v5544
  %v5546 = vmul.f32 %v5542, 1.442695
  %v5547 = vpow.pop %v5546
  %v5548 = vmul.f32 %v5543, 1.442695
  %v5549 = vpow.pop %v5548
  %v5550 = vsel %vm362, %v5545, 0.0
  %5551 = vadd.xlane.f32.xlu0 %v5550
  %v5552 = vpop.xlane.xlu0 %5551
  %v5553 = vsel %vm362, %v5547, 0.0
  %5554 = vadd.xlane.f32.xlu0 %v5553
  %v5555 = vpop.xlane.xlu0 %5554
  %v5556 = vsel %vm362, %v5549, 0.0
  %5557 = vadd.xlane.f32.xlu0 %v5556
  %v5558 = vpop.xlane.xlu0 %5557
  %v5559 = vrcp.pop %v5552
  %v5560 = vrcp.pop %v5555
  %v5561 = vrcp.pop %v5558
  %v5562 = vmul.f32 %v5545, %v5559
  %v5563 = vmul.f32 %v5547, %v5560
  %v5564 = vmul.f32 %v5549, %v5561
  %v5565 = vpack.c.bf16 %v5563, %v5562
  %v5566 = vpack.c.bf16 %v5564, %v5564
  %5567 = vrot.lane.b32.xlu0 %v5155, 40
  %v5568 = vpop.permute.xlu0 %5567
  %5569 = vrot.lane.b32.xlu0 %v5156, 40
  %v5570 = vpop.permute.xlu0 %5569
  %v5573 = vsel %vm362, %v5565, 0
  %v5576 = vsel %vm362, %v5566, 0
  %v5579 = vsel %vm477, %v5570, 0
  %5581 = vmatpush.bf16.msra.mxu0 0
  %5582 = vmatpush.bf16.msra.mxu0 0
  %5583 = vmatpush.bf16.msra.mxu0 0
  %5584 = vmatpush.bf16.msra.mxu0 0
  %5585 = vmatpush.bf16.msra.mxu0 0
  %5586 = vmatpush.bf16.msra.mxu0 0
  %5587 = vmatpush.bf16.msra.mxu0 %v5579
  %5588 = vmatpush.bf16.msra.mxu0 %v5568
  %5589 = vmatmul.bf16.gmra.mxu0 %v5573
  %v5590 = vpop.f32.mrf.mxu0
  %v5591 = vadd.f32 0.0, %v5590
  %v5592 = vpop.f32.mrf.mxu0
  %v5593 = vadd.f32 0.0, %v5592
  %5594 = vmatmul.bf16.gmra.mxu0 %v5576
  %v5595 = vpop.f32.mrf.mxu0
  %v5596 = vadd.f32 0.0, %v5595
  %v5597 = vpop.f32.mrf.mxu0
  %5598 = vdwg.mxu0
  %5602 = vrot.lane.b32.xlu0 %v5369, 8
  %v5603 = vpop.permute.xlu0 %5602
  %5604 = vrot.lane.b32.xlu0 %v5371, 8
  %v5605 = vpop.permute.xlu0 %5604
  %5606 = vrot.lane.b32.xlu0 %v5374, 8
  %v5607 = vpop.permute.xlu0 %5606
  %5614 = vrot.lane.b32.xlu0 %v5480, 16
  %v5615 = vpop.permute.xlu0 %5614
  %5616 = vrot.lane.b32.xlu0 %v5482, 16
  %v5617 = vpop.permute.xlu0 %5616
  %5618 = vrot.lane.b32.xlu0 %v5485, 16
  %v5619 = vpop.permute.xlu0 %5618
  %5626 = vrot.lane.b32.xlu0 %v5591, 24
  %v5627 = vpop.permute.xlu0 %5626
  %5628 = vrot.lane.b32.xlu0 %v5593, 24
  %v5629 = vpop.permute.xlu0 %5628
  %5630 = vrot.lane.b32.xlu0 %v5596, 24
  %v5631 = vpop.permute.xlu0 %5630
  %v5635 = vsel %vm325, %v5258, %v5603
  %v5636 = vsel %vm325, %v5260, %v5605
  %v5637 = vsel %vm325, %v5263, %v5607
  %v5638 = vsel %vm1078, %v5635, %v5615
  %v5639 = vsel %vm1078, %v5636, %v5617
  %v5640 = vsel %vm1078, %v5637, %v5619
  %v5641 = vsel %vm362, %v5638, %v5627
  %v5642 = vsel %vm362, %v5639, %v5629
  %v5643 = vsel %vm362, %v5640, %v5631
  %v5644 = vpack.c.bf16 %v5151, %v5148
  %v5645 = vpack.c.bf16 %v5153, %v5153
  %5648 = vrot.lane.b32.xlu0 %v5644, 96
  %v5649 = vpop.permute.xlu0 %5648
  %5650 = vrot.lane.b32.xlu0 %v5645, 96
  %v5651 = vpop.permute.xlu0 %5650
  %v5653 = vsel %vm325, %v5644, 0
  %v5656 = vsel %vm325, %v5645, 0
  %v5659 = vsel %vm325, %v5649, 0
  %v5662 = vsel %vm325, %v5651, 0
  %5664 = vmatpush.bf16.xpose.msra.mxu0 0
  %5665 = vmatpush.bf16.xpose.msra.mxu0 0
  %5666 = vmatpush.bf16.xpose.msra.mxu0 0
  %5667 = vmatpush.bf16.xpose.msra.mxu0 0
  %5668 = vmatpush.bf16.xpose.msra.mxu0 0
  %5669 = vmatpush.bf16.xpose.msra.mxu0 0
  %5670 = vmatpush.bf16.xpose.msra.mxu0 %v5662
  %5671 = vmatpush.bf16.xpose.msra.mxu0 %v5659
  %5672 = vmatmul.bf16.gmra.mxu0 %v5653
  %v5673 = vpop.f32.mrf.mxu0
  %v5674 = vadd.f32 0.0, %v5673
  %v5675 = vpop.f32.mrf.mxu0
  %v5676 = vadd.f32 0.0, %v5675
  %5677 = vmatmul.bf16.gmra.mxu0 %v5656
  %v5678 = vpop.f32.mrf.mxu0
  %v5679 = vadd.f32 0.0, %v5678
  %v5680 = vpop.f32.mrf.mxu0
  %5681 = vdwg.mxu0
  %v5682 = vmul.f32 %v5674, 0.35355338
  %v5683 = vmul.f32 %v5676, 0.35355338
  %v5684 = vmul.f32 %v5679, 0.35355338
  %v5685 = vadd.f32 %v5682, %v108
  %v5686 = vadd.f32 %v5683, %v108
  %v5687 = vadd.f32 %v5684, %v108
  %v5688 = vsel %vm362, %v5685, -inf
  %5689 = vmax.xlane.f32.xlu0 %v5688
  %v5690 = vpop.xlane.xlu0 %5689
  %v5691 = vsel %vm362, %v5686, -inf
  %5692 = vmax.xlane.f32.xlu0 %v5691
  %v5693 = vpop.xlane.xlu0 %5692
  %v5694 = vsel %vm362, %v5687, -inf
  %5695 = vmax.xlane.f32.xlu0 %v5694
  %v5696 = vpop.xlane.xlu0 %5695
  %v5697 = vsub.f32 %v5685, %v5690
  %v5698 = vsub.f32 %v5686, %v5693
  %v5699 = vsub.f32 %v5687, %v5696
  %v5700 = vmul.f32 %v5697, 1.442695
  %v5701 = vpow.pop %v5700
  %v5702 = vmul.f32 %v5698, 1.442695
  %v5703 = vpow.pop %v5702
  %v5704 = vmul.f32 %v5699, 1.442695
  %v5705 = vpow.pop %v5704
  %v5706 = vsel %vm362, %v5701, 0.0
  %5707 = vadd.xlane.f32.xlu0 %v5706
  %v5708 = vpop.xlane.xlu0 %5707
  %v5709 = vsel %vm362, %v5703, 0.0
  %5710 = vadd.xlane.f32.xlu0 %v5709
  %v5711 = vpop.xlane.xlu0 %5710
  %v5712 = vsel %vm362, %v5705, 0.0
  %5713 = vadd.xlane.f32.xlu0 %v5712
  %v5714 = vpop.xlane.xlu0 %5713
  %v5715 = vrcp.pop %v5708
  %v5716 = vrcp.pop %v5711
  %v5717 = vrcp.pop %v5714
  %v5718 = vmul.f32 %v5701, %v5715
  %v5719 = vmul.f32 %v5703, %v5716
  %v5720 = vmul.f32 %v5705, %v5717
  %v5721 = vpack.c.bf16 %v5719, %v5718
  %v5722 = vpack.c.bf16 %v5720, %v5720
  %5723 = vrot.lane.b32.xlu0 %v5644, 64
  %v5724 = vpop.permute.xlu0 %5723
  %5725 = vrot.lane.b32.xlu0 %v5645, 64
  %v5726 = vpop.permute.xlu0 %5725
  %v5729 = vsel %vm362, %v5721, 0
  %v5732 = vsel %vm362, %v5722, 0
  %v5735 = vsel %vm477, %v5726, 0
  %5737 = vmatpush.bf16.msra.mxu0 0
  %5738 = vmatpush.bf16.msra.mxu0 0
  %5739 = vmatpush.bf16.msra.mxu0 0
  %5740 = vmatpush.bf16.msra.mxu0 0
  %5741 = vmatpush.bf16.msra.mxu0 0
  %5742 = vmatpush.bf16.msra.mxu0 0
  %5743 = vmatpush.bf16.msra.mxu0 %v5735
  %5744 = vmatpush.bf16.msra.mxu0 %v5724
  %5745 = vmatmul.bf16.gmra.mxu0 %v5729
  %v5746 = vpop.f32.mrf.mxu0
  %v5747 = vadd.f32 0.0, %v5746
  %v5748 = vpop.f32.mrf.mxu0
  %v5749 = vadd.f32 0.0, %v5748
  %5750 = vmatmul.bf16.gmra.mxu0 %v5732
  %v5751 = vpop.f32.mrf.mxu0
  %v5752 = vadd.f32 0.0, %v5751
  %v5753 = vpop.f32.mrf.mxu0
  %5754 = vdwg.mxu0
  %5755 = vrot.lane.b32.xlu0 %v5644, 120
  %v5756 = vpop.permute.xlu0 %5755
  %5757 = vrot.lane.b32.xlu0 %v5645, 120
  %v5758 = vpop.permute.xlu0 %5757
  %5759 = vrot.lane.b32.xlu0 %v5644, 88
  %v5760 = vpop.permute.xlu0 %5759
  %5761 = vrot.lane.b32.xlu0 %v5645, 88
  %v5762 = vpop.permute.xlu0 %5761
  %v5764 = vsel %vm325, %v5756, 0
  %v5767 = vsel %vm325, %v5758, 0
  %v5770 = vsel %vm325, %v5760, 0
  %v5773 = vsel %vm325, %v5762, 0
  %5775 = vmatpush.bf16.xpose.msra.mxu0 0
  %5776 = vmatpush.bf16.xpose.msra.mxu0 0
  %5777 = vmatpush.bf16.xpose.msra.mxu0 0
  %5778 = vmatpush.bf16.xpose.msra.mxu0 0
  %5779 = vmatpush.bf16.xpose.msra.mxu0 0
  %5780 = vmatpush.bf16.xpose.msra.mxu0 0
  %5781 = vmatpush.bf16.xpose.msra.mxu0 %v5773
  %5782 = vmatpush.bf16.xpose.msra.mxu0 %v5770
  %5783 = vmatmul.bf16.gmra.mxu0 %v5764
  %v5784 = vpop.f32.mrf.mxu0
  %v5785 = vadd.f32 0.0, %v5784
  %v5786 = vpop.f32.mrf.mxu0
  %v5787 = vadd.f32 0.0, %v5786
  %5788 = vmatmul.bf16.gmra.mxu0 %v5767
  %v5789 = vpop.f32.mrf.mxu0
  %v5790 = vadd.f32 0.0, %v5789
  %v5791 = vpop.f32.mrf.mxu0
  %5792 = vdwg.mxu0
  %v5793 = vmul.f32 %v5785, 0.35355338
  %v5794 = vmul.f32 %v5787, 0.35355338
  %v5795 = vmul.f32 %v5790, 0.35355338
  %v5796 = vadd.f32 %v5793, %v108
  %v5797 = vadd.f32 %v5794, %v108
  %v5798 = vadd.f32 %v5795, %v108
  %v5799 = vsel %vm362, %v5796, -inf
  %5800 = vmax.xlane.f32.xlu0 %v5799
  %v5801 = vpop.xlane.xlu0 %5800
  %v5802 = vsel %vm362, %v5797, -inf
  %5803 = vmax.xlane.f32.xlu0 %v5802
  %v5804 = vpop.xlane.xlu0 %5803
  %v5805 = vsel %vm362, %v5798, -inf
  %5806 = vmax.xlane.f32.xlu0 %v5805
  %v5807 = vpop.xlane.xlu0 %5806
  %v5808 = vsub.f32 %v5796, %v5801
  %v5809 = vsub.f32 %v5797, %v5804
  %v5810 = vsub.f32 %v5798, %v5807
  %v5811 = vmul.f32 %v5808, 1.442695
  %v5812 = vpow.pop %v5811
  %v5813 = vmul.f32 %v5809, 1.442695
  %v5814 = vpow.pop %v5813
  %v5815 = vmul.f32 %v5810, 1.442695
  %v5816 = vpow.pop %v5815
  %v5817 = vsel %vm362, %v5812, 0.0
  %5818 = vadd.xlane.f32.xlu0 %v5817
  %v5819 = vpop.xlane.xlu0 %5818
  %v5820 = vsel %vm362, %v5814, 0.0
  %5821 = vadd.xlane.f32.xlu0 %v5820
  %v5822 = vpop.xlane.xlu0 %5821
  %v5823 = vsel %vm362, %v5816, 0.0
  %5824 = vadd.xlane.f32.xlu0 %v5823
  %v5825 = vpop.xlane.xlu0 %5824
  %v5826 = vrcp.pop %v5819
  %v5827 = vrcp.pop %v5822
  %v5828 = vrcp.pop %v5825
  %v5829 = vmul.f32 %v5812, %v5826
  %v5830 = vmul.f32 %v5814, %v5827
  %v5831 = vmul.f32 %v5816, %v5828
  %v5832 = vpack.c.bf16 %v5830, %v5829
  %v5833 = vpack.c.bf16 %v5831, %v5831
  %5834 = vrot.lane.b32.xlu0 %v5644, 56
  %v5835 = vpop.permute.xlu0 %5834
  %5836 = vrot.lane.b32.xlu0 %v5645, 56
  %v5837 = vpop.permute.xlu0 %5836
  %v5840 = vsel %vm362, %v5832, 0
  %v5843 = vsel %vm362, %v5833, 0
  %v5846 = vsel %vm477, %v5837, 0
  %5848 = vmatpush.bf16.msra.mxu0 0
  %5849 = vmatpush.bf16.msra.mxu0 0
  %5850 = vmatpush.bf16.msra.mxu0 0
  %5851 = vmatpush.bf16.msra.mxu0 0
  %5852 = vmatpush.bf16.msra.mxu0 0
  %5853 = vmatpush.bf16.msra.mxu0 0
  %5854 = vmatpush.bf16.msra.mxu0 %v5846
  %5855 = vmatpush.bf16.msra.mxu0 %v5835
  %5856 = vmatmul.bf16.gmra.mxu0 %v5840
  %v5857 = vpop.f32.mrf.mxu0
  %v5858 = vadd.f32 0.0, %v5857
  %v5859 = vpop.f32.mrf.mxu0
  %v5860 = vadd.f32 0.0, %v5859
  %5861 = vmatmul.bf16.gmra.mxu0 %v5843
  %v5862 = vpop.f32.mrf.mxu0
  %v5863 = vadd.f32 0.0, %v5862
  %v5864 = vpop.f32.mrf.mxu0
  %5865 = vdwg.mxu0
  %5866 = vrot.lane.b32.xlu0 %v5644, 112
  %v5867 = vpop.permute.xlu0 %5866
  %5868 = vrot.lane.b32.xlu0 %v5645, 112
  %v5869 = vpop.permute.xlu0 %5868
  %5870 = vrot.lane.b32.xlu0 %v5644, 80
  %v5871 = vpop.permute.xlu0 %5870
  %5872 = vrot.lane.b32.xlu0 %v5645, 80
  %v5873 = vpop.permute.xlu0 %5872
  %v5875 = vsel %vm325, %v5867, 0
  %v5878 = vsel %vm325, %v5869, 0
  %v5881 = vsel %vm325, %v5871, 0
  %v5884 = vsel %vm325, %v5873, 0
  %5886 = vmatpush.bf16.xpose.msra.mxu0 0
  %5887 = vmatpush.bf16.xpose.msra.mxu0 0
  %5888 = vmatpush.bf16.xpose.msra.mxu0 0
  %5889 = vmatpush.bf16.xpose.msra.mxu0 0
  %5890 = vmatpush.bf16.xpose.msra.mxu0 0
  %5891 = vmatpush.bf16.xpose.msra.mxu0 0
  %5892 = vmatpush.bf16.xpose.msra.mxu0 %v5884
  %5893 = vmatpush.bf16.xpose.msra.mxu0 %v5881
  %5894 = vmatmul.bf16.gmra.mxu0 %v5875
  %v5895 = vpop.f32.mrf.mxu0
  %v5896 = vadd.f32 0.0, %v5895
  %v5897 = vpop.f32.mrf.mxu0
  %v5898 = vadd.f32 0.0, %v5897
  %5899 = vmatmul.bf16.gmra.mxu0 %v5878
  %v5900 = vpop.f32.mrf.mxu0
  %v5901 = vadd.f32 0.0, %v5900
  %v5902 = vpop.f32.mrf.mxu0
  %5903 = vdwg.mxu0
  %v5904 = vmul.f32 %v5896, 0.35355338
  %v5905 = vmul.f32 %v5898, 0.35355338
  %v5906 = vmul.f32 %v5901, 0.35355338
  %v5907 = vadd.f32 %v5904, %v108
  %v5908 = vadd.f32 %v5905, %v108
  %v5909 = vadd.f32 %v5906, %v108
  %v5910 = vsel %vm362, %v5907, -inf
  %5911 = vmax.xlane.f32.xlu0 %v5910
  %v5912 = vpop.xlane.xlu0 %5911
  %v5913 = vsel %vm362, %v5908, -inf
  %5914 = vmax.xlane.f32.xlu0 %v5913
  %v5915 = vpop.xlane.xlu0 %5914
  %v5916 = vsel %vm362, %v5909, -inf
  %5917 = vmax.xlane.f32.xlu0 %v5916
  %v5918 = vpop.xlane.xlu0 %5917
  %v5919 = vsub.f32 %v5907, %v5912
  %v5920 = vsub.f32 %v5908, %v5915
  %v5921 = vsub.f32 %v5909, %v5918
  %v5922 = vmul.f32 %v5919, 1.442695
  %v5923 = vpow.pop %v5922
  %v5924 = vmul.f32 %v5920, 1.442695
  %v5925 = vpow.pop %v5924
  %v5926 = vmul.f32 %v5921, 1.442695
  %v5927 = vpow.pop %v5926
  %v5928 = vsel %vm362, %v5923, 0.0
  %5929 = vadd.xlane.f32.xlu0 %v5928
  %v5930 = vpop.xlane.xlu0 %5929
  %v5931 = vsel %vm362, %v5925, 0.0
  %5932 = vadd.xlane.f32.xlu0 %v5931
  %v5933 = vpop.xlane.xlu0 %5932
  %v5934 = vsel %vm362, %v5927, 0.0
  %5935 = vadd.xlane.f32.xlu0 %v5934
  %v5936 = vpop.xlane.xlu0 %5935
  %v5937 = vrcp.pop %v5930
  %v5938 = vrcp.pop %v5933
  %v5939 = vrcp.pop %v5936
  %v5940 = vmul.f32 %v5923, %v5937
  %v5941 = vmul.f32 %v5925, %v5938
  %v5942 = vmul.f32 %v5927, %v5939
  %v5943 = vpack.c.bf16 %v5941, %v5940
  %v5944 = vpack.c.bf16 %v5942, %v5942
  %5945 = vrot.lane.b32.xlu0 %v5644, 48
  %v5946 = vpop.permute.xlu0 %5945
  %5947 = vrot.lane.b32.xlu0 %v5645, 48
  %v5948 = vpop.permute.xlu0 %5947
  %v5951 = vsel %vm362, %v5943, 0
  %v5954 = vsel %vm362, %v5944, 0
  %v5957 = vsel %vm477, %v5948, 0
  %5959 = vmatpush.bf16.msra.mxu0 0
  %5960 = vmatpush.bf16.msra.mxu0 0
  %5961 = vmatpush.bf16.msra.mxu0 0
  %5962 = vmatpush.bf16.msra.mxu0 0
  %5963 = vmatpush.bf16.msra.mxu0 0
  %5964 = vmatpush.bf16.msra.mxu0 0
  %5965 = vmatpush.bf16.msra.mxu0 %v5957
  %5966 = vmatpush.bf16.msra.mxu0 %v5946
  %5967 = vmatmul.bf16.gmra.mxu0 %v5951
  %v5968 = vpop.f32.mrf.mxu0
  %v5969 = vadd.f32 0.0, %v5968
  %v5970 = vpop.f32.mrf.mxu0
  %v5971 = vadd.f32 0.0, %v5970
  %5972 = vmatmul.bf16.gmra.mxu0 %v5954
  %v5973 = vpop.f32.mrf.mxu0
  %v5974 = vadd.f32 0.0, %v5973
  %v5975 = vpop.f32.mrf.mxu0
  %5976 = vdwg.mxu0
  %5977 = vrot.lane.b32.xlu0 %v5644, 104
  %v5978 = vpop.permute.xlu0 %5977
  %5979 = vrot.lane.b32.xlu0 %v5645, 104
  %v5980 = vpop.permute.xlu0 %5979
  %5981 = vrot.lane.b32.xlu0 %v5644, 72
  %v5982 = vpop.permute.xlu0 %5981
  %5983 = vrot.lane.b32.xlu0 %v5645, 72
  %v5984 = vpop.permute.xlu0 %5983
  %v5986 = vsel %vm325, %v5978, 0
  %v5989 = vsel %vm325, %v5980, 0
  %v5992 = vsel %vm325, %v5982, 0
  %v5995 = vsel %vm325, %v5984, 0
  %5997 = vmatpush.bf16.xpose.msra.mxu0 0
  %5998 = vmatpush.bf16.xpose.msra.mxu0 0
  %5999 = vmatpush.bf16.xpose.msra.mxu0 0
  %6000 = vmatpush.bf16.xpose.msra.mxu0 0
  %6001 = vmatpush.bf16.xpose.msra.mxu0 0
  %6002 = vmatpush.bf16.xpose.msra.mxu0 0
  %6003 = vmatpush.bf16.xpose.msra.mxu0 %v5995
  %6004 = vmatpush.bf16.xpose.msra.mxu0 %v5992
  %6005 = vmatmul.bf16.gmra.mxu0 %v5986
  %v6006 = vpop.f32.mrf.mxu0
  %v6007 = vadd.f32 0.0, %v6006
  %v6008 = vpop.f32.mrf.mxu0
  %v6009 = vadd.f32 0.0, %v6008
  %6010 = vmatmul.bf16.gmra.mxu0 %v5989
  %v6011 = vpop.f32.mrf.mxu0
  %v6012 = vadd.f32 0.0, %v6011
  %v6013 = vpop.f32.mrf.mxu0
  %6014 = vdwg.mxu0
  %v6015 = vmul.f32 %v6007, 0.35355338
  %v6016 = vmul.f32 %v6009, 0.35355338
  %v6017 = vmul.f32 %v6012, 0.35355338
  %v6018 = vadd.f32 %v6015, %v108
  %v6019 = vadd.f32 %v6016, %v108
  %v6020 = vadd.f32 %v6017, %v108
  %v6021 = vsel %vm362, %v6018, -inf
  %6022 = vmax.xlane.f32.xlu0 %v6021
  %v6023 = vpop.xlane.xlu0 %6022
  %v6024 = vsel %vm362, %v6019, -inf
  %6025 = vmax.xlane.f32.xlu0 %v6024
  %v6026 = vpop.xlane.xlu0 %6025
  %v6027 = vsel %vm362, %v6020, -inf
  %6028 = vmax.xlane.f32.xlu0 %v6027
  %v6029 = vpop.xlane.xlu0 %6028
  %v6030 = vsub.f32 %v6018, %v6023
  %v6031 = vsub.f32 %v6019, %v6026
  %v6032 = vsub.f32 %v6020, %v6029
  %v6033 = vmul.f32 %v6030, 1.442695
  %v6034 = vpow.pop %v6033
  %v6035 = vmul.f32 %v6031, 1.442695
  %v6036 = vpow.pop %v6035
  %v6037 = vmul.f32 %v6032, 1.442695
  %v6038 = vpow.pop %v6037
  %v6039 = vsel %vm362, %v6034, 0.0
  %6040 = vadd.xlane.f32.xlu0 %v6039
  %v6041 = vpop.xlane.xlu0 %6040
  %v6042 = vsel %vm362, %v6036, 0.0
  %6043 = vadd.xlane.f32.xlu0 %v6042
  %v6044 = vpop.xlane.xlu0 %6043
  %v6045 = vsel %vm362, %v6038, 0.0
  %6046 = vadd.xlane.f32.xlu0 %v6045
  %v6047 = vpop.xlane.xlu0 %6046
  %v6048 = vrcp.pop %v6041
  %v6049 = vrcp.pop %v6044
  %v6050 = vrcp.pop %v6047
  %v6051 = vmul.f32 %v6034, %v6048
  %v6052 = vmul.f32 %v6036, %v6049
  %v6053 = vmul.f32 %v6038, %v6050
  %v6054 = vpack.c.bf16 %v6052, %v6051
  %v6055 = vpack.c.bf16 %v6053, %v6053
  %6056 = vrot.lane.b32.xlu0 %v5644, 40
  %v6057 = vpop.permute.xlu0 %6056
  %6058 = vrot.lane.b32.xlu0 %v5645, 40
  %v6059 = vpop.permute.xlu0 %6058
  %v6062 = vsel %vm362, %v6054, 0
  %v6065 = vsel %vm362, %v6055, 0
  %v6068 = vsel %vm477, %v6059, 0
  %6070 = vmatpush.bf16.msra.mxu0 0
  %6071 = vmatpush.bf16.msra.mxu0 0
  %6072 = vmatpush.bf16.msra.mxu0 0
  %6073 = vmatpush.bf16.msra.mxu0 0
  %6074 = vmatpush.bf16.msra.mxu0 0
  %6075 = vmatpush.bf16.msra.mxu0 0
  %6076 = vmatpush.bf16.msra.mxu0 %v6068
  %6077 = vmatpush.bf16.msra.mxu0 %v6057
  %6078 = vmatmul.bf16.gmra.mxu0 %v6062
  %v6079 = vpop.f32.mrf.mxu0
  %v6080 = vadd.f32 0.0, %v6079
  %v6081 = vpop.f32.mrf.mxu0
  %v6082 = vadd.f32 0.0, %v6081
  %6083 = vmatmul.bf16.gmra.mxu0 %v6065
  %v6084 = vpop.f32.mrf.mxu0
  %v6085 = vadd.f32 0.0, %v6084
  %v6086 = vpop.f32.mrf.mxu0
  %6087 = vdwg.mxu0
  %6091 = vrot.lane.b32.xlu0 %v5858, 8
  %v6092 = vpop.permute.xlu0 %6091
  %6093 = vrot.lane.b32.xlu0 %v5860, 8
  %v6094 = vpop.permute.xlu0 %6093
  %6095 = vrot.lane.b32.xlu0 %v5863, 8
  %v6096 = vpop.permute.xlu0 %6095
  %6103 = vrot.lane.b32.xlu0 %v5969, 16
  %v6104 = vpop.permute.xlu0 %6103
  %6105 = vrot.lane.b32.xlu0 %v5971, 16
  %v6106 = vpop.permute.xlu0 %6105
  %6107 = vrot.lane.b32.xlu0 %v5974, 16
  %v6108 = vpop.permute.xlu0 %6107
  %6115 = vrot.lane.b32.xlu0 %v6080, 24
  %v6116 = vpop.permute.xlu0 %6115
  %6117 = vrot.lane.b32.xlu0 %v6082, 24
  %v6118 = vpop.permute.xlu0 %6117
  %6119 = vrot.lane.b32.xlu0 %v6085, 24
  %v6120 = vpop.permute.xlu0 %6119
  %v6124 = vsel %vm325, %v5747, %v6092
  %v6125 = vsel %vm325, %v5749, %v6094
  %v6126 = vsel %vm325, %v5752, %v6096
  %v6127 = vsel %vm1078, %v6124, %v6104
  %v6128 = vsel %vm1078, %v6125, %v6106
  %v6129 = vsel %vm1078, %v6126, %v6108
  %v6130 = vsel %vm362, %v6127, %v6116
  %v6131 = vsel %vm362, %v6128, %v6118
  %v6132 = vsel %vm362, %v6129, %v6120
  %v6133 = vpack.c.bf16 %v5642, %v5641
  %v6134 = vpack.c.bf16 %v6130, %v5643
  %v6135 = vpack.c.bf16 %v6132, %v6131
  %6136 = vrot.lane.b32.xlu0 %v5118, 32
  %v6137 = vpop.permute.xlu0 %6136
  %6138 = vrot.lane.b32.xlu0 %v5119, 32
  %v6139 = vpop.permute.xlu0 %6138
  %v6143 = vsel %vm140, %v6133, 0
  %v6146 = vsel %vm140, %v6134, 0
  %v6149 = vsel %vm140, %v6135, 0
  %6151 = vmatpush.bf16.msra.mxu0 0
  %6152 = vmatpush.bf16.msra.mxu0 0
  %6153 = vmatpush.bf16.msra.mxu0 0
  %6154 = vmatpush.bf16.msra.mxu0 0
  %6155 = vmatpush.bf16.msra.mxu0 0
  %6156 = vmatpush.bf16.msra.mxu0 0
  %6157 = vmatpush.bf16.msra.mxu0 %v6139
  %6158 = vmatpush.bf16.msra.mxu0 %v6137
  %6159 = vmatmul.bf16.gmra.mxu0 %v6143
  %v6160 = vpop.f32.mrf.mxu0
  %v6161 = vadd.f32 0.0, %v6160
  %v6162 = vpop.f32.mrf.mxu0
  %v6163 = vadd.f32 0.0, %v6162
  %6164 = vmatmul.bf16.gmra.mxu0 %v6146
  %v6165 = vpop.f32.mrf.mxu0
  %v6166 = vadd.f32 0.0, %v6165
  %v6167 = vpop.f32.mrf.mxu0
  %v6168 = vadd.f32 0.0, %v6167
  %6169 = vmatmul.bf16.gmra.mxu0 %v6149
  %v6170 = vpop.f32.mrf.mxu0
  %v6171 = vadd.f32 0.0, %v6170
  %v6172 = vpop.f32.mrf.mxu0
  %v6173 = vadd.f32 0.0, %v6172
  %6174 = vdwg.mxu0
  %v6175 = vadd.f32 %v4922, %v6161
  %v6176 = vadd.f32 %v4923, %v6163
  %v6177 = vadd.f32 %v4924, %v6166
  %v6178 = vadd.f32 %v4925, %v6168
  %v6179 = vadd.f32 %v4926, %v6171
  %v6180 = vadd.f32 %v4927, %v6173
  %v6181 = vperm.slane %v4931, 0
  %v6182 = vadd.f32 %v6175, %v6181
  %v6183 = vadd.f32 %v6176, %v6181
  %v6184 = vadd.f32 %v6177, %v6181
  %v6185 = vadd.f32 %v6178, %v6181
  %v6186 = vadd.f32 %v6179, %v6181
  %v6187 = vadd.f32 %v6180, %v6181
  %v6188 = vsel %vm140, %v6182, 0.0
  %6189 = vadd.xlane.f32.xlu0 %v6188
  %v6190 = vpop.xlane.xlu0 %6189
  %v6191 = vsel %vm140, %v6183, 0.0
  %6192 = vadd.xlane.f32.xlu0 %v6191
  %v6193 = vpop.xlane.xlu0 %6192
  %v6194 = vsel %vm140, %v6184, 0.0
  %6195 = vadd.xlane.f32.xlu0 %v6194
  %v6196 = vpop.xlane.xlu0 %6195
  %v6197 = vsel %vm140, %v6185, 0.0
  %6198 = vadd.xlane.f32.xlu0 %v6197
  %v6199 = vpop.xlane.xlu0 %6198
  %v6200 = vsel %vm140, %v6186, 0.0
  %6201 = vadd.xlane.f32.xlu0 %v6200
  %v6202 = vpop.xlane.xlu0 %6201
  %v6203 = vsel %vm140, %v6187, 0.0
  %6204 = vadd.xlane.f32.xlu0 %v6203
  %v6205 = vpop.xlane.xlu0 %6204
  %v6206 = vmul.f32 %v6190, %v161
  %v6207 = vmul.f32 %v6193, %v161
  %v6208 = vmul.f32 %v6196, %v161
  %v6209 = vmul.f32 %v6199, %v161
  %v6210 = vmul.f32 %v6202, %v161
  %v6211 = vmul.f32 %v6205, %v161
  %v6212 = vsub.f32 %v6182, %v6206
  %v6213 = vsub.f32 %v6183, %v6207
  %v6214 = vsub.f32 %v6184, %v6208
  %v6215 = vsub.f32 %v6185, %v6209
  %v6216 = vsub.f32 %v6186, %v6210
  %v6217 = vsub.f32 %v6187, %v6211
  %v6218 = vmul.f32 %v6212, %v6212
  %v6219 = vmul.f32 %v6213, %v6213
  %v6220 = vmul.f32 %v6214, %v6214
  %v6221 = vmul.f32 %v6215, %v6215
  %v6222 = vmul.f32 %v6216, %v6216
  %v6223 = vmul.f32 %v6217, %v6217
  %v6224 = vsel %vm140, %v6218, 0.0
  %6225 = vadd.xlane.f32.xlu0 %v6224
  %v6226 = vpop.xlane.xlu0 %6225
  %v6227 = vsel %vm140, %v6219, 0.0
  %6228 = vadd.xlane.f32.xlu0 %v6227
  %v6229 = vpop.xlane.xlu0 %6228
  %v6230 = vsel %vm140, %v6220, 0.0
  %6231 = vadd.xlane.f32.xlu0 %v6230
  %v6232 = vpop.xlane.xlu0 %6231
  %v6233 = vsel %vm140, %v6221, 0.0
  %6234 = vadd.xlane.f32.xlu0 %v6233
  %v6235 = vpop.xlane.xlu0 %6234
  %v6236 = vsel %vm140, %v6222, 0.0
  %6237 = vadd.xlane.f32.xlu0 %v6236
  %v6238 = vpop.xlane.xlu0 %6237
  %v6239 = vsel %vm140, %v6223, 0.0
  %6240 = vadd.xlane.f32.xlu0 %v6239
  %v6241 = vpop.xlane.xlu0 %6240
  %v6242 = vmul.f32 %v6226, %v161
  %v6243 = vmul.f32 %v6229, %v161
  %v6244 = vmul.f32 %v6232, %v161
  %v6245 = vmul.f32 %v6235, %v161
  %v6246 = vmul.f32 %v6238, %v161
  %v6247 = vmul.f32 %v6241, %v161
  %v6248 = vadd.f32 %v6242, 1e-05
  %v6249 = vadd.f32 %v6243, 1e-05
  %v6250 = vadd.f32 %v6244, 1e-05
  %v6251 = vadd.f32 %v6245, 1e-05
  %v6252 = vadd.f32 %v6246, 1e-05
  %v6253 = vadd.f32 %v6247, 1e-05
  %v6254 = vrsqrt.pop %v6248
  %v6255 = vmul.f32 %v6254, %v6248
  %v6256 = vmul.f32 %v6255, %v6254
  %v6257 = vmul.f32 0.5, %v6256
  %v6258 = vsub.f32 1.5, %v6257
  %v6259 = vmul.f32 %v6254, %v6258
  %vm6260 = vweird.f32 %v6248
  %vm6261 = vweird.f32 %v6254
  %vm6262 = vmor %vm6260, %vm6261
  %v6263 = vsel %vm6262, %v6254, %v6259
  %v6264 = vrsqrt.pop %v6249
  %v6265 = vmul.f32 %v6264, %v6249
  %v6266 = vmul.f32 %v6265, %v6264
  %v6267 = vmul.f32 0.5, %v6266
  %v6268 = vsub.f32 1.5, %v6267
  %v6269 = vmul.f32 %v6264, %v6268
  %vm6270 = vweird.f32 %v6249
  %vm6271 = vweird.f32 %v6264
  %vm6272 = vmor %vm6270, %vm6271
  %v6273 = vsel %vm6272, %v6264, %v6269
  %v6274 = vrsqrt.pop %v6250
  %v6275 = vmul.f32 %v6274, %v6250
  %v6276 = vmul.f32 %v6275, %v6274
  %v6277 = vmul.f32 0.5, %v6276
  %v6278 = vsub.f32 1.5, %v6277
  %v6279 = vmul.f32 %v6274, %v6278
  %vm6280 = vweird.f32 %v6250
  %vm6281 = vweird.f32 %v6274
  %vm6282 = vmor %vm6280, %vm6281
  %v6283 = vsel %vm6282, %v6274, %v6279
  %v6284 = vrsqrt.pop %v6251
  %v6285 = vmul.f32 %v6284, %v6251
  %v6286 = vmul.f32 %v6285, %v6284
  %v6287 = vmul.f32 0.5, %v6286
  %v6288 = vsub.f32 1.5, %v6287
  %v6289 = vmul.f32 %v6284, %v6288
  %vm6290 = vweird.f32 %v6251
  %vm6291 = vweird.f32 %v6284
  %vm6292 = vmor %vm6290, %vm6291
  %v6293 = vsel %vm6292, %v6284, %v6289
  %v6294 = vrsqrt.pop %v6252
  %v6295 = vmul.f32 %v6294, %v6252
  %v6296 = vmul.f32 %v6295, %v6294
  %v6297 = vmul.f32 0.5, %v6296
  %v6298 = vsub.f32 1.5, %v6297
  %v6299 = vmul.f32 %v6294, %v6298
  %vm6300 = vweird.f32 %v6252
  %vm6301 = vweird.f32 %v6294
  %vm6302 = vmor %vm6300, %vm6301
  %v6303 = vsel %vm6302, %v6294, %v6299
  %v6304 = vrsqrt.pop %v6253
  %v6305 = vmul.f32 %v6304, %v6253
  %v6306 = vmul.f32 %v6305, %v6304
  %v6307 = vmul.f32 0.5, %v6306
  %v6308 = vsub.f32 1.5, %v6307
  %v6309 = vmul.f32 %v6304, %v6308
  %vm6310 = vweird.f32 %v6253
  %vm6311 = vweird.f32 %v6304
  %vm6312 = vmor %vm6310, %vm6311
  %v6313 = vsel %vm6312, %v6304, %v6309
  %v6314 = vmul.f32 %v6212, %v6263
  %v6315 = vmul.f32 %v6213, %v6273
  %v6316 = vmul.f32 %v6214, %v6283
  %v6317 = vmul.f32 %v6215, %v6293
  %v6318 = vmul.f32 %v6216, %v6303
  %v6319 = vmul.f32 %v6217, %v6313
  %v6320 = vperm.slane %v4932, 0
  %v6321 = vmul.f32 %v6314, %v6320
  %v6322 = vmul.f32 %v6315, %v6320
  %v6323 = vmul.f32 %v6316, %v6320
  %v6324 = vmul.f32 %v6317, %v6320
  %v6325 = vmul.f32 %v6318, %v6320
  %v6326 = vmul.f32 %v6319, %v6320
  %v6327 = vperm.slane %v4933, 0
  %v6328 = vadd.f32 %v6321, %v6327
  %v6329 = vadd.f32 %v6322, %v6327
  %v6330 = vadd.f32 %v6323, %v6327
  %v6331 = vadd.f32 %v6324, %v6327
  %v6332 = vadd.f32 %v6325, %v6327
  %v6333 = vadd.f32 %v6326, %v6327
  %v6334 = vpack.c.bf16 %v6329, %v6328
  %v6335 = vpack.c.bf16 %v6331, %v6330
  %v6336 = vpack.c.bf16 %v6333, %v6332
  %v6337 = vperm.slane %v4934, 0
  %v6342 = vunpack.c.l.b16 %v4941
  %v6343 = vunpack.c.l.b16 %v4942
  %v6344 = vunpack.c.l.b16 %v4943
  %v6345 = vunpack.c.l.b16 %v4944
  %v6346 = vpack.c.b16 %v6343, %v6342
  %v6347 = vpack.c.b16 %v6345, %v6344
  %v6351 = vsel %vm140, %v6334, 0
  %v6354 = vsel %vm140, %v6335, 0
  %v6357 = vsel %vm140, %v6336, 0
  %6359 = vmatpush.bf16.msra.mxu0 0
  %6360 = vmatpush.bf16.msra.mxu0 0
  %6361 = vmatpush.bf16.msra.mxu0 0
  %6362 = vmatpush.bf16.msra.mxu0 0
  %6363 = vmatpush.bf16.msra.mxu0 0
  %6364 = vmatpush.bf16.msra.mxu0 0
  %6365 = vmatpush.bf16.msra.mxu0 %v6347
  %6366 = vmatpush.bf16.msra.mxu0 %v6346
  %6367 = vmatmul.bf16.gmra.mxu0 %v6351
  %v6368 = vpop.f32.mrf.mxu0
  %v6369 = vadd.f32 %v6337, %v6368
  %v6370 = vpop.f32.mrf.mxu0
  %v6371 = vadd.f32 %v6337, %v6370
  %6372 = vmatmul.bf16.gmra.mxu0 %v6354
  %v6373 = vpop.f32.mrf.mxu0
  %v6374 = vadd.f32 %v6337, %v6373
  %v6375 = vpop.f32.mrf.mxu0
  %v6376 = vadd.f32 %v6337, %v6375
  %6377 = vmatmul.bf16.gmra.mxu0 %v6357
  %v6378 = vpop.f32.mrf.mxu0
  %v6379 = vadd.f32 %v6337, %v6378
  %v6380 = vpop.f32.mrf.mxu0
  %v6381 = vadd.f32 %v6337, %v6380
  %6382 = vdwg.mxu0
  %v6383 = vmul.f32 %v6369, 0.5
  %v6384 = vmul.f32 %v6371, 0.5
  %v6385 = vmul.f32 %v6374, 0.5
  %v6386 = vmul.f32 %v6376, 0.5
  %v6387 = vmul.f32 %v6379, 0.5
  %v6388 = vmul.f32 %v6381, 0.5
  %v6389 = vmul.f32 %v6369, 0.70710677
  %v6390 = vmul.f32 %v6371, 0.70710677
  %v6391 = vmul.f32 %v6374, 0.70710677
  %v6392 = vmul.f32 %v6376, 0.70710677
  %v6393 = vmul.f32 %v6379, 0.70710677
  %v6394 = vmul.f32 %v6381, 0.70710677
  %vm6395 = vcmp.ge.f32.partialorder %v6389, 0.0
  %vm6396 = vcmp.ge.f32.partialorder %v6390, 0.0
  %vm6397 = vcmp.ge.f32.partialorder %v6391, 0.0
  %vm6398 = vcmp.ge.f32.partialorder %v6392, 0.0
  %vm6399 = vcmp.ge.f32.partialorder %v6393, 0.0
  %vm6400 = vcmp.ge.f32.partialorder %v6394, 0.0
  %v6401 = vsel %vm6395, 1.0, -1.0
  %v6402 = vsel %vm6396, 1.0, -1.0
  %v6403 = vsel %vm6397, 1.0, -1.0
  %v6404 = vsel %vm6398, 1.0, -1.0
  %v6405 = vsel %vm6399, 1.0, -1.0
  %v6406 = vsel %vm6400, 1.0, -1.0
  %v6407 = vand.u32 2147483647, %v6389
  %v6408 = vand.u32 2147483647, %v6390
  %v6409 = vand.u32 2147483647, %v6391
  %v6410 = vand.u32 2147483647, %v6392
  %v6411 = vand.u32 2147483647, %v6393
  %v6412 = vand.u32 2147483647, %v6394
  %v6413 = vmul.f32 %v6407, 0.3275911
  %v6414 = vmul.f32 %v6408, 0.3275911
  %v6415 = vmul.f32 %v6409, 0.3275911
  %v6416 = vmul.f32 %v6410, 0.3275911
  %v6417 = vmul.f32 %v6411, 0.3275911
  %v6418 = vmul.f32 %v6412, 0.3275911
  %v6419 = vadd.f32 %v6413, 1.0
  %v6420 = vadd.f32 %v6414, 1.0
  %v6421 = vadd.f32 %v6415, 1.0
  %v6422 = vadd.f32 %v6416, 1.0
  %v6423 = vadd.f32 %v6417, 1.0
  %v6424 = vadd.f32 %v6418, 1.0
  %v6425 = vrcp.pop %v6419
  %v6426 = vmul.f32 %v6419, %v6425
  %v6427 = vsub.f32 1.0, %v6426
  %v6428 = vmul.f32 %v6425, %v6427
  %v6429 = vadd.f32 %v6425, %v6428
  %vm6430 = vweird.f32 %v6419
  %vm6431 = vweird.f32 %v6425
  %vm6432 = vmor %vm6430, %vm6431
  %v6433 = vsel %vm6432, %v6425, %v6429
  %v6434 = vand.u32 2147483647, %v6419
  %vm6435 = vcmp.eq.f32.partialorder %v6434, 8.507059e+37
  %v6436 = vand.u32 %v6419, 2147483648
  %v6437 = vor.u32 1.1754944e-38, %v6436
  %v6438 = vsel %vm6435, %v6437, %v6433
  %v6439 = vmul.f32 1.0, %v6438
  %v6440 = vrcp.pop %v6420
  %v6441 = vmul.f32 %v6420, %v6440
  %v6442 = vsub.f32 1.0, %v6441
  %v6443 = vmul.f32 %v6440, %v6442
  %v6444 = vadd.f32 %v6440, %v6443
  %vm6445 = vweird.f32 %v6420
  %vm6446 = vweird.f32 %v6440
  %vm6447 = vmor %vm6445, %vm6446
  %v6448 = vsel %vm6447, %v6440, %v6444
  %v6449 = vand.u32 2147483647, %v6420
  %vm6450 = vcmp.eq.f32.partialorder %v6449, 8.507059e+37
  %v6451 = vand.u32 %v6420, 2147483648
  %v6452 = vor.u32 1.1754944e-38, %v6451
  %v6453 = vsel %vm6450, %v6452, %v6448
  %v6454 = vmul.f32 1.0, %v6453
  %v6455 = vrcp.pop %v6421
  %v6456 = vmul.f32 %v6421, %v6455
  %v6457 = vsub.f32 1.0, %v6456
  %v6458 = vmul.f32 %v6455, %v6457
  %v6459 = vadd.f32 %v6455, %v6458
  %vm6460 = vweird.f32 %v6421
  %vm6461 = vweird.f32 %v6455
  %vm6462 = vmor %vm6460, %vm6461
  %v6463 = vsel %vm6462, %v6455, %v6459
  %v6464 = vand.u32 2147483647, %v6421
  %vm6465 = vcmp.eq.f32.partialorder %v6464, 8.507059e+37
  %v6466 = vand.u32 %v6421, 2147483648
  %v6467 = vor.u32 1.1754944e-38, %v6466
  %v6468 = vsel %vm6465, %v6467, %v6463
  %v6469 = vmul.f32 1.0, %v6468
  %v6470 = vrcp.pop %v6422
  %v6471 = vmul.f32 %v6422, %v6470
  %v6472 = vsub.f32 1.0, %v6471
  %v6473 = vmul.f32 %v6470, %v6472
  %v6474 = vadd.f32 %v6470, %v6473
  %vm6475 = vweird.f32 %v6422
  %vm6476 = vweird.f32 %v6470
  %vm6477 = vmor %vm6475, %vm6476
  %v6478 = vsel %vm6477, %v6470, %v6474
  %v6479 = vand.u32 2147483647, %v6422
  %vm6480 = vcmp.eq.f32.partialorder %v6479, 8.507059e+37
  %v6481 = vand.u32 %v6422, 2147483648
  %v6482 = vor.u32 1.1754944e-38, %v6481
  %v6483 = vsel %vm6480, %v6482, %v6478
  %v6484 = vmul.f32 1.0, %v6483
  %v6485 = vrcp.pop %v6423
  %v6486 = vmul.f32 %v6423, %v6485
  %v6487 = vsub.f32 1.0, %v6486
  %v6488 = vmul.f32 %v6485, %v6487
  %v6489 = vadd.f32 %v6485, %v6488
  %vm6490 = vweird.f32 %v6423
  %vm6491 = vweird.f32 %v6485
  %vm6492 = vmor %vm6490, %vm6491
  %v6493 = vsel %vm6492, %v6485, %v6489
  %v6494 = vand.u32 2147483647, %v6423
  %vm6495 = vcmp.eq.f32.partialorder %v6494, 8.507059e+37
  %v6496 = vand.u32 %v6423, 2147483648
  %v6497 = vor.u32 1.1754944e-38, %v6496
  %v6498 = vsel %vm6495, %v6497, %v6493
  %v6499 = vmul.f32 1.0, %v6498
  %v6500 = vrcp.pop %v6424
  %v6501 = vmul.f32 %v6424, %v6500
  %v6502 = vsub.f32 1.0, %v6501
  %v6503 = vmul.f32 %v6500, %v6502
  %v6504 = vadd.f32 %v6500, %v6503
  %vm6505 = vweird.f32 %v6424
  %vm6506 = vweird.f32 %v6500
  %vm6507 = vmor %vm6505, %vm6506
  %v6508 = vsel %vm6507, %v6500, %v6504
  %v6509 = vand.u32 2147483647, %v6424
  %vm6510 = vcmp.eq.f32.partialorder %v6509, 8.507059e+37
  %v6511 = vand.u32 %v6424, 2147483648
  %v6512 = vor.u32 1.1754944e-38, %v6511
  %v6513 = vsel %vm6510, %v6512, %v6508
  %v6514 = vmul.f32 1.0, %v6513
  %v6515 = vmul.f32 %v6439, 1.0614054
  %v6516 = vmul.f32 %v6454, 1.0614054
  %v6517 = vmul.f32 %v6469, 1.0614054
  %v6518 = vmul.f32 %v6484, 1.0614054
  %v6519 = vmul.f32 %v6499, 1.0614054
  %v6520 = vmul.f32 %v6514, 1.0614054
  %v6521 = vadd.f32 %v6515, -1.4531521
  %v6522 = vadd.f32 %v6516, -1.4531521
  %v6523 = vadd.f32 %v6517, -1.4531521
  %v6524 = vadd.f32 %v6518, -1.4531521
  %v6525 = vadd.f32 %v6519, -1.4531521
  %v6526 = vadd.f32 %v6520, -1.4531521
  %v6527 = vmul.f32 %v6521, %v6439
  %v6528 = vmul.f32 %v6522, %v6454
  %v6529 = vmul.f32 %v6523, %v6469
  %v6530 = vmul.f32 %v6524, %v6484
  %v6531 = vmul.f32 %v6525, %v6499
  %v6532 = vmul.f32 %v6526, %v6514
  %v6533 = vadd.f32 %v6527, 1.4214138
  %v6534 = vadd.f32 %v6528, 1.4214138
  %v6535 = vadd.f32 %v6529, 1.4214138
  %v6536 = vadd.f32 %v6530, 1.4214138
  %v6537 = vadd.f32 %v6531, 1.4214138
  %v6538 = vadd.f32 %v6532, 1.4214138
  %v6539 = vmul.f32 %v6533, %v6439
  %v6540 = vmul.f32 %v6534, %v6454
  %v6541 = vmul.f32 %v6535, %v6469
  %v6542 = vmul.f32 %v6536, %v6484
  %v6543 = vmul.f32 %v6537, %v6499
  %v6544 = vmul.f32 %v6538, %v6514
  %v6545 = vadd.f32 %v6539, -0.28449672
  %v6546 = vadd.f32 %v6540, -0.28449672
  %v6547 = vadd.f32 %v6541, -0.28449672
  %v6548 = vadd.f32 %v6542, -0.28449672
  %v6549 = vadd.f32 %v6543, -0.28449672
  %v6550 = vadd.f32 %v6544, -0.28449672
  %v6551 = vmul.f32 %v6545, %v6439
  %v6552 = vmul.f32 %v6546, %v6454
  %v6553 = vmul.f32 %v6547, %v6469
  %v6554 = vmul.f32 %v6548, %v6484
  %v6555 = vmul.f32 %v6549, %v6499
  %v6556 = vmul.f32 %v6550, %v6514
  %v6557 = vadd.f32 %v6551, 0.2548296
  %v6558 = vadd.f32 %v6552, 0.2548296
  %v6559 = vadd.f32 %v6553, 0.2548296
  %v6560 = vadd.f32 %v6554, 0.2548296
  %v6561 = vadd.f32 %v6555, 0.2548296
  %v6562 = vadd.f32 %v6556, 0.2548296
  %v6563 = vmul.f32 %v6557, %v6439
  %v6564 = vmul.f32 %v6558, %v6454
  %v6565 = vmul.f32 %v6559, %v6469
  %v6566 = vmul.f32 %v6560, %v6484
  %v6567 = vmul.f32 %v6561, %v6499
  %v6568 = vmul.f32 %v6562, %v6514
  %v6569 = vsub.f32 0.0, %v6407
  %v6570 = vsub.f32 0.0, %v6408
  %v6571 = vsub.f32 0.0, %v6409
  %v6572 = vsub.f32 0.0, %v6410
  %v6573 = vsub.f32 0.0, %v6411
  %v6574 = vsub.f32 0.0, %v6412
  %v6575 = vmul.f32 %v6569, %v6407
  %v6576 = vmul.f32 %v6570, %v6408
  %v6577 = vmul.f32 %v6571, %v6409
  %v6578 = vmul.f32 %v6572, %v6410
  %v6579 = vmul.f32 %v6573, %v6411
  %v6580 = vmul.f32 %v6574, %v6412
  %v6581 = vmul.f32 %v6575, 1.442695
  %v6582 = vpow.pop %v6581
  %v6583 = vmul.f32 %v6576, 1.442695
  %v6584 = vpow.pop %v6583
  %v6585 = vmul.f32 %v6577, 1.442695
  %v6586 = vpow.pop %v6585
  %v6587 = vmul.f32 %v6578, 1.442695
  %v6588 = vpow.pop %v6587
  %v6589 = vmul.f32 %v6579, 1.442695
  %v6590 = vpow.pop %v6589
  %v6591 = vmul.f32 %v6580, 1.442695
  %v6592 = vpow.pop %v6591
  %v6593 = vmul.f32 %v6563, %v6582
  %v6594 = vmul.f32 %v6564, %v6584
  %v6595 = vmul.f32 %v6565, %v6586
  %v6596 = vmul.f32 %v6566, %v6588
  %v6597 = vmul.f32 %v6567, %v6590
  %v6598 = vmul.f32 %v6568, %v6592
  %v6599 = vsub.f32 1.0, %v6593
  %v6600 = vsub.f32 1.0, %v6594
  %v6601 = vsub.f32 1.0, %v6595
  %v6602 = vsub.f32 1.0, %v6596
  %v6603 = vsub.f32 1.0, %v6597
  %v6604 = vsub.f32 1.0, %v6598
  %v6605 = vmul.f32 %v6401, %v6599
  %v6606 = vmul.f32 %v6402, %v6600
  %v6607 = vmul.f32 %v6403, %v6601
  %v6608 = vmul.f32 %v6404, %v6602
  %v6609 = vmul.f32 %v6405, %v6603
  %v6610 = vmul.f32 %v6406, %v6604
  %v6611 = vadd.f32 %v6605, 1.0
  %v6612 = vadd.f32 %v6606, 1.0
  %v6613 = vadd.f32 %v6607, 1.0
  %v6614 = vadd.f32 %v6608, 1.0
  %v6615 = vadd.f32 %v6609, 1.0
  %v6616 = vadd.f32 %v6610, 1.0
  %v6617 = vmul.f32 %v6383, %v6611
  %v6618 = vmul.f32 %v6384, %v6612
  %v6619 = vmul.f32 %v6385, %v6613
  %v6620 = vmul.f32 %v6386, %v6614
  %v6621 = vmul.f32 %v6387, %v6615
  %v6622 = vmul.f32 %v6388, %v6616
  %v6623 = vpack.c.bf16 %v6618, %v6617
  %v6624 = vpack.c.bf16 %v6620, %v6619
  %v6625 = vpack.c.bf16 %v6622, %v6621
  %v6642 = vunpack.c.l.b16 %v4945
  %v6643 = vunpack.c.l.b16 %v4946
  %v6644 = vunpack.c.l.b16 %v4947
  %v6645 = vunpack.c.l.b16 %v4948
  %v6646 = vunpack.c.l.b16 %v4949
  %v6647 = vunpack.c.l.b16 %v4950
  %v6648 = vunpack.c.l.b16 %v4951
  %v6649 = vunpack.c.l.b16 %v4952
  %v6650 = vunpack.c.l.b16 %v4953
  %v6651 = vunpack.c.l.b16 %v4954
  %v6652 = vunpack.c.l.b16 %v4955
  %v6653 = vunpack.c.l.b16 %v4956
  %v6654 = vunpack.c.l.b16 %v4957
  %v6655 = vunpack.c.l.b16 %v4958
  %v6656 = vunpack.c.l.b16 %v4959
  %v6657 = vunpack.c.l.b16 %v4960
  %v6658 = vpack.c.b16 %v6643, %v6642
  %v6659 = vpack.c.b16 %v6645, %v6644
  %v6660 = vpack.c.b16 %v6647, %v6646
  %v6661 = vpack.c.b16 %v6649, %v6648
  %v6662 = vpack.c.b16 %v6651, %v6650
  %v6663 = vpack.c.b16 %v6653, %v6652
  %v6664 = vpack.c.b16 %v6655, %v6654
  %v6665 = vpack.c.b16 %v6657, %v6656
  %6674 = vmatpush.bf16.msra.mxu0 %v6665
  %6675 = vmatpush.bf16.msra.mxu0 %v6664
  %6676 = vmatpush.bf16.msra.mxu0 %v6663
  %6677 = vmatpush.bf16.msra.mxu0 %v6662
  %6678 = vmatpush.bf16.msra.mxu0 %v6661
  %6679 = vmatpush.bf16.msra.mxu0 %v6660
  %6680 = vmatpush.bf16.msra.mxu0 %v6659
  %6681 = vmatpush.bf16.msra.mxu0 %v6658
  %6682 = vmatmul.bf16.gmra.mxu0 %v6623
  %v6683 = vpop.f32.mrf.mxu0
  %v6684 = vadd.f32 0.0, %v6683
  %v6685 = vpop.f32.mrf.mxu0
  %v6686 = vadd.f32 0.0, %v6685
  %6687 = vmatmul.bf16.gmra.mxu0 %v6624
  %v6688 = vpop.f32.mrf.mxu0
  %v6689 = vadd.f32 0.0, %v6688
  %v6690 = vpop.f32.mrf.mxu0
  %v6691 = vadd.f32 0.0, %v6690
  %6692 = vmatmul.bf16.gmra.mxu0 %v6625
  %v6693 = vpop.f32.mrf.mxu0
  %v6694 = vadd.f32 0.0, %v6693
  %v6695 = vpop.f32.mrf.mxu0
  %v6696 = vadd.f32 0.0, %v6695
  %6697 = vdwg.mxu0
  %v6698 = vadd.f32 %v6182, %v6684
  %v6699 = vadd.f32 %v6183, %v6686
  %v6700 = vadd.f32 %v6184, %v6689
  %v6701 = vadd.f32 %v6185, %v6691
  %v6702 = vadd.f32 %v6186, %v6694
  %v6703 = vadd.f32 %v6187, %v6696
  %v6704 = vperm.slane %v4935, 0
  %v6705 = vadd.f32 %v6698, %v6704
  %v6706 = vadd.f32 %v6699, %v6704
  %v6707 = vadd.f32 %v6700, %v6704
  %v6708 = vadd.f32 %v6701, %v6704
  %v6709 = vadd.f32 %v6702, %v6704
  %v6710 = vadd.f32 %v6703, %v6704
  %s6711 = scalar_lea.vmem %s4, 24
  %v6712 = vld [vmem:[%s6711] sm:$0x1]
  %v6713 = vld [vmem:[%s6711 + $0x1] sm:$0x1]
  %v6714 = vld [vmem:[%s6711 + $0x2] sm:$0x1]
  %v6715 = vld [vmem:[%s6711 + $0x3] sm:$0x1]
  %v6716 = vld [vmem:[%s6711 + $0x4] sm:$0x1]
  %v6717 = vld [vmem:[%s6711 + $0x5] sm:$0x1]
  %v6718 = vld [vmem:[%s6711 + $0x6] sm:$0x1]
  %s6719 = scalar_lea.vmem %s3, 576
  %v6720 = vld [vmem:[%s6719] sm:$0xf]
  %v6721 = vld [vmem:[%s6719 + $0xc] sm:$0xf]
  %v6722 = vld [vmem:[%s6719 + $0x18] sm:$0xf]
  %v6723 = vld [vmem:[%s6719 + $0x24] sm:$0xf]
  %v6724 = vld [vmem:[%s6719 + $0x4] sm:$0xf]
  %v6725 = vld [vmem:[%s6719 + $0x10] sm:$0xf]
  %v6726 = vld [vmem:[%s6719 + $0x1c] sm:$0xf]
  %v6727 = vld [vmem:[%s6719 + $0x28] sm:$0xf]
  %v6728 = vld [vmem:[%s6719 + $0x8] sm:$0xf]
  %v6729 = vld [vmem:[%s6719 + $0x14] sm:$0xf]
  %v6730 = vld [vmem:[%s6719 + $0x20] sm:$0xf]
  %v6731 = vld [vmem:[%s6719 + $0x2c] sm:$0xf]
  %v6732 = vld [vmem:[%s6719 + $0x38] sm:$0xf]
  %v6733 = vld [vmem:[%s6719 + $0x44] sm:$0xf]
  %v6734 = vld [vmem:[%s6719 + $0x50] sm:$0xf]
  %v6735 = vld [vmem:[%s6719 + $0x5c] sm:$0xf]
  %v6736 = vld [vmem:[%s6719 + $0x68] sm:$0xf]
  %v6737 = vld [vmem:[%s6719 + $0x74] sm:$0xf]
  %v6738 = vld [vmem:[%s6719 + $0x80] sm:$0xf]
  %v6739 = vld [vmem:[%s6719 + $0x8c] sm:$0xf]
  %v6740 = vld [vmem:[%s6719 + $0x98] sm:$0xf]
  %v6741 = vld [vmem:[%s6719 + $0xa4] sm:$0xf]
  %v6742 = vld [vmem:[%s6719 + $0xb0] sm:$0xf]
  %v6743 = vld [vmem:[%s6719 + $0xbc] sm:$0xf]
  %v6744 = vsel %vm140, %v6705, 0.0
  %6745 = vadd.xlane.f32.xlu0 %v6744
  %v6746 = vpop.xlane.xlu0 %6745
  %v6747 = vsel %vm140, %v6706, 0.0
  %6748 = vadd.xlane.f32.xlu0 %v6747
  %v6749 = vpop.xlane.xlu0 %6748
  %v6750 = vsel %vm140, %v6707, 0.0
  %6751 = vadd.xlane.f32.xlu0 %v6750
  %v6752 = vpop.xlane.xlu0 %6751
  %v6753 = vsel %vm140, %v6708, 0.0
  %6754 = vadd.xlane.f32.xlu0 %v6753
  %v6755 = vpop.xlane.xlu0 %6754
  %v6756 = vsel %vm140, %v6709, 0.0
  %6757 = vadd.xlane.f32.xlu0 %v6756
  %v6758 = vpop.xlane.xlu0 %6757
  %v6759 = vsel %vm140, %v6710, 0.0
  %6760 = vadd.xlane.f32.xlu0 %v6759
  %v6761 = vpop.xlane.xlu0 %6760
  %v6762 = vmul.f32 %v6746, %v161
  %v6763 = vmul.f32 %v6749, %v161
  %v6764 = vmul.f32 %v6752, %v161
  %v6765 = vmul.f32 %v6755, %v161
  %v6766 = vmul.f32 %v6758, %v161
  %v6767 = vmul.f32 %v6761, %v161
  %v6768 = vsub.f32 %v6705, %v6762
  %v6769 = vsub.f32 %v6706, %v6763
  %v6770 = vsub.f32 %v6707, %v6764
  %v6771 = vsub.f32 %v6708, %v6765
  %v6772 = vsub.f32 %v6709, %v6766
  %v6773 = vsub.f32 %v6710, %v6767
  %v6774 = vmul.f32 %v6768, %v6768
  %v6775 = vmul.f32 %v6769, %v6769
  %v6776 = vmul.f32 %v6770, %v6770
  %v6777 = vmul.f32 %v6771, %v6771
  %v6778 = vmul.f32 %v6772, %v6772
  %v6779 = vmul.f32 %v6773, %v6773
  %v6780 = vsel %vm140, %v6774, 0.0
  %6781 = vadd.xlane.f32.xlu0 %v6780
  %v6782 = vpop.xlane.xlu0 %6781
  %v6783 = vsel %vm140, %v6775, 0.0
  %6784 = vadd.xlane.f32.xlu0 %v6783
  %v6785 = vpop.xlane.xlu0 %6784
  %v6786 = vsel %vm140, %v6776, 0.0
  %6787 = vadd.xlane.f32.xlu0 %v6786
  %v6788 = vpop.xlane.xlu0 %6787
  %v6789 = vsel %vm140, %v6777, 0.0
  %6790 = vadd.xlane.f32.xlu0 %v6789
  %v6791 = vpop.xlane.xlu0 %6790
  %v6792 = vsel %vm140, %v6778, 0.0
  %6793 = vadd.xlane.f32.xlu0 %v6792
  %v6794 = vpop.xlane.xlu0 %6793
  %v6795 = vsel %vm140, %v6779, 0.0
  %6796 = vadd.xlane.f32.xlu0 %v6795
  %v6797 = vpop.xlane.xlu0 %6796
  %v6798 = vmul.f32 %v6782, %v161
  %v6799 = vmul.f32 %v6785, %v161
  %v6800 = vmul.f32 %v6788, %v161
  %v6801 = vmul.f32 %v6791, %v161
  %v6802 = vmul.f32 %v6794, %v161
  %v6803 = vmul.f32 %v6797, %v161
  %v6804 = vadd.f32 %v6798, 1e-05
  %v6805 = vadd.f32 %v6799, 1e-05
  %v6806 = vadd.f32 %v6800, 1e-05
  %v6807 = vadd.f32 %v6801, 1e-05
  %v6808 = vadd.f32 %v6802, 1e-05
  %v6809 = vadd.f32 %v6803, 1e-05
  %v6810 = vrsqrt.pop %v6804
  %v6811 = vmul.f32 %v6810, %v6804
  %v6812 = vmul.f32 %v6811, %v6810
  %v6813 = vmul.f32 0.5, %v6812
  %v6814 = vsub.f32 1.5, %v6813
  %v6815 = vmul.f32 %v6810, %v6814
  %vm6816 = vweird.f32 %v6804
  %vm6817 = vweird.f32 %v6810
  %vm6818 = vmor %vm6816, %vm6817
  %v6819 = vsel %vm6818, %v6810, %v6815
  %v6820 = vrsqrt.pop %v6805
  %v6821 = vmul.f32 %v6820, %v6805
  %v6822 = vmul.f32 %v6821, %v6820
  %v6823 = vmul.f32 0.5, %v6822
  %v6824 = vsub.f32 1.5, %v6823
  %v6825 = vmul.f32 %v6820, %v6824
  %vm6826 = vweird.f32 %v6805
  %vm6827 = vweird.f32 %v6820
  %vm6828 = vmor %vm6826, %vm6827
  %v6829 = vsel %vm6828, %v6820, %v6825
  %v6830 = vrsqrt.pop %v6806
  %v6831 = vmul.f32 %v6830, %v6806
  %v6832 = vmul.f32 %v6831, %v6830
  %v6833 = vmul.f32 0.5, %v6832
  %v6834 = vsub.f32 1.5, %v6833
  %v6835 = vmul.f32 %v6830, %v6834
  %vm6836 = vweird.f32 %v6806
  %vm6837 = vweird.f32 %v6830
  %vm6838 = vmor %vm6836, %vm6837
  %v6839 = vsel %vm6838, %v6830, %v6835
  %v6840 = vrsqrt.pop %v6807
  %v6841 = vmul.f32 %v6840, %v6807
  %v6842 = vmul.f32 %v6841, %v6840
  %v6843 = vmul.f32 0.5, %v6842
  %v6844 = vsub.f32 1.5, %v6843
  %v6845 = vmul.f32 %v6840, %v6844
  %vm6846 = vweird.f32 %v6807
  %vm6847 = vweird.f32 %v6840
  %vm6848 = vmor %vm6846, %vm6847
  %v6849 = vsel %vm6848, %v6840, %v6845
  %v6850 = vrsqrt.pop %v6808
  %v6851 = vmul.f32 %v6850, %v6808
  %v6852 = vmul.f32 %v6851, %v6850
  %v6853 = vmul.f32 0.5, %v6852
  %v6854 = vsub.f32 1.5, %v6853
  %v6855 = vmul.f32 %v6850, %v6854
  %vm6856 = vweird.f32 %v6808
  %vm6857 = vweird.f32 %v6850
  %vm6858 = vmor %vm6856, %vm6857
  %v6859 = vsel %vm6858, %v6850, %v6855
  %v6860 = vrsqrt.pop %v6809
  %v6861 = vmul.f32 %v6860, %v6809
  %v6862 = vmul.f32 %v6861, %v6860
  %v6863 = vmul.f32 0.5, %v6862
  %v6864 = vsub.f32 1.5, %v6863
  %v6865 = vmul.f32 %v6860, %v6864
  %vm6866 = vweird.f32 %v6809
  %vm6867 = vweird.f32 %v6860
  %vm6868 = vmor %vm6866, %vm6867
  %v6869 = vsel %vm6868, %v6860, %v6865
  %v6870 = vmul.f32 %v6768, %v6819
  %v6871 = vmul.f32 %v6769, %v6829
  %v6872 = vmul.f32 %v6770, %v6839
  %v6873 = vmul.f32 %v6771, %v6849
  %v6874 = vmul.f32 %v6772, %v6859
  %v6875 = vmul.f32 %v6773, %v6869
  %v6876 = vperm.slane %v6712, 0
  %v6877 = vmul.f32 %v6870, %v6876
  %v6878 = vmul.f32 %v6871, %v6876
  %v6879 = vmul.f32 %v6872, %v6876
  %v6880 = vmul.f32 %v6873, %v6876
  %v6881 = vmul.f32 %v6874, %v6876
  %v6882 = vmul.f32 %v6875, %v6876
  %v6883 = vperm.slane %v6713, 0
  %v6884 = vadd.f32 %v6877, %v6883
  %v6885 = vadd.f32 %v6878, %v6883
  %v6886 = vadd.f32 %v6879, %v6883
  %v6887 = vadd.f32 %v6880, %v6883
  %v6888 = vadd.f32 %v6881, %v6883
  %v6889 = vadd.f32 %v6882, %v6883
  %v6890 = vpack.c.bf16 %v6885, %v6884
  %v6891 = vpack.c.bf16 %v6887, %v6886
  %v6892 = vpack.c.bf16 %v6889, %v6888
  %v6897 = vunpack.c.l.b16 %v6720
  %v6898 = vunpack.c.l.b16 %v6721
  %v6899 = vunpack.c.l.b16 %v6722
  %v6900 = vunpack.c.l.b16 %v6723
  %v6901 = vpack.c.b16 %v6898, %v6897
  %v6902 = vpack.c.b16 %v6900, %v6899
  %v6906 = vsel %vm140, %v6890, 0
  %v6909 = vsel %vm140, %v6891, 0
  %v6912 = vsel %vm140, %v6892, 0
  %6914 = vmatpush.bf16.msra.mxu0 0
  %6915 = vmatpush.bf16.msra.mxu0 0
  %6916 = vmatpush.bf16.msra.mxu0 0
  %6917 = vmatpush.bf16.msra.mxu0 0
  %6918 = vmatpush.bf16.msra.mxu0 0
  %6919 = vmatpush.bf16.msra.mxu0 0
  %6920 = vmatpush.bf16.msra.mxu0 %v6902
  %6921 = vmatpush.bf16.msra.mxu0 %v6901
  %6922 = vmatmul.bf16.gmra.mxu0 %v6906
  %v6923 = vpop.f32.mrf.mxu0
  %v6924 = vadd.f32 0.0, %v6923
  %v6925 = vpop.f32.mrf.mxu0
  %v6926 = vadd.f32 0.0, %v6925
  %6927 = vmatmul.bf16.gmra.mxu0 %v6909
  %v6928 = vpop.f32.mrf.mxu0
  %v6929 = vadd.f32 0.0, %v6928
  %v6930 = vpop.f32.mrf.mxu0
  %v6931 = vadd.f32 0.0, %v6930
  %6932 = vmatmul.bf16.gmra.mxu0 %v6912
  %v6933 = vpop.f32.mrf.mxu0
  %v6934 = vadd.f32 0.0, %v6933
  %v6935 = vpop.f32.mrf.mxu0
  %v6936 = vadd.f32 0.0, %v6935
  %6937 = vdwg.mxu0
  %v6938 = vpack.c.bf16 %v6926, %v6924
  %v6939 = vpack.c.bf16 %v6929, %v6929
  %6942 = vrot.lane.b32.xlu0 %v6938, 96
  %v6943 = vpop.permute.xlu0 %6942
  %6944 = vrot.lane.b32.xlu0 %v6939, 96
  %v6945 = vpop.permute.xlu0 %6944
  %v6947 = vsel %vm325, %v6938, 0
  %v6950 = vsel %vm325, %v6939, 0
  %v6953 = vsel %vm325, %v6943, 0
  %v6956 = vsel %vm325, %v6945, 0
  %6958 = vmatpush.bf16.xpose.msra.mxu0 0
  %6959 = vmatpush.bf16.xpose.msra.mxu0 0
  %6960 = vmatpush.bf16.xpose.msra.mxu0 0
  %6961 = vmatpush.bf16.xpose.msra.mxu0 0
  %6962 = vmatpush.bf16.xpose.msra.mxu0 0
  %6963 = vmatpush.bf16.xpose.msra.mxu0 0
  %6964 = vmatpush.bf16.xpose.msra.mxu0 %v6956
  %6965 = vmatpush.bf16.xpose.msra.mxu0 %v6953
  %6966 = vmatmul.bf16.gmra.mxu0 %v6947
  %v6967 = vpop.f32.mrf.mxu0
  %v6968 = vadd.f32 0.0, %v6967
  %v6969 = vpop.f32.mrf.mxu0
  %v6970 = vadd.f32 0.0, %v6969
  %6971 = vmatmul.bf16.gmra.mxu0 %v6950
  %v6972 = vpop.f32.mrf.mxu0
  %v6973 = vadd.f32 0.0, %v6972
  %v6974 = vpop.f32.mrf.mxu0
  %6975 = vdwg.mxu0
  %v6976 = vmul.f32 %v6968, 0.35355338
  %v6977 = vmul.f32 %v6970, 0.35355338
  %v6978 = vmul.f32 %v6973, 0.35355338
  %v6979 = vadd.f32 %v6976, %v108
  %v6980 = vadd.f32 %v6977, %v108
  %v6981 = vadd.f32 %v6978, %v108
  %v6982 = vsel %vm362, %v6979, -inf
  %6983 = vmax.xlane.f32.xlu0 %v6982
  %v6984 = vpop.xlane.xlu0 %6983
  %v6985 = vsel %vm362, %v6980, -inf
  %6986 = vmax.xlane.f32.xlu0 %v6985
  %v6987 = vpop.xlane.xlu0 %6986
  %v6988 = vsel %vm362, %v6981, -inf
  %6989 = vmax.xlane.f32.xlu0 %v6988
  %v6990 = vpop.xlane.xlu0 %6989
  %v6991 = vsub.f32 %v6979, %v6984
  %v6992 = vsub.f32 %v6980, %v6987
  %v6993 = vsub.f32 %v6981, %v6990
  %v6994 = vmul.f32 %v6991, 1.442695
  %v6995 = vpow.pop %v6994
  %v6996 = vmul.f32 %v6992, 1.442695
  %v6997 = vpow.pop %v6996
  %v6998 = vmul.f32 %v6993, 1.442695
  %v6999 = vpow.pop %v6998
  %v7000 = vsel %vm362, %v6995, 0.0
  %7001 = vadd.xlane.f32.xlu0 %v7000
  %v7002 = vpop.xlane.xlu0 %7001
  %v7003 = vsel %vm362, %v6997, 0.0
  %7004 = vadd.xlane.f32.xlu0 %v7003
  %v7005 = vpop.xlane.xlu0 %7004
  %v7006 = vsel %vm362, %v6999, 0.0
  %7007 = vadd.xlane.f32.xlu0 %v7006
  %v7008 = vpop.xlane.xlu0 %7007
  %v7009 = vrcp.pop %v7002
  %v7010 = vrcp.pop %v7005
  %v7011 = vrcp.pop %v7008
  %v7012 = vmul.f32 %v6995, %v7009
  %v7013 = vmul.f32 %v6997, %v7010
  %v7014 = vmul.f32 %v6999, %v7011
  %v7015 = vpack.c.bf16 %v7013, %v7012
  %v7016 = vpack.c.bf16 %v7014, %v7014
  %7017 = vrot.lane.b32.xlu0 %v6938, 64
  %v7018 = vpop.permute.xlu0 %7017
  %7019 = vrot.lane.b32.xlu0 %v6939, 64
  %v7020 = vpop.permute.xlu0 %7019
  %v7023 = vsel %vm362, %v7015, 0
  %v7026 = vsel %vm362, %v7016, 0
  %v7029 = vsel %vm477, %v7020, 0
  %7031 = vmatpush.bf16.msra.mxu0 0
  %7032 = vmatpush.bf16.msra.mxu0 0
  %7033 = vmatpush.bf16.msra.mxu0 0
  %7034 = vmatpush.bf16.msra.mxu0 0
  %7035 = vmatpush.bf16.msra.mxu0 0
  %7036 = vmatpush.bf16.msra.mxu0 0
  %7037 = vmatpush.bf16.msra.mxu0 %v7029
  %7038 = vmatpush.bf16.msra.mxu0 %v7018
  %7039 = vmatmul.bf16.gmra.mxu0 %v7023
  %v7040 = vpop.f32.mrf.mxu0
  %v7041 = vadd.f32 0.0, %v7040
  %v7042 = vpop.f32.mrf.mxu0
  %v7043 = vadd.f32 0.0, %v7042
  %7044 = vmatmul.bf16.gmra.mxu0 %v7026
  %v7045 = vpop.f32.mrf.mxu0
  %v7046 = vadd.f32 0.0, %v7045
  %v7047 = vpop.f32.mrf.mxu0
  %7048 = vdwg.mxu0
  %7049 = vrot.lane.b32.xlu0 %v6938, 120
  %v7050 = vpop.permute.xlu0 %7049
  %7051 = vrot.lane.b32.xlu0 %v6939, 120
  %v7052 = vpop.permute.xlu0 %7051
  %7053 = vrot.lane.b32.xlu0 %v6938, 88
  %v7054 = vpop.permute.xlu0 %7053
  %7055 = vrot.lane.b32.xlu0 %v6939, 88
  %v7056 = vpop.permute.xlu0 %7055
  %v7058 = vsel %vm325, %v7050, 0
  %v7061 = vsel %vm325, %v7052, 0
  %v7064 = vsel %vm325, %v7054, 0
  %v7067 = vsel %vm325, %v7056, 0
  %7069 = vmatpush.bf16.xpose.msra.mxu0 0
  %7070 = vmatpush.bf16.xpose.msra.mxu0 0
  %7071 = vmatpush.bf16.xpose.msra.mxu0 0
  %7072 = vmatpush.bf16.xpose.msra.mxu0 0
  %7073 = vmatpush.bf16.xpose.msra.mxu0 0
  %7074 = vmatpush.bf16.xpose.msra.mxu0 0
  %7075 = vmatpush.bf16.xpose.msra.mxu0 %v7067
  %7076 = vmatpush.bf16.xpose.msra.mxu0 %v7064
  %7077 = vmatmul.bf16.gmra.mxu0 %v7058
  %v7078 = vpop.f32.mrf.mxu0
  %v7079 = vadd.f32 0.0, %v7078
  %v7080 = vpop.f32.mrf.mxu0
  %v7081 = vadd.f32 0.0, %v7080
  %7082 = vmatmul.bf16.gmra.mxu0 %v7061
  %v7083 = vpop.f32.mrf.mxu0
  %v7084 = vadd.f32 0.0, %v7083
  %v7085 = vpop.f32.mrf.mxu0
  %7086 = vdwg.mxu0
  %v7087 = vmul.f32 %v7079, 0.35355338
  %v7088 = vmul.f32 %v7081, 0.35355338
  %v7089 = vmul.f32 %v7084, 0.35355338
  %v7090 = vadd.f32 %v7087, %v108
  %v7091 = vadd.f32 %v7088, %v108
  %v7092 = vadd.f32 %v7089, %v108
  %v7093 = vsel %vm362, %v7090, -inf
  %7094 = vmax.xlane.f32.xlu0 %v7093
  %v7095 = vpop.xlane.xlu0 %7094
  %v7096 = vsel %vm362, %v7091, -inf
  %7097 = vmax.xlane.f32.xlu0 %v7096
  %v7098 = vpop.xlane.xlu0 %7097
  %v7099 = vsel %vm362, %v7092, -inf
  %7100 = vmax.xlane.f32.xlu0 %v7099
  %v7101 = vpop.xlane.xlu0 %7100
  %v7102 = vsub.f32 %v7090, %v7095
  %v7103 = vsub.f32 %v7091, %v7098
  %v7104 = vsub.f32 %v7092, %v7101
  %v7105 = vmul.f32 %v7102, 1.442695
  %v7106 = vpow.pop %v7105
  %v7107 = vmul.f32 %v7103, 1.442695
  %v7108 = vpow.pop %v7107
  %v7109 = vmul.f32 %v7104, 1.442695
  %v7110 = vpow.pop %v7109
  %v7111 = vsel %vm362, %v7106, 0.0
  %7112 = vadd.xlane.f32.xlu0 %v7111
  %v7113 = vpop.xlane.xlu0 %7112
  %v7114 = vsel %vm362, %v7108, 0.0
  %7115 = vadd.xlane.f32.xlu0 %v7114
  %v7116 = vpop.xlane.xlu0 %7115
  %v7117 = vsel %vm362, %v7110, 0.0
  %7118 = vadd.xlane.f32.xlu0 %v7117
  %v7119 = vpop.xlane.xlu0 %7118
  %v7120 = vrcp.pop %v7113
  %v7121 = vrcp.pop %v7116
  %v7122 = vrcp.pop %v7119
  %v7123 = vmul.f32 %v7106, %v7120
  %v7124 = vmul.f32 %v7108, %v7121
  %v7125 = vmul.f32 %v7110, %v7122
  %v7126 = vpack.c.bf16 %v7124, %v7123
  %v7127 = vpack.c.bf16 %v7125, %v7125
  %7128 = vrot.lane.b32.xlu0 %v6938, 56
  %v7129 = vpop.permute.xlu0 %7128
  %7130 = vrot.lane.b32.xlu0 %v6939, 56
  %v7131 = vpop.permute.xlu0 %7130
  %v7134 = vsel %vm362, %v7126, 0
  %v7137 = vsel %vm362, %v7127, 0
  %v7140 = vsel %vm477, %v7131, 0
  %7142 = vmatpush.bf16.msra.mxu0 0
  %7143 = vmatpush.bf16.msra.mxu0 0
  %7144 = vmatpush.bf16.msra.mxu0 0
  %7145 = vmatpush.bf16.msra.mxu0 0
  %7146 = vmatpush.bf16.msra.mxu0 0
  %7147 = vmatpush.bf16.msra.mxu0 0
  %7148 = vmatpush.bf16.msra.mxu0 %v7140
  %7149 = vmatpush.bf16.msra.mxu0 %v7129
  %7150 = vmatmul.bf16.gmra.mxu0 %v7134
  %v7151 = vpop.f32.mrf.mxu0
  %v7152 = vadd.f32 0.0, %v7151
  %v7153 = vpop.f32.mrf.mxu0
  %v7154 = vadd.f32 0.0, %v7153
  %7155 = vmatmul.bf16.gmra.mxu0 %v7137
  %v7156 = vpop.f32.mrf.mxu0
  %v7157 = vadd.f32 0.0, %v7156
  %v7158 = vpop.f32.mrf.mxu0
  %7159 = vdwg.mxu0
  %7160 = vrot.lane.b32.xlu0 %v6938, 112
  %v7161 = vpop.permute.xlu0 %7160
  %7162 = vrot.lane.b32.xlu0 %v6939, 112
  %v7163 = vpop.permute.xlu0 %7162
  %7164 = vrot.lane.b32.xlu0 %v6938, 80
  %v7165 = vpop.permute.xlu0 %7164
  %7166 = vrot.lane.b32.xlu0 %v6939, 80
  %v7167 = vpop.permute.xlu0 %7166
  %v7169 = vsel %vm325, %v7161, 0
  %v7172 = vsel %vm325, %v7163, 0
  %v7175 = vsel %vm325, %v7165, 0
  %v7178 = vsel %vm325, %v7167, 0
  %7180 = vmatpush.bf16.xpose.msra.mxu0 0
  %7181 = vmatpush.bf16.xpose.msra.mxu0 0
  %7182 = vmatpush.bf16.xpose.msra.mxu0 0
  %7183 = vmatpush.bf16.xpose.msra.mxu0 0
  %7184 = vmatpush.bf16.xpose.msra.mxu0 0
  %7185 = vmatpush.bf16.xpose.msra.mxu0 0
  %7186 = vmatpush.bf16.xpose.msra.mxu0 %v7178
  %7187 = vmatpush.bf16.xpose.msra.mxu0 %v7175
  %7188 = vmatmul.bf16.gmra.mxu0 %v7169
  %v7189 = vpop.f32.mrf.mxu0
  %v7190 = vadd.f32 0.0, %v7189
  %v7191 = vpop.f32.mrf.mxu0
  %v7192 = vadd.f32 0.0, %v7191
  %7193 = vmatmul.bf16.gmra.mxu0 %v7172
  %v7194 = vpop.f32.mrf.mxu0
  %v7195 = vadd.f32 0.0, %v7194
  %v7196 = vpop.f32.mrf.mxu0
  %7197 = vdwg.mxu0
  %v7198 = vmul.f32 %v7190, 0.35355338
  %v7199 = vmul.f32 %v7192, 0.35355338
  %v7200 = vmul.f32 %v7195, 0.35355338
  %v7201 = vadd.f32 %v7198, %v108
  %v7202 = vadd.f32 %v7199, %v108
  %v7203 = vadd.f32 %v7200, %v108
  %v7204 = vsel %vm362, %v7201, -inf
  %7205 = vmax.xlane.f32.xlu0 %v7204
  %v7206 = vpop.xlane.xlu0 %7205
  %v7207 = vsel %vm362, %v7202, -inf
  %7208 = vmax.xlane.f32.xlu0 %v7207
  %v7209 = vpop.xlane.xlu0 %7208
  %v7210 = vsel %vm362, %v7203, -inf
  %7211 = vmax.xlane.f32.xlu0 %v7210
  %v7212 = vpop.xlane.xlu0 %7211
  %v7213 = vsub.f32 %v7201, %v7206
  %v7214 = vsub.f32 %v7202, %v7209
  %v7215 = vsub.f32 %v7203, %v7212
  %v7216 = vmul.f32 %v7213, 1.442695
  %v7217 = vpow.pop %v7216
  %v7218 = vmul.f32 %v7214, 1.442695
  %v7219 = vpow.pop %v7218
  %v7220 = vmul.f32 %v7215, 1.442695
  %v7221 = vpow.pop %v7220
  %v7222 = vsel %vm362, %v7217, 0.0
  %7223 = vadd.xlane.f32.xlu0 %v7222
  %v7224 = vpop.xlane.xlu0 %7223
  %v7225 = vsel %vm362, %v7219, 0.0
  %7226 = vadd.xlane.f32.xlu0 %v7225
  %v7227 = vpop.xlane.xlu0 %7226
  %v7228 = vsel %vm362, %v7221, 0.0
  %7229 = vadd.xlane.f32.xlu0 %v7228
  %v7230 = vpop.xlane.xlu0 %7229
  %v7231 = vrcp.pop %v7224
  %v7232 = vrcp.pop %v7227
  %v7233 = vrcp.pop %v7230
  %v7234 = vmul.f32 %v7217, %v7231
  %v7235 = vmul.f32 %v7219, %v7232
  %v7236 = vmul.f32 %v7221, %v7233
  %v7237 = vpack.c.bf16 %v7235, %v7234
  %v7238 = vpack.c.bf16 %v7236, %v7236
  %7239 = vrot.lane.b32.xlu0 %v6938, 48
  %v7240 = vpop.permute.xlu0 %7239
  %7241 = vrot.lane.b32.xlu0 %v6939, 48
  %v7242 = vpop.permute.xlu0 %7241
  %v7245 = vsel %vm362, %v7237, 0
  %v7248 = vsel %vm362, %v7238, 0
  %v7251 = vsel %vm477, %v7242, 0
  %7253 = vmatpush.bf16.msra.mxu0 0
  %7254 = vmatpush.bf16.msra.mxu0 0
  %7255 = vmatpush.bf16.msra.mxu0 0
  %7256 = vmatpush.bf16.msra.mxu0 0
  %7257 = vmatpush.bf16.msra.mxu0 0
  %7258 = vmatpush.bf16.msra.mxu0 0
  %7259 = vmatpush.bf16.msra.mxu0 %v7251
  %7260 = vmatpush.bf16.msra.mxu0 %v7240
  %7261 = vmatmul.bf16.gmra.mxu0 %v7245
  %v7262 = vpop.f32.mrf.mxu0
  %v7263 = vadd.f32 0.0, %v7262
  %v7264 = vpop.f32.mrf.mxu0
  %v7265 = vadd.f32 0.0, %v7264
  %7266 = vmatmul.bf16.gmra.mxu0 %v7248
  %v7267 = vpop.f32.mrf.mxu0
  %v7268 = vadd.f32 0.0, %v7267
  %v7269 = vpop.f32.mrf.mxu0
  %7270 = vdwg.mxu0
  %7271 = vrot.lane.b32.xlu0 %v6938, 104
  %v7272 = vpop.permute.xlu0 %7271
  %7273 = vrot.lane.b32.xlu0 %v6939, 104
  %v7274 = vpop.permute.xlu0 %7273
  %7275 = vrot.lane.b32.xlu0 %v6938, 72
  %v7276 = vpop.permute.xlu0 %7275
  %7277 = vrot.lane.b32.xlu0 %v6939, 72
  %v7278 = vpop.permute.xlu0 %7277
  %v7280 = vsel %vm325, %v7272, 0
  %v7283 = vsel %vm325, %v7274, 0
  %v7286 = vsel %vm325, %v7276, 0
  %v7289 = vsel %vm325, %v7278, 0
  %7291 = vmatpush.bf16.xpose.msra.mxu0 0
  %7292 = vmatpush.bf16.xpose.msra.mxu0 0
  %7293 = vmatpush.bf16.xpose.msra.mxu0 0
  %7294 = vmatpush.bf16.xpose.msra.mxu0 0
  %7295 = vmatpush.bf16.xpose.msra.mxu0 0
  %7296 = vmatpush.bf16.xpose.msra.mxu0 0
  %7297 = vmatpush.bf16.xpose.msra.mxu0 %v7289
  %7298 = vmatpush.bf16.xpose.msra.mxu0 %v7286
  %7299 = vmatmul.bf16.gmra.mxu0 %v7280
  %v7300 = vpop.f32.mrf.mxu0
  %v7301 = vadd.f32 0.0, %v7300
  %v7302 = vpop.f32.mrf.mxu0
  %v7303 = vadd.f32 0.0, %v7302
  %7304 = vmatmul.bf16.gmra.mxu0 %v7283
  %v7305 = vpop.f32.mrf.mxu0
  %v7306 = vadd.f32 0.0, %v7305
  %v7307 = vpop.f32.mrf.mxu0
  %7308 = vdwg.mxu0
  %v7309 = vmul.f32 %v7301, 0.35355338
  %v7310 = vmul.f32 %v7303, 0.35355338
  %v7311 = vmul.f32 %v7306, 0.35355338
  %v7312 = vadd.f32 %v7309, %v108
  %v7313 = vadd.f32 %v7310, %v108
  %v7314 = vadd.f32 %v7311, %v108
  %v7315 = vsel %vm362, %v7312, -inf
  %7316 = vmax.xlane.f32.xlu0 %v7315
  %v7317 = vpop.xlane.xlu0 %7316
  %v7318 = vsel %vm362, %v7313, -inf
  %7319 = vmax.xlane.f32.xlu0 %v7318
  %v7320 = vpop.xlane.xlu0 %7319
  %v7321 = vsel %vm362, %v7314, -inf
  %7322 = vmax.xlane.f32.xlu0 %v7321
  %v7323 = vpop.xlane.xlu0 %7322
  %v7324 = vsub.f32 %v7312, %v7317
  %v7325 = vsub.f32 %v7313, %v7320
  %v7326 = vsub.f32 %v7314, %v7323
  %v7327 = vmul.f32 %v7324, 1.442695
  %v7328 = vpow.pop %v7327
  %v7329 = vmul.f32 %v7325, 1.442695
  %v7330 = vpow.pop %v7329
  %v7331 = vmul.f32 %v7326, 1.442695
  %v7332 = vpow.pop %v7331
  %v7333 = vsel %vm362, %v7328, 0.0
  %7334 = vadd.xlane.f32.xlu0 %v7333
  %v7335 = vpop.xlane.xlu0 %7334
  %v7336 = vsel %vm362, %v7330, 0.0
  %7337 = vadd.xlane.f32.xlu0 %v7336
  %v7338 = vpop.xlane.xlu0 %7337
  %v7339 = vsel %vm362, %v7332, 0.0
  %7340 = vadd.xlane.f32.xlu0 %v7339
  %v7341 = vpop.xlane.xlu0 %7340
  %v7342 = vrcp.pop %v7335
  %v7343 = vrcp.pop %v7338
  %v7344 = vrcp.pop %v7341
  %v7345 = vmul.f32 %v7328, %v7342
  %v7346 = vmul.f32 %v7330, %v7343
  %v7347 = vmul.f32 %v7332, %v7344
  %v7348 = vpack.c.bf16 %v7346, %v7345
  %v7349 = vpack.c.bf16 %v7347, %v7347
  %7350 = vrot.lane.b32.xlu0 %v6938, 40
  %v7351 = vpop.permute.xlu0 %7350
  %7352 = vrot.lane.b32.xlu0 %v6939, 40
  %v7353 = vpop.permute.xlu0 %7352
  %v7356 = vsel %vm362, %v7348, 0
  %v7359 = vsel %vm362, %v7349, 0
  %v7362 = vsel %vm477, %v7353, 0
  %7364 = vmatpush.bf16.msra.mxu0 0
  %7365 = vmatpush.bf16.msra.mxu0 0
  %7366 = vmatpush.bf16.msra.mxu0 0
  %7367 = vmatpush.bf16.msra.mxu0 0
  %7368 = vmatpush.bf16.msra.mxu0 0
  %7369 = vmatpush.bf16.msra.mxu0 0
  %7370 = vmatpush.bf16.msra.mxu0 %v7362
  %7371 = vmatpush.bf16.msra.mxu0 %v7351
  %7372 = vmatmul.bf16.gmra.mxu0 %v7356
  %v7373 = vpop.f32.mrf.mxu0
  %v7374 = vadd.f32 0.0, %v7373
  %v7375 = vpop.f32.mrf.mxu0
  %v7376 = vadd.f32 0.0, %v7375
  %7377 = vmatmul.bf16.gmra.mxu0 %v7359
  %v7378 = vpop.f32.mrf.mxu0
  %v7379 = vadd.f32 0.0, %v7378
  %v7380 = vpop.f32.mrf.mxu0
  %7381 = vdwg.mxu0
  %7385 = vrot.lane.b32.xlu0 %v7152, 8
  %v7386 = vpop.permute.xlu0 %7385
  %7387 = vrot.lane.b32.xlu0 %v7154, 8
  %v7388 = vpop.permute.xlu0 %7387
  %7389 = vrot.lane.b32.xlu0 %v7157, 8
  %v7390 = vpop.permute.xlu0 %7389
  %7397 = vrot.lane.b32.xlu0 %v7263, 16
  %v7398 = vpop.permute.xlu0 %7397
  %7399 = vrot.lane.b32.xlu0 %v7265, 16
  %v7400 = vpop.permute.xlu0 %7399
  %7401 = vrot.lane.b32.xlu0 %v7268, 16
  %v7402 = vpop.permute.xlu0 %7401
  %7409 = vrot.lane.b32.xlu0 %v7374, 24
  %v7410 = vpop.permute.xlu0 %7409
  %7411 = vrot.lane.b32.xlu0 %v7376, 24
  %v7412 = vpop.permute.xlu0 %7411
  %7413 = vrot.lane.b32.xlu0 %v7379, 24
  %v7414 = vpop.permute.xlu0 %7413
  %v7418 = vsel %vm325, %v7041, %v7386
  %v7419 = vsel %vm325, %v7043, %v7388
  %v7420 = vsel %vm325, %v7046, %v7390
  %v7421 = vsel %vm1078, %v7418, %v7398
  %v7422 = vsel %vm1078, %v7419, %v7400
  %v7423 = vsel %vm1078, %v7420, %v7402
  %v7424 = vsel %vm362, %v7421, %v7410
  %v7425 = vsel %vm362, %v7422, %v7412
  %v7426 = vsel %vm362, %v7423, %v7414
  %v7427 = vpack.c.bf16 %v6934, %v6931
  %v7428 = vpack.c.bf16 %v6936, %v6936
  %7431 = vrot.lane.b32.xlu0 %v7427, 96
  %v7432 = vpop.permute.xlu0 %7431
  %7433 = vrot.lane.b32.xlu0 %v7428, 96
  %v7434 = vpop.permute.xlu0 %7433
  %v7436 = vsel %vm325, %v7427, 0
  %v7439 = vsel %vm325, %v7428, 0
  %v7442 = vsel %vm325, %v7432, 0
  %v7445 = vsel %vm325, %v7434, 0
  %7447 = vmatpush.bf16.xpose.msra.mxu0 0
  %7448 = vmatpush.bf16.xpose.msra.mxu0 0
  %7449 = vmatpush.bf16.xpose.msra.mxu0 0
  %7450 = vmatpush.bf16.xpose.msra.mxu0 0
  %7451 = vmatpush.bf16.xpose.msra.mxu0 0
  %7452 = vmatpush.bf16.xpose.msra.mxu0 0
  %7453 = vmatpush.bf16.xpose.msra.mxu0 %v7445
  %7454 = vmatpush.bf16.xpose.msra.mxu0 %v7442
  %7455 = vmatmul.bf16.gmra.mxu0 %v7436
  %v7456 = vpop.f32.mrf.mxu0
  %v7457 = vadd.f32 0.0, %v7456
  %v7458 = vpop.f32.mrf.mxu0
  %v7459 = vadd.f32 0.0, %v7458
  %7460 = vmatmul.bf16.gmra.mxu0 %v7439
  %v7461 = vpop.f32.mrf.mxu0
  %v7462 = vadd.f32 0.0, %v7461
  %v7463 = vpop.f32.mrf.mxu0
  %7464 = vdwg.mxu0
  %v7465 = vmul.f32 %v7457, 0.35355338
  %v7466 = vmul.f32 %v7459, 0.35355338
  %v7467 = vmul.f32 %v7462, 0.35355338
  %v7468 = vadd.f32 %v7465, %v108
  %v7469 = vadd.f32 %v7466, %v108
  %v7470 = vadd.f32 %v7467, %v108
  %v7471 = vsel %vm362, %v7468, -inf
  %7472 = vmax.xlane.f32.xlu0 %v7471
  %v7473 = vpop.xlane.xlu0 %7472
  %v7474 = vsel %vm362, %v7469, -inf
  %7475 = vmax.xlane.f32.xlu0 %v7474
  %v7476 = vpop.xlane.xlu0 %7475
  %v7477 = vsel %vm362, %v7470, -inf
  %7478 = vmax.xlane.f32.xlu0 %v7477
  %v7479 = vpop.xlane.xlu0 %7478
  %v7480 = vsub.f32 %v7468, %v7473
  %v7481 = vsub.f32 %v7469, %v7476
  %v7482 = vsub.f32 %v7470, %v7479
  %v7483 = vmul.f32 %v7480, 1.442695
  %v7484 = vpow.pop %v7483
  %v7485 = vmul.f32 %v7481, 1.442695
  %v7486 = vpow.pop %v7485
  %v7487 = vmul.f32 %v7482, 1.442695
  %v7488 = vpow.pop %v7487
  %v7489 = vsel %vm362, %v7484, 0.0
  %7490 = vadd.xlane.f32.xlu0 %v7489
  %v7491 = vpop.xlane.xlu0 %7490
  %v7492 = vsel %vm362, %v7486, 0.0
  %7493 = vadd.xlane.f32.xlu0 %v7492
  %v7494 = vpop.xlane.xlu0 %7493
  %v7495 = vsel %vm362, %v7488, 0.0
  %7496 = vadd.xlane.f32.xlu0 %v7495
  %v7497 = vpop.xlane.xlu0 %7496
  %v7498 = vrcp.pop %v7491
  %v7499 = vrcp.pop %v7494
  %v7500 = vrcp.pop %v7497
  %v7501 = vmul.f32 %v7484, %v7498
  %v7502 = vmul.f32 %v7486, %v7499
  %v7503 = vmul.f32 %v7488, %v7500
  %v7504 = vpack.c.bf16 %v7502, %v7501
  %v7505 = vpack.c.bf16 %v7503, %v7503
  %7506 = vrot.lane.b32.xlu0 %v7427, 64
  %v7507 = vpop.permute.xlu0 %7506
  %7508 = vrot.lane.b32.xlu0 %v7428, 64
  %v7509 = vpop.permute.xlu0 %7508
  %v7512 = vsel %vm362, %v7504, 0
  %v7515 = vsel %vm362, %v7505, 0
  %v7518 = vsel %vm477, %v7509, 0
  %7520 = vmatpush.bf16.msra.mxu0 0
  %7521 = vmatpush.bf16.msra.mxu0 0
  %7522 = vmatpush.bf16.msra.mxu0 0
  %7523 = vmatpush.bf16.msra.mxu0 0
  %7524 = vmatpush.bf16.msra.mxu0 0
  %7525 = vmatpush.bf16.msra.mxu0 0
  %7526 = vmatpush.bf16.msra.mxu0 %v7518
  %7527 = vmatpush.bf16.msra.mxu0 %v7507
  %7528 = vmatmul.bf16.gmra.mxu0 %v7512
  %v7529 = vpop.f32.mrf.mxu0
  %v7530 = vadd.f32 0.0, %v7529
  %v7531 = vpop.f32.mrf.mxu0
  %v7532 = vadd.f32 0.0, %v7531
  %7533 = vmatmul.bf16.gmra.mxu0 %v7515
  %v7534 = vpop.f32.mrf.mxu0
  %v7535 = vadd.f32 0.0, %v7534
  %v7536 = vpop.f32.mrf.mxu0
  %7537 = vdwg.mxu0
  %7538 = vrot.lane.b32.xlu0 %v7427, 120
  %v7539 = vpop.permute.xlu0 %7538
  %7540 = vrot.lane.b32.xlu0 %v7428, 120
  %v7541 = vpop.permute.xlu0 %7540
  %7542 = vrot.lane.b32.xlu0 %v7427, 88
  %v7543 = vpop.permute.xlu0 %7542
  %7544 = vrot.lane.b32.xlu0 %v7428, 88
  %v7545 = vpop.permute.xlu0 %7544
  %v7547 = vsel %vm325, %v7539, 0
  %v7550 = vsel %vm325, %v7541, 0
  %v7553 = vsel %vm325, %v7543, 0
  %v7556 = vsel %vm325, %v7545, 0
  %7558 = vmatpush.bf16.xpose.msra.mxu0 0
  %7559 = vmatpush.bf16.xpose.msra.mxu0 0
  %7560 = vmatpush.bf16.xpose.msra.mxu0 0
  %7561 = vmatpush.bf16.xpose.msra.mxu0 0
  %7562 = vmatpush.bf16.xpose.msra.mxu0 0
  %7563 = vmatpush.bf16.xpose.msra.mxu0 0
  %7564 = vmatpush.bf16.xpose.msra.mxu0 %v7556
  %7565 = vmatpush.bf16.xpose.msra.mxu0 %v7553
  %7566 = vmatmul.bf16.gmra.mxu0 %v7547
  %v7567 = vpop.f32.mrf.mxu0
  %v7568 = vadd.f32 0.0, %v7567
  %v7569 = vpop.f32.mrf.mxu0
  %v7570 = vadd.f32 0.0, %v7569
  %7571 = vmatmul.bf16.gmra.mxu0 %v7550
  %v7572 = vpop.f32.mrf.mxu0
  %v7573 = vadd.f32 0.0, %v7572
  %v7574 = vpop.f32.mrf.mxu0
  %7575 = vdwg.mxu0
  %v7576 = vmul.f32 %v7568, 0.35355338
  %v7577 = vmul.f32 %v7570, 0.35355338
  %v7578 = vmul.f32 %v7573, 0.35355338
  %v7579 = vadd.f32 %v7576, %v108
  %v7580 = vadd.f32 %v7577, %v108
  %v7581 = vadd.f32 %v7578, %v108
  %v7582 = vsel %vm362, %v7579, -inf
  %7583 = vmax.xlane.f32.xlu0 %v7582
  %v7584 = vpop.xlane.xlu0 %7583
  %v7585 = vsel %vm362, %v7580, -inf
  %7586 = vmax.xlane.f32.xlu0 %v7585
  %v7587 = vpop.xlane.xlu0 %7586
  %v7588 = vsel %vm362, %v7581, -inf
  %7589 = vmax.xlane.f32.xlu0 %v7588
  %v7590 = vpop.xlane.xlu0 %7589
  %v7591 = vsub.f32 %v7579, %v7584
  %v7592 = vsub.f32 %v7580, %v7587
  %v7593 = vsub.f32 %v7581, %v7590
  %v7594 = vmul.f32 %v7591, 1.442695
  %v7595 = vpow.pop %v7594
  %v7596 = vmul.f32 %v7592, 1.442695
  %v7597 = vpow.pop %v7596
  %v7598 = vmul.f32 %v7593, 1.442695
  %v7599 = vpow.pop %v7598
  %v7600 = vsel %vm362, %v7595, 0.0
  %7601 = vadd.xlane.f32.xlu0 %v7600
  %v7602 = vpop.xlane.xlu0 %7601
  %v7603 = vsel %vm362, %v7597, 0.0
  %7604 = vadd.xlane.f32.xlu0 %v7603
  %v7605 = vpop.xlane.xlu0 %7604
  %v7606 = vsel %vm362, %v7599, 0.0
  %7607 = vadd.xlane.f32.xlu0 %v7606
  %v7608 = vpop.xlane.xlu0 %7607
  %v7609 = vrcp.pop %v7602
  %v7610 = vrcp.pop %v7605
  %v7611 = vrcp.pop %v7608
  %v7612 = vmul.f32 %v7595, %v7609
  %v7613 = vmul.f32 %v7597, %v7610
  %v7614 = vmul.f32 %v7599, %v7611
  %v7615 = vpack.c.bf16 %v7613, %v7612
  %v7616 = vpack.c.bf16 %v7614, %v7614
  %7617 = vrot.lane.b32.xlu0 %v7427, 56
  %v7618 = vpop.permute.xlu0 %7617
  %7619 = vrot.lane.b32.xlu0 %v7428, 56
  %v7620 = vpop.permute.xlu0 %7619
  %v7623 = vsel %vm362, %v7615, 0
  %v7626 = vsel %vm362, %v7616, 0
  %v7629 = vsel %vm477, %v7620, 0
  %7631 = vmatpush.bf16.msra.mxu0 0
  %7632 = vmatpush.bf16.msra.mxu0 0
  %7633 = vmatpush.bf16.msra.mxu0 0
  %7634 = vmatpush.bf16.msra.mxu0 0
  %7635 = vmatpush.bf16.msra.mxu0 0
  %7636 = vmatpush.bf16.msra.mxu0 0
  %7637 = vmatpush.bf16.msra.mxu0 %v7629
  %7638 = vmatpush.bf16.msra.mxu0 %v7618
  %7639 = vmatmul.bf16.gmra.mxu0 %v7623
  %v7640 = vpop.f32.mrf.mxu0
  %v7641 = vadd.f32 0.0, %v7640
  %v7642 = vpop.f32.mrf.mxu0
  %v7643 = vadd.f32 0.0, %v7642
  %7644 = vmatmul.bf16.gmra.mxu0 %v7626
  %v7645 = vpop.f32.mrf.mxu0
  %v7646 = vadd.f32 0.0, %v7645
  %v7647 = vpop.f32.mrf.mxu0
  %7648 = vdwg.mxu0
  %7649 = vrot.lane.b32.xlu0 %v7427, 112
  %v7650 = vpop.permute.xlu0 %7649
  %7651 = vrot.lane.b32.xlu0 %v7428, 112
  %v7652 = vpop.permute.xlu0 %7651
  %7653 = vrot.lane.b32.xlu0 %v7427, 80
  %v7654 = vpop.permute.xlu0 %7653
  %7655 = vrot.lane.b32.xlu0 %v7428, 80
  %v7656 = vpop.permute.xlu0 %7655
  %v7658 = vsel %vm325, %v7650, 0
  %v7661 = vsel %vm325, %v7652, 0
  %v7664 = vsel %vm325, %v7654, 0
  %v7667 = vsel %vm325, %v7656, 0
  %7669 = vmatpush.bf16.xpose.msra.mxu0 0
  %7670 = vmatpush.bf16.xpose.msra.mxu0 0
  %7671 = vmatpush.bf16.xpose.msra.mxu0 0
  %7672 = vmatpush.bf16.xpose.msra.mxu0 0
  %7673 = vmatpush.bf16.xpose.msra.mxu0 0
  %7674 = vmatpush.bf16.xpose.msra.mxu0 0
  %7675 = vmatpush.bf16.xpose.msra.mxu0 %v7667
  %7676 = vmatpush.bf16.xpose.msra.mxu0 %v7664
  %7677 = vmatmul.bf16.gmra.mxu0 %v7658
  %v7678 = vpop.f32.mrf.mxu0
  %v7679 = vadd.f32 0.0, %v7678
  %v7680 = vpop.f32.mrf.mxu0
  %v7681 = vadd.f32 0.0, %v7680
  %7682 = vmatmul.bf16.gmra.mxu0 %v7661
  %v7683 = vpop.f32.mrf.mxu0
  %v7684 = vadd.f32 0.0, %v7683
  %v7685 = vpop.f32.mrf.mxu0
  %7686 = vdwg.mxu0
  %v7687 = vmul.f32 %v7679, 0.35355338
  %v7688 = vmul.f32 %v7681, 0.35355338
  %v7689 = vmul.f32 %v7684, 0.35355338
  %v7690 = vadd.f32 %v7687, %v108
  %v7691 = vadd.f32 %v7688, %v108
  %v7692 = vadd.f32 %v7689, %v108
  %v7693 = vsel %vm362, %v7690, -inf
  %7694 = vmax.xlane.f32.xlu0 %v7693
  %v7695 = vpop.xlane.xlu0 %7694
  %v7696 = vsel %vm362, %v7691, -inf
  %7697 = vmax.xlane.f32.xlu0 %v7696
  %v7698 = vpop.xlane.xlu0 %7697
  %v7699 = vsel %vm362, %v7692, -inf
  %7700 = vmax.xlane.f32.xlu0 %v7699
  %v7701 = vpop.xlane.xlu0 %7700
  %v7702 = vsub.f32 %v7690, %v7695
  %v7703 = vsub.f32 %v7691, %v7698
  %v7704 = vsub.f32 %v7692, %v7701
  %v7705 = vmul.f32 %v7702, 1.442695
  %v7706 = vpow.pop %v7705
  %v7707 = vmul.f32 %v7703, 1.442695
  %v7708 = vpow.pop %v7707
  %v7709 = vmul.f32 %v7704, 1.442695
  %v7710 = vpow.pop %v7709
  %v7711 = vsel %vm362, %v7706, 0.0
  %7712 = vadd.xlane.f32.xlu0 %v7711
  %v7713 = vpop.xlane.xlu0 %7712
  %v7714 = vsel %vm362, %v7708, 0.0
  %7715 = vadd.xlane.f32.xlu0 %v7714
  %v7716 = vpop.xlane.xlu0 %7715
  %v7717 = vsel %vm362, %v7710, 0.0
  %7718 = vadd.xlane.f32.xlu0 %v7717
  %v7719 = vpop.xlane.xlu0 %7718
  %v7720 = vrcp.pop %v7713
  %v7721 = vrcp.pop %v7716
  %v7722 = vrcp.pop %v7719
  %v7723 = vmul.f32 %v7706, %v7720
  %v7724 = vmul.f32 %v7708, %v7721
  %v7725 = vmul.f32 %v7710, %v7722
  %v7726 = vpack.c.bf16 %v7724, %v7723
  %v7727 = vpack.c.bf16 %v7725, %v7725
  %7728 = vrot.lane.b32.xlu0 %v7427, 48
  %v7729 = vpop.permute.xlu0 %7728
  %7730 = vrot.lane.b32.xlu0 %v7428, 48
  %v7731 = vpop.permute.xlu0 %7730
  %v7734 = vsel %vm362, %v7726, 0
  %v7737 = vsel %vm362, %v7727, 0
  %v7740 = vsel %vm477, %v7731, 0
  %7742 = vmatpush.bf16.msra.mxu0 0
  %7743 = vmatpush.bf16.msra.mxu0 0
  %7744 = vmatpush.bf16.msra.mxu0 0
  %7745 = vmatpush.bf16.msra.mxu0 0
  %7746 = vmatpush.bf16.msra.mxu0 0
  %7747 = vmatpush.bf16.msra.mxu0 0
  %7748 = vmatpush.bf16.msra.mxu0 %v7740
  %7749 = vmatpush.bf16.msra.mxu0 %v7729
  %7750 = vmatmul.bf16.gmra.mxu0 %v7734
  %v7751 = vpop.f32.mrf.mxu0
  %v7752 = vadd.f32 0.0, %v7751
  %v7753 = vpop.f32.mrf.mxu0
  %v7754 = vadd.f32 0.0, %v7753
  %7755 = vmatmul.bf16.gmra.mxu0 %v7737
  %v7756 = vpop.f32.mrf.mxu0
  %v7757 = vadd.f32 0.0, %v7756
  %v7758 = vpop.f32.mrf.mxu0
  %7759 = vdwg.mxu0
  %7760 = vrot.lane.b32.xlu0 %v7427, 104
  %v7761 = vpop.permute.xlu0 %7760
  %7762 = vrot.lane.b32.xlu0 %v7428, 104
  %v7763 = vpop.permute.xlu0 %7762
  %7764 = vrot.lane.b32.xlu0 %v7427, 72
  %v7765 = vpop.permute.xlu0 %7764
  %7766 = vrot.lane.b32.xlu0 %v7428, 72
  %v7767 = vpop.permute.xlu0 %7766
  %v7769 = vsel %vm325, %v7761, 0
  %v7772 = vsel %vm325, %v7763, 0
  %v7775 = vsel %vm325, %v7765, 0
  %v7778 = vsel %vm325, %v7767, 0
  %7780 = vmatpush.bf16.xpose.msra.mxu0 0
  %7781 = vmatpush.bf16.xpose.msra.mxu0 0
  %7782 = vmatpush.bf16.xpose.msra.mxu0 0
  %7783 = vmatpush.bf16.xpose.msra.mxu0 0
  %7784 = vmatpush.bf16.xpose.msra.mxu0 0
  %7785 = vmatpush.bf16.xpose.msra.mxu0 0
  %7786 = vmatpush.bf16.xpose.msra.mxu0 %v7778
  %7787 = vmatpush.bf16.xpose.msra.mxu0 %v7775
  %7788 = vmatmul.bf16.gmra.mxu0 %v7769
  %v7789 = vpop.f32.mrf.mxu0
  %v7790 = vadd.f32 0.0, %v7789
  %v7791 = vpop.f32.mrf.mxu0
  %v7792 = vadd.f32 0.0, %v7791
  %7793 = vmatmul.bf16.gmra.mxu0 %v7772
  %v7794 = vpop.f32.mrf.mxu0
  %v7795 = vadd.f32 0.0, %v7794
  %v7796 = vpop.f32.mrf.mxu0
  %7797 = vdwg.mxu0
  %v7798 = vmul.f32 %v7790, 0.35355338
  %v7799 = vmul.f32 %v7792, 0.35355338
  %v7800 = vmul.f32 %v7795, 0.35355338
  %v7801 = vadd.f32 %v7798, %v108
  %v7802 = vadd.f32 %v7799, %v108
  %v7803 = vadd.f32 %v7800, %v108
  %v7804 = vsel %vm362, %v7801, -inf
  %7805 = vmax.xlane.f32.xlu0 %v7804
  %v7806 = vpop.xlane.xlu0 %7805
  %v7807 = vsel %vm362, %v7802, -inf
  %7808 = vmax.xlane.f32.xlu0 %v7807
  %v7809 = vpop.xlane.xlu0 %7808
  %v7810 = vsel %vm362, %v7803, -inf
  %7811 = vmax.xlane.f32.xlu0 %v7810
  %v7812 = vpop.xlane.xlu0 %7811
  %v7813 = vsub.f32 %v7801, %v7806
  %v7814 = vsub.f32 %v7802, %v7809
  %v7815 = vsub.f32 %v7803, %v7812
  %v7816 = vmul.f32 %v7813, 1.442695
  %v7817 = vpow.pop %v7816
  %v7818 = vmul.f32 %v7814, 1.442695
  %v7819 = vpow.pop %v7818
  %v7820 = vmul.f32 %v7815, 1.442695
  %v7821 = vpow.pop %v7820
  %v7822 = vsel %vm362, %v7817, 0.0
  %7823 = vadd.xlane.f32.xlu0 %v7822
  %v7824 = vpop.xlane.xlu0 %7823
  %v7825 = vsel %vm362, %v7819, 0.0
  %7826 = vadd.xlane.f32.xlu0 %v7825
  %v7827 = vpop.xlane.xlu0 %7826
  %v7828 = vsel %vm362, %v7821, 0.0
  %7829 = vadd.xlane.f32.xlu0 %v7828
  %v7830 = vpop.xlane.xlu0 %7829
  %v7831 = vrcp.pop %v7824
  %v7832 = vrcp.pop %v7827
  %v7833 = vrcp.pop %v7830
  %v7834 = vmul.f32 %v7817, %v7831
  %v7835 = vmul.f32 %v7819, %v7832
  %v7836 = vmul.f32 %v7821, %v7833
  %v7837 = vpack.c.bf16 %v7835, %v7834
  %v7838 = vpack.c.bf16 %v7836, %v7836
  %7839 = vrot.lane.b32.xlu0 %v7427, 40
  %v7840 = vpop.permute.xlu0 %7839
  %7841 = vrot.lane.b32.xlu0 %v7428, 40
  %v7842 = vpop.permute.xlu0 %7841
  %v7845 = vsel %vm362, %v7837, 0
  %v7848 = vsel %vm362, %v7838, 0
  %v7851 = vsel %vm477, %v7842, 0
  %7853 = vmatpush.bf16.msra.mxu0 0
  %7854 = vmatpush.bf16.msra.mxu0 0
  %7855 = vmatpush.bf16.msra.mxu0 0
  %7856 = vmatpush.bf16.msra.mxu0 0
  %7857 = vmatpush.bf16.msra.mxu0 0
  %7858 = vmatpush.bf16.msra.mxu0 0
  %7859 = vmatpush.bf16.msra.mxu0 %v7851
  %7860 = vmatpush.bf16.msra.mxu0 %v7840
  %7861 = vmatmul.bf16.gmra.mxu0 %v7845
  %v7862 = vpop.f32.mrf.mxu0
  %v7863 = vadd.f32 0.0, %v7862
  %v7864 = vpop.f32.mrf.mxu0
  %v7865 = vadd.f32 0.0, %v7864
  %7866 = vmatmul.bf16.gmra.mxu0 %v7848
  %v7867 = vpop.f32.mrf.mxu0
  %v7868 = vadd.f32 0.0, %v7867
  %v7869 = vpop.f32.mrf.mxu0
  %7870 = vdwg.mxu0
  %7874 = vrot.lane.b32.xlu0 %v7641, 8
  %v7875 = vpop.permute.xlu0 %7874
  %7876 = vrot.lane.b32.xlu0 %v7643, 8
  %v7877 = vpop.permute.xlu0 %7876
  %7878 = vrot.lane.b32.xlu0 %v7646, 8
  %v7879 = vpop.permute.xlu0 %7878
  %7886 = vrot.lane.b32.xlu0 %v7752, 16
  %v7887 = vpop.permute.xlu0 %7886
  %7888 = vrot.lane.b32.xlu0 %v7754, 16
  %v7889 = vpop.permute.xlu0 %7888
  %7890 = vrot.lane.b32.xlu0 %v7757, 16
  %v7891 = vpop.permute.xlu0 %7890
  %7898 = vrot.lane.b32.xlu0 %v7863, 24
  %v7899 = vpop.permute.xlu0 %7898
  %7900 = vrot.lane.b32.xlu0 %v7865, 24
  %v7901 = vpop.permute.xlu0 %7900
  %7902 = vrot.lane.b32.xlu0 %v7868, 24
  %v7903 = vpop.permute.xlu0 %7902
  %v7907 = vsel %vm325, %v7530, %v7875
  %v7908 = vsel %vm325, %v7532, %v7877
  %v7909 = vsel %vm325, %v7535, %v7879
  %v7910 = vsel %vm1078, %v7907, %v7887
  %v7911 = vsel %vm1078, %v7908, %v7889
  %v7912 = vsel %vm1078, %v7909, %v7891
  %v7913 = vsel %vm362, %v7910, %v7899
  %v7914 = vsel %vm362, %v7911, %v7901
  %v7915 = vsel %vm362, %v7912, %v7903
  %v7916 = vpack.c.bf16 %v7425, %v7424
  %v7917 = vpack.c.bf16 %v7913, %v7426
  %v7918 = vpack.c.bf16 %v7915, %v7914
  %7919 = vrot.lane.b32.xlu0 %v6901, 32
  %v7920 = vpop.permute.xlu0 %7919
  %7921 = vrot.lane.b32.xlu0 %v6902, 32
  %v7922 = vpop.permute.xlu0 %7921
  %v7926 = vsel %vm140, %v7916, 0
  %v7929 = vsel %vm140, %v7917, 0
  %v7932 = vsel %vm140, %v7918, 0
  %7934 = vmatpush.bf16.msra.mxu0 0
  %7935 = vmatpush.bf16.msra.mxu0 0
  %7936 = vmatpush.bf16.msra.mxu0 0
  %7937 = vmatpush.bf16.msra.mxu0 0
  %7938 = vmatpush.bf16.msra.mxu0 0
  %7939 = vmatpush.bf16.msra.mxu0 0
  %7940 = vmatpush.bf16.msra.mxu0 %v7922
  %7941 = vmatpush.bf16.msra.mxu0 %v7920
  %7942 = vmatmul.bf16.gmra.mxu0 %v7926
  %v7943 = vpop.f32.mrf.mxu0
  %v7944 = vadd.f32 0.0, %v7943
  %v7945 = vpop.f32.mrf.mxu0
  %v7946 = vadd.f32 0.0, %v7945
  %7947 = vmatmul.bf16.gmra.mxu0 %v7929
  %v7948 = vpop.f32.mrf.mxu0
  %v7949 = vadd.f32 0.0, %v7948
  %v7950 = vpop.f32.mrf.mxu0
  %v7951 = vadd.f32 0.0, %v7950
  %7952 = vmatmul.bf16.gmra.mxu0 %v7932
  %v7953 = vpop.f32.mrf.mxu0
  %v7954 = vadd.f32 0.0, %v7953
  %v7955 = vpop.f32.mrf.mxu0
  %v7956 = vadd.f32 0.0, %v7955
  %7957 = vdwg.mxu0
  %v7958 = vadd.f32 %v6705, %v7944
  %v7959 = vadd.f32 %v6706, %v7946
  %v7960 = vadd.f32 %v6707, %v7949
  %v7961 = vadd.f32 %v6708, %v7951
  %v7962 = vadd.f32 %v6709, %v7954
  %v7963 = vadd.f32 %v6710, %v7956
  %v7964 = vperm.slane %v6714, 0
  %v7965 = vadd.f32 %v7958, %v7964
  %v7966 = vadd.f32 %v7959, %v7964
  %v7967 = vadd.f32 %v7960, %v7964
  %v7968 = vadd.f32 %v7961, %v7964
  %v7969 = vadd.f32 %v7962, %v7964
  %v7970 = vadd.f32 %v7963, %v7964
  %v7971 = vsel %vm140, %v7965, 0.0
  %7972 = vadd.xlane.f32.xlu0 %v7971
  %v7973 = vpop.xlane.xlu0 %7972
  %v7974 = vsel %vm140, %v7966, 0.0
  %7975 = vadd.xlane.f32.xlu0 %v7974
  %v7976 = vpop.xlane.xlu0 %7975
  %v7977 = vsel %vm140, %v7967, 0.0
  %7978 = vadd.xlane.f32.xlu0 %v7977
  %v7979 = vpop.xlane.xlu0 %7978
  %v7980 = vsel %vm140, %v7968, 0.0
  %7981 = vadd.xlane.f32.xlu0 %v7980
  %v7982 = vpop.xlane.xlu0 %7981
  %v7983 = vsel %vm140, %v7969, 0.0
  %7984 = vadd.xlane.f32.xlu0 %v7983
  %v7985 = vpop.xlane.xlu0 %7984
  %v7986 = vsel %vm140, %v7970, 0.0
  %7987 = vadd.xlane.f32.xlu0 %v7986
  %v7988 = vpop.xlane.xlu0 %7987
  %v7989 = vmul.f32 %v7973, %v161
  %v7990 = vmul.f32 %v7976, %v161
  %v7991 = vmul.f32 %v7979, %v161
  %v7992 = vmul.f32 %v7982, %v161
  %v7993 = vmul.f32 %v7985, %v161
  %v7994 = vmul.f32 %v7988, %v161
  %v7995 = vsub.f32 %v7965, %v7989
  %v7996 = vsub.f32 %v7966, %v7990
  %v7997 = vsub.f32 %v7967, %v7991
  %v7998 = vsub.f32 %v7968, %v7992
  %v7999 = vsub.f32 %v7969, %v7993
  %v8000 = vsub.f32 %v7970, %v7994
  %v8001 = vmul.f32 %v7995, %v7995
  %v8002 = vmul.f32 %v7996, %v7996
  %v8003 = vmul.f32 %v7997, %v7997
  %v8004 = vmul.f32 %v7998, %v7998
  %v8005 = vmul.f32 %v7999, %v7999
  %v8006 = vmul.f32 %v8000, %v8000
  %v8007 = vsel %vm140, %v8001, 0.0
  %8008 = vadd.xlane.f32.xlu0 %v8007
  %v8009 = vpop.xlane.xlu0 %8008
  %v8010 = vsel %vm140, %v8002, 0.0
  %8011 = vadd.xlane.f32.xlu0 %v8010
  %v8012 = vpop.xlane.xlu0 %8011
  %v8013 = vsel %vm140, %v8003, 0.0
  %8014 = vadd.xlane.f32.xlu0 %v8013
  %v8015 = vpop.xlane.xlu0 %8014
  %v8016 = vsel %vm140, %v8004, 0.0
  %8017 = vadd.xlane.f32.xlu0 %v8016
  %v8018 = vpop.xlane.xlu0 %8017
  %v8019 = vsel %vm140, %v8005, 0.0
  %8020 = vadd.xlane.f32.xlu0 %v8019
  %v8021 = vpop.xlane.xlu0 %8020
  %v8022 = vsel %vm140, %v8006, 0.0
  %8023 = vadd.xlane.f32.xlu0 %v8022
  %v8024 = vpop.xlane.xlu0 %8023
  %v8025 = vmul.f32 %v8009, %v161
  %v8026 = vmul.f32 %v8012, %v161
  %v8027 = vmul.f32 %v8015, %v161
  %v8028 = vmul.f32 %v8018, %v161
  %v8029 = vmul.f32 %v8021, %v161
  %v8030 = vmul.f32 %v8024, %v161
  %v8031 = vadd.f32 %v8025, 1e-05
  %v8032 = vadd.f32 %v8026, 1e-05
  %v8033 = vadd.f32 %v8027, 1e-05
  %v8034 = vadd.f32 %v8028, 1e-05
  %v8035 = vadd.f32 %v8029, 1e-05
  %v8036 = vadd.f32 %v8030, 1e-05
  %v8037 = vrsqrt.pop %v8031
  %v8038 = vmul.f32 %v8037, %v8031
  %v8039 = vmul.f32 %v8038, %v8037
  %v8040 = vmul.f32 0.5, %v8039
  %v8041 = vsub.f32 1.5, %v8040
  %v8042 = vmul.f32 %v8037, %v8041
  %vm8043 = vweird.f32 %v8031
  %vm8044 = vweird.f32 %v8037
  %vm8045 = vmor %vm8043, %vm8044
  %v8046 = vsel %vm8045, %v8037, %v8042
  %v8047 = vrsqrt.pop %v8032
  %v8048 = vmul.f32 %v8047, %v8032
  %v8049 = vmul.f32 %v8048, %v8047
  %v8050 = vmul.f32 0.5, %v8049
  %v8051 = vsub.f32 1.5, %v8050
  %v8052 = vmul.f32 %v8047, %v8051
  %vm8053 = vweird.f32 %v8032
  %vm8054 = vweird.f32 %v8047
  %vm8055 = vmor %vm8053, %vm8054
  %v8056 = vsel %vm8055, %v8047, %v8052
  %v8057 = vrsqrt.pop %v8033
  %v8058 = vmul.f32 %v8057, %v8033
  %v8059 = vmul.f32 %v8058, %v8057
  %v8060 = vmul.f32 0.5, %v8059
  %v8061 = vsub.f32 1.5, %v8060
  %v8062 = vmul.f32 %v8057, %v8061
  %vm8063 = vweird.f32 %v8033
  %vm8064 = vweird.f32 %v8057
  %vm8065 = vmor %vm8063, %vm8064
  %v8066 = vsel %vm8065, %v8057, %v8062
  %v8067 = vrsqrt.pop %v8034
  %v8068 = vmul.f32 %v8067, %v8034
  %v8069 = vmul.f32 %v8068, %v8067
  %v8070 = vmul.f32 0.5, %v8069
  %v8071 = vsub.f32 1.5, %v8070
  %v8072 = vmul.f32 %v8067, %v8071
  %vm8073 = vweird.f32 %v8034
  %vm8074 = vweird.f32 %v8067
  %vm8075 = vmor %vm8073, %vm8074
  %v8076 = vsel %vm8075, %v8067, %v8072
  %v8077 = vrsqrt.pop %v8035
  %v8078 = vmul.f32 %v8077, %v8035
  %v8079 = vmul.f32 %v8078, %v8077
  %v8080 = vmul.f32 0.5, %v8079
  %v8081 = vsub.f32 1.5, %v8080
  %v8082 = vmul.f32 %v8077, %v8081
  %vm8083 = vweird.f32 %v8035
  %vm8084 = vweird.f32 %v8077
  %vm8085 = vmor %vm8083, %vm8084
  %v8086 = vsel %vm8085, %v8077, %v8082
  %v8087 = vrsqrt.pop %v8036
  %v8088 = vmul.f32 %v8087, %v8036
  %v8089 = vmul.f32 %v8088, %v8087
  %v8090 = vmul.f32 0.5, %v8089
  %v8091 = vsub.f32 1.5, %v8090
  %v8092 = vmul.f32 %v8087, %v8091
  %vm8093 = vweird.f32 %v8036
  %vm8094 = vweird.f32 %v8087
  %vm8095 = vmor %vm8093, %vm8094
  %v8096 = vsel %vm8095, %v8087, %v8092
  %v8097 = vmul.f32 %v7995, %v8046
  %v8098 = vmul.f32 %v7996, %v8056
  %v8099 = vmul.f32 %v7997, %v8066
  %v8100 = vmul.f32 %v7998, %v8076
  %v8101 = vmul.f32 %v7999, %v8086
  %v8102 = vmul.f32 %v8000, %v8096
  %v8103 = vperm.slane %v6715, 0
  %v8104 = vmul.f32 %v8097, %v8103
  %v8105 = vmul.f32 %v8098, %v8103
  %v8106 = vmul.f32 %v8099, %v8103
  %v8107 = vmul.f32 %v8100, %v8103
  %v8108 = vmul.f32 %v8101, %v8103
  %v8109 = vmul.f32 %v8102, %v8103
  %v8110 = vperm.slane %v6716, 0
  %v8111 = vadd.f32 %v8104, %v8110
  %v8112 = vadd.f32 %v8105, %v8110
  %v8113 = vadd.f32 %v8106, %v8110
  %v8114 = vadd.f32 %v8107, %v8110
  %v8115 = vadd.f32 %v8108, %v8110
  %v8116 = vadd.f32 %v8109, %v8110
  %v8117 = vpack.c.bf16 %v8112, %v8111
  %v8118 = vpack.c.bf16 %v8114, %v8113
  %v8119 = vpack.c.bf16 %v8116, %v8115
  %v8120 = vperm.slane %v6717, 0
  %v8125 = vunpack.c.l.b16 %v6724
  %v8126 = vunpack.c.l.b16 %v6725
  %v8127 = vunpack.c.l.b16 %v6726
  %v8128 = vunpack.c.l.b16 %v6727
  %v8129 = vpack.c.b16 %v8126, %v8125
  %v8130 = vpack.c.b16 %v8128, %v8127
  %v8134 = vsel %vm140, %v8117, 0
  %v8137 = vsel %vm140, %v8118, 0
  %v8140 = vsel %vm140, %v8119, 0
  %8142 = vmatpush.bf16.msra.mxu0 0
  %8143 = vmatpush.bf16.msra.mxu0 0
  %8144 = vmatpush.bf16.msra.mxu0 0
  %8145 = vmatpush.bf16.msra.mxu0 0
  %8146 = vmatpush.bf16.msra.mxu0 0
  %8147 = vmatpush.bf16.msra.mxu0 0
  %8148 = vmatpush.bf16.msra.mxu0 %v8130
  %8149 = vmatpush.bf16.msra.mxu0 %v8129
  %8150 = vmatmul.bf16.gmra.mxu0 %v8134
  %v8151 = vpop.f32.mrf.mxu0
  %v8152 = vadd.f32 %v8120, %v8151
  %v8153 = vpop.f32.mrf.mxu0
  %v8154 = vadd.f32 %v8120, %v8153
  %8155 = vmatmul.bf16.gmra.mxu0 %v8137
  %v8156 = vpop.f32.mrf.mxu0
  %v8157 = vadd.f32 %v8120, %v8156
  %v8158 = vpop.f32.mrf.mxu0
  %v8159 = vadd.f32 %v8120, %v8158
  %8160 = vmatmul.bf16.gmra.mxu0 %v8140
  %v8161 = vpop.f32.mrf.mxu0
  %v8162 = vadd.f32 %v8120, %v8161
  %v8163 = vpop.f32.mrf.mxu0
  %v8164 = vadd.f32 %v8120, %v8163
  %8165 = vdwg.mxu0
  %v8166 = vmul.f32 %v8152, 0.5
  %v8167 = vmul.f32 %v8154, 0.5
  %v8168 = vmul.f32 %v8157, 0.5
  %v8169 = vmul.f32 %v8159, 0.5
  %v8170 = vmul.f32 %v8162, 0.5
  %v8171 = vmul.f32 %v8164, 0.5
  %v8172 = vmul.f32 %v8152, 0.70710677
  %v8173 = vmul.f32 %v8154, 0.70710677
  %v8174 = vmul.f32 %v8157, 0.70710677
  %v8175 = vmul.f32 %v8159, 0.70710677
  %v8176 = vmul.f32 %v8162, 0.70710677
  %v8177 = vmul.f32 %v8164, 0.70710677
  %vm8178 = vcmp.ge.f32.partialorder %v8172, 0.0
  %vm8179 = vcmp.ge.f32.partialorder %v8173, 0.0
  %vm8180 = vcmp.ge.f32.partialorder %v8174, 0.0
  %vm8181 = vcmp.ge.f32.partialorder %v8175, 0.0
  %vm8182 = vcmp.ge.f32.partialorder %v8176, 0.0
  %vm8183 = vcmp.ge.f32.partialorder %v8177, 0.0
  %v8184 = vsel %vm8178, 1.0, -1.0
  %v8185 = vsel %vm8179, 1.0, -1.0
  %v8186 = vsel %vm8180, 1.0, -1.0
  %v8187 = vsel %vm8181, 1.0, -1.0
  %v8188 = vsel %vm8182, 1.0, -1.0
  %v8189 = vsel %vm8183, 1.0, -1.0
  %v8190 = vand.u32 2147483647, %v8172
  %v8191 = vand.u32 2147483647, %v8173
  %v8192 = vand.u32 2147483647, %v8174
  %v8193 = vand.u32 2147483647, %v8175
  %v8194 = vand.u32 2147483647, %v8176
  %v8195 = vand.u32 2147483647, %v8177
  %v8196 = vmul.f32 %v8190, 0.3275911
  %v8197 = vmul.f32 %v8191, 0.3275911
  %v8198 = vmul.f32 %v8192, 0.3275911
  %v8199 = vmul.f32 %v8193, 0.3275911
  %v8200 = vmul.f32 %v8194, 0.3275911
  %v8201 = vmul.f32 %v8195, 0.3275911
  %v8202 = vadd.f32 %v8196, 1.0
  %v8203 = vadd.f32 %v8197, 1.0
  %v8204 = vadd.f32 %v8198, 1.0
  %v8205 = vadd.f32 %v8199, 1.0
  %v8206 = vadd.f32 %v8200, 1.0
  %v8207 = vadd.f32 %v8201, 1.0
  %v8208 = vrcp.pop %v8202
  %v8209 = vmul.f32 %v8202, %v8208
  %v8210 = vsub.f32 1.0, %v8209
  %v8211 = vmul.f32 %v8208, %v8210
  %v8212 = vadd.f32 %v8208, %v8211
  %vm8213 = vweird.f32 %v8202
  %vm8214 = vweird.f32 %v8208
  %vm8215 = vmor %vm8213, %vm8214
  %v8216 = vsel %vm8215, %v8208, %v8212
  %v8217 = vand.u32 2147483647, %v8202
  %vm8218 = vcmp.eq.f32.partialorder %v8217, 8.507059e+37
  %v8219 = vand.u32 %v8202, 2147483648
  %v8220 = vor.u32 1.1754944e-38, %v8219
  %v8221 = vsel %vm8218, %v8220, %v8216
  %v8222 = vmul.f32 1.0, %v8221
  %v8223 = vrcp.pop %v8203
  %v8224 = vmul.f32 %v8203, %v8223
  %v8225 = vsub.f32 1.0, %v8224
  %v8226 = vmul.f32 %v8223, %v8225
  %v8227 = vadd.f32 %v8223, %v8226
  %vm8228 = vweird.f32 %v8203
  %vm8229 = vweird.f32 %v8223
  %vm8230 = vmor %vm8228, %vm8229
  %v8231 = vsel %vm8230, %v8223, %v8227
  %v8232 = vand.u32 2147483647, %v8203
  %vm8233 = vcmp.eq.f32.partialorder %v8232, 8.507059e+37
  %v8234 = vand.u32 %v8203, 2147483648
  %v8235 = vor.u32 1.1754944e-38, %v8234
  %v8236 = vsel %vm8233, %v8235, %v8231
  %v8237 = vmul.f32 1.0, %v8236
  %v8238 = vrcp.pop %v8204
  %v8239 = vmul.f32 %v8204, %v8238
  %v8240 = vsub.f32 1.0, %v8239
  %v8241 = vmul.f32 %v8238, %v8240
  %v8242 = vadd.f32 %v8238, %v8241
  %vm8243 = vweird.f32 %v8204
  %vm8244 = vweird.f32 %v8238
  %vm8245 = vmor %vm8243, %vm8244
  %v8246 = vsel %vm8245, %v8238, %v8242
  %v8247 = vand.u32 2147483647, %v8204
  %vm8248 = vcmp.eq.f32.partialorder %v8247, 8.507059e+37
  %v8249 = vand.u32 %v8204, 2147483648
  %v8250 = vor.u32 1.1754944e-38, %v8249
  %v8251 = vsel %vm8248, %v8250, %v8246
  %v8252 = vmul.f32 1.0, %v8251
  %v8253 = vrcp.pop %v8205
  %v8254 = vmul.f32 %v8205, %v8253
  %v8255 = vsub.f32 1.0, %v8254
  %v8256 = vmul.f32 %v8253, %v8255
  %v8257 = vadd.f32 %v8253, %v8256
  %vm8258 = vweird.f32 %v8205
  %vm8259 = vweird.f32 %v8253
  %vm8260 = vmor %vm8258, %vm8259
  %v8261 = vsel %vm8260, %v8253, %v8257
  %v8262 = vand.u32 2147483647, %v8205
  %vm8263 = vcmp.eq.f32.partialorder %v8262, 8.507059e+37
  %v8264 = vand.u32 %v8205, 2147483648
  %v8265 = vor.u32 1.1754944e-38, %v8264
  %v8266 = vsel %vm8263, %v8265, %v8261
  %v8267 = vmul.f32 1.0, %v8266
  %v8268 = vrcp.pop %v8206
  %v8269 = vmul.f32 %v8206, %v8268
  %v8270 = vsub.f32 1.0, %v8269
  %v8271 = vmul.f32 %v8268, %v8270
  %v8272 = vadd.f32 %v8268, %v8271
  %vm8273 = vweird.f32 %v8206
  %vm8274 = vweird.f32 %v8268
  %vm8275 = vmor %vm8273, %vm8274
  %v8276 = vsel %vm8275, %v8268, %v8272
  %v8277 = vand.u32 2147483647, %v8206
  %vm8278 = vcmp.eq.f32.partialorder %v8277, 8.507059e+37
  %v8279 = vand.u32 %v8206, 2147483648
  %v8280 = vor.u32 1.1754944e-38, %v8279
  %v8281 = vsel %vm8278, %v8280, %v8276
  %v8282 = vmul.f32 1.0, %v8281
  %v8283 = vrcp.pop %v8207
  %v8284 = vmul.f32 %v8207, %v8283
  %v8285 = vsub.f32 1.0, %v8284
  %v8286 = vmul.f32 %v8283, %v8285
  %v8287 = vadd.f32 %v8283, %v8286
  %vm8288 = vweird.f32 %v8207
  %vm8289 = vweird.f32 %v8283
  %vm8290 = vmor %vm8288, %vm8289
  %v8291 = vsel %vm8290, %v8283, %v8287
  %v8292 = vand.u32 2147483647, %v8207
  %vm8293 = vcmp.eq.f32.partialorder %v8292, 8.507059e+37
  %v8294 = vand.u32 %v8207, 2147483648
  %v8295 = vor.u32 1.1754944e-38, %v8294
  %v8296 = vsel %vm8293, %v8295, %v8291
  %v8297 = vmul.f32 1.0, %v8296
  %v8298 = vmul.f32 %v8222, 1.0614054
  %v8299 = vmul.f32 %v8237, 1.0614054
  %v8300 = vmul.f32 %v8252, 1.0614054
  %v8301 = vmul.f32 %v8267, 1.0614054
  %v8302 = vmul.f32 %v8282, 1.0614054
  %v8303 = vmul.f32 %v8297, 1.0614054
  %v8304 = vadd.f32 %v8298, -1.4531521
  %v8305 = vadd.f32 %v8299, -1.4531521
  %v8306 = vadd.f32 %v8300, -1.4531521
  %v8307 = vadd.f32 %v8301, -1.4531521
  %v8308 = vadd.f32 %v8302, -1.4531521
  %v8309 = vadd.f32 %v8303, -1.4531521
  %v8310 = vmul.f32 %v8304, %v8222
  %v8311 = vmul.f32 %v8305, %v8237
  %v8312 = vmul.f32 %v8306, %v8252
  %v8313 = vmul.f32 %v8307, %v8267
  %v8314 = vmul.f32 %v8308, %v8282
  %v8315 = vmul.f32 %v8309, %v8297
  %v8316 = vadd.f32 %v8310, 1.4214138
  %v8317 = vadd.f32 %v8311, 1.4214138
  %v8318 = vadd.f32 %v8312, 1.4214138
  %v8319 = vadd.f32 %v8313, 1.4214138
  %v8320 = vadd.f32 %v8314, 1.4214138
  %v8321 = vadd.f32 %v8315, 1.4214138
  %v8322 = vmul.f32 %v8316, %v8222
  %v8323 = vmul.f32 %v8317, %v8237
  %v8324 = vmul.f32 %v8318, %v8252
  %v8325 = vmul.f32 %v8319, %v8267
  %v8326 = vmul.f32 %v8320, %v8282
  %v8327 = vmul.f32 %v8321, %v8297
  %v8328 = vadd.f32 %v8322, -0.28449672
  %v8329 = vadd.f32 %v8323, -0.28449672
  %v8330 = vadd.f32 %v8324, -0.28449672
  %v8331 = vadd.f32 %v8325, -0.28449672
  %v8332 = vadd.f32 %v8326, -0.28449672
  %v8333 = vadd.f32 %v8327, -0.28449672
  %v8334 = vmul.f32 %v8328, %v8222
  %v8335 = vmul.f32 %v8329, %v8237
  %v8336 = vmul.f32 %v8330, %v8252
  %v8337 = vmul.f32 %v8331, %v8267
  %v8338 = vmul.f32 %v8332, %v8282
  %v8339 = vmul.f32 %v8333, %v8297
  %v8340 = vadd.f32 %v8334, 0.2548296
  %v8341 = vadd.f32 %v8335, 0.2548296
  %v8342 = vadd.f32 %v8336, 0.2548296
  %v8343 = vadd.f32 %v8337, 0.2548296
  %v8344 = vadd.f32 %v8338, 0.2548296
  %v8345 = vadd.f32 %v8339, 0.2548296
  %v8346 = vmul.f32 %v8340, %v8222
  %v8347 = vmul.f32 %v8341, %v8237
  %v8348 = vmul.f32 %v8342, %v8252
  %v8349 = vmul.f32 %v8343, %v8267
  %v8350 = vmul.f32 %v8344, %v8282
  %v8351 = vmul.f32 %v8345, %v8297
  %v8352 = vsub.f32 0.0, %v8190
  %v8353 = vsub.f32 0.0, %v8191
  %v8354 = vsub.f32 0.0, %v8192
  %v8355 = vsub.f32 0.0, %v8193
  %v8356 = vsub.f32 0.0, %v8194
  %v8357 = vsub.f32 0.0, %v8195
  %v8358 = vmul.f32 %v8352, %v8190
  %v8359 = vmul.f32 %v8353, %v8191
  %v8360 = vmul.f32 %v8354, %v8192
  %v8361 = vmul.f32 %v8355, %v8193
  %v8362 = vmul.f32 %v8356, %v8194
  %v8363 = vmul.f32 %v8357, %v8195
  %v8364 = vmul.f32 %v8358, 1.442695
  %v8365 = vpow.pop %v8364
  %v8366 = vmul.f32 %v8359, 1.442695
  %v8367 = vpow.pop %v8366
  %v8368 = vmul.f32 %v8360, 1.442695
  %v8369 = vpow.pop %v8368
  %v8370 = vmul.f32 %v8361, 1.442695
  %v8371 = vpow.pop %v8370
  %v8372 = vmul.f32 %v8362, 1.442695
  %v8373 = vpow.pop %v8372
  %v8374 = vmul.f32 %v8363, 1.442695
  %v8375 = vpow.pop %v8374
  %v8376 = vmul.f32 %v8346, %v8365
  %v8377 = vmul.f32 %v8347, %v8367
  %v8378 = vmul.f32 %v8348, %v8369
  %v8379 = vmul.f32 %v8349, %v8371
  %v8380 = vmul.f32 %v8350, %v8373
  %v8381 = vmul.f32 %v8351, %v8375
  %v8382 = vsub.f32 1.0, %v8376
  %v8383 = vsub.f32 1.0, %v8377
  %v8384 = vsub.f32 1.0, %v8378
  %v8385 = vsub.f32 1.0, %v8379
  %v8386 = vsub.f32 1.0, %v8380
  %v8387 = vsub.f32 1.0, %v8381
  %v8388 = vmul.f32 %v8184, %v8382
  %v8389 = vmul.f32 %v8185, %v8383
  %v8390 = vmul.f32 %v8186, %v8384
  %v8391 = vmul.f32 %v8187, %v8385
  %v8392 = vmul.f32 %v8188, %v8386
  %v8393 = vmul.f32 %v8189, %v8387
  %v8394 = vadd.f32 %v8388, 1.0
  %v8395 = vadd.f32 %v8389, 1.0
  %v8396 = vadd.f32 %v8390, 1.0
  %v8397 = vadd.f32 %v8391, 1.0
  %v8398 = vadd.f32 %v8392, 1.0
  %v8399 = vadd.f32 %v8393, 1.0
  %v8400 = vmul.f32 %v8166, %v8394
  %v8401 = vmul.f32 %v8167, %v8395
  %v8402 = vmul.f32 %v8168, %v8396
  %v8403 = vmul.f32 %v8169, %v8397
  %v8404 = vmul.f32 %v8170, %v8398
  %v8405 = vmul.f32 %v8171, %v8399
  %v8406 = vpack.c.bf16 %v8401, %v8400
  %v8407 = vpack.c.bf16 %v8403, %v8402
  %v8408 = vpack.c.bf16 %v8405, %v8404
  %v8425 = vunpack.c.l.b16 %v6728
  %v8426 = vunpack.c.l.b16 %v6729
  %v8427 = vunpack.c.l.b16 %v6730
  %v8428 = vunpack.c.l.b16 %v6731
  %v8429 = vunpack.c.l.b16 %v6732
  %v8430 = vunpack.c.l.b16 %v6733
  %v8431 = vunpack.c.l.b16 %v6734
  %v8432 = vunpack.c.l.b16 %v6735
  %v8433 = vunpack.c.l.b16 %v6736
  %v8434 = vunpack.c.l.b16 %v6737
  %v8435 = vunpack.c.l.b16 %v6738
  %v8436 = vunpack.c.l.b16 %v6739
  %v8437 = vunpack.c.l.b16 %v6740
  %v8438 = vunpack.c.l.b16 %v6741
  %v8439 = vunpack.c.l.b16 %v6742
  %v8440 = vunpack.c.l.b16 %v6743
  %v8441 = vpack.c.b16 %v8426, %v8425
  %v8442 = vpack.c.b16 %v8428, %v8427
  %v8443 = vpack.c.b16 %v8430, %v8429
  %v8444 = vpack.c.b16 %v8432, %v8431
  %v8445 = vpack.c.b16 %v8434, %v8433
  %v8446 = vpack.c.b16 %v8436, %v8435
  %v8447 = vpack.c.b16 %v8438, %v8437
  %v8448 = vpack.c.b16 %v8440, %v8439
  %8457 = vmatpush.bf16.msra.mxu0 %v8448
  %8458 = vmatpush.bf16.msra.mxu0 %v8447
  %8459 = vmatpush.bf16.msra.mxu0 %v8446
  %8460 = vmatpush.bf16.msra.mxu0 %v8445
  %8461 = vmatpush.bf16.msra.mxu0 %v8444
  %8462 = vmatpush.bf16.msra.mxu0 %v8443
  %8463 = vmatpush.bf16.msra.mxu0 %v8442
  %8464 = vmatpush.bf16.msra.mxu0 %v8441
  %8465 = vmatmul.bf16.gmra.mxu0 %v8406
  %v8466 = vpop.f32.mrf.mxu0
  %v8467 = vpop.f32.mrf.mxu0
  %8468 = vmatmul.bf16.gmra.mxu0 %v8407
  %v8469 = vpop.f32.mrf.mxu0
  %v8470 = vadd.f32 0.0, %v8469
  %v8471 = vpop.f32.mrf.mxu0
  %8472 = vmatmul.bf16.gmra.mxu0 %v8408
  %v8473 = vpop.f32.mrf.mxu0
  %v8474 = vpop.f32.mrf.mxu0
  %v8475 = vadd.f32 0.0, %v8474
  %8476 = vdwg.mxu0
  %v8477 = vadd.f32 %v7967, %v8470
  %v8478 = vadd.f32 %v7970, %v8475
  %v8479 = vperm.slane %v6718, 0
  %v8480 = vadd.f32 %v8477, %v8479
  %v8481 = vadd.f32 %v8478, %v8479
  %v8483 = vrot.slane %v8481, 7
  %vm8485 = vcmask 1040384
  %v8486 = vsel %vm8485, %v8480, %v8483
  %vm8487 = vcmask 1041408
  %v8488 = vsel %vm8487, %v8486, 0.0
  %v8489 = vld [vmem:[%s1 + $0x11] sm:$0x1]
  %v8490 = vld [vmem:[%s1 + $0x12] sm:$0x1]
  %v8491 = vld [vmem:[%s1 + $0x13] sm:$0x1]
  %v8492 = vsel %vm140, %v8488, 0.0
  %8493 = vadd.xlane.f32.xlu0 %v8492
  %v8494 = vpop.xlane.xlu0 %8493
  %v8495 = vmul.f32 %v8494, %v161
  %v8496 = vsub.f32 %v8488, %v8495
  %v8497 = vmul.f32 %v8496, %v8496
  %v8498 = vsel %vm140, %v8497, 0.0
  %8499 = vadd.xlane.f32.xlu0 %v8498
  %v8500 = vpop.xlane.xlu0 %8499
  %v8501 = vmul.f32 %v8500, %v161
  %v8502 = vadd.f32 %v8501, 1e-05
  %v8503 = vrsqrt.pop %v8502
  %v8504 = vmul.f32 %v8503, %v8502
  %v8505 = vmul.f32 %v8504, %v8503
  %v8506 = vmul.f32 0.5, %v8505
  %v8507 = vsub.f32 1.5, %v8506
  %v8508 = vmul.f32 %v8503, %v8507
  %vm8509 = vweird.f32 %v8502
  %vm8510 = vweird.f32 %v8503
  %vm8511 = vmor %vm8509, %vm8510
  %v8512 = vsel %vm8511, %v8503, %v8508
  %v8513 = vmul.f32 %v8496, %v8512
  %v8514 = vperm.slane %v8489, 0
  %v8515 = vmul.f32 %v8513, %v8514
  %v8516 = vperm.slane %v8490, 0
  %v8517 = vadd.f32 %v8515, %v8516
  %v8518 = vpack.c.bf16 %v8517, %v8517
  %v8519 = vld [vmem:[%s6] sm:$0xf]
  %v8520 = vld [vmem:[%s6 + $0x4] sm:$0xf]
  %v8521 = vld [vmem:[%s6 + $0x8] sm:$0xf]
  %v8522 = vld [vmem:[%s6 + $0xc] sm:$0xf]
  %v8523 = vperm.slane %v8491, 0
  %v8528 = vunpack.c.l.b16 %v8519
  %v8529 = vunpack.c.l.b16 %v8520
  %v8530 = vunpack.c.l.b16 %v8521
  %v8531 = vunpack.c.l.b16 %v8522
  %v8532 = vpack.c.b16 %v8529, %v8528
  %v8533 = vpack.c.b16 %v8531, %v8530
  %v8537 = vsel %vm140, %v8518, 0
  %8539 = vmatpush.bf16.msra.mxu0 0
  %8540 = vmatpush.bf16.msra.mxu0 0
  %8541 = vmatpush.bf16.msra.mxu0 0
  %8542 = vmatpush.bf16.msra.mxu0 0
  %8543 = vmatpush.bf16.msra.mxu0 0
  %8544 = vmatpush.bf16.msra.mxu0 0
  %8545 = vmatpush.bf16.msra.mxu0 %v8533
  %8546 = vmatpush.bf16.msra.mxu0 %v8532
  %8547 = vmatmul.bf16.gmra.mxu0 %v8537
  %v8548 = vpop.f32.mrf.mxu0
  %v8549 = vadd.f32 %v8523, %v8548
  %v8550 = vpop.f32.mrf.mxu0
  %8551 = vdwg.mxu0
  %8552 = vst [vmem:[%s7] sm:$0xff] %v8549
  // Predicated region
  $region30: #{_convit_forward_impl.1} parent=0 // pred_check
    _
  $region31: #{_convit_forward_impl.1} parent=0 // pred_check_branch
    %8554 = sbr.rel (0) target = $region33
  $region32: #{_convit_forward_impl.1} parent=0 // pred_region
    _
  $region33: #{_convit_forward_impl.1} parent=0 // pred_fallthru
    _
  // Predicated region
  $region34: #{_convit_forward_impl.1} parent=0 // pred_check
    _
  $region35: #{_convit_forward_impl.1} parent=0 // pred_check_branch
    %8556 = sbr.rel (0) target = $region37
  $region36: #{_convit_forward_impl.1} parent=0 // pred_region
    _
  $region37: #{_convit_forward_impl.1} parent=0 // pred_fallthru
    _

</llo_original>
